<compile_context>
chip_gen: v7x
topology: tpu7x:2x2x1
jax: 0.10.0
libtpu: 0.0.40
codegen_flags: <defaults>
</compile_context>

<pallas_src>
import functools

import jax
import jax.numpy as jnp
from jax import lax
from jax.experimental import pallas as pl
from jax.experimental.pallas import tpu as pltpu


def _lrelu(x, leak):
    return jnp.where(x > 0, x, leak * x)


def _wide_basic_kernel(x_ref, w1_ref, b1_ref, w2_ref, b2_ref, ws_ref, bs_ref,
                       o_ref, xpad_ref, hpad_ref,
                       *, k1, leak, st, sf, cut_off, has_shortcut_conv):
    # Per grid step (one batch tile of B elements):
    #   x_ref:    (B, T, F, Cin)      bf16  NHWC slice of the input
    #   w1_ref:   (k1, 3*Cin, P)      bf16  conv1 weight, row index (per kh) = kw*Cin + c
    #   w2_ref:   (3, 3*P, P)         bf16  conv2 weight, row index (per kh) = kw*P + c
    #   ws_ref:   (Cin, P)            bf16  1x1 shortcut conv weight (zeros if identity)
    #   b*_ref:   (1, P)              f32
    #   o_ref:    (B, P, T2*F2)       f32   channel-major (== flattened NCHW), lane-dense
    #   xpad_ref: (B, T,  F+2, Cin)   bf16  scratch: freq-padded lrelu(x)
    #   hpad_ref: (B, T1, F+2, P)     bf16  scratch: freq-padded conv1 activation
    B, T, F, Cin = x_ref.shape
    P = w1_ref.shape[-1]
    T1 = T - (k1 - 1)               # conv1 output time (valid in time, "same" in freq)
    T2 = (T1 - 3) // st + 1         # conv2 output time
    F2 = (F - 1) // sf + 1          # conv2 output freq
    M1 = B * T1 * F
    M2 = B * T2 * F2

    x = x_ref[...]                  # (B, T, F, Cin) bf16

    # ---- lrelu(bn1(x)) (bn1 = Identity); freq zero-pad into persistent scratch ----
    # Border columns are rewritten each step: cheap, and safe under megacore sharding
    # of the parallel batch axis (a once-only pl.when(program_id==0) init would not be).
    zc = jnp.zeros((B, T, 1, Cin), jnp.bfloat16)
    xpad_ref[:, :, 0:1, :] = zc
    xpad_ref[:, :, F + 1:F + 2, :] = zc
    xpad_ref[:, :, 1:F + 1, :] = _lrelu(x, leak)
    xp = xpad_ref[...]              # (B, T, F+2, Cin) bf16

    # ---- conv1: (k1,3) kernel, padding (0,1), stride (1,1) ----
    # 3 kw-shifts concatenated (K = 3*Cin), kh taps accumulated in f32: 3 matmuls,
    # 3 shifted copies instead of 9.
    acc1 = None
    for kh in range(k1):
        col = jnp.concatenate(
            [xp[:, kh:kh + T1, kw:kw + F, :] for kw in range(3)],
            axis=-1).reshape(M1, 3 * Cin)
        y = jnp.dot(col, w1_ref[kh], preferred_element_type=jnp.float32)
        acc1 = y if acc1 is None else acc1 + y
    h = _lrelu(acc1 + b1_ref[...], leak)                 # f32, (M1, P)
    h16 = h.astype(jnp.bfloat16).reshape(B, T1, F, P)

    # ---- conv2 input: freq zero-pad via persistent scratch (no concat copy of h) ----
    zp = jnp.zeros((B, T1, 1, P), jnp.bfloat16)
    hpad_ref[:, :, 0:1, :] = zp
    hpad_ref[:, :, F + 1:F + 2, :] = zp
    hpad_ref[:, :, 1:F + 1, :] = h16
    hp = hpad_ref[...]              # (B, T1, F+2, P) bf16

    # ---- conv2: 3x3, padding (0,1), stride (st,sf); same 3-copy + kh-accumulate ----
    def patch(kh, kw):
        if st == 1 and sf == 1:
            return hp[:, kh:kh + T2, kw:kw + F2, :]
        return lax.slice(hp, (0, kh, kw, 0),
                         (B, kh + (T2 - 1) * st + 1, kw + (F2 - 1) * sf + 1, P),
                         (1, st, sf, 1))

    acc2 = None
    for kh in range(3):
        col = jnp.concatenate(
            [patch(kh, kw) for kw in range(3)], axis=-1).reshape(M2, 3 * P)
        y = jnp.dot(col, w2_ref[kh], preferred_element_type=jnp.float32)
        acc2 = y if acc2 is None else acc2 + y
    out = acc2 + b2_ref[...]                             # f32, (M2, P)

    # ---- shortcut: crop x in time, then strided 1x1 conv (or identity) ----
    xsc = x[:, cut_off:T - cut_off, :, :]                # (B, T - 2*cut, F, Cin) bf16
    if st == 1 and sf == 1:
        xss = xsc
    else:
        xss = lax.slice(xsc, (0, 0, 0, 0),
                        (B, (T2 - 1) * st + 1, (F2 - 1) * sf + 1, Cin),
                        (1, st, sf, 1))
    if has_shortcut_conv:
        sc = jnp.dot(xss.reshape(M2, Cin), ws_ref[...],
                     preferred_element_type=jnp.float32) + bs_ref[...]
    else:
        sc = xss.reshape(M2, P).astype(jnp.float32)      # identity path (Cin == P)

    # ---- channel-major, lane-dense store: (B, P, T2*F2) == flattened NCHW per sample ----
    # Transpose kept because P < 128; for real planes store NHWC instead.
    res = (out + sc).reshape(B, T2 * F2, P)
    o_ref[...] = jnp.transpose(res, (0, 2, 1))


def wide_basic_forward(x_nchw, w1, b1, w2, b2, ws, bs, *,
                       time_stride=1, freq_stride=1, time_padding=0,
                       conv1_kernel_size=3, leak=0.2, batch_tile=None):
    """Pallas implementation of WideBasic.forward.  x_nchw: (N, Cin, T, F) float32.

    w1: (k1, 3, Cin, P) HWIO, w2: (3, 3, P, P) HWIO, ws: (Cin, P) or None, biases (P,).
    Returns (N, P, T2, F2) float32 (NCHW), matching the PyTorch module.
    """
    # TODO(synk): time_padding=1 gives cut_off==0 -> x[..., 0:-0, :] is an empty slice in
    # the reference PyTorch code (upstream bug); only the time_padding=0 path is implemented.
    assert time_padding == 0
    N, Cin, T, F = x_nchw.shape
    k1 = conv1_kernel_size
    cut_off = (1 - time_padding) * (k1 + 1) // 2
    P = w1.shape[-1]
    st, sf = time_stride, freq_stride
    T1 = T - (k1 - 1)
    T2 = (T1 - 3) // st + 1
    F2 = (F - 1) // sf + 1
    has_shortcut_conv = ws is not None
    if not has_shortcut_conv:
        assert Cin == P, "identity shortcut requires in_planes == planes"

    # Batch tile per grid step: largest power-of-two divisor of N that keeps >= 2 grid
    # steps (so the "parallel" axis still shards across both v7x TensorCores).
    if batch_tile is None:
        batch_tile = 1
        while (batch_tile * 2 <= N and N % (batch_tile * 2) == 0
               and N // (batch_tile * 2) >= 2):
            batch_tile *= 2
    assert N % batch_tile == 0
    n_steps = N // batch_tile

    # NCHW -> NHWC once at the model boundary, DMA'd as bf16 (halves input HBM traffic).
    # If this block feeds energy/score gradients, keep x in f32 instead (MXU has slack).
    x_nhwc = jnp.transpose(x_nchw, (0, 2, 3, 1)).astype(jnp.bfloat16)

    # Conv weights flattened per-kh for the kh-accumulated im2col matmuls.
    w1_mat = w1.reshape(k1, 3 * Cin, P).astype(jnp.bfloat16)
    w2_mat = w2.reshape(3, 3 * P, P).astype(jnp.bfloat16)
    if has_shortcut_conv:
        ws_mat = ws.astype(jnp.bfloat16)
        bs_vec = bs.reshape(1, P).astype(jnp.float32)
    else:
        ws_mat = jnp.zeros((Cin, P), jnp.bfloat16)
        bs_vec = jnp.zeros((1, P), jnp.float32)

    kernel = functools.partial(
        _wide_basic_kernel, k1=k1, leak=leak, st=st, sf=sf,
        cut_off=cut_off, has_shortcut_conv=has_shortcut_conv)

    out_flat = pl.pallas_call(
        kernel,
        out_shape=jax.ShapeDtypeStruct((N, P, T2 * F2), jnp.float32),
        grid_spec=pltpu.PrefetchScalarGridSpec(
            num_scalar_prefetch=0,
            grid=(n_steps,),                             # one batch tile per grid step
            in_specs=[
                pl.BlockSpec((batch_tile, T, F, Cin), lambda n: (n, 0, 0, 0)),
                pl.BlockSpec((k1, 3 * Cin, P), lambda n: (0, 0, 0)),
                pl.BlockSpec((1, P), lambda n: (0, 0)),
                pl.BlockSpec((3, 3 * P, P), lambda n: (0, 0, 0)),
                pl.BlockSpec((1, P), lambda n: (0, 0)),
                pl.BlockSpec((Cin, P), lambda n: (0, 0)),
                pl.BlockSpec((1, P), lambda n: (0, 0)),
            ],
            out_specs=pl.BlockSpec((batch_tile, P, T2 * F2), lambda n: (n, 0, 0)),
            scratch_shapes=[
                pltpu.VMEM((batch_tile, T, F + 2, Cin), jnp.bfloat16),   # padded lrelu(x)
                pltpu.VMEM((batch_tile, T1, F + 2, P), jnp.bfloat16),    # padded conv1 act
            ]),
        compiler_params=pltpu.CompilerParams(
            dimension_semantics=("parallel",),           # megacore sharding on v7x
            # Explicit budget with headroom under v7x's 64 MiB physical VMEM; above the
            # scoped defaults on v5e/v6e.  Real-sized inputs would also tile over T and
            # re-derive batch_tile against this budget (lane-padded buffers included).
            vmem_limit_bytes=48 * 1024 * 1024),
    )(x_nhwc, w1_mat, b1.reshape(1, P).astype(jnp.float32),
      w2_mat, b2.reshape(1, P).astype(jnp.float32), ws_mat, bs_vec)

    # (N, P, T2*F2) is already channel-major NCHW -> reshape only (no transpose / HBM pass).
    return out_flat.reshape(N, P, T2, F2)


def _ref_forward(x, w1, b1, w2, b2, ws, bs, *, time_stride, freq_stride,
                 time_padding, conv1_kernel_size, leak):
    """Pure-JAX reference (lax.conv) matching the PyTorch module semantics."""
    k1 = conv1_kernel_size
    pt1 = time_padding if k1 == 3 else 0
    pt2 = time_padding
    st, sf = time_stride, freq_stride

    def conv(xi, w, b, stride, padding):
        y = lax.conv_general_dilated(xi, w, window_strides=stride, padding=padding,
                                     dimension_numbers=('NCHW', 'HWIO', 'NCHW'))
        return y + b.reshape(1, -1, 1, 1)

    def lrelu(v):
        return jnp.where(v > 0, v, leak * v)

    out = conv(lrelu(x), w1, b1, (1, 1), [(pt1, pt1), (1, 1)])
    out = conv(lrelu(out), w2, b2, (st, sf), [(pt2, pt2), (1, 1)])
    cut = (1 - pt2) * (k1 + 1) // 2
    xsc = x[:, :, cut:x.shape[2] - cut, :]
    if ws is not None:
        Cin, P = ws.shape
        sc = conv(xsc, ws.reshape(1, 1, Cin, P), bs, (st, sf), [(0, 0), (0, 0)])
    else:
        sc = xsc[:, :, ::st, ::sf]
    return out + sc


if __name__ == "__main__":
    key = jax.random.PRNGKey(0)
    N, Cin, T, F = 4, 4, 16, 16
    P = 8                      # planes (!= in_planes -> shortcut 1x1 conv is active)
    k1 = 3
    leak = 0.2

    ks = jax.random.split(key, 7)
    x = jax.random.normal(ks[0], (N, Cin, T, F), jnp.float32)
    w1 = jax.random.normal(ks[1], (k1, 3, Cin, P), jnp.float32) * 0.1   # HWIO
    b1 = jax.random.normal(ks[2], (P,), jnp.float32) * 0.1
    w2 = jax.random.normal(ks[3], (3, 3, P, P), jnp.float32) * 0.1      # HWIO
    b2 = jax.random.normal(ks[4], (P,), jnp.float32) * 0.1
    ws = jax.random.normal(ks[5], (Cin, P), jnp.float32) * 0.1          # 1x1 shortcut
    bs = jax.random.normal(ks[6], (P,), jnp.float32) * 0.1

    cfg = dict(time_stride=1, freq_stride=1, time_padding=0,
               conv1_kernel_size=k1, leak=leak)

    fwd = jax.jit(functools.partial(wide_basic_forward, **cfg))
    out = jax.block_until_ready(fwd(x, w1, b1, w2, b2, ws, bs))

    ref = _ref_forward(x, w1, b1, w2, b2, ws, bs, **cfg)
    assert out.shape == (N, P, T - 4, F), out.shape
    max_err = float(jnp.max(jnp.abs(out - ref)))
    # bf16 input DMA + bf16 matmul inputs with f32 accumulation -> bf16-level tolerance.
    assert max_err < 5e-2, f"max abs err {max_err}"

    print("KERNEL_OK")
</pallas_src>

<mosaic_0001>
module attributes {stable_mosaic.version = 11 : i64} {
  func.func @_wide_basic_kernel(%arg0: i32, %arg1: memref<2x16x16x4xbf16, #tpu.memory_space<vmem>>, %arg2: memref<3x12x8xbf16, #tpu.memory_space<vmem>>, %arg3: memref<1x8xf32, #tpu.memory_space<vmem>>, %arg4: memref<3x24x8xbf16, #tpu.memory_space<vmem>>, %arg5: memref<1x8xf32, #tpu.memory_space<vmem>>, %arg6: memref<4x8xbf16, #tpu.memory_space<vmem>>, %arg7: memref<1x8xf32, #tpu.memory_space<vmem>>, %arg8: memref<2x8x192xf32, #tpu.memory_space<vmem>>, %arg9: memref<2x16x18x4xbf16, #tpu.memory_space<vmem>>, %arg10: memref<2x14x18x8xbf16, #tpu.memory_space<vmem>>) attributes {dimension_semantics = [#tpu.dimension_semantics<parallel>], iteration_bounds = array<i64: 2>, scalar_prefetch = 0 : i64, scratch_operands = 2 : i64, tpu.core_type = #tpu.core_type<tc>, window_params = [{transform_indices = @transform_0, window_bounds = array<i64: 2, 16, 16, 4>}, {pipeline_mode = #tpu.pipeline_mode<synchronous>, transform_indices = @transform_1, window_bounds = array<i64: 3, 12, 8>}, {pipeline_mode = #tpu.pipeline_mode<synchronous>, transform_indices = @transform_2, window_bounds = array<i64: 1, 8>}, {pipeline_mode = #tpu.pipeline_mode<synchronous>, transform_indices = @transform_3, window_bounds = array<i64: 3, 24, 8>}, {pipeline_mode = #tpu.pipeline_mode<synchronous>, transform_indices = @transform_4, window_bounds = array<i64: 1, 8>}, {pipeline_mode = #tpu.pipeline_mode<synchronous>, transform_indices = @transform_5, window_bounds = array<i64: 4, 8>}, {pipeline_mode = #tpu.pipeline_mode<synchronous>, transform_indices = @transform_6, window_bounds = array<i64: 1, 8>}, {transform_indices = @transform_7, window_bounds = array<i64: 2, 8, 192>}]} {
    %c0 = arith.constant 0 : index
    %c0_0 = arith.constant 0 : index
    %c0_1 = arith.constant 0 : index
    %c0_2 = arith.constant 0 : index
    %0 = vector.load %arg1[%c0, %c0_0, %c0_1, %c0_2] : memref<2x16x16x4xbf16, #tpu.memory_space<vmem>>, vector<2x16x16x4xbf16>
    %cst = arith.constant 0.000000e+00 : bf16
    %1 = vector.broadcast %cst : bf16 to vector<2x16x1x4xbf16>
    %c0_3 = arith.constant 0 : index
    %c0_4 = arith.constant 0 : index
    %c0_5 = arith.constant 0 : index
    %c0_6 = arith.constant 0 : index
    %2 = vector.load %arg9[%c0_3, %c0_4, %c0_5, %c0_6] : memref<2x16x18x4xbf16, #tpu.memory_space<vmem>>, vector<2x16x1x4xbf16>
    tpu.vector_store %arg9[%c0_3, %c0_4, %c0_5, %c0_6], %1 {strides = array<i32>} : memref<2x16x18x4xbf16, #tpu.memory_space<vmem>>, vector<2x16x1x4xbf16>,
    %c0_7 = arith.constant 0 : index
    %c0_8 = arith.constant 0 : index
    %c17 = arith.constant 17 : index
    %c0_9 = arith.constant 0 : index
    %3 = vector.load %arg9[%c0_7, %c0_8, %c17, %c0_9] : memref<2x16x18x4xbf16, #tpu.memory_space<vmem>>, vector<2x16x1x4xbf16>
    tpu.vector_store %arg9[%c0_7, %c0_8, %c17, %c0_9], %1 {strides = array<i32>} : memref<2x16x18x4xbf16, #tpu.memory_space<vmem>>, vector<2x16x1x4xbf16>,
    %cst_10 = arith.constant 0.000000e+00 : bf16
    %4 = vector.broadcast %cst_10 : bf16 to vector<2x16x16x4xbf16>
    %5 = arith.cmpf ogt, %0, %4 : vector<2x16x16x4xbf16>
    %cst_11 = arith.constant 2.001950e-01 : bf16
    %6 = vector.broadcast %cst_11 : bf16 to vector<2x16x16x4xbf16>
    %7 = arith.mulf %6, %0 : vector<2x16x16x4xbf16>
    %8 = arith.select %5, %0, %7 : vector<2x16x16x4xi1>, vector<2x16x16x4xbf16>
    %c0_12 = arith.constant 0 : index
    %c0_13 = arith.constant 0 : index
    %c1 = arith.constant 1 : index
    %c0_14 = arith.constant 0 : index
    %9 = vector.load %arg9[%c0_12, %c0_13, %c1, %c0_14] : memref<2x16x18x4xbf16, #tpu.memory_space<vmem>>, vector<2x16x16x4xbf16>
    tpu.vector_store %arg9[%c0_12, %c0_13, %c1, %c0_14], %8 {strides = array<i32>} : memref<2x16x18x4xbf16, #tpu.memory_space<vmem>>, vector<2x16x16x4xbf16>,
    %c0_15 = arith.constant 0 : index
    %c0_16 = arith.constant 0 : index
    %c0_17 = arith.constant 0 : index
    %c0_18 = arith.constant 0 : index
    %10 = vector.load %arg9[%c0_15, %c0_16, %c0_17, %c0_18] : memref<2x16x18x4xbf16, #tpu.memory_space<vmem>>, vector<2x16x18x4xbf16>
    %11 = vector.extract_strided_slice %10 {offsets = [0, 0, 0, 0], sizes = [2, 14, 16, 4], strides = [1, 1, 1, 1]} : vector<2x16x18x4xbf16> to vector<2x14x16x4xbf16>
    %12 = vector.extract_strided_slice %10 {offsets = [0, 0, 1, 0], sizes = [2, 14, 16, 4], strides = [1, 1, 1, 1]} : vector<2x16x18x4xbf16> to vector<2x14x16x4xbf16>
    %13 = vector.extract_strided_slice %10 {offsets = [0, 0, 2, 0], sizes = [2, 14, 16, 4], strides = [1, 1, 1, 1]} : vector<2x16x18x4xbf16> to vector<2x14x16x4xbf16>
    %14 = tpu.concatenate %11, %12, %13 in 3 : vector<2x14x16x4xbf16>, vector<2x14x16x4xbf16>, vector<2x14x16x4xbf16> -> vector<2x14x16x12xbf16>
    %15 = vector.shape_cast %14 : vector<2x14x16x12xbf16> to vector<448x12xbf16>
    %c0_19 = arith.constant 0 : index
    %c0_20 = arith.constant 0 : index
    %c0_21 = arith.constant 0 : index
    %16 = vector.load %arg2[%c0_19, %c0_20, %c0_21] : memref<3x12x8xbf16, #tpu.memory_space<vmem>>, vector<1x12x8xbf16>
    %17 = vector.shape_cast %16 : vector<1x12x8xbf16> to vector<12x8xbf16>
    %cst_22 = arith.constant dense<0.000000e+00> : vector<448x8xf32>
    %18 = tpu.matmul %15, %17, %cst_22 {dimension_numbers = #tpu.dot_dimension_numbers<[1], [0], [0], [1], [0, 0, 1, 1], [], []>} : vector<448x12xbf16>, vector<12x8xbf16>, vector<448x8xf32> -> vector<448x8xf32>
    %19 = vector.extract_strided_slice %10 {offsets = [0, 1, 0, 0], sizes = [2, 14, 16, 4], strides = [1, 1, 1, 1]} : vector<2x16x18x4xbf16> to vector<2x14x16x4xbf16>
    %20 = vector.extract_strided_slice %10 {offsets = [0, 1, 1, 0], sizes = [2, 14, 16, 4], strides = [1, 1, 1, 1]} : vector<2x16x18x4xbf16> to vector<2x14x16x4xbf16>
    %21 = vector.extract_strided_slice %10 {offsets = [0, 1, 2, 0], sizes = [2, 14, 16, 4], strides = [1, 1, 1, 1]} : vector<2x16x18x4xbf16> to vector<2x14x16x4xbf16>
    %22 = tpu.concatenate %19, %20, %21 in 3 : vector<2x14x16x4xbf16>, vector<2x14x16x4xbf16>, vector<2x14x16x4xbf16> -> vector<2x14x16x12xbf16>
    %23 = vector.shape_cast %22 : vector<2x14x16x12xbf16> to vector<448x12xbf16>
    %c1_23 = arith.constant 1 : index
    %c0_24 = arith.constant 0 : index
    %c0_25 = arith.constant 0 : index
    %24 = vector.load %arg2[%c1_23, %c0_24, %c0_25] : memref<3x12x8xbf16, #tpu.memory_space<vmem>>, vector<1x12x8xbf16>
    %25 = vector.shape_cast %24 : vector<1x12x8xbf16> to vector<12x8xbf16>
    %cst_26 = arith.constant dense<0.000000e+00> : vector<448x8xf32>
    %26 = tpu.matmul %23, %25, %cst_26 {dimension_numbers = #tpu.dot_dimension_numbers<[1], [0], [0], [1], [0, 0, 1, 1], [], []>} : vector<448x12xbf16>, vector<12x8xbf16>, vector<448x8xf32> -> vector<448x8xf32>
    %27 = arith.addf %18, %26 : vector<448x8xf32>
    %28 = vector.extract_strided_slice %10 {offsets = [0, 2, 0, 0], sizes = [2, 14, 16, 4], strides = [1, 1, 1, 1]} : vector<2x16x18x4xbf16> to vector<2x14x16x4xbf16>
    %29 = vector.extract_strided_slice %10 {offsets = [0, 2, 1, 0], sizes = [2, 14, 16, 4], strides = [1, 1, 1, 1]} : vector<2x16x18x4xbf16> to vector<2x14x16x4xbf16>
    %30 = vector.extract_strided_slice %10 {offsets = [0, 2, 2, 0], sizes = [2, 14, 16, 4], strides = [1, 1, 1, 1]} : vector<2x16x18x4xbf16> to vector<2x14x16x4xbf16>
    %31 = tpu.concatenate %28, %29, %30 in 3 : vector<2x14x16x4xbf16>, vector<2x14x16x4xbf16>, vector<2x14x16x4xbf16> -> vector<2x14x16x12xbf16>
    %32 = vector.shape_cast %31 : vector<2x14x16x12xbf16> to vector<448x12xbf16>
    %c2 = arith.constant 2 : index
    %c0_27 = arith.constant 0 : index
    %c0_28 = arith.constant 0 : index
    %33 = vector.load %arg2[%c2, %c0_27, %c0_28] : memref<3x12x8xbf16, #tpu.memory_space<vmem>>, vector<1x12x8xbf16>
    %34 = vector.shape_cast %33 : vector<1x12x8xbf16> to vector<12x8xbf16>
    %cst_29 = arith.constant dense<0.000000e+00> : vector<448x8xf32>
    %35 = tpu.matmul %32, %34, %cst_29 {dimension_numbers = #tpu.dot_dimension_numbers<[1], [0], [0], [1], [0, 0, 1, 1], [], []>} : vector<448x12xbf16>, vector<12x8xbf16>, vector<448x8xf32> -> vector<448x8xf32>
    %36 = arith.addf %27, %35 : vector<448x8xf32>
    %c0_30 = arith.constant 0 : index
    %c0_31 = arith.constant 0 : index
    %37 = vector.load %arg3[%c0_30, %c0_31] : memref<1x8xf32, #tpu.memory_space<vmem>>, vector<1x8xf32>
    %38 = vector.broadcast %37 : vector<1x8xf32> to vector<448x8xf32>
    %39 = arith.addf %36, %38 : vector<448x8xf32>
    %cst_32 = arith.constant 0.000000e+00 : f32
    %40 = vector.broadcast %cst_32 : f32 to vector<448x8xf32>
    %41 = arith.cmpf ogt, %39, %40 : vector<448x8xf32>
    %cst_33 = arith.constant 2.000000e-01 : f32
    %42 = vector.broadcast %cst_33 : f32 to vector<448x8xf32>
    %43 = arith.mulf %42, %39 : vector<448x8xf32>
    %44 = arith.select %41, %39, %43 : vector<448x8xi1>, vector<448x8xf32>
    %45 = arith.truncf %44 : vector<448x8xf32> to vector<448x8xbf16>
    %46 = vector.shape_cast %45 : vector<448x8xbf16> to vector<2x14x16x8xbf16>
    %cst_34 = arith.constant 0.000000e+00 : bf16
    %47 = vector.broadcast %cst_34 : bf16 to vector<2x14x1x8xbf16>
    %c0_35 = arith.constant 0 : index
    %c0_36 = arith.constant 0 : index
    %c0_37 = arith.constant 0 : index
    %c0_38 = arith.constant 0 : index
    %48 = vector.load %arg10[%c0_35, %c0_36, %c0_37, %c0_38] : memref<2x14x18x8xbf16, #tpu.memory_space<vmem>>, vector<2x14x1x8xbf16>
    tpu.vector_store %arg10[%c0_35, %c0_36, %c0_37, %c0_38], %47 {strides = array<i32>} : memref<2x14x18x8xbf16, #tpu.memory_space<vmem>>, vector<2x14x1x8xbf16>,
    %c0_39 = arith.constant 0 : index
    %c0_40 = arith.constant 0 : index
    %c17_41 = arith.constant 17 : index
    %c0_42 = arith.constant 0 : index
    %49 = vector.load %arg10[%c0_39, %c0_40, %c17_41, %c0_42] : memref<2x14x18x8xbf16, #tpu.memory_space<vmem>>, vector<2x14x1x8xbf16>
    tpu.vector_store %arg10[%c0_39, %c0_40, %c17_41, %c0_42], %47 {strides = array<i32>} : memref<2x14x18x8xbf16, #tpu.memory_space<vmem>>, vector<2x14x1x8xbf16>,
    %c0_43 = arith.constant 0 : index
    %c0_44 = arith.constant 0 : index
    %c1_45 = arith.constant 1 : index
    %c0_46 = arith.constant 0 : index
    %50 = vector.load %arg10[%c0_43, %c0_44, %c1_45, %c0_46] : memref<2x14x18x8xbf16, #tpu.memory_space<vmem>>, vector<2x14x16x8xbf16>
    tpu.vector_store %arg10[%c0_43, %c0_44, %c1_45, %c0_46], %46 {strides = array<i32>} : memref<2x14x18x8xbf16, #tpu.memory_space<vmem>>, vector<2x14x16x8xbf16>,
    %c0_47 = arith.constant 0 : index
    %c0_48 = arith.constant 0 : index
    %c0_49 = arith.constant 0 : index
    %c0_50 = arith.constant 0 : index
    %51 = vector.load %arg10[%c0_47, %c0_48, %c0_49, %c0_50] : memref<2x14x18x8xbf16, #tpu.memory_space<vmem>>, vector<2x14x18x8xbf16>
    %52 = vector.extract_strided_slice %51 {offsets = [0, 0, 0, 0], sizes = [2, 12, 16, 8], strides = [1, 1, 1, 1]} : vector<2x14x18x8xbf16> to vector<2x12x16x8xbf16>
    %53 = vector.extract_strided_slice %51 {offsets = [0, 0, 1, 0], sizes = [2, 12, 16, 8], strides = [1, 1, 1, 1]} : vector<2x14x18x8xbf16> to vector<2x12x16x8xbf16>
    %54 = vector.extract_strided_slice %51 {offsets = [0, 0, 2, 0], sizes = [2, 12, 16, 8], strides = [1, 1, 1, 1]} : vector<2x14x18x8xbf16> to vector<2x12x16x8xbf16>
    %55 = tpu.concatenate %52, %53, %54 in 3 : vector<2x12x16x8xbf16>, vector<2x12x16x8xbf16>, vector<2x12x16x8xbf16> -> vector<2x12x16x24xbf16>
    %56 = vector.shape_cast %55 : vector<2x12x16x24xbf16> to vector<384x24xbf16>
    %c0_51 = arith.constant 0 : index
    %c0_52 = arith.constant 0 : index
    %c0_53 = arith.constant 0 : index
    %57 = vector.load %arg4[%c0_51, %c0_52, %c0_53] : memref<3x24x8xbf16, #tpu.memory_space<vmem>>, vector<1x24x8xbf16>
    %58 = vector.shape_cast %57 : vector<1x24x8xbf16> to vector<24x8xbf16>
    %cst_54 = arith.constant dense<0.000000e+00> : vector<384x8xf32>
    %59 = tpu.matmul %56, %58, %cst_54 {dimension_numbers = #tpu.dot_dimension_numbers<[1], [0], [0], [1], [0, 0, 1, 1], [], []>} : vector<384x24xbf16>, vector<24x8xbf16>, vector<384x8xf32> -> vector<384x8xf32>
    %60 = vector.extract_strided_slice %51 {offsets = [0, 1, 0, 0], sizes = [2, 12, 16, 8], strides = [1, 1, 1, 1]} : vector<2x14x18x8xbf16> to vector<2x12x16x8xbf16>
    %61 = vector.extract_strided_slice %51 {offsets = [0, 1, 1, 0], sizes = [2, 12, 16, 8], strides = [1, 1, 1, 1]} : vector<2x14x18x8xbf16> to vector<2x12x16x8xbf16>
    %62 = vector.extract_strided_slice %51 {offsets = [0, 1, 2, 0], sizes = [2, 12, 16, 8], strides = [1, 1, 1, 1]} : vector<2x14x18x8xbf16> to vector<2x12x16x8xbf16>
    %63 = tpu.concatenate %60, %61, %62 in 3 : vector<2x12x16x8xbf16>, vector<2x12x16x8xbf16>, vector<2x12x16x8xbf16> -> vector<2x12x16x24xbf16>
    %64 = vector.shape_cast %63 : vector<2x12x16x24xbf16> to vector<384x24xbf16>
    %c1_55 = arith.constant 1 : index
    %c0_56 = arith.constant 0 : index
    %c0_57 = arith.constant 0 : index
    %65 = vector.load %arg4[%c1_55, %c0_56, %c0_57] : memref<3x24x8xbf16, #tpu.memory_space<vmem>>, vector<1x24x8xbf16>
    %66 = vector.shape_cast %65 : vector<1x24x8xbf16> to vector<24x8xbf16>
    %cst_58 = arith.constant dense<0.000000e+00> : vector<384x8xf32>
    %67 = tpu.matmul %64, %66, %cst_58 {dimension_numbers = #tpu.dot_dimension_numbers<[1], [0], [0], [1], [0, 0, 1, 1], [], []>} : vector<384x24xbf16>, vector<24x8xbf16>, vector<384x8xf32> -> vector<384x8xf32>
    %68 = arith.addf %59, %67 : vector<384x8xf32>
    %69 = vector.extract_strided_slice %51 {offsets = [0, 2, 0, 0], sizes = [2, 12, 16, 8], strides = [1, 1, 1, 1]} : vector<2x14x18x8xbf16> to vector<2x12x16x8xbf16>
    %70 = vector.extract_strided_slice %51 {offsets = [0, 2, 1, 0], sizes = [2, 12, 16, 8], strides = [1, 1, 1, 1]} : vector<2x14x18x8xbf16> to vector<2x12x16x8xbf16>
    %71 = vector.extract_strided_slice %51 {offsets = [0, 2, 2, 0], sizes = [2, 12, 16, 8], strides = [1, 1, 1, 1]} : vector<2x14x18x8xbf16> to vector<2x12x16x8xbf16>
    %72 = tpu.concatenate %69, %70, %71 in 3 : vector<2x12x16x8xbf16>, vector<2x12x16x8xbf16>, vector<2x12x16x8xbf16> -> vector<2x12x16x24xbf16>
    %73 = vector.shape_cast %72 : vector<2x12x16x24xbf16> to vector<384x24xbf16>
    %c2_59 = arith.constant 2 : index
    %c0_60 = arith.constant 0 : index
    %c0_61 = arith.constant 0 : index
    %74 = vector.load %arg4[%c2_59, %c0_60, %c0_61] : memref<3x24x8xbf16, #tpu.memory_space<vmem>>, vector<1x24x8xbf16>
    %75 = vector.shape_cast %74 : vector<1x24x8xbf16> to vector<24x8xbf16>
    %cst_62 = arith.constant dense<0.000000e+00> : vector<384x8xf32>
    %76 = tpu.matmul %73, %75, %cst_62 {dimension_numbers = #tpu.dot_dimension_numbers<[1], [0], [0], [1], [0, 0, 1, 1], [], []>} : vector<384x24xbf16>, vector<24x8xbf16>, vector<384x8xf32> -> vector<384x8xf32>
    %77 = arith.addf %68, %76 : vector<384x8xf32>
    %c0_63 = arith.constant 0 : index
    %c0_64 = arith.constant 0 : index
    %78 = vector.load %arg5[%c0_63, %c0_64] : memref<1x8xf32, #tpu.memory_space<vmem>>, vector<1x8xf32>
    %79 = vector.broadcast %78 : vector<1x8xf32> to vector<384x8xf32>
    %80 = arith.addf %77, %79 : vector<384x8xf32>
    %81 = vector.extract_strided_slice %0 {offsets = [0, 2, 0, 0], sizes = [2, 12, 16, 4], strides = [1, 1, 1, 1]} : vector<2x16x16x4xbf16> to vector<2x12x16x4xbf16>
    %82 = vector.shape_cast %81 : vector<2x12x16x4xbf16> to vector<384x4xbf16>
    %c0_65 = arith.constant 0 : index
    %c0_66 = arith.constant 0 : index
    %83 = vector.load %arg6[%c0_65, %c0_66] : memref<4x8xbf16, #tpu.memory_space<vmem>>, vector<4x8xbf16>
    %cst_67 = arith.constant dense<0.000000e+00> : vector<384x8xf32>
    %84 = tpu.matmul %82, %83, %cst_67 {dimension_numbers = #tpu.dot_dimension_numbers<[1], [0], [0], [1], [0, 0, 1, 1], [], []>} : vector<384x4xbf16>, vector<4x8xbf16>, vector<384x8xf32> -> vector<384x8xf32>
    %c0_68 = arith.constant 0 : index
    %c0_69 = arith.constant 0 : index
    %85 = vector.load %arg7[%c0_68, %c0_69] : memref<1x8xf32, #tpu.memory_space<vmem>>, vector<1x8xf32>
    %86 = vector.broadcast %85 : vector<1x8xf32> to vector<384x8xf32>
    %87 = arith.addf %84, %86 : vector<384x8xf32>
    %88 = arith.addf %80, %87 : vector<384x8xf32>
    %89 = vector.shape_cast %88 : vector<384x8xf32> to vector<2x192x8xf32>
    %90 = tpu.transpose %89, [0, 2, 1] : vector<2x192x8xf32> -> vector<2x8x192xf32>
    %c0_70 = arith.constant 0 : index
    %c0_71 = arith.constant 0 : index
    %c0_72 = arith.constant 0 : index
    %91 = vector.load %arg8[%c0_70, %c0_71, %c0_72] : memref<2x8x192xf32, #tpu.memory_space<vmem>>, vector<2x8x192xf32>
    tpu.vector_store %arg8[%c0_70, %c0_71, %c0_72], %90 {strides = array<i32>} : memref<2x8x192xf32, #tpu.memory_space<vmem>>, vector<2x8x192xf32>,
    return
  }
  func.func @transform_0(%arg0: i32) -> (i32, i32, i32, i32) {
    %c0_i32 = arith.constant 0 : i32
    %c0_i32_0 = arith.constant 0 : i32
    %c0_i32_1 = arith.constant 0 : i32
    %c0_i32_2 = arith.constant 0 : i32
    return %arg0, %c0_i32, %c0_i32_0, %c0_i32_1 : i32, i32, i32, i32
  }
  func.func @transform_1(%arg0: i32) -> (i32, i32, i32) {
    %c0_i32 = arith.constant 0 : i32
    %c0_i32_0 = arith.constant 0 : i32
    %c0_i32_1 = arith.constant 0 : i32
    %c0_i32_2 = arith.constant 0 : i32
    return %c0_i32, %c0_i32_0, %c0_i32_1 : i32, i32, i32
  }
  func.func @transform_2(%arg0: i32) -> (i32, i32) {
    %c0_i32 = arith.constant 0 : i32
    %c0_i32_0 = arith.constant 0 : i32
    %c0_i32_1 = arith.constant 0 : i32
    return %c0_i32, %c0_i32_0 : i32, i32
  }
  func.func @transform_3(%arg0: i32) -> (i32, i32, i32) {
    %c0_i32 = arith.constant 0 : i32
    %c0_i32_0 = arith.constant 0 : i32
    %c0_i32_1 = arith.constant 0 : i32
    %c0_i32_2 = arith.constant 0 : i32
    return %c0_i32, %c0_i32_0, %c0_i32_1 : i32, i32, i32
  }
  func.func @transform_4(%arg0: i32) -> (i32, i32) {
    %c0_i32 = arith.constant 0 : i32
    %c0_i32_0 = arith.constant 0 : i32
    %c0_i32_1 = arith.constant 0 : i32
    return %c0_i32, %c0_i32_0 : i32, i32
  }
  func.func @transform_5(%arg0: i32) -> (i32, i32) {
    %c0_i32 = arith.constant 0 : i32
    %c0_i32_0 = arith.constant 0 : i32
    %c0_i32_1 = arith.constant 0 : i32
    return %c0_i32, %c0_i32_0 : i32, i32
  }
  func.func @transform_6(%arg0: i32) -> (i32, i32) {
    %c0_i32 = arith.constant 0 : i32
    %c0_i32_0 = arith.constant 0 : i32
    %c0_i32_1 = arith.constant 0 : i32
    return %c0_i32, %c0_i32_0 : i32, i32
  }
  func.func @transform_7(%arg0: i32) -> (i32, i32, i32) {
    %c0_i32 = arith.constant 0 : i32
    %c0_i32_0 = arith.constant 0 : i32
    %c0_i32_1 = arith.constant 0 : i32
    return %arg0, %c0_i32, %c0_i32_0 : i32, i32, i32
  }
}

</mosaic_0001>

<llo_original>
// kernel: wide_basic_forward.1
$region0: #{wide_basic_forward.1}
  #allocation0 [shape = 'u32[]', space=smem, size = 0x4, offset = 0x4, fixed_abs, tag = 'smem constant byte address 0x4 - core index']
  #allocation1 [shape = 'u32[144,128]{1,0:T(1,128)}', space=vmem, size = 0x12000, scoped, tag = 'internal scratch']
  #allocation2 [shape = 'bf16[2,16,18,4]{3,2,1,0:T(8,128)(2,1)}', space=vmem, size = 0x30000, scoped, tag = 'scratch operand']
  #allocation3 [shape = 'bf16[2,14,18,8]{3,2,1,0:T(8,128)(2,1)}', space=vmem, size = 0x2a000, scoped, tag = 'scratch operand']
  %s0 = inlined_call_operand.vmem [shape: bf16[4,16,16,4], index: 0, kind: input, shape index: {}]
  %s1 = inlined_call_operand.vmem [shape: bf16[3,12,8], index: 1, kind: input, shape index: {}]
  %s2 = inlined_call_operand.vmem [shape: f32[1,8], index: 2, kind: input, shape index: {}]
  %s3 = inlined_call_operand.vmem [shape: bf16[3,24,8], index: 3, kind: input, shape index: {}]
  %s4 = inlined_call_operand.vmem [shape: f32[1,8], index: 4, kind: input, shape index: {}]
  %s5 = inlined_call_operand.vmem [shape: bf16[4,8], index: 5, kind: input, shape index: {}]
  %s6 = inlined_call_operand.vmem [shape: f32[1,8], index: 6, kind: input, shape index: {}]
  %s7 = inlined_call_operand.vmem [shape: f32[4,8,192], index: 7, kind: output, shape index: {}]
  %s8 = sld [smem:[#allocation0]]
  $region61: #{wide_basic_forward.1} parent=0
    _
  %s10 = ssub.s32 1, %s8
  %s11 = scalar_select 0, %s10, %s8
  loop: start=0, step=1, limit=4
  $region2: #{wide_basic_forward.1} parent=0 // loop_pre_header
    _
  $region3: #{wide_basic_forward.1} parent=0 // loop_header
    %s13 = sphi 0, %s17
    %p14 = scmp.ge.s32.totalorder %s13, 4
    %s23 = sphi 0, %s25
    %s26 = sphi 0, %s23
    %s27 = sphi 0, %s26
    %s43 = sphi 0, %s27
    %s47 = sphi 0, %s47
    %s49 = sphi 0, %s47
    %s50 = sphi 0, %s49
    %s64 = sphi 0, %s50
    %s68 = sphi 0, %s68
    %s70 = sphi 0, %s68
    %s71 = sphi 0, %s70
    %s85 = sphi 0, %s71
    %s89 = sphi 0, %s89
    %s91 = sphi 0, %s89
    %s92 = sphi 0, %s91
    %s106 = sphi 0, %s92
    %s110 = sphi 0, %s110
    %s112 = sphi 0, %s110
    %s113 = sphi 0, %s112
    %s127 = sphi 0, %s113
    %s131 = sphi 0, %s131
    %s133 = sphi 0, %s131
    %s134 = sphi 0, %s133
    %s148 = sphi 0, %s134
    %s152 = sphi 0, %s152
    %s154 = sphi 0, %s152
    %s155 = sphi 0, %s154
    %s169 = sphi 0, %s155
    %s175 = sphi 0, %s177
    %s178 = sphi 0, %s175
    %s179 = sphi 0, %s178
    %s195 = sphi 0, %s179
  $region4: #{wide_basic_forward.1} parent=0 // loop_header_branch
    %16 = sbr.rel (%p14) target = $region8
  $region5: #{wide_basic_forward.1} parent=0 // loop_body
    %s18 = ssub.s32 %s13, 1
    %s19 = ssub.s32 %s13, 2
    %s20 = sadd.s32 %s13, 1
    %s21 = ssub.s32 %s13, %s20
    %p22 = scmp.eq.s32.totalorder %s21, 0
    %s24 = sadd.s32 %s23, 1
    %s25 = scalar_select %p22, %s23, %s24
    %p28 = pneg %p22
    %p29 = scmp.eq.s32.totalorder %s13, 1
    %p30 = por %p28, %p29
    %p31 = scmp.ne.s32.totalorder %s23, %s26
    %p32 = scmp.eq.s32.totalorder %s13, 0
    %p33 = por %p31, %p32
    %p34 = scmp.ne.s32.totalorder %s23, %s26
    %p35 = scmp.eq.s32.totalorder %s18, 1
    %p36 = por %p34, %p35
    %p37 = scmp.ne.s32.totalorder %s26, %s27
    %p38 = scmp.eq.s32.totalorder %s18, 0
    %p39 = por %p37, %p38
    %p40 = scmp.ne.s32.totalorder %s26, %s27
    %p41 = scmp.eq.s32.totalorder %s19, 1
    %p42 = por %p40, %p41
    %p44 = scmp.ne.s32.totalorder %s27, %s43
    %p45 = scmp.eq.s32.totalorder %s19, 0
    %p46 = por %p44, %p45
    %s48 = sadd.s32 %s47, 1
    %p51 = scmp.eq.s32.totalorder %s13, 1
    %p52 = scmp.ne.s32.totalorder %s47, %s49
    %p53 = scmp.eq.s32.totalorder %s13, 0
    %p54 = por %p52, %p53
    %p55 = scmp.ne.s32.totalorder %s47, %s49
    %p56 = scmp.eq.s32.totalorder %s18, 1
    %p57 = por %p55, %p56
    %p58 = scmp.ne.s32.totalorder %s49, %s50
    %p59 = scmp.eq.s32.totalorder %s18, 0
    %p60 = por %p58, %p59
    %p61 = scmp.ne.s32.totalorder %s49, %s50
    %p62 = scmp.eq.s32.totalorder %s19, 1
    %p63 = por %p61, %p62
    %p65 = scmp.ne.s32.totalorder %s50, %s64
    %p66 = scmp.eq.s32.totalorder %s19, 0
    %p67 = por %p65, %p66
    %s69 = sadd.s32 %s68, 1
    %p72 = scmp.eq.s32.totalorder %s13, 1
    %p73 = scmp.ne.s32.totalorder %s68, %s70
    %p74 = scmp.eq.s32.totalorder %s13, 0
    %p75 = por %p73, %p74
    %p76 = scmp.ne.s32.totalorder %s68, %s70
    %p77 = scmp.eq.s32.totalorder %s18, 1
    %p78 = por %p76, %p77
    %p79 = scmp.ne.s32.totalorder %s70, %s71
    %p80 = scmp.eq.s32.totalorder %s18, 0
    %p81 = por %p79, %p80
    %p82 = scmp.ne.s32.totalorder %s70, %s71
    %p83 = scmp.eq.s32.totalorder %s19, 1
    %p84 = por %p82, %p83
    %p86 = scmp.ne.s32.totalorder %s71, %s85
    %p87 = scmp.eq.s32.totalorder %s19, 0
    %p88 = por %p86, %p87
    %s90 = sadd.s32 %s89, 1
    %p93 = scmp.eq.s32.totalorder %s13, 1
    %p94 = scmp.ne.s32.totalorder %s89, %s91
    %p95 = scmp.eq.s32.totalorder %s13, 0
    %p96 = por %p94, %p95
    %p97 = scmp.ne.s32.totalorder %s89, %s91
    %p98 = scmp.eq.s32.totalorder %s18, 1
    %p99 = por %p97, %p98
    %p100 = scmp.ne.s32.totalorder %s91, %s92
    %p101 = scmp.eq.s32.totalorder %s18, 0
    %p102 = por %p100, %p101
    %p103 = scmp.ne.s32.totalorder %s91, %s92
    %p104 = scmp.eq.s32.totalorder %s19, 1
    %p105 = por %p103, %p104
    %p107 = scmp.ne.s32.totalorder %s92, %s106
    %p108 = scmp.eq.s32.totalorder %s19, 0
    %p109 = por %p107, %p108
    %s111 = sadd.s32 %s110, 1
    %p114 = scmp.eq.s32.totalorder %s13, 1
    %p115 = scmp.ne.s32.totalorder %s110, %s112
    %p116 = scmp.eq.s32.totalorder %s13, 0
    %p117 = por %p115, %p116
    %p118 = scmp.ne.s32.totalorder %s110, %s112
    %p119 = scmp.eq.s32.totalorder %s18, 1
    %p120 = por %p118, %p119
    %p121 = scmp.ne.s32.totalorder %s112, %s113
    %p122 = scmp.eq.s32.totalorder %s18, 0
    %p123 = por %p121, %p122
    %p124 = scmp.ne.s32.totalorder %s112, %s113
    %p125 = scmp.eq.s32.totalorder %s19, 1
    %p126 = por %p124, %p125
    %p128 = scmp.ne.s32.totalorder %s113, %s127
    %p129 = scmp.eq.s32.totalorder %s19, 0
    %p130 = por %p128, %p129
    %s132 = sadd.s32 %s131, 1
    %p135 = scmp.eq.s32.totalorder %s13, 1
    %p136 = scmp.ne.s32.totalorder %s131, %s133
    %p137 = scmp.eq.s32.totalorder %s13, 0
    %p138 = por %p136, %p137
    %p139 = scmp.ne.s32.totalorder %s131, %s133
    %p140 = scmp.eq.s32.totalorder %s18, 1
    %p141 = por %p139, %p140
    %p142 = scmp.ne.s32.totalorder %s133, %s134
    %p143 = scmp.eq.s32.totalorder %s18, 0
    %p144 = por %p142, %p143
    %p145 = scmp.ne.s32.totalorder %s133, %s134
    %p146 = scmp.eq.s32.totalorder %s19, 1
    %p147 = por %p145, %p146
    %p149 = scmp.ne.s32.totalorder %s134, %s148
    %p150 = scmp.eq.s32.totalorder %s19, 0
    %p151 = por %p149, %p150
    %s153 = sadd.s32 %s152, 1
    %p156 = scmp.eq.s32.totalorder %s13, 1
    %p157 = scmp.ne.s32.totalorder %s152, %s154
    %p158 = scmp.eq.s32.totalorder %s13, 0
    %p159 = por %p157, %p158
    %p160 = scmp.ne.s32.totalorder %s152, %s154
    %p161 = scmp.eq.s32.totalorder %s18, 1
    %p162 = por %p160, %p161
    %p163 = scmp.ne.s32.totalorder %s154, %s155
    %p164 = scmp.eq.s32.totalorder %s18, 0
    %p165 = por %p163, %p164
    %p166 = scmp.ne.s32.totalorder %s154, %s155
    %p167 = scmp.eq.s32.totalorder %s19, 1
    %p168 = por %p166, %p167
    %p170 = scmp.ne.s32.totalorder %s155, %s169
    %p171 = scmp.eq.s32.totalorder %s19, 0
    %p172 = por %p170, %p171
    %s173 = ssub.s32 %s13, %s20
    %p174 = scmp.eq.s32.totalorder %s173, 0
    %s176 = sadd.s32 %s175, 1
    %s177 = scalar_select %p174, %s175, %s176
    %p180 = pneg %p174
    %p181 = scmp.eq.s32.totalorder %s13, 1
    %p182 = por %p180, %p181
    %p183 = scmp.ne.s32.totalorder %s175, %s178
    %p184 = scmp.eq.s32.totalorder %s13, 0
    %p185 = por %p183, %p184
    %p186 = scmp.ne.s32.totalorder %s175, %s178
    %p187 = scmp.eq.s32.totalorder %s18, 1
    %p188 = por %p186, %p187
    %p189 = scmp.ne.s32.totalorder %s178, %s179
    %p190 = scmp.eq.s32.totalorder %s18, 0
    %p191 = por %p189, %p190
    %p192 = scmp.ne.s32.totalorder %s178, %s179
    %p193 = scmp.eq.s32.totalorder %s19, 1
    %p194 = por %p192, %p193
    %p196 = scmp.ne.s32.totalorder %s179, %s195
    %p197 = scmp.eq.s32.totalorder %s19, 0
    %p198 = por %p196, %p197
    %p199 = scmp.le.s32.totalorder 1, %s13
    %p200 = scmp.lt.s32.totalorder %s13, 3
    %p201 = pnand %p199, %p200
    %p202 = pneg %p201
    // Predicated region
    $region9: #{wide_basic_forward.1} parent=5 // pred_check
      _
    $region10: #{wide_basic_forward.1} parent=5 // pred_check_branch
      %204 = sbr.rel (%p201) target = $region12
    $region11: #{wide_basic_forward.1} parent=5 // pred_region
      %s205 = ssub.s32 %s13, 1
      // Predicated region
      $region13: #{wide_basic_forward.1} parent=11 // pred_check
        %p206 = pneg %p60
      $region14: #{wide_basic_forward.1} parent=11 // pred_check_branch
        %208 = sbr.rel (%p206) target = $region16
      $region15: #{wide_basic_forward.1} parent=11 // pred_region
        _
      $region16: #{wide_basic_forward.1} parent=11 // pred_fallthru
        _
      // Predicated region
      $region17: #{wide_basic_forward.1} parent=11 // pred_check
        %p209 = pneg %p81
      $region18: #{wide_basic_forward.1} parent=11 // pred_check_branch
        %211 = sbr.rel (%p209) target = $region20
      $region19: #{wide_basic_forward.1} parent=11 // pred_region
        _
      $region20: #{wide_basic_forward.1} parent=11 // pred_fallthru
        _
      // Predicated region
      $region21: #{wide_basic_forward.1} parent=11 // pred_check
        %p212 = pneg %p102
      $region22: #{wide_basic_forward.1} parent=11 // pred_check_branch
        %214 = sbr.rel (%p212) target = $region24
      $region23: #{wide_basic_forward.1} parent=11 // pred_region
        _
      $region24: #{wide_basic_forward.1} parent=11 // pred_fallthru
        _
      // Predicated region
      $region25: #{wide_basic_forward.1} parent=11 // pred_check
        %p215 = pneg %p123
      $region26: #{wide_basic_forward.1} parent=11 // pred_check_branch
        %217 = sbr.rel (%p215) target = $region28
      $region27: #{wide_basic_forward.1} parent=11 // pred_region
        _
      $region28: #{wide_basic_forward.1} parent=11 // pred_fallthru
        _
      // Predicated region
      $region29: #{wide_basic_forward.1} parent=11 // pred_check
        %p218 = pneg %p144
      $region30: #{wide_basic_forward.1} parent=11 // pred_check_branch
        %220 = sbr.rel (%p218) target = $region32
      $region31: #{wide_basic_forward.1} parent=11 // pred_region
        _
      $region32: #{wide_basic_forward.1} parent=11 // pred_fallthru
        _
      // Predicated region
      $region33: #{wide_basic_forward.1} parent=11 // pred_check
        %p221 = pneg %p165
      $region34: #{wide_basic_forward.1} parent=11 // pred_check_branch
        %223 = sbr.rel (%p221) target = $region36
      $region35: #{wide_basic_forward.1} parent=11 // pred_region
        _
      $region36: #{wide_basic_forward.1} parent=11 // pred_fallthru
        _
    $region12: #{wide_basic_forward.1} parent=5 // pred_fallthru
      _
    %p224 = scmp.lt.s32.totalorder %s13, 2
    // Predicated region
    $region37: #{wide_basic_forward.1} parent=5 // pred_check
      %p225 = pneg %p224
    $region38: #{wide_basic_forward.1} parent=5 // pred_check_branch
      %227 = sbr.rel (%p225) target = $region40
    $region39: #{wide_basic_forward.1} parent=5 // pred_region
      // Predicated region
      $region41: #{wide_basic_forward.1} parent=39 // pred_check
        %p228 = pneg %p33
      $region42: #{wide_basic_forward.1} parent=39 // pred_check_branch
        %230 = sbr.rel (%p228) target = $region44
      $region43: #{wide_basic_forward.1} parent=39 // pred_region
        %s231 = smul.u32 2, %s13
        %p232 = scmp.lt.s32.totalorder %s231, 3
        %s233 = scalar_select %p232, %s231, 3
        %s234 = smul.addr %s233, 32
        %s235 = smul.addr %s234, 4
        %s236 = scalar_lea.vmem %s0, %s235
        %s237 = smul.u32 2, %s13
      $region44: #{wide_basic_forward.1} parent=39 // pred_fallthru
        _
    $region40: #{wide_basic_forward.1} parent=5 // pred_fallthru
      _
    %p238 = scmp.le.s32.totalorder 1, %s13
    %p239 = scmp.lt.s32.totalorder %s13, 3
    %p240 = pnand %p238, %p239
    %p241 = pneg %p240
    // Predicated region
    $region45: #{wide_basic_forward.1} parent=5 // pred_check
      _
    $region46: #{wide_basic_forward.1} parent=5 // pred_check_branch
      %243 = sbr.rel (%p240) target = $region48
    $region47: #{wide_basic_forward.1} parent=5 // pred_region
      %s244 = ssub.s32 %s13, 1
      %s245 = smul.u32 2, %s18
      %p246 = scmp.lt.s32.totalorder %s245, 3
      %s247 = scalar_select %p246, %s245, 3
      %s248 = smul.addr %s247, 32
      %s249 = smul.addr %s248, 4
      %s250 = scalar_lea.vmem %s0, %s249
      %p251 = pneg %p39
      %p252 = pneg %p36
      %p253 = pneg %p60
      %p254 = pneg %p57
      %p255 = pneg %p81
      %p256 = pneg %p78
      %p257 = pneg %p102
      %p258 = pneg %p99
      %p259 = pneg %p123
      %p260 = pneg %p120
      %p261 = pneg %p144
      %p262 = pneg %p141
      %p263 = pneg %p165
      %p264 = pneg %p162
      %p265 = pneg %p191
      %p266 = pneg %p188
      %s267 = smul.u32 2, %s18
      %p268 = scmp.lt.s32.totalorder %s267, 3
      %s269 = scalar_select %p268, %s267, 3
      %s270 = smul.addr %s269, 2
      %s271 = smul.addr %s270, 8
      %s272 = scalar_lea.vmem %s7, %s271
      %s273 = smul.u32 2, %s18
      %p274 = scmp.lt.s32.totalorder %s273, 3
      %s275 = scalar_select %p274, %s273, 3
      %s276 = smul.addr %s275, 32
      %s277 = smul.addr %s276, 4
      %s278 = scalar_lea.vmem %s0, %s277
      %s279 = smul.u32 2, %s18
      %s280 = smul.u32 2, %s18
      %p281 = scmp.lt.s32.totalorder %s280, 3
      %s282 = scalar_select %p281, %s280, 3
      %s283 = smul.addr %s282, 2
      %s284 = smul.addr %s283, 8
      %s285 = scalar_lea.vmem %s7, %s284
      %s286 = smul.u32 2, %s18
      %v289 = vld [vmem:[%s278] sm:$0xf]
      %v290 = vld [vmem:[%s278 + $0x4] sm:$0xf]
      %v291 = vld [vmem:[%s278 + $0x8] sm:$0xf]
      %v292 = vld [vmem:[%s278 + $0xc] sm:$0xf]
      %v293 = vld [vmem:[%s278 + $0x10] sm:$0xf]
      %v294 = vld [vmem:[%s278 + $0x14] sm:$0xf]
      %v295 = vld [vmem:[%s278 + $0x18] sm:$0xf]
      %v296 = vld [vmem:[%s278 + $0x1c] sm:$0xf]
      %v297 = vld [vmem:[%s278 + $0x20] sm:$0xf]
      %v298 = vld [vmem:[%s278 + $0x24] sm:$0xf]
      %v299 = vld [vmem:[%s278 + $0x28] sm:$0xf]
      %v300 = vld [vmem:[%s278 + $0x2c] sm:$0xf]
      %v301 = vld [vmem:[%s278 + $0x30] sm:$0xf]
      %v302 = vld [vmem:[%s278 + $0x34] sm:$0xf]
      %v303 = vld [vmem:[%s278 + $0x38] sm:$0xf]
      %v304 = vld [vmem:[%s278 + $0x3c] sm:$0xf]
      %v305 = vld [vmem:[%s278 + $0x40] sm:$0xf]
      %v306 = vld [vmem:[%s278 + $0x44] sm:$0xf]
      %v307 = vld [vmem:[%s278 + $0x48] sm:$0xf]
      %v308 = vld [vmem:[%s278 + $0x4c] sm:$0xf]
      %v309 = vld [vmem:[%s278 + $0x50] sm:$0xf]
      %v310 = vld [vmem:[%s278 + $0x54] sm:$0xf]
      %v311 = vld [vmem:[%s278 + $0x58] sm:$0xf]
      %v312 = vld [vmem:[%s278 + $0x5c] sm:$0xf]
      %v313 = vld [vmem:[%s278 + $0x60] sm:$0xf]
      %v314 = vld [vmem:[%s278 + $0x64] sm:$0xf]
      %v315 = vld [vmem:[%s278 + $0x68] sm:$0xf]
      %v316 = vld [vmem:[%s278 + $0x6c] sm:$0xf]
      %v317 = vld [vmem:[%s278 + $0x70] sm:$0xf]
      %v318 = vld [vmem:[%s278 + $0x74] sm:$0xf]
      %v319 = vld [vmem:[%s278 + $0x78] sm:$0xf]
      %v320 = vld [vmem:[%s278 + $0x7c] sm:$0xf]
      %v321 = vld [vmem:[%s278 + $0x80] sm:$0xf]
      %v322 = vld [vmem:[%s278 + $0x84] sm:$0xf]
      %v323 = vld [vmem:[%s278 + $0x88] sm:$0xf]
      %v324 = vld [vmem:[%s278 + $0x8c] sm:$0xf]
      %v325 = vld [vmem:[%s278 + $0x90] sm:$0xf]
      %v326 = vld [vmem:[%s278 + $0x94] sm:$0xf]
      %v327 = vld [vmem:[%s278 + $0x98] sm:$0xf]
      %v328 = vld [vmem:[%s278 + $0x9c] sm:$0xf]
      %v329 = vld [vmem:[%s278 + $0xa0] sm:$0xf]
      %v330 = vld [vmem:[%s278 + $0xa4] sm:$0xf]
      %v331 = vld [vmem:[%s278 + $0xa8] sm:$0xf]
      %v332 = vld [vmem:[%s278 + $0xac] sm:$0xf]
      %v333 = vld [vmem:[%s278 + $0xb0] sm:$0xf]
      %v334 = vld [vmem:[%s278 + $0xb4] sm:$0xf]
      %v335 = vld [vmem:[%s278 + $0xb8] sm:$0xf]
      %v336 = vld [vmem:[%s278 + $0xbc] sm:$0xf]
      %v337 = vld [vmem:[%s278 + $0xc0] sm:$0xf]
      %v338 = vld [vmem:[%s278 + $0xc4] sm:$0xf]
      %v339 = vld [vmem:[%s278 + $0xc8] sm:$0xf]
      %v340 = vld [vmem:[%s278 + $0xcc] sm:$0xf]
      %v341 = vld [vmem:[%s278 + $0xd0] sm:$0xf]
      %v342 = vld [vmem:[%s278 + $0xd4] sm:$0xf]
      %v343 = vld [vmem:[%s278 + $0xd8] sm:$0xf]
      %v344 = vld [vmem:[%s278 + $0xdc] sm:$0xf]
      %v345 = vld [vmem:[%s278 + $0xe0] sm:$0xf]
      %v346 = vld [vmem:[%s278 + $0xe4] sm:$0xf]
      %v347 = vld [vmem:[%s278 + $0xe8] sm:$0xf]
      %v348 = vld [vmem:[%s278 + $0xec] sm:$0xf]
      %v349 = vld [vmem:[%s278 + $0xf0] sm:$0xf]
      %v350 = vld [vmem:[%s278 + $0xf4] sm:$0xf]
      %v351 = vld [vmem:[%s278 + $0xf8] sm:$0xf]
      %v352 = vld [vmem:[%s278 + $0xfc] sm:$0xf]
      %vm353 = vcmask 24576
      %vm354 = vsmask.f32 256
      %vm355 = vmand %vm353, %vm354
      %v356 = vld [vmem:[#allocation2] sm:$0x1]
      %v357 = vsel %vm355, 0, %v356
      %358 = vst [vmem:[#allocation2] sm:$0x1] %v357
      %v359 = vld [vmem:[#allocation2 + $0xc] sm:$0x1]
      %v360 = vsel %vm355, 0, %v359
      %361 = vst [vmem:[#allocation2 + $0xc] sm:$0x1] %v360
      %v362 = vld [vmem:[#allocation2 + $0x18] sm:$0x1]
      %v363 = vsel %vm355, 0, %v362
      %364 = vst [vmem:[#allocation2 + $0x18] sm:$0x1] %v363
      %v365 = vld [vmem:[#allocation2 + $0x24] sm:$0x1]
      %v366 = vsel %vm355, 0, %v365
      %367 = vst [vmem:[#allocation2 + $0x24] sm:$0x1] %v366
      %v368 = vld [vmem:[#allocation2 + $0x30] sm:$0x1]
      %v369 = vsel %vm355, 0, %v368
      %370 = vst [vmem:[#allocation2 + $0x30] sm:$0x1] %v369
      %v371 = vld [vmem:[#allocation2 + $0x3c] sm:$0x1]
      %v372 = vsel %vm355, 0, %v371
      %373 = vst [vmem:[#allocation2 + $0x3c] sm:$0x1] %v372
      %v374 = vld [vmem:[#allocation2 + $0x48] sm:$0x1]
      %v375 = vsel %vm355, 0, %v374
      %376 = vst [vmem:[#allocation2 + $0x48] sm:$0x1] %v375
      %v377 = vld [vmem:[#allocation2 + $0x54] sm:$0x1]
      %v378 = vsel %vm355, 0, %v377
      %379 = vst [vmem:[#allocation2 + $0x54] sm:$0x1] %v378
      %v380 = vld [vmem:[#allocation2 + $0x60] sm:$0x1]
      %v381 = vsel %vm355, 0, %v380
      %382 = vst [vmem:[#allocation2 + $0x60] sm:$0x1] %v381
      %v383 = vld [vmem:[#allocation2 + $0x6c] sm:$0x1]
      %v384 = vsel %vm355, 0, %v383
      %385 = vst [vmem:[#allocation2 + $0x6c] sm:$0x1] %v384
      %v386 = vld [vmem:[#allocation2 + $0x78] sm:$0x1]
      %v387 = vsel %vm355, 0, %v386
      %388 = vst [vmem:[#allocation2 + $0x78] sm:$0x1] %v387
      %v389 = vld [vmem:[#allocation2 + $0x84] sm:$0x1]
      %v390 = vsel %vm355, 0, %v389
      %391 = vst [vmem:[#allocation2 + $0x84] sm:$0x1] %v390
      %v392 = vld [vmem:[#allocation2 + $0x90] sm:$0x1]
      %v393 = vsel %vm355, 0, %v392
      %394 = vst [vmem:[#allocation2 + $0x90] sm:$0x1] %v393
      %v395 = vld [vmem:[#allocation2 + $0x9c] sm:$0x1]
      %v396 = vsel %vm355, 0, %v395
      %397 = vst [vmem:[#allocation2 + $0x9c] sm:$0x1] %v396
      %v398 = vld [vmem:[#allocation2 + $0xa8] sm:$0x1]
      %v399 = vsel %vm355, 0, %v398
      %400 = vst [vmem:[#allocation2 + $0xa8] sm:$0x1] %v399
      %v401 = vld [vmem:[#allocation2 + $0xb4] sm:$0x1]
      %v402 = vsel %vm355, 0, %v401
      %403 = vst [vmem:[#allocation2 + $0xb4] sm:$0x1] %v402
      %v404 = vld [vmem:[#allocation2 + $0xc0] sm:$0x1]
      %v405 = vsel %vm355, 0, %v404
      %406 = vst [vmem:[#allocation2 + $0xc0] sm:$0x1] %v405
      %v407 = vld [vmem:[#allocation2 + $0xcc] sm:$0x1]
      %v408 = vsel %vm355, 0, %v407
      %409 = vst [vmem:[#allocation2 + $0xcc] sm:$0x1] %v408
      %v410 = vld [vmem:[#allocation2 + $0xd8] sm:$0x1]
      %v411 = vsel %vm355, 0, %v410
      %412 = vst [vmem:[#allocation2 + $0xd8] sm:$0x1] %v411
      %v413 = vld [vmem:[#allocation2 + $0xe4] sm:$0x1]
      %v414 = vsel %vm355, 0, %v413
      %415 = vst [vmem:[#allocation2 + $0xe4] sm:$0x1] %v414
      %v416 = vld [vmem:[#allocation2 + $0xf0] sm:$0x1]
      %v417 = vsel %vm355, 0, %v416
      %418 = vst [vmem:[#allocation2 + $0xf0] sm:$0x1] %v417
      %v419 = vld [vmem:[#allocation2 + $0xfc] sm:$0x1]
      %v420 = vsel %vm355, 0, %v419
      %421 = vst [vmem:[#allocation2 + $0xfc] sm:$0x1] %v420
      %v422 = vld [vmem:[#allocation2 + $0x108] sm:$0x1]
      %v423 = vsel %vm355, 0, %v422
      %424 = vst [vmem:[#allocation2 + $0x108] sm:$0x1] %v423
      %v425 = vld [vmem:[#allocation2 + $0x114] sm:$0x1]
      %v426 = vsel %vm355, 0, %v425
      %427 = vst [vmem:[#allocation2 + $0x114] sm:$0x1] %v426
      %v428 = vld [vmem:[#allocation2 + $0x120] sm:$0x1]
      %v429 = vsel %vm355, 0, %v428
      %430 = vst [vmem:[#allocation2 + $0x120] sm:$0x1] %v429
      %v431 = vld [vmem:[#allocation2 + $0x12c] sm:$0x1]
      %v432 = vsel %vm355, 0, %v431
      %433 = vst [vmem:[#allocation2 + $0x12c] sm:$0x1] %v432
      %v434 = vld [vmem:[#allocation2 + $0x138] sm:$0x1]
      %v435 = vsel %vm355, 0, %v434
      %436 = vst [vmem:[#allocation2 + $0x138] sm:$0x1] %v435
      %v437 = vld [vmem:[#allocation2 + $0x144] sm:$0x1]
      %v438 = vsel %vm355, 0, %v437
      %439 = vst [vmem:[#allocation2 + $0x144] sm:$0x1] %v438
      %v440 = vld [vmem:[#allocation2 + $0x150] sm:$0x1]
      %v441 = vsel %vm355, 0, %v440
      %442 = vst [vmem:[#allocation2 + $0x150] sm:$0x1] %v441
      %v443 = vld [vmem:[#allocation2 + $0x15c] sm:$0x1]
      %v444 = vsel %vm355, 0, %v443
      %445 = vst [vmem:[#allocation2 + $0x15c] sm:$0x1] %v444
      %v446 = vld [vmem:[#allocation2 + $0x168] sm:$0x1]
      %v447 = vsel %vm355, 0, %v446
      %448 = vst [vmem:[#allocation2 + $0x168] sm:$0x1] %v447
      %v449 = vld [vmem:[#allocation2 + $0x174] sm:$0x1]
      %v450 = vsel %vm355, 0, %v449
      %451 = vst [vmem:[#allocation2 + $0x174] sm:$0x1] %v450
      %vm452 = vsmask.f32 7938
      %vm453 = vmand %vm353, %vm452
      %v454 = vld [vmem:[#allocation2 + $0x8] sm:$0x1]
      %v455 = vsel %vm453, 0, %v454
      %456 = vst [vmem:[#allocation2 + $0x8] sm:$0x1] %v455
      %v457 = vld [vmem:[#allocation2 + $0x14] sm:$0x1]
      %v458 = vsel %vm453, 0, %v457
      %459 = vst [vmem:[#allocation2 + $0x14] sm:$0x1] %v458
      %v460 = vld [vmem:[#allocation2 + $0x20] sm:$0x1]
      %v461 = vsel %vm453, 0, %v460
      %462 = vst [vmem:[#allocation2 + $0x20] sm:$0x1] %v461
      %v463 = vld [vmem:[#allocation2 + $0x2c] sm:$0x1]
      %v464 = vsel %vm453, 0, %v463
      %465 = vst [vmem:[#allocation2 + $0x2c] sm:$0x1] %v464
      %v466 = vld [vmem:[#allocation2 + $0x38] sm:$0x1]
      %v467 = vsel %vm453, 0, %v466
      %468 = vst [vmem:[#allocation2 + $0x38] sm:$0x1] %v467
      %v469 = vld [vmem:[#allocation2 + $0x44] sm:$0x1]
      %v470 = vsel %vm453, 0, %v469
      %471 = vst [vmem:[#allocation2 + $0x44] sm:$0x1] %v470
      %v472 = vld [vmem:[#allocation2 + $0x50] sm:$0x1]
      %v473 = vsel %vm453, 0, %v472
      %474 = vst [vmem:[#allocation2 + $0x50] sm:$0x1] %v473
      %v475 = vld [vmem:[#allocation2 + $0x5c] sm:$0x1]
      %v476 = vsel %vm453, 0, %v475
      %477 = vst [vmem:[#allocation2 + $0x5c] sm:$0x1] %v476
      %v478 = vld [vmem:[#allocation2 + $0x68] sm:$0x1]
      %v479 = vsel %vm453, 0, %v478
      %480 = vst [vmem:[#allocation2 + $0x68] sm:$0x1] %v479
      %v481 = vld [vmem:[#allocation2 + $0x74] sm:$0x1]
      %v482 = vsel %vm453, 0, %v481
      %483 = vst [vmem:[#allocation2 + $0x74] sm:$0x1] %v482
      %v484 = vld [vmem:[#allocation2 + $0x80] sm:$0x1]
      %v485 = vsel %vm453, 0, %v484
      %486 = vst [vmem:[#allocation2 + $0x80] sm:$0x1] %v485
      %v487 = vld [vmem:[#allocation2 + $0x8c] sm:$0x1]
      %v488 = vsel %vm453, 0, %v487
      %489 = vst [vmem:[#allocation2 + $0x8c] sm:$0x1] %v488
      %v490 = vld [vmem:[#allocation2 + $0x98] sm:$0x1]
      %v491 = vsel %vm453, 0, %v490
      %492 = vst [vmem:[#allocation2 + $0x98] sm:$0x1] %v491
      %v493 = vld [vmem:[#allocation2 + $0xa4] sm:$0x1]
      %v494 = vsel %vm453, 0, %v493
      %495 = vst [vmem:[#allocation2 + $0xa4] sm:$0x1] %v494
      %v496 = vld [vmem:[#allocation2 + $0xb0] sm:$0x1]
      %v497 = vsel %vm453, 0, %v496
      %498 = vst [vmem:[#allocation2 + $0xb0] sm:$0x1] %v497
      %v499 = vld [vmem:[#allocation2 + $0xbc] sm:$0x1]
      %v500 = vsel %vm453, 0, %v499
      %501 = vst [vmem:[#allocation2 + $0xbc] sm:$0x1] %v500
      %v502 = vld [vmem:[#allocation2 + $0xc8] sm:$0x1]
      %v503 = vsel %vm453, 0, %v502
      %504 = vst [vmem:[#allocation2 + $0xc8] sm:$0x1] %v503
      %v505 = vld [vmem:[#allocation2 + $0xd4] sm:$0x1]
      %v506 = vsel %vm453, 0, %v505
      %507 = vst [vmem:[#allocation2 + $0xd4] sm:$0x1] %v506
      %v508 = vld [vmem:[#allocation2 + $0xe0] sm:$0x1]
      %v509 = vsel %vm453, 0, %v508
      %510 = vst [vmem:[#allocation2 + $0xe0] sm:$0x1] %v509
      %v511 = vld [vmem:[#allocation2 + $0xec] sm:$0x1]
      %v512 = vsel %vm453, 0, %v511
      %513 = vst [vmem:[#allocation2 + $0xec] sm:$0x1] %v512
      %v514 = vld [vmem:[#allocation2 + $0xf8] sm:$0x1]
      %v515 = vsel %vm453, 0, %v514
      %516 = vst [vmem:[#allocation2 + $0xf8] sm:$0x1] %v515
      %v517 = vld [vmem:[#allocation2 + $0x104] sm:$0x1]
      %v518 = vsel %vm453, 0, %v517
      %519 = vst [vmem:[#allocation2 + $0x104] sm:$0x1] %v518
      %v520 = vld [vmem:[#allocation2 + $0x110] sm:$0x1]
      %v521 = vsel %vm453, 0, %v520
      %522 = vst [vmem:[#allocation2 + $0x110] sm:$0x1] %v521
      %v523 = vld [vmem:[#allocation2 + $0x11c] sm:$0x1]
      %v524 = vsel %vm453, 0, %v523
      %525 = vst [vmem:[#allocation2 + $0x11c] sm:$0x1] %v524
      %v526 = vld [vmem:[#allocation2 + $0x128] sm:$0x1]
      %v527 = vsel %vm453, 0, %v526
      %528 = vst [vmem:[#allocation2 + $0x128] sm:$0x1] %v527
      %v529 = vld [vmem:[#allocation2 + $0x134] sm:$0x1]
      %v530 = vsel %vm453, 0, %v529
      %531 = vst [vmem:[#allocation2 + $0x134] sm:$0x1] %v530
      %v532 = vld [vmem:[#allocation2 + $0x140] sm:$0x1]
      %v533 = vsel %vm453, 0, %v532
      %534 = vst [vmem:[#allocation2 + $0x140] sm:$0x1] %v533
      %v535 = vld [vmem:[#allocation2 + $0x14c] sm:$0x1]
      %v536 = vsel %vm453, 0, %v535
      %537 = vst [vmem:[#allocation2 + $0x14c] sm:$0x1] %v536
      %v538 = vld [vmem:[#allocation2 + $0x158] sm:$0x1]
      %v539 = vsel %vm453, 0, %v538
      %540 = vst [vmem:[#allocation2 + $0x158] sm:$0x1] %v539
      %v541 = vld [vmem:[#allocation2 + $0x164] sm:$0x1]
      %v542 = vsel %vm453, 0, %v541
      %543 = vst [vmem:[#allocation2 + $0x164] sm:$0x1] %v542
      %v544 = vld [vmem:[#allocation2 + $0x170] sm:$0x1]
      %v545 = vsel %vm453, 0, %v544
      %546 = vst [vmem:[#allocation2 + $0x170] sm:$0x1] %v545
      %v547 = vld [vmem:[#allocation2 + $0x17c] sm:$0x1]
      %v548 = vsel %vm453, 0, %v547
      %549 = vst [vmem:[#allocation2 + $0x17c] sm:$0x1] %v548
      %vm550 = vcmp.gt.bf16.partialorder %v289, 0
      %vm551 = vcmp.gt.bf16.partialorder %v290, 0
      %vm552 = vcmp.gt.bf16.partialorder %v291, 0
      %vm553 = vcmp.gt.bf16.partialorder %v292, 0
      %vm554 = vcmp.gt.bf16.partialorder %v293, 0
      %vm555 = vcmp.gt.bf16.partialorder %v294, 0
      %vm556 = vcmp.gt.bf16.partialorder %v295, 0
      %vm557 = vcmp.gt.bf16.partialorder %v296, 0
      %vm558 = vcmp.gt.bf16.partialorder %v297, 0
      %vm559 = vcmp.gt.bf16.partialorder %v298, 0
      %vm560 = vcmp.gt.bf16.partialorder %v299, 0
      %vm561 = vcmp.gt.bf16.partialorder %v300, 0
      %vm562 = vcmp.gt.bf16.partialorder %v301, 0
      %vm563 = vcmp.gt.bf16.partialorder %v302, 0
      %vm564 = vcmp.gt.bf16.partialorder %v303, 0
      %vm565 = vcmp.gt.bf16.partialorder %v304, 0
      %vm566 = vcmp.gt.bf16.partialorder %v305, 0
      %vm567 = vcmp.gt.bf16.partialorder %v306, 0
      %vm568 = vcmp.gt.bf16.partialorder %v307, 0
      %vm569 = vcmp.gt.bf16.partialorder %v308, 0
      %vm570 = vcmp.gt.bf16.partialorder %v309, 0
      %vm571 = vcmp.gt.bf16.partialorder %v310, 0
      %vm572 = vcmp.gt.bf16.partialorder %v311, 0
      %vm573 = vcmp.gt.bf16.partialorder %v312, 0
      %vm574 = vcmp.gt.bf16.partialorder %v313, 0
      %vm575 = vcmp.gt.bf16.partialorder %v314, 0
      %vm576 = vcmp.gt.bf16.partialorder %v315, 0
      %vm577 = vcmp.gt.bf16.partialorder %v316, 0
      %vm578 = vcmp.gt.bf16.partialorder %v317, 0
      %vm579 = vcmp.gt.bf16.partialorder %v318, 0
      %vm580 = vcmp.gt.bf16.partialorder %v319, 0
      %vm581 = vcmp.gt.bf16.partialorder %v320, 0
      %vm582 = vcmp.gt.bf16.partialorder %v321, 0
      %vm583 = vcmp.gt.bf16.partialorder %v322, 0
      %vm584 = vcmp.gt.bf16.partialorder %v323, 0
      %vm585 = vcmp.gt.bf16.partialorder %v324, 0
      %vm586 = vcmp.gt.bf16.partialorder %v325, 0
      %vm587 = vcmp.gt.bf16.partialorder %v326, 0
      %vm588 = vcmp.gt.bf16.partialorder %v327, 0
      %vm589 = vcmp.gt.bf16.partialorder %v328, 0
      %vm590 = vcmp.gt.bf16.partialorder %v329, 0
      %vm591 = vcmp.gt.bf16.partialorder %v330, 0
      %vm592 = vcmp.gt.bf16.partialorder %v331, 0
      %vm593 = vcmp.gt.bf16.partialorder %v332, 0
      %vm594 = vcmp.gt.bf16.partialorder %v333, 0
      %vm595 = vcmp.gt.bf16.partialorder %v334, 0
      %vm596 = vcmp.gt.bf16.partialorder %v335, 0
      %vm597 = vcmp.gt.bf16.partialorder %v336, 0
      %vm598 = vcmp.gt.bf16.partialorder %v337, 0
      %vm599 = vcmp.gt.bf16.partialorder %v338, 0
      %vm600 = vcmp.gt.bf16.partialorder %v339, 0
      %vm601 = vcmp.gt.bf16.partialorder %v340, 0
      %vm602 = vcmp.gt.bf16.partialorder %v341, 0
      %vm603 = vcmp.gt.bf16.partialorder %v342, 0
      %vm604 = vcmp.gt.bf16.partialorder %v343, 0
      %vm605 = vcmp.gt.bf16.partialorder %v344, 0
      %vm606 = vcmp.gt.bf16.partialorder %v345, 0
      %vm607 = vcmp.gt.bf16.partialorder %v346, 0
      %vm608 = vcmp.gt.bf16.partialorder %v347, 0
      %vm609 = vcmp.gt.bf16.partialorder %v348, 0
      %vm610 = vcmp.gt.bf16.partialorder %v349, 0
      %vm611 = vcmp.gt.bf16.partialorder %v350, 0
      %vm612 = vcmp.gt.bf16.partialorder %v351, 0
      %vm613 = vcmp.gt.bf16.partialorder %v352, 0
      %v614 = vmul.bf16 %v289, 1045249613
      %v615 = vmul.bf16 %v290, 1045249613
      %v616 = vmul.bf16 %v291, 1045249613
      %v617 = vmul.bf16 %v292, 1045249613
      %v618 = vmul.bf16 %v293, 1045249613
      %v619 = vmul.bf16 %v294, 1045249613
      %v620 = vmul.bf16 %v295, 1045249613
      %v621 = vmul.bf16 %v296, 1045249613
      %v622 = vmul.bf16 %v297, 1045249613
      %v623 = vmul.bf16 %v298, 1045249613
      %v624 = vmul.bf16 %v299, 1045249613
      %v625 = vmul.bf16 %v300, 1045249613
      %v626 = vmul.bf16 %v301, 1045249613
      %v627 = vmul.bf16 %v302, 1045249613
      %v628 = vmul.bf16 %v303, 1045249613
      %v629 = vmul.bf16 %v304, 1045249613
      %v630 = vmul.bf16 %v305, 1045249613
      %v631 = vmul.bf16 %v306, 1045249613
      %v632 = vmul.bf16 %v307, 1045249613
      %v633 = vmul.bf16 %v308, 1045249613
      %v634 = vmul.bf16 %v309, 1045249613
      %v635 = vmul.bf16 %v310, 1045249613
      %v636 = vmul.bf16 %v311, 1045249613
      %v637 = vmul.bf16 %v312, 1045249613
      %v638 = vmul.bf16 %v313, 1045249613
      %v639 = vmul.bf16 %v314, 1045249613
      %v640 = vmul.bf16 %v315, 1045249613
      %v641 = vmul.bf16 %v316, 1045249613
      %v642 = vmul.bf16 %v317, 1045249613
      %v643 = vmul.bf16 %v318, 1045249613
      %v644 = vmul.bf16 %v319, 1045249613
      %v645 = vmul.bf16 %v320, 1045249613
      %v646 = vmul.bf16 %v321, 1045249613
      %v647 = vmul.bf16 %v322, 1045249613
      %v648 = vmul.bf16 %v323, 1045249613
      %v649 = vmul.bf16 %v324, 1045249613
      %v650 = vmul.bf16 %v325, 1045249613
      %v651 = vmul.bf16 %v326, 1045249613
      %v652 = vmul.bf16 %v327, 1045249613
      %v653 = vmul.bf16 %v328, 1045249613
      %v654 = vmul.bf16 %v329, 1045249613
      %v655 = vmul.bf16 %v330, 1045249613
      %v656 = vmul.bf16 %v331, 1045249613
      %v657 = vmul.bf16 %v332, 1045249613
      %v658 = vmul.bf16 %v333, 1045249613
      %v659 = vmul.bf16 %v334, 1045249613
      %v660 = vmul.bf16 %v335, 1045249613
      %v661 = vmul.bf16 %v336, 1045249613
      %v662 = vmul.bf16 %v337, 1045249613
      %v663 = vmul.bf16 %v338, 1045249613
      %v664 = vmul.bf16 %v339, 1045249613
      %v665 = vmul.bf16 %v340, 1045249613
      %v666 = vmul.bf16 %v341, 1045249613
      %v667 = vmul.bf16 %v342, 1045249613
      %v668 = vmul.bf16 %v343, 1045249613
      %v669 = vmul.bf16 %v344, 1045249613
      %v670 = vmul.bf16 %v345, 1045249613
      %v671 = vmul.bf16 %v346, 1045249613
      %v672 = vmul.bf16 %v347, 1045249613
      %v673 = vmul.bf16 %v348, 1045249613
      %v674 = vmul.bf16 %v349, 1045249613
      %v675 = vmul.bf16 %v350, 1045249613
      %v676 = vmul.bf16 %v351, 1045249613
      %v677 = vmul.bf16 %v352, 1045249613
      %v678 = vsel %vm550, %v289, %v614
      %v679 = vsel %vm551, %v290, %v615
      %v680 = vsel %vm552, %v291, %v616
      %v681 = vsel %vm553, %v292, %v617
      %v682 = vsel %vm554, %v293, %v618
      %v683 = vsel %vm555, %v294, %v619
      %v684 = vsel %vm556, %v295, %v620
      %v685 = vsel %vm557, %v296, %v621
      %v686 = vsel %vm558, %v297, %v622
      %v687 = vsel %vm559, %v298, %v623
      %v688 = vsel %vm560, %v299, %v624
      %v689 = vsel %vm561, %v300, %v625
      %v690 = vsel %vm562, %v301, %v626
      %v691 = vsel %vm563, %v302, %v627
      %v692 = vsel %vm564, %v303, %v628
      %v693 = vsel %vm565, %v304, %v629
      %v694 = vsel %vm566, %v305, %v630
      %v695 = vsel %vm567, %v306, %v631
      %v696 = vsel %vm568, %v307, %v632
      %v697 = vsel %vm569, %v308, %v633
      %v698 = vsel %vm570, %v309, %v634
      %v699 = vsel %vm571, %v310, %v635
      %v700 = vsel %vm572, %v311, %v636
      %v701 = vsel %vm573, %v312, %v637
      %v702 = vsel %vm574, %v313, %v638
      %v703 = vsel %vm575, %v314, %v639
      %v704 = vsel %vm576, %v315, %v640
      %v705 = vsel %vm577, %v316, %v641
      %v706 = vsel %vm578, %v317, %v642
      %v707 = vsel %vm579, %v318, %v643
      %v708 = vsel %vm580, %v319, %v644
      %v709 = vsel %vm581, %v320, %v645
      %v710 = vsel %vm582, %v321, %v646
      %v711 = vsel %vm583, %v322, %v647
      %v712 = vsel %vm584, %v323, %v648
      %v713 = vsel %vm585, %v324, %v649
      %v714 = vsel %vm586, %v325, %v650
      %v715 = vsel %vm587, %v326, %v651
      %v716 = vsel %vm588, %v327, %v652
      %v717 = vsel %vm589, %v328, %v653
      %v718 = vsel %vm590, %v329, %v654
      %v719 = vsel %vm591, %v330, %v655
      %v720 = vsel %vm592, %v331, %v656
      %v721 = vsel %vm593, %v332, %v657
      %v722 = vsel %vm594, %v333, %v658
      %v723 = vsel %vm595, %v334, %v659
      %v724 = vsel %vm596, %v335, %v660
      %v725 = vsel %vm597, %v336, %v661
      %v726 = vsel %vm598, %v337, %v662
      %v727 = vsel %vm599, %v338, %v663
      %v728 = vsel %vm600, %v339, %v664
      %v729 = vsel %vm601, %v340, %v665
      %v730 = vsel %vm602, %v341, %v666
      %v731 = vsel %vm603, %v342, %v667
      %v732 = vsel %vm604, %v343, %v668
      %v733 = vsel %vm605, %v344, %v669
      %v734 = vsel %vm606, %v345, %v670
      %v735 = vsel %vm607, %v346, %v671
      %v736 = vsel %vm608, %v347, %v672
      %v737 = vsel %vm609, %v348, %v673
      %v738 = vsel %vm610, %v349, %v674
      %v739 = vsel %vm611, %v350, %v675
      %v740 = vsel %vm612, %v351, %v676
      %v741 = vsel %vm613, %v352, %v677
      %vm742 = vsmask.f32 4368
      %vm743 = vmor %vm354, %vm742
      %v745 = vshrl.u32 %v678, 16
      %v747 = vrot.slane %v745, 7
      %v748 = vshll.u32 %v678, 16
      %v750 = vor.u32 %v747, %v748
      %v751 = vrot.slane %v747, 4
      %v753 = vshrl.u32 %v679, 16
      %v755 = vrot.slane %v753, 7
      %v756 = vshll.u32 %v679, 16
      %v758 = vor.u32 %v755, %v756
      %v759 = vsel %vm743, %v751, %v758
      %v760 = vrot.slane %v755, 4
      %v762 = vshrl.u32 %v680, 16
      %v764 = vrot.slane %v762, 7
      %v765 = vshll.u32 %v680, 16
      %v767 = vor.u32 %v764, %v765
      %v768 = vrot.slane %v764, 4
      %v770 = vshrl.u32 %v681, 16
      %v772 = vrot.slane %v770, 7
      %v773 = vshll.u32 %v681, 16
      %v775 = vor.u32 %v772, %v773
      %v776 = vsel %vm743, %v768, %v775
      %v777 = vrot.slane %v772, 4
      %v779 = vshrl.u32 %v682, 16
      %v781 = vrot.slane %v779, 7
      %v782 = vshll.u32 %v682, 16
      %v784 = vor.u32 %v781, %v782
      %v785 = vrot.slane %v781, 4
      %v787 = vshrl.u32 %v683, 16
      %v789 = vrot.slane %v787, 7
      %v790 = vshll.u32 %v683, 16
      %v792 = vor.u32 %v789, %v790
      %v793 = vsel %vm743, %v785, %v792
      %v794 = vrot.slane %v789, 4
      %v796 = vshrl.u32 %v684, 16
      %v798 = vrot.slane %v796, 7
      %v799 = vshll.u32 %v684, 16
      %v801 = vor.u32 %v798, %v799
      %v802 = vrot.slane %v798, 4
      %v804 = vshrl.u32 %v685, 16
      %v806 = vrot.slane %v804, 7
      %v807 = vshll.u32 %v685, 16
      %v809 = vor.u32 %v806, %v807
      %v810 = vsel %vm743, %v802, %v809
      %v811 = vrot.slane %v806, 4
      %v813 = vshrl.u32 %v686, 16
      %v815 = vrot.slane %v813, 7
      %v816 = vshll.u32 %v686, 16
      %v818 = vor.u32 %v815, %v816
      %v819 = vrot.slane %v815, 4
      %v821 = vshrl.u32 %v687, 16
      %v823 = vrot.slane %v821, 7
      %v824 = vshll.u32 %v687, 16
      %v826 = vor.u32 %v823, %v824
      %v827 = vsel %vm743, %v819, %v826
      %v828 = vrot.slane %v823, 4
      %v830 = vshrl.u32 %v688, 16
      %v832 = vrot.slane %v830, 7
      %v833 = vshll.u32 %v688, 16
      %v835 = vor.u32 %v832, %v833
      %v836 = vrot.slane %v832, 4
      %v838 = vshrl.u32 %v689, 16
      %v840 = vrot.slane %v838, 7
      %v841 = vshll.u32 %v689, 16
      %v843 = vor.u32 %v840, %v841
      %v844 = vsel %vm743, %v836, %v843
      %v845 = vrot.slane %v840, 4
      %v847 = vshrl.u32 %v690, 16
      %v849 = vrot.slane %v847, 7
      %v850 = vshll.u32 %v690, 16
      %v852 = vor.u32 %v849, %v850
      %v853 = vrot.slane %v849, 4
      %v855 = vshrl.u32 %v691, 16
      %v857 = vrot.slane %v855, 7
      %v858 = vshll.u32 %v691, 16
      %v860 = vor.u32 %v857, %v858
      %v861 = vsel %vm743, %v853, %v860
      %v862 = vrot.slane %v857, 4
      %v864 = vshrl.u32 %v692, 16
      %v866 = vrot.slane %v864, 7
      %v867 = vshll.u32 %v692, 16
      %v869 = vor.u32 %v866, %v867
      %v870 = vrot.slane %v866, 4
      %v872 = vshrl.u32 %v693, 16
      %v874 = vrot.slane %v872, 7
      %v875 = vshll.u32 %v693, 16
      %v877 = vor.u32 %v874, %v875
      %v878 = vsel %vm743, %v870, %v877
      %v879 = vrot.slane %v874, 4
      %v881 = vshrl.u32 %v694, 16
      %v883 = vrot.slane %v881, 7
      %v884 = vshll.u32 %v694, 16
      %v886 = vor.u32 %v883, %v884
      %v887 = vrot.slane %v883, 4
      %v889 = vshrl.u32 %v695, 16
      %v891 = vrot.slane %v889, 7
      %v892 = vshll.u32 %v695, 16
      %v894 = vor.u32 %v891, %v892
      %v895 = vsel %vm743, %v887, %v894
      %v896 = vrot.slane %v891, 4
      %v898 = vshrl.u32 %v696, 16
      %v900 = vrot.slane %v898, 7
      %v901 = vshll.u32 %v696, 16
      %v903 = vor.u32 %v900, %v901
      %v904 = vrot.slane %v900, 4
      %v906 = vshrl.u32 %v697, 16
      %v908 = vrot.slane %v906, 7
      %v909 = vshll.u32 %v697, 16
      %v911 = vor.u32 %v908, %v909
      %v912 = vsel %vm743, %v904, %v911
      %v913 = vrot.slane %v908, 4
      %v915 = vshrl.u32 %v698, 16
      %v917 = vrot.slane %v915, 7
      %v918 = vshll.u32 %v698, 16
      %v920 = vor.u32 %v917, %v918
      %v921 = vrot.slane %v917, 4
      %v923 = vshrl.u32 %v699, 16
      %v925 = vrot.slane %v923, 7
      %v926 = vshll.u32 %v699, 16
      %v928 = vor.u32 %v925, %v926
      %v929 = vsel %vm743, %v921, %v928
      %v930 = vrot.slane %v925, 4
      %v932 = vshrl.u32 %v700, 16
      %v934 = vrot.slane %v932, 7
      %v935 = vshll.u32 %v700, 16
      %v937 = vor.u32 %v934, %v935
      %v938 = vrot.slane %v934, 4
      %v940 = vshrl.u32 %v701, 16
      %v942 = vrot.slane %v940, 7
      %v943 = vshll.u32 %v701, 16
      %v945 = vor.u32 %v942, %v943
      %v946 = vsel %vm743, %v938, %v945
      %v947 = vrot.slane %v942, 4
      %v949 = vshrl.u32 %v702, 16
      %v951 = vrot.slane %v949, 7
      %v952 = vshll.u32 %v702, 16
      %v954 = vor.u32 %v951, %v952
      %v955 = vrot.slane %v951, 4
      %v957 = vshrl.u32 %v703, 16
      %v959 = vrot.slane %v957, 7
      %v960 = vshll.u32 %v703, 16
      %v962 = vor.u32 %v959, %v960
      %v963 = vsel %vm743, %v955, %v962
      %v964 = vrot.slane %v959, 4
      %v966 = vshrl.u32 %v704, 16
      %v968 = vrot.slane %v966, 7
      %v969 = vshll.u32 %v704, 16
      %v971 = vor.u32 %v968, %v969
      %v972 = vrot.slane %v968, 4
      %v974 = vshrl.u32 %v705, 16
      %v976 = vrot.slane %v974, 7
      %v977 = vshll.u32 %v705, 16
      %v979 = vor.u32 %v976, %v977
      %v980 = vsel %vm743, %v972, %v979
      %v981 = vrot.slane %v976, 4
      %v983 = vshrl.u32 %v706, 16
      %v985 = vrot.slane %v983, 7
      %v986 = vshll.u32 %v706, 16
      %v988 = vor.u32 %v985, %v986
      %v989 = vrot.slane %v985, 4
      %v991 = vshrl.u32 %v707, 16
      %v993 = vrot.slane %v991, 7
      %v994 = vshll.u32 %v707, 16
      %v996 = vor.u32 %v993, %v994
      %v997 = vsel %vm743, %v989, %v996
      %v998 = vrot.slane %v993, 4
      %v1000 = vshrl.u32 %v708, 16
      %v1002 = vrot.slane %v1000, 7
      %v1003 = vshll.u32 %v708, 16
      %v1005 = vor.u32 %v1002, %v1003
      %v1006 = vrot.slane %v1002, 4
      %v1008 = vshrl.u32 %v709, 16
      %v1010 = vrot.slane %v1008, 7
      %v1011 = vshll.u32 %v709, 16
      %v1013 = vor.u32 %v1010, %v1011
      %v1014 = vsel %vm743, %v1006, %v1013
      %v1015 = vrot.slane %v1010, 4
      %v1017 = vshrl.u32 %v710, 16
      %v1019 = vrot.slane %v1017, 7
      %v1020 = vshll.u32 %v710, 16
      %v1022 = vor.u32 %v1019, %v1020
      %v1023 = vrot.slane %v1019, 4
      %v1025 = vshrl.u32 %v711, 16
      %v1027 = vrot.slane %v1025, 7
      %v1028 = vshll.u32 %v711, 16
      %v1030 = vor.u32 %v1027, %v1028
      %v1031 = vsel %vm743, %v1023, %v1030
      %v1032 = vrot.slane %v1027, 4
      %v1034 = vshrl.u32 %v712, 16
      %v1036 = vrot.slane %v1034, 7
      %v1037 = vshll.u32 %v712, 16
      %v1039 = vor.u32 %v1036, %v1037
      %v1040 = vrot.slane %v1036, 4
      %v1042 = vshrl.u32 %v713, 16
      %v1044 = vrot.slane %v1042, 7
      %v1045 = vshll.u32 %v713, 16
      %v1047 = vor.u32 %v1044, %v1045
      %v1048 = vsel %vm743, %v1040, %v1047
      %v1049 = vrot.slane %v1044, 4
      %v1051 = vshrl.u32 %v714, 16
      %v1053 = vrot.slane %v1051, 7
      %v1054 = vshll.u32 %v714, 16
      %v1056 = vor.u32 %v1053, %v1054
      %v1057 = vrot.slane %v1053, 4
      %v1059 = vshrl.u32 %v715, 16
      %v1061 = vrot.slane %v1059, 7
      %v1062 = vshll.u32 %v715, 16
      %v1064 = vor.u32 %v1061, %v1062
      %v1065 = vsel %vm743, %v1057, %v1064
      %v1066 = vrot.slane %v1061, 4
      %v1068 = vshrl.u32 %v716, 16
      %v1070 = vrot.slane %v1068, 7
      %v1071 = vshll.u32 %v716, 16
      %v1073 = vor.u32 %v1070, %v1071
      %v1074 = vrot.slane %v1070, 4
      %v1076 = vshrl.u32 %v717, 16
      %v1078 = vrot.slane %v1076, 7
      %v1079 = vshll.u32 %v717, 16
      %v1081 = vor.u32 %v1078, %v1079
      %v1082 = vsel %vm743, %v1074, %v1081
      %v1083 = vrot.slane %v1078, 4
      %v1085 = vshrl.u32 %v718, 16
      %v1087 = vrot.slane %v1085, 7
      %v1088 = vshll.u32 %v718, 16
      %v1090 = vor.u32 %v1087, %v1088
      %v1091 = vrot.slane %v1087, 4
      %v1093 = vshrl.u32 %v719, 16
      %v1095 = vrot.slane %v1093, 7
      %v1096 = vshll.u32 %v719, 16
      %v1098 = vor.u32 %v1095, %v1096
      %v1099 = vsel %vm743, %v1091, %v1098
      %v1100 = vrot.slane %v1095, 4
      %v1102 = vshrl.u32 %v720, 16
      %v1104 = vrot.slane %v1102, 7
      %v1105 = vshll.u32 %v720, 16
      %v1107 = vor.u32 %v1104, %v1105
      %v1108 = vrot.slane %v1104, 4
      %v1110 = vshrl.u32 %v721, 16
      %v1112 = vrot.slane %v1110, 7
      %v1113 = vshll.u32 %v721, 16
      %v1115 = vor.u32 %v1112, %v1113
      %v1116 = vsel %vm743, %v1108, %v1115
      %v1117 = vrot.slane %v1112, 4
      %v1119 = vshrl.u32 %v722, 16
      %v1121 = vrot.slane %v1119, 7
      %v1122 = vshll.u32 %v722, 16
      %v1124 = vor.u32 %v1121, %v1122
      %v1125 = vrot.slane %v1121, 4
      %v1127 = vshrl.u32 %v723, 16
      %v1129 = vrot.slane %v1127, 7
      %v1130 = vshll.u32 %v723, 16
      %v1132 = vor.u32 %v1129, %v1130
      %v1133 = vsel %vm743, %v1125, %v1132
      %v1134 = vrot.slane %v1129, 4
      %v1136 = vshrl.u32 %v724, 16
      %v1138 = vrot.slane %v1136, 7
      %v1139 = vshll.u32 %v724, 16
      %v1141 = vor.u32 %v1138, %v1139
      %v1142 = vrot.slane %v1138, 4
      %v1144 = vshrl.u32 %v725, 16
      %v1146 = vrot.slane %v1144, 7
      %v1147 = vshll.u32 %v725, 16
      %v1149 = vor.u32 %v1146, %v1147
      %v1150 = vsel %vm743, %v1142, %v1149
      %v1151 = vrot.slane %v1146, 4
      %v1153 = vshrl.u32 %v726, 16
      %v1155 = vrot.slane %v1153, 7
      %v1156 = vshll.u32 %v726, 16
      %v1158 = vor.u32 %v1155, %v1156
      %v1159 = vrot.slane %v1155, 4
      %v1161 = vshrl.u32 %v727, 16
      %v1163 = vrot.slane %v1161, 7
      %v1164 = vshll.u32 %v727, 16
      %v1166 = vor.u32 %v1163, %v1164
      %v1167 = vsel %vm743, %v1159, %v1166
      %v1168 = vrot.slane %v1163, 4
      %v1170 = vshrl.u32 %v728, 16
      %v1172 = vrot.slane %v1170, 7
      %v1173 = vshll.u32 %v728, 16
      %v1175 = vor.u32 %v1172, %v1173
      %v1176 = vrot.slane %v1172, 4
      %v1178 = vshrl.u32 %v729, 16
      %v1180 = vrot.slane %v1178, 7
      %v1181 = vshll.u32 %v729, 16
      %v1183 = vor.u32 %v1180, %v1181
      %v1184 = vsel %vm743, %v1176, %v1183
      %v1185 = vrot.slane %v1180, 4
      %v1187 = vshrl.u32 %v730, 16
      %v1189 = vrot.slane %v1187, 7
      %v1190 = vshll.u32 %v730, 16
      %v1192 = vor.u32 %v1189, %v1190
      %v1193 = vrot.slane %v1189, 4
      %v1195 = vshrl.u32 %v731, 16
      %v1197 = vrot.slane %v1195, 7
      %v1198 = vshll.u32 %v731, 16
      %v1200 = vor.u32 %v1197, %v1198
      %v1201 = vsel %vm743, %v1193, %v1200
      %v1202 = vrot.slane %v1197, 4
      %v1204 = vshrl.u32 %v732, 16
      %v1206 = vrot.slane %v1204, 7
      %v1207 = vshll.u32 %v732, 16
      %v1209 = vor.u32 %v1206, %v1207
      %v1210 = vrot.slane %v1206, 4
      %v1212 = vshrl.u32 %v733, 16
      %v1214 = vrot.slane %v1212, 7
      %v1215 = vshll.u32 %v733, 16
      %v1217 = vor.u32 %v1214, %v1215
      %v1218 = vsel %vm743, %v1210, %v1217
      %v1219 = vrot.slane %v1214, 4
      %v1221 = vshrl.u32 %v734, 16
      %v1223 = vrot.slane %v1221, 7
      %v1224 = vshll.u32 %v734, 16
      %v1226 = vor.u32 %v1223, %v1224
      %v1227 = vrot.slane %v1223, 4
      %v1229 = vshrl.u32 %v735, 16
      %v1231 = vrot.slane %v1229, 7
      %v1232 = vshll.u32 %v735, 16
      %v1234 = vor.u32 %v1231, %v1232
      %v1235 = vsel %vm743, %v1227, %v1234
      %v1236 = vrot.slane %v1231, 4
      %v1238 = vshrl.u32 %v736, 16
      %v1240 = vrot.slane %v1238, 7
      %v1241 = vshll.u32 %v736, 16
      %v1243 = vor.u32 %v1240, %v1241
      %v1244 = vrot.slane %v1240, 4
      %v1246 = vshrl.u32 %v737, 16
      %v1248 = vrot.slane %v1246, 7
      %v1249 = vshll.u32 %v737, 16
      %v1251 = vor.u32 %v1248, %v1249
      %v1252 = vsel %vm743, %v1244, %v1251
      %v1253 = vrot.slane %v1248, 4
      %v1255 = vshrl.u32 %v738, 16
      %v1257 = vrot.slane %v1255, 7
      %v1258 = vshll.u32 %v738, 16
      %v1260 = vor.u32 %v1257, %v1258
      %v1261 = vrot.slane %v1257, 4
      %v1263 = vshrl.u32 %v739, 16
      %v1265 = vrot.slane %v1263, 7
      %v1266 = vshll.u32 %v739, 16
      %v1268 = vor.u32 %v1265, %v1266
      %v1269 = vsel %vm743, %v1261, %v1268
      %v1270 = vrot.slane %v1265, 4
      %v1272 = vshrl.u32 %v740, 16
      %v1274 = vrot.slane %v1272, 7
      %v1275 = vshll.u32 %v740, 16
      %v1277 = vor.u32 %v1274, %v1275
      %v1278 = vrot.slane %v1274, 4
      %v1280 = vshrl.u32 %v741, 16
      %v1282 = vrot.slane %v1280, 7
      %v1283 = vshll.u32 %v741, 16
      %v1285 = vor.u32 %v1282, %v1283
      %v1286 = vsel %vm743, %v1278, %v1285
      %v1287 = vrot.slane %v1282, 4
      %vm1384 = vcmask 27648
      %vm1385 = vmand %vm1384, %vm452
      %v1386 = vld [vmem:[#allocation2] sm:$0xf]
      %v1387 = vsel %vm1385, %v750, %v1386
      %1388 = vst [vmem:[#allocation2] sm:$0xf] %v1387
      %vm1389 = vcmask 27648
      %1390 = vst.msk [vmem:[#allocation2 + $0x4] sm:$0xf] %vm1389, %v759
      %v1391 = vld [vmem:[#allocation2 + $0x8] sm:$0x1]
      %v1392 = vsel %vm355, %v760, %v1391
      %1393 = vst [vmem:[#allocation2 + $0x8] sm:$0x1] %v1392
      %v1394 = vld [vmem:[#allocation2 + $0xc] sm:$0xf]
      %v1395 = vsel %vm1385, %v767, %v1394
      %1396 = vst [vmem:[#allocation2 + $0xc] sm:$0xf] %v1395
      %1397 = vst.msk [vmem:[#allocation2 + $0x10] sm:$0xf] %vm1389, %v776
      %v1398 = vld [vmem:[#allocation2 + $0x14] sm:$0x1]
      %v1399 = vsel %vm355, %v777, %v1398
      %1400 = vst [vmem:[#allocation2 + $0x14] sm:$0x1] %v1399
      %v1401 = vld [vmem:[#allocation2 + $0x18] sm:$0xf]
      %v1402 = vsel %vm1385, %v784, %v1401
      %1403 = vst [vmem:[#allocation2 + $0x18] sm:$0xf] %v1402
      %1404 = vst.msk [vmem:[#allocation2 + $0x1c] sm:$0xf] %vm1389, %v793
      %v1405 = vld [vmem:[#allocation2 + $0x20] sm:$0x1]
      %v1406 = vsel %vm355, %v794, %v1405
      %1407 = vst [vmem:[#allocation2 + $0x20] sm:$0x1] %v1406
      %v1408 = vld [vmem:[#allocation2 + $0x24] sm:$0xf]
      %v1409 = vsel %vm1385, %v801, %v1408
      %1410 = vst [vmem:[#allocation2 + $0x24] sm:$0xf] %v1409
      %1411 = vst.msk [vmem:[#allocation2 + $0x28] sm:$0xf] %vm1389, %v810
      %v1412 = vld [vmem:[#allocation2 + $0x2c] sm:$0x1]
      %v1413 = vsel %vm355, %v811, %v1412
      %1414 = vst [vmem:[#allocation2 + $0x2c] sm:$0x1] %v1413
      %v1415 = vld [vmem:[#allocation2 + $0x30] sm:$0xf]
      %v1416 = vsel %vm1385, %v818, %v1415
      %1417 = vst [vmem:[#allocation2 + $0x30] sm:$0xf] %v1416
      %1418 = vst.msk [vmem:[#allocation2 + $0x34] sm:$0xf] %vm1389, %v827
      %v1419 = vld [vmem:[#allocation2 + $0x38] sm:$0x1]
      %v1420 = vsel %vm355, %v828, %v1419
      %1421 = vst [vmem:[#allocation2 + $0x38] sm:$0x1] %v1420
      %v1422 = vld [vmem:[#allocation2 + $0x3c] sm:$0xf]
      %v1423 = vsel %vm1385, %v835, %v1422
      %1424 = vst [vmem:[#allocation2 + $0x3c] sm:$0xf] %v1423
      %1425 = vst.msk [vmem:[#allocation2 + $0x40] sm:$0xf] %vm1389, %v844
      %v1426 = vld [vmem:[#allocation2 + $0x44] sm:$0x1]
      %v1427 = vsel %vm355, %v845, %v1426
      %1428 = vst [vmem:[#allocation2 + $0x44] sm:$0x1] %v1427
      %v1429 = vld [vmem:[#allocation2 + $0x48] sm:$0xf]
      %v1430 = vsel %vm1385, %v852, %v1429
      %1431 = vst [vmem:[#allocation2 + $0x48] sm:$0xf] %v1430
      %1432 = vst.msk [vmem:[#allocation2 + $0x4c] sm:$0xf] %vm1389, %v861
      %v1433 = vld [vmem:[#allocation2 + $0x50] sm:$0x1]
      %v1434 = vsel %vm355, %v862, %v1433
      %1435 = vst [vmem:[#allocation2 + $0x50] sm:$0x1] %v1434
      %v1436 = vld [vmem:[#allocation2 + $0x54] sm:$0xf]
      %v1437 = vsel %vm1385, %v869, %v1436
      %1438 = vst [vmem:[#allocation2 + $0x54] sm:$0xf] %v1437
      %1439 = vst.msk [vmem:[#allocation2 + $0x58] sm:$0xf] %vm1389, %v878
      %v1440 = vld [vmem:[#allocation2 + $0x5c] sm:$0x1]
      %v1441 = vsel %vm355, %v879, %v1440
      %1442 = vst [vmem:[#allocation2 + $0x5c] sm:$0x1] %v1441
      %v1443 = vld [vmem:[#allocation2 + $0x60] sm:$0xf]
      %v1444 = vsel %vm1385, %v886, %v1443
      %1445 = vst [vmem:[#allocation2 + $0x60] sm:$0xf] %v1444
      %1446 = vst.msk [vmem:[#allocation2 + $0x64] sm:$0xf] %vm1389, %v895
      %v1447 = vld [vmem:[#allocation2 + $0x68] sm:$0x1]
      %v1448 = vsel %vm355, %v896, %v1447
      %1449 = vst [vmem:[#allocation2 + $0x68] sm:$0x1] %v1448
      %v1450 = vld [vmem:[#allocation2 + $0x6c] sm:$0xf]
      %v1451 = vsel %vm1385, %v903, %v1450
      %1452 = vst [vmem:[#allocation2 + $0x6c] sm:$0xf] %v1451
      %1453 = vst.msk [vmem:[#allocation2 + $0x70] sm:$0xf] %vm1389, %v912
      %v1454 = vld [vmem:[#allocation2 + $0x74] sm:$0x1]
      %v1455 = vsel %vm355, %v913, %v1454
      %1456 = vst [vmem:[#allocation2 + $0x74] sm:$0x1] %v1455
      %v1457 = vld [vmem:[#allocation2 + $0x78] sm:$0xf]
      %v1458 = vsel %vm1385, %v920, %v1457
      %1459 = vst [vmem:[#allocation2 + $0x78] sm:$0xf] %v1458
      %1460 = vst.msk [vmem:[#allocation2 + $0x7c] sm:$0xf] %vm1389, %v929
      %v1461 = vld [vmem:[#allocation2 + $0x80] sm:$0x1]
      %v1462 = vsel %vm355, %v930, %v1461
      %1463 = vst [vmem:[#allocation2 + $0x80] sm:$0x1] %v1462
      %v1464 = vld [vmem:[#allocation2 + $0x84] sm:$0xf]
      %v1465 = vsel %vm1385, %v937, %v1464
      %1466 = vst [vmem:[#allocation2 + $0x84] sm:$0xf] %v1465
      %1467 = vst.msk [vmem:[#allocation2 + $0x88] sm:$0xf] %vm1389, %v946
      %v1468 = vld [vmem:[#allocation2 + $0x8c] sm:$0x1]
      %v1469 = vsel %vm355, %v947, %v1468
      %1470 = vst [vmem:[#allocation2 + $0x8c] sm:$0x1] %v1469
      %v1471 = vld [vmem:[#allocation2 + $0x90] sm:$0xf]
      %v1472 = vsel %vm1385, %v954, %v1471
      %1473 = vst [vmem:[#allocation2 + $0x90] sm:$0xf] %v1472
      %1474 = vst.msk [vmem:[#allocation2 + $0x94] sm:$0xf] %vm1389, %v963
      %v1475 = vld [vmem:[#allocation2 + $0x98] sm:$0x1]
      %v1476 = vsel %vm355, %v964, %v1475
      %1477 = vst [vmem:[#allocation2 + $0x98] sm:$0x1] %v1476
      %v1478 = vld [vmem:[#allocation2 + $0x9c] sm:$0xf]
      %v1479 = vsel %vm1385, %v971, %v1478
      %1480 = vst [vmem:[#allocation2 + $0x9c] sm:$0xf] %v1479
      %1481 = vst.msk [vmem:[#allocation2 + $0xa0] sm:$0xf] %vm1389, %v980
      %v1482 = vld [vmem:[#allocation2 + $0xa4] sm:$0x1]
      %v1483 = vsel %vm355, %v981, %v1482
      %1484 = vst [vmem:[#allocation2 + $0xa4] sm:$0x1] %v1483
      %v1485 = vld [vmem:[#allocation2 + $0xa8] sm:$0xf]
      %v1486 = vsel %vm1385, %v988, %v1485
      %1487 = vst [vmem:[#allocation2 + $0xa8] sm:$0xf] %v1486
      %1488 = vst.msk [vmem:[#allocation2 + $0xac] sm:$0xf] %vm1389, %v997
      %v1489 = vld [vmem:[#allocation2 + $0xb0] sm:$0x1]
      %v1490 = vsel %vm355, %v998, %v1489
      %1491 = vst [vmem:[#allocation2 + $0xb0] sm:$0x1] %v1490
      %v1492 = vld [vmem:[#allocation2 + $0xb4] sm:$0xf]
      %v1493 = vsel %vm1385, %v1005, %v1492
      %1494 = vst [vmem:[#allocation2 + $0xb4] sm:$0xf] %v1493
      %1495 = vst.msk [vmem:[#allocation2 + $0xb8] sm:$0xf] %vm1389, %v1014
      %v1496 = vld [vmem:[#allocation2 + $0xbc] sm:$0x1]
      %v1497 = vsel %vm355, %v1015, %v1496
      %1498 = vst [vmem:[#allocation2 + $0xbc] sm:$0x1] %v1497
      %v1499 = vld [vmem:[#allocation2 + $0xc0] sm:$0xf]
      %v1500 = vsel %vm1385, %v1022, %v1499
      %1501 = vst [vmem:[#allocation2 + $0xc0] sm:$0xf] %v1500
      %1502 = vst.msk [vmem:[#allocation2 + $0xc4] sm:$0xf] %vm1389, %v1031
      %v1503 = vld [vmem:[#allocation2 + $0xc8] sm:$0x1]
      %v1504 = vsel %vm355, %v1032, %v1503
      %1505 = vst [vmem:[#allocation2 + $0xc8] sm:$0x1] %v1504
      %v1506 = vld [vmem:[#allocation2 + $0xcc] sm:$0xf]
      %v1507 = vsel %vm1385, %v1039, %v1506
      %1508 = vst [vmem:[#allocation2 + $0xcc] sm:$0xf] %v1507
      %1509 = vst.msk [vmem:[#allocation2 + $0xd0] sm:$0xf] %vm1389, %v1048
      %v1510 = vld [vmem:[#allocation2 + $0xd4] sm:$0x1]
      %v1511 = vsel %vm355, %v1049, %v1510
      %1512 = vst [vmem:[#allocation2 + $0xd4] sm:$0x1] %v1511
      %v1513 = vld [vmem:[#allocation2 + $0xd8] sm:$0xf]
      %v1514 = vsel %vm1385, %v1056, %v1513
      %1515 = vst [vmem:[#allocation2 + $0xd8] sm:$0xf] %v1514
      %1516 = vst.msk [vmem:[#allocation2 + $0xdc] sm:$0xf] %vm1389, %v1065
      %v1517 = vld [vmem:[#allocation2 + $0xe0] sm:$0x1]
      %v1518 = vsel %vm355, %v1066, %v1517
      %1519 = vst [vmem:[#allocation2 + $0xe0] sm:$0x1] %v1518
      %v1520 = vld [vmem:[#allocation2 + $0xe4] sm:$0xf]
      %v1521 = vsel %vm1385, %v1073, %v1520
      %1522 = vst [vmem:[#allocation2 + $0xe4] sm:$0xf] %v1521
      %1523 = vst.msk [vmem:[#allocation2 + $0xe8] sm:$0xf] %vm1389, %v1082
      %v1524 = vld [vmem:[#allocation2 + $0xec] sm:$0x1]
      %v1525 = vsel %vm355, %v1083, %v1524
      %1526 = vst [vmem:[#allocation2 + $0xec] sm:$0x1] %v1525
      %v1527 = vld [vmem:[#allocation2 + $0xf0] sm:$0xf]
      %v1528 = vsel %vm1385, %v1090, %v1527
      %1529 = vst [vmem:[#allocation2 + $0xf0] sm:$0xf] %v1528
      %1530 = vst.msk [vmem:[#allocation2 + $0xf4] sm:$0xf] %vm1389, %v1099
      %v1531 = vld [vmem:[#allocation2 + $0xf8] sm:$0x1]
      %v1532 = vsel %vm355, %v1100, %v1531
      %1533 = vst [vmem:[#allocation2 + $0xf8] sm:$0x1] %v1532
      %v1534 = vld [vmem:[#allocation2 + $0xfc] sm:$0xf]
      %v1535 = vsel %vm1385, %v1107, %v1534
      %1536 = vst [vmem:[#allocation2 + $0xfc] sm:$0xf] %v1535
      %1537 = vst.msk [vmem:[#allocation2 + $0x100] sm:$0xf] %vm1389, %v1116
      %v1538 = vld [vmem:[#allocation2 + $0x104] sm:$0x1]
      %v1539 = vsel %vm355, %v1117, %v1538
      %1540 = vst [vmem:[#allocation2 + $0x104] sm:$0x1] %v1539
      %v1541 = vld [vmem:[#allocation2 + $0x108] sm:$0xf]
      %v1542 = vsel %vm1385, %v1124, %v1541
      %1543 = vst [vmem:[#allocation2 + $0x108] sm:$0xf] %v1542
      %1544 = vst.msk [vmem:[#allocation2 + $0x10c] sm:$0xf] %vm1389, %v1133
      %v1545 = vld [vmem:[#allocation2 + $0x110] sm:$0x1]
      %v1546 = vsel %vm355, %v1134, %v1545
      %1547 = vst [vmem:[#allocation2 + $0x110] sm:$0x1] %v1546
      %v1548 = vld [vmem:[#allocation2 + $0x114] sm:$0xf]
      %v1549 = vsel %vm1385, %v1141, %v1548
      %1550 = vst [vmem:[#allocation2 + $0x114] sm:$0xf] %v1549
      %1551 = vst.msk [vmem:[#allocation2 + $0x118] sm:$0xf] %vm1389, %v1150
      %v1552 = vld [vmem:[#allocation2 + $0x11c] sm:$0x1]
      %v1553 = vsel %vm355, %v1151, %v1552
      %1554 = vst [vmem:[#allocation2 + $0x11c] sm:$0x1] %v1553
      %v1555 = vld [vmem:[#allocation2 + $0x120] sm:$0xf]
      %v1556 = vsel %vm1385, %v1158, %v1555
      %1557 = vst [vmem:[#allocation2 + $0x120] sm:$0xf] %v1556
      %1558 = vst.msk [vmem:[#allocation2 + $0x124] sm:$0xf] %vm1389, %v1167
      %v1559 = vld [vmem:[#allocation2 + $0x128] sm:$0x1]
      %v1560 = vsel %vm355, %v1168, %v1559
      %1561 = vst [vmem:[#allocation2 + $0x128] sm:$0x1] %v1560
      %v1562 = vld [vmem:[#allocation2 + $0x12c] sm:$0xf]
      %v1563 = vsel %vm1385, %v1175, %v1562
      %1564 = vst [vmem:[#allocation2 + $0x12c] sm:$0xf] %v1563
      %1565 = vst.msk [vmem:[#allocation2 + $0x130] sm:$0xf] %vm1389, %v1184
      %v1566 = vld [vmem:[#allocation2 + $0x134] sm:$0x1]
      %v1567 = vsel %vm355, %v1185, %v1566
      %1568 = vst [vmem:[#allocation2 + $0x134] sm:$0x1] %v1567
      %v1569 = vld [vmem:[#allocation2 + $0x138] sm:$0xf]
      %v1570 = vsel %vm1385, %v1192, %v1569
      %1571 = vst [vmem:[#allocation2 + $0x138] sm:$0xf] %v1570
      %1572 = vst.msk [vmem:[#allocation2 + $0x13c] sm:$0xf] %vm1389, %v1201
      %v1573 = vld [vmem:[#allocation2 + $0x140] sm:$0x1]
      %v1574 = vsel %vm355, %v1202, %v1573
      %1575 = vst [vmem:[#allocation2 + $0x140] sm:$0x1] %v1574
      %v1576 = vld [vmem:[#allocation2 + $0x144] sm:$0xf]
      %v1577 = vsel %vm1385, %v1209, %v1576
      %1578 = vst [vmem:[#allocation2 + $0x144] sm:$0xf] %v1577
      %1579 = vst.msk [vmem:[#allocation2 + $0x148] sm:$0xf] %vm1389, %v1218
      %v1580 = vld [vmem:[#allocation2 + $0x14c] sm:$0x1]
      %v1581 = vsel %vm355, %v1219, %v1580
      %1582 = vst [vmem:[#allocation2 + $0x14c] sm:$0x1] %v1581
      %v1583 = vld [vmem:[#allocation2 + $0x150] sm:$0xf]
      %v1584 = vsel %vm1385, %v1226, %v1583
      %1585 = vst [vmem:[#allocation2 + $0x150] sm:$0xf] %v1584
      %1586 = vst.msk [vmem:[#allocation2 + $0x154] sm:$0xf] %vm1389, %v1235
      %v1587 = vld [vmem:[#allocation2 + $0x158] sm:$0x1]
      %v1588 = vsel %vm355, %v1236, %v1587
      %1589 = vst [vmem:[#allocation2 + $0x158] sm:$0x1] %v1588
      %v1590 = vld [vmem:[#allocation2 + $0x15c] sm:$0xf]
      %v1591 = vsel %vm1385, %v1243, %v1590
      %1592 = vst [vmem:[#allocation2 + $0x15c] sm:$0xf] %v1591
      %1593 = vst.msk [vmem:[#allocation2 + $0x160] sm:$0xf] %vm1389, %v1252
      %v1594 = vld [vmem:[#allocation2 + $0x164] sm:$0x1]
      %v1595 = vsel %vm355, %v1253, %v1594
      %1596 = vst [vmem:[#allocation2 + $0x164] sm:$0x1] %v1595
      %v1597 = vld [vmem:[#allocation2 + $0x168] sm:$0xf]
      %v1598 = vsel %vm1385, %v1260, %v1597
      %1599 = vst [vmem:[#allocation2 + $0x168] sm:$0xf] %v1598
      %1600 = vst.msk [vmem:[#allocation2 + $0x16c] sm:$0xf] %vm1389, %v1269
      %v1601 = vld [vmem:[#allocation2 + $0x170] sm:$0x1]
      %v1602 = vsel %vm355, %v1270, %v1601
      %1603 = vst [vmem:[#allocation2 + $0x170] sm:$0x1] %v1602
      %v1604 = vld [vmem:[#allocation2 + $0x174] sm:$0xf]
      %v1605 = vsel %vm1385, %v1277, %v1604
      %1606 = vst [vmem:[#allocation2 + $0x174] sm:$0xf] %v1605
      %1607 = vst.msk [vmem:[#allocation2 + $0x178] sm:$0xf] %vm1389, %v1286
      %v1608 = vld [vmem:[#allocation2 + $0x17c] sm:$0x1]
      %v1609 = vsel %vm355, %v1287, %v1608
      %1610 = vst [vmem:[#allocation2 + $0x17c] sm:$0x1] %v1609
      %v1611 = vld [vmem:[#allocation2] sm:$0xf]
      %v1612 = vld [vmem:[#allocation2 + $0x4] sm:$0xf]
      %v1613 = vld [vmem:[#allocation2 + $0x8] sm:$0x1]
      %v1614 = vld [vmem:[#allocation2 + $0xc] sm:$0xf]
      %v1615 = vld [vmem:[#allocation2 + $0x10] sm:$0xf]
      %v1616 = vld [vmem:[#allocation2 + $0x14] sm:$0x1]
      %v1617 = vld [vmem:[#allocation2 + $0x18] sm:$0xf]
      %v1618 = vld [vmem:[#allocation2 + $0x1c] sm:$0xf]
      %v1619 = vld [vmem:[#allocation2 + $0x20] sm:$0x1]
      %v1620 = vld [vmem:[#allocation2 + $0x24] sm:$0xf]
      %v1621 = vld [vmem:[#allocation2 + $0x28] sm:$0xf]
      %v1622 = vld [vmem:[#allocation2 + $0x2c] sm:$0x1]
      %v1623 = vld [vmem:[#allocation2 + $0x30] sm:$0xf]
      %v1624 = vld [vmem:[#allocation2 + $0x34] sm:$0xf]
      %v1625 = vld [vmem:[#allocation2 + $0x38] sm:$0x1]
      %v1626 = vld [vmem:[#allocation2 + $0x3c] sm:$0xf]
      %v1627 = vld [vmem:[#allocation2 + $0x40] sm:$0xf]
      %v1628 = vld [vmem:[#allocation2 + $0x44] sm:$0x1]
      %v1629 = vld [vmem:[#allocation2 + $0x48] sm:$0xf]
      %v1630 = vld [vmem:[#allocation2 + $0x4c] sm:$0xf]
      %v1631 = vld [vmem:[#allocation2 + $0x50] sm:$0x1]
      %v1632 = vld [vmem:[#allocation2 + $0x54] sm:$0xf]
      %v1633 = vld [vmem:[#allocation2 + $0x58] sm:$0xf]
      %v1634 = vld [vmem:[#allocation2 + $0x5c] sm:$0x1]
      %v1635 = vld [vmem:[#allocation2 + $0x60] sm:$0xf]
      %v1636 = vld [vmem:[#allocation2 + $0x64] sm:$0xf]
      %v1637 = vld [vmem:[#allocation2 + $0x68] sm:$0x1]
      %v1638 = vld [vmem:[#allocation2 + $0x6c] sm:$0xf]
      %v1639 = vld [vmem:[#allocation2 + $0x70] sm:$0xf]
      %v1640 = vld [vmem:[#allocation2 + $0x74] sm:$0x1]
      %v1641 = vld [vmem:[#allocation2 + $0x78] sm:$0xf]
      %v1642 = vld [vmem:[#allocation2 + $0x7c] sm:$0xf]
      %v1643 = vld [vmem:[#allocation2 + $0x80] sm:$0x1]
      %v1644 = vld [vmem:[#allocation2 + $0x84] sm:$0xf]
      %v1645 = vld [vmem:[#allocation2 + $0x88] sm:$0xf]
      %v1646 = vld [vmem:[#allocation2 + $0x8c] sm:$0x1]
      %v1647 = vld [vmem:[#allocation2 + $0x90] sm:$0xf]
      %v1648 = vld [vmem:[#allocation2 + $0x94] sm:$0xf]
      %v1649 = vld [vmem:[#allocation2 + $0x98] sm:$0x1]
      %v1650 = vld [vmem:[#allocation2 + $0x9c] sm:$0xf]
      %v1651 = vld [vmem:[#allocation2 + $0xa0] sm:$0xf]
      %v1652 = vld [vmem:[#allocation2 + $0xa4] sm:$0x1]
      %v1653 = vld [vmem:[#allocation2 + $0xa8] sm:$0xf]
      %v1654 = vld [vmem:[#allocation2 + $0xac] sm:$0xf]
      %v1655 = vld [vmem:[#allocation2 + $0xb0] sm:$0x1]
      %v1656 = vld [vmem:[#allocation2 + $0xb4] sm:$0xf]
      %v1657 = vld [vmem:[#allocation2 + $0xb8] sm:$0xf]
      %v1658 = vld [vmem:[#allocation2 + $0xbc] sm:$0x1]
      %v1659 = vld [vmem:[#allocation2 + $0xc0] sm:$0xf]
      %v1660 = vld [vmem:[#allocation2 + $0xc4] sm:$0xf]
      %v1661 = vld [vmem:[#allocation2 + $0xc8] sm:$0x1]
      %v1662 = vld [vmem:[#allocation2 + $0xcc] sm:$0xf]
      %v1663 = vld [vmem:[#allocation2 + $0xd0] sm:$0xf]
      %v1664 = vld [vmem:[#allocation2 + $0xd4] sm:$0x1]
      %v1665 = vld [vmem:[#allocation2 + $0xd8] sm:$0xf]
      %v1666 = vld [vmem:[#allocation2 + $0xdc] sm:$0xf]
      %v1667 = vld [vmem:[#allocation2 + $0xe0] sm:$0x1]
      %v1668 = vld [vmem:[#allocation2 + $0xe4] sm:$0xf]
      %v1669 = vld [vmem:[#allocation2 + $0xe8] sm:$0xf]
      %v1670 = vld [vmem:[#allocation2 + $0xec] sm:$0x1]
      %v1671 = vld [vmem:[#allocation2 + $0xf0] sm:$0xf]
      %v1672 = vld [vmem:[#allocation2 + $0xf4] sm:$0xf]
      %v1673 = vld [vmem:[#allocation2 + $0xf8] sm:$0x1]
      %v1674 = vld [vmem:[#allocation2 + $0xfc] sm:$0xf]
      %v1675 = vld [vmem:[#allocation2 + $0x100] sm:$0xf]
      %v1676 = vld [vmem:[#allocation2 + $0x104] sm:$0x1]
      %v1677 = vld [vmem:[#allocation2 + $0x108] sm:$0xf]
      %v1678 = vld [vmem:[#allocation2 + $0x10c] sm:$0xf]
      %v1679 = vld [vmem:[#allocation2 + $0x110] sm:$0x1]
      %v1680 = vld [vmem:[#allocation2 + $0x114] sm:$0xf]
      %v1681 = vld [vmem:[#allocation2 + $0x118] sm:$0xf]
      %v1682 = vld [vmem:[#allocation2 + $0x11c] sm:$0x1]
      %v1683 = vld [vmem:[#allocation2 + $0x120] sm:$0xf]
      %v1684 = vld [vmem:[#allocation2 + $0x124] sm:$0xf]
      %v1685 = vld [vmem:[#allocation2 + $0x128] sm:$0x1]
      %v1686 = vld [vmem:[#allocation2 + $0x12c] sm:$0xf]
      %v1687 = vld [vmem:[#allocation2 + $0x130] sm:$0xf]
      %v1688 = vld [vmem:[#allocation2 + $0x134] sm:$0x1]
      %v1689 = vld [vmem:[#allocation2 + $0x138] sm:$0xf]
      %v1690 = vld [vmem:[#allocation2 + $0x13c] sm:$0xf]
      %v1691 = vld [vmem:[#allocation2 + $0x140] sm:$0x1]
      %v1692 = vld [vmem:[#allocation2 + $0x144] sm:$0xf]
      %v1693 = vld [vmem:[#allocation2 + $0x148] sm:$0xf]
      %v1694 = vld [vmem:[#allocation2 + $0x14c] sm:$0x1]
      %v1695 = vld [vmem:[#allocation2 + $0x150] sm:$0xf]
      %v1696 = vld [vmem:[#allocation2 + $0x154] sm:$0xf]
      %v1697 = vld [vmem:[#allocation2 + $0x158] sm:$0x1]
      %v1698 = vld [vmem:[#allocation2 + $0x15c] sm:$0xf]
      %v1699 = vld [vmem:[#allocation2 + $0x160] sm:$0xf]
      %v1700 = vld [vmem:[#allocation2 + $0x164] sm:$0x1]
      %v1701 = vld [vmem:[#allocation2 + $0x168] sm:$0xf]
      %v1702 = vld [vmem:[#allocation2 + $0x16c] sm:$0xf]
      %v1703 = vld [vmem:[#allocation2 + $0x170] sm:$0x1]
      %v1704 = vld [vmem:[#allocation2 + $0x174] sm:$0xf]
      %v1705 = vld [vmem:[#allocation2 + $0x178] sm:$0xf]
      %v1706 = vld [vmem:[#allocation2 + $0x17c] sm:$0x1]
      %v1763 = vunpack.c.l.b16 %v1611
      %v1764 = vunpack.c.l.b16 %v1612
      %v1765 = vunpack.c.l.b16 %v1614
      %v1766 = vunpack.c.l.b16 %v1615
      %v1767 = vunpack.c.l.b16 %v1617
      %v1768 = vunpack.c.l.b16 %v1618
      %v1769 = vunpack.c.l.b16 %v1620
      %v1770 = vunpack.c.l.b16 %v1621
      %v1771 = vunpack.c.l.b16 %v1623
      %v1772 = vunpack.c.l.b16 %v1624
      %v1773 = vunpack.c.l.b16 %v1626
      %v1774 = vunpack.c.l.b16 %v1627
      %v1775 = vunpack.c.l.b16 %v1629
      %v1776 = vunpack.c.l.b16 %v1630
      %v1777 = vunpack.c.l.b16 %v1632
      %v1778 = vunpack.c.l.b16 %v1633
      %v1779 = vunpack.c.l.b16 %v1635
      %v1780 = vunpack.c.l.b16 %v1636
      %v1781 = vunpack.c.l.b16 %v1638
      %v1782 = vunpack.c.l.b16 %v1639
      %v1783 = vunpack.c.l.b16 %v1641
      %v1784 = vunpack.c.l.b16 %v1642
      %v1785 = vunpack.c.l.b16 %v1644
      %v1786 = vunpack.c.l.b16 %v1645
      %v1787 = vunpack.c.l.b16 %v1647
      %v1788 = vunpack.c.l.b16 %v1648
      %v1789 = vunpack.c.l.b16 %v1650
      %v1790 = vunpack.c.l.b16 %v1651
      %v1791 = vunpack.c.l.b16 %v1659
      %v1792 = vunpack.c.l.b16 %v1660
      %v1793 = vunpack.c.l.b16 %v1662
      %v1794 = vunpack.c.l.b16 %v1663
      %v1795 = vunpack.c.l.b16 %v1665
      %v1796 = vunpack.c.l.b16 %v1666
      %v1797 = vunpack.c.l.b16 %v1668
      %v1798 = vunpack.c.l.b16 %v1669
      %v1799 = vunpack.c.l.b16 %v1671
      %v1800 = vunpack.c.l.b16 %v1672
      %v1801 = vunpack.c.l.b16 %v1674
      %v1802 = vunpack.c.l.b16 %v1675
      %v1803 = vunpack.c.l.b16 %v1677
      %v1804 = vunpack.c.l.b16 %v1678
      %v1805 = vunpack.c.l.b16 %v1680
      %v1806 = vunpack.c.l.b16 %v1681
      %v1807 = vunpack.c.l.b16 %v1683
      %v1808 = vunpack.c.l.b16 %v1684
      %v1809 = vunpack.c.l.b16 %v1686
      %v1810 = vunpack.c.l.b16 %v1687
      %v1811 = vunpack.c.l.b16 %v1689
      %v1812 = vunpack.c.l.b16 %v1690
      %v1813 = vunpack.c.l.b16 %v1692
      %v1814 = vunpack.c.l.b16 %v1693
      %v1815 = vunpack.c.l.b16 %v1695
      %v1816 = vunpack.c.l.b16 %v1696
      %v1817 = vunpack.c.l.b16 %v1698
      %v1818 = vunpack.c.l.b16 %v1699
      %v1819 = vpack.c.b16 %v1764, %v1763
      %v1820 = vpack.c.b16 %v1766, %v1765
      %v1821 = vpack.c.b16 %v1768, %v1767
      %v1822 = vpack.c.b16 %v1770, %v1769
      %v1823 = vpack.c.b16 %v1772, %v1771
      %v1824 = vpack.c.b16 %v1774, %v1773
      %v1825 = vpack.c.b16 %v1776, %v1775
      %v1826 = vpack.c.b16 %v1778, %v1777
      %v1827 = vpack.c.b16 %v1780, %v1779
      %v1828 = vpack.c.b16 %v1782, %v1781
      %v1829 = vpack.c.b16 %v1784, %v1783
      %v1830 = vpack.c.b16 %v1786, %v1785
      %v1831 = vpack.c.b16 %v1788, %v1787
      %v1832 = vpack.c.b16 %v1790, %v1789
      %v1833 = vpack.c.b16 %v1792, %v1791
      %v1834 = vpack.c.b16 %v1794, %v1793
      %v1835 = vpack.c.b16 %v1796, %v1795
      %v1836 = vpack.c.b16 %v1798, %v1797
      %v1837 = vpack.c.b16 %v1800, %v1799
      %v1838 = vpack.c.b16 %v1802, %v1801
      %v1839 = vpack.c.b16 %v1804, %v1803
      %v1840 = vpack.c.b16 %v1806, %v1805
      %v1841 = vpack.c.b16 %v1808, %v1807
      %v1842 = vpack.c.b16 %v1810, %v1809
      %v1843 = vpack.c.b16 %v1812, %v1811
      %v1844 = vpack.c.b16 %v1814, %v1813
      %v1845 = vpack.c.b16 %v1816, %v1815
      %v1846 = vpack.c.b16 %v1818, %v1817
      %v1875 = vunpack.c.l.b16 %v1613
      %v1876 = vunpack.c.l.b16 %v1616
      %v1877 = vunpack.c.l.b16 %v1619
      %v1878 = vunpack.c.l.b16 %v1622
      %v1879 = vunpack.c.l.b16 %v1625
      %v1880 = vunpack.c.l.b16 %v1628
      %v1881 = vunpack.c.l.b16 %v1631
      %v1882 = vunpack.c.l.b16 %v1634
      %v1883 = vunpack.c.l.b16 %v1637
      %v1884 = vunpack.c.l.b16 %v1640
      %v1885 = vunpack.c.l.b16 %v1643
      %v1886 = vunpack.c.l.b16 %v1646
      %v1887 = vunpack.c.l.b16 %v1649
      %v1888 = vunpack.c.l.b16 %v1652
      %v1889 = vunpack.c.l.b16 %v1661
      %v1890 = vunpack.c.l.b16 %v1664
      %v1891 = vunpack.c.l.b16 %v1667
      %v1892 = vunpack.c.l.b16 %v1670
      %v1893 = vunpack.c.l.b16 %v1673
      %v1894 = vunpack.c.l.b16 %v1676
      %v1895 = vunpack.c.l.b16 %v1679
      %v1896 = vunpack.c.l.b16 %v1682
      %v1897 = vunpack.c.l.b16 %v1685
      %v1898 = vunpack.c.l.b16 %v1688
      %v1899 = vunpack.c.l.b16 %v1691
      %v1900 = vunpack.c.l.b16 %v1694
      %v1901 = vunpack.c.l.b16 %v1697
      %v1902 = vunpack.c.l.b16 %v1700
      %v1903 = vpack.c.b16 %v1875, %v1875
      %v1904 = vpack.c.b16 %v1876, %v1876
      %v1905 = vpack.c.b16 %v1877, %v1877
      %v1906 = vpack.c.b16 %v1878, %v1878
      %v1907 = vpack.c.b16 %v1879, %v1879
      %v1908 = vpack.c.b16 %v1880, %v1880
      %v1909 = vpack.c.b16 %v1881, %v1881
      %v1910 = vpack.c.b16 %v1882, %v1882
      %v1911 = vpack.c.b16 %v1883, %v1883
      %v1912 = vpack.c.b16 %v1884, %v1884
      %v1913 = vpack.c.b16 %v1885, %v1885
      %v1914 = vpack.c.b16 %v1886, %v1886
      %v1915 = vpack.c.b16 %v1887, %v1887
      %v1916 = vpack.c.b16 %v1888, %v1888
      %v1917 = vpack.c.b16 %v1889, %v1889
      %v1918 = vpack.c.b16 %v1890, %v1890
      %v1919 = vpack.c.b16 %v1891, %v1891
      %v1920 = vpack.c.b16 %v1892, %v1892
      %v1921 = vpack.c.b16 %v1893, %v1893
      %v1922 = vpack.c.b16 %v1894, %v1894
      %v1923 = vpack.c.b16 %v1895, %v1895
      %v1924 = vpack.c.b16 %v1896, %v1896
      %v1925 = vpack.c.b16 %v1897, %v1897
      %v1926 = vpack.c.b16 %v1898, %v1898
      %v1927 = vpack.c.b16 %v1899, %v1899
      %v1928 = vpack.c.b16 %v1900, %v1900
      %v1929 = vpack.c.b16 %v1901, %v1901
      %v1930 = vpack.c.b16 %v1902, %v1902
      %vm1931 = vsmask.f32 7424
      %v1933 = vshrl.u32 %v1819, 16
      %v1935 = vshll.u32 %v1819, 16
      %v1937 = vrot.slane %v1935, 1
      %v1938 = vor.u32 %v1933, %v1937
      %v1940 = vshll.u32 %v1903, 16
      %v1942 = vrot.slane %v1940, 1
      %v1943 = vsel %vm1931, %v1938, %v1942
      %v1945 = vshrl.u32 %v1820, 16
      %v1947 = vshll.u32 %v1820, 16
      %v1949 = vrot.slane %v1947, 1
      %v1950 = vor.u32 %v1945, %v1949
      %v1952 = vshll.u32 %v1904, 16
      %v1954 = vrot.slane %v1952, 1
      %v1955 = vsel %vm1931, %v1950, %v1954
      %v1957 = vshrl.u32 %v1821, 16
      %v1959 = vshll.u32 %v1821, 16
      %v1961 = vrot.slane %v1959, 1
      %v1962 = vor.u32 %v1957, %v1961
      %v1964 = vshll.u32 %v1905, 16
      %v1966 = vrot.slane %v1964, 1
      %v1967 = vsel %vm1931, %v1962, %v1966
      %v1969 = vshrl.u32 %v1822, 16
      %v1971 = vshll.u32 %v1822, 16
      %v1973 = vrot.slane %v1971, 1
      %v1974 = vor.u32 %v1969, %v1973
      %v1976 = vshll.u32 %v1906, 16
      %v1978 = vrot.slane %v1976, 1
      %v1979 = vsel %vm1931, %v1974, %v1978
      %v1981 = vshrl.u32 %v1823, 16
      %v1983 = vshll.u32 %v1823, 16
      %v1985 = vrot.slane %v1983, 1
      %v1986 = vor.u32 %v1981, %v1985
      %v1988 = vshll.u32 %v1907, 16
      %v1990 = vrot.slane %v1988, 1
      %v1991 = vsel %vm1931, %v1986, %v1990
      %v1993 = vshrl.u32 %v1824, 16
      %v1995 = vshll.u32 %v1824, 16
      %v1997 = vrot.slane %v1995, 1
      %v1998 = vor.u32 %v1993, %v1997
      %v2000 = vshll.u32 %v1908, 16
      %v2002 = vrot.slane %v2000, 1
      %v2003 = vsel %vm1931, %v1998, %v2002
      %v2005 = vshrl.u32 %v1825, 16
      %v2007 = vshll.u32 %v1825, 16
      %v2009 = vrot.slane %v2007, 1
      %v2010 = vor.u32 %v2005, %v2009
      %v2012 = vshll.u32 %v1909, 16
      %v2014 = vrot.slane %v2012, 1
      %v2015 = vsel %vm1931, %v2010, %v2014
      %v2017 = vshrl.u32 %v1826, 16
      %v2019 = vshll.u32 %v1826, 16
      %v2021 = vrot.slane %v2019, 1
      %v2022 = vor.u32 %v2017, %v2021
      %v2024 = vshll.u32 %v1910, 16
      %v2026 = vrot.slane %v2024, 1
      %v2027 = vsel %vm1931, %v2022, %v2026
      %v2029 = vshrl.u32 %v1827, 16
      %v2031 = vshll.u32 %v1827, 16
      %v2033 = vrot.slane %v2031, 1
      %v2034 = vor.u32 %v2029, %v2033
      %v2036 = vshll.u32 %v1911, 16
      %v2038 = vrot.slane %v2036, 1
      %v2039 = vsel %vm1931, %v2034, %v2038
      %v2041 = vshrl.u32 %v1828, 16
      %v2043 = vshll.u32 %v1828, 16
      %v2045 = vrot.slane %v2043, 1
      %v2046 = vor.u32 %v2041, %v2045
      %v2048 = vshll.u32 %v1912, 16
      %v2050 = vrot.slane %v2048, 1
      %v2051 = vsel %vm1931, %v2046, %v2050
      %v2053 = vshrl.u32 %v1829, 16
      %v2055 = vshll.u32 %v1829, 16
      %v2057 = vrot.slane %v2055, 1
      %v2058 = vor.u32 %v2053, %v2057
      %v2060 = vshll.u32 %v1913, 16
      %v2062 = vrot.slane %v2060, 1
      %v2063 = vsel %vm1931, %v2058, %v2062
      %v2065 = vshrl.u32 %v1830, 16
      %v2067 = vshll.u32 %v1830, 16
      %v2069 = vrot.slane %v2067, 1
      %v2070 = vor.u32 %v2065, %v2069
      %v2072 = vshll.u32 %v1914, 16
      %v2074 = vrot.slane %v2072, 1
      %v2075 = vsel %vm1931, %v2070, %v2074
      %v2077 = vshrl.u32 %v1831, 16
      %v2079 = vshll.u32 %v1831, 16
      %v2081 = vrot.slane %v2079, 1
      %v2082 = vor.u32 %v2077, %v2081
      %v2084 = vshll.u32 %v1915, 16
      %v2086 = vrot.slane %v2084, 1
      %v2087 = vsel %vm1931, %v2082, %v2086
      %v2089 = vshrl.u32 %v1832, 16
      %v2091 = vshll.u32 %v1832, 16
      %v2093 = vrot.slane %v2091, 1
      %v2094 = vor.u32 %v2089, %v2093
      %v2096 = vshll.u32 %v1916, 16
      %v2098 = vrot.slane %v2096, 1
      %v2099 = vsel %vm1931, %v2094, %v2098
      %v2101 = vshrl.u32 %v1833, 16
      %v2103 = vshll.u32 %v1833, 16
      %v2105 = vrot.slane %v2103, 1
      %v2106 = vor.u32 %v2101, %v2105
      %v2108 = vshll.u32 %v1917, 16
      %v2110 = vrot.slane %v2108, 1
      %v2111 = vsel %vm1931, %v2106, %v2110
      %v2113 = vshrl.u32 %v1834, 16
      %v2115 = vshll.u32 %v1834, 16
      %v2117 = vrot.slane %v2115, 1
      %v2118 = vor.u32 %v2113, %v2117
      %v2120 = vshll.u32 %v1918, 16
      %v2122 = vrot.slane %v2120, 1
      %v2123 = vsel %vm1931, %v2118, %v2122
      %v2125 = vshrl.u32 %v1835, 16
      %v2127 = vshll.u32 %v1835, 16
      %v2129 = vrot.slane %v2127, 1
      %v2130 = vor.u32 %v2125, %v2129
      %v2132 = vshll.u32 %v1919, 16
      %v2134 = vrot.slane %v2132, 1
      %v2135 = vsel %vm1931, %v2130, %v2134
      %v2137 = vshrl.u32 %v1836, 16
      %v2139 = vshll.u32 %v1836, 16
      %v2141 = vrot.slane %v2139, 1
      %v2142 = vor.u32 %v2137, %v2141
      %v2144 = vshll.u32 %v1920, 16
      %v2146 = vrot.slane %v2144, 1
      %v2147 = vsel %vm1931, %v2142, %v2146
      %v2149 = vshrl.u32 %v1837, 16
      %v2151 = vshll.u32 %v1837, 16
      %v2153 = vrot.slane %v2151, 1
      %v2154 = vor.u32 %v2149, %v2153
      %v2156 = vshll.u32 %v1921, 16
      %v2158 = vrot.slane %v2156, 1
      %v2159 = vsel %vm1931, %v2154, %v2158
      %v2161 = vshrl.u32 %v1838, 16
      %v2163 = vshll.u32 %v1838, 16
      %v2165 = vrot.slane %v2163, 1
      %v2166 = vor.u32 %v2161, %v2165
      %v2168 = vshll.u32 %v1922, 16
      %v2170 = vrot.slane %v2168, 1
      %v2171 = vsel %vm1931, %v2166, %v2170
      %v2173 = vshrl.u32 %v1839, 16
      %v2175 = vshll.u32 %v1839, 16
      %v2177 = vrot.slane %v2175, 1
      %v2178 = vor.u32 %v2173, %v2177
      %v2180 = vshll.u32 %v1923, 16
      %v2182 = vrot.slane %v2180, 1
      %v2183 = vsel %vm1931, %v2178, %v2182
      %v2185 = vshrl.u32 %v1840, 16
      %v2187 = vshll.u32 %v1840, 16
      %v2189 = vrot.slane %v2187, 1
      %v2190 = vor.u32 %v2185, %v2189
      %v2192 = vshll.u32 %v1924, 16
      %v2194 = vrot.slane %v2192, 1
      %v2195 = vsel %vm1931, %v2190, %v2194
      %v2197 = vshrl.u32 %v1841, 16
      %v2199 = vshll.u32 %v1841, 16
      %v2201 = vrot.slane %v2199, 1
      %v2202 = vor.u32 %v2197, %v2201
      %v2204 = vshll.u32 %v1925, 16
      %v2206 = vrot.slane %v2204, 1
      %v2207 = vsel %vm1931, %v2202, %v2206
      %v2209 = vshrl.u32 %v1842, 16
      %v2211 = vshll.u32 %v1842, 16
      %v2213 = vrot.slane %v2211, 1
      %v2214 = vor.u32 %v2209, %v2213
      %v2216 = vshll.u32 %v1926, 16
      %v2218 = vrot.slane %v2216, 1
      %v2219 = vsel %vm1931, %v2214, %v2218
      %v2221 = vshrl.u32 %v1843, 16
      %v2223 = vshll.u32 %v1843, 16
      %v2225 = vrot.slane %v2223, 1
      %v2226 = vor.u32 %v2221, %v2225
      %v2228 = vshll.u32 %v1927, 16
      %v2230 = vrot.slane %v2228, 1
      %v2231 = vsel %vm1931, %v2226, %v2230
      %v2233 = vshrl.u32 %v1844, 16
      %v2235 = vshll.u32 %v1844, 16
      %v2237 = vrot.slane %v2235, 1
      %v2238 = vor.u32 %v2233, %v2237
      %v2240 = vshll.u32 %v1928, 16
      %v2242 = vrot.slane %v2240, 1
      %v2243 = vsel %vm1931, %v2238, %v2242
      %v2245 = vshrl.u32 %v1845, 16
      %v2247 = vshll.u32 %v1845, 16
      %v2249 = vrot.slane %v2247, 1
      %v2250 = vor.u32 %v2245, %v2249
      %v2252 = vshll.u32 %v1929, 16
      %v2254 = vrot.slane %v2252, 1
      %v2255 = vsel %vm1931, %v2250, %v2254
      %v2257 = vshrl.u32 %v1846, 16
      %v2259 = vshll.u32 %v1846, 16
      %v2261 = vrot.slane %v2259, 1
      %v2262 = vor.u32 %v2257, %v2261
      %v2264 = vshll.u32 %v1930, 16
      %v2266 = vrot.slane %v2264, 1
      %v2267 = vsel %vm1931, %v2262, %v2266
      %2268 = vrot.lane.b32.xlu0 %v1943, 4
      %v2269 = vpop.permute.xlu0 %2268
      %2270 = vrot.lane.b32.xlu0 %v1955, 4
      %v2271 = vpop.permute.xlu0 %2270
      %2272 = vrot.lane.b32.xlu0 %v1967, 4
      %v2273 = vpop.permute.xlu0 %2272
      %2274 = vrot.lane.b32.xlu0 %v1979, 4
      %v2275 = vpop.permute.xlu0 %2274
      %2276 = vrot.lane.b32.xlu0 %v1991, 4
      %v2277 = vpop.permute.xlu0 %2276
      %2278 = vrot.lane.b32.xlu0 %v2003, 4
      %v2279 = vpop.permute.xlu0 %2278
      %2280 = vrot.lane.b32.xlu0 %v2015, 4
      %v2281 = vpop.permute.xlu0 %2280
      %2282 = vrot.lane.b32.xlu0 %v2027, 4
      %v2283 = vpop.permute.xlu0 %2282
      %2284 = vrot.lane.b32.xlu0 %v2039, 4
      %v2285 = vpop.permute.xlu0 %2284
      %2286 = vrot.lane.b32.xlu0 %v2051, 4
      %v2287 = vpop.permute.xlu0 %2286
      %2288 = vrot.lane.b32.xlu0 %v2063, 4
      %v2289 = vpop.permute.xlu0 %2288
      %2290 = vrot.lane.b32.xlu0 %v2075, 4
      %v2291 = vpop.permute.xlu0 %2290
      %2292 = vrot.lane.b32.xlu0 %v2087, 4
      %v2293 = vpop.permute.xlu0 %2292
      %2294 = vrot.lane.b32.xlu0 %v2099, 4
      %v2295 = vpop.permute.xlu0 %2294
      %2296 = vrot.lane.b32.xlu0 %v2111, 4
      %v2297 = vpop.permute.xlu0 %2296
      %2298 = vrot.lane.b32.xlu0 %v2123, 4
      %v2299 = vpop.permute.xlu0 %2298
      %2300 = vrot.lane.b32.xlu0 %v2135, 4
      %v2301 = vpop.permute.xlu0 %2300
      %2302 = vrot.lane.b32.xlu0 %v2147, 4
      %v2303 = vpop.permute.xlu0 %2302
      %2304 = vrot.lane.b32.xlu0 %v2159, 4
      %v2305 = vpop.permute.xlu0 %2304
      %2306 = vrot.lane.b32.xlu0 %v2171, 4
      %v2307 = vpop.permute.xlu0 %2306
      %2308 = vrot.lane.b32.xlu0 %v2183, 4
      %v2309 = vpop.permute.xlu0 %2308
      %2310 = vrot.lane.b32.xlu0 %v2195, 4
      %v2311 = vpop.permute.xlu0 %2310
      %2312 = vrot.lane.b32.xlu0 %v2207, 4
      %v2313 = vpop.permute.xlu0 %2312
      %2314 = vrot.lane.b32.xlu0 %v2219, 4
      %v2315 = vpop.permute.xlu0 %2314
      %2316 = vrot.lane.b32.xlu0 %v2231, 4
      %v2317 = vpop.permute.xlu0 %2316
      %2318 = vrot.lane.b32.xlu0 %v2243, 4
      %v2319 = vpop.permute.xlu0 %2318
      %2320 = vrot.lane.b32.xlu0 %v2255, 4
      %v2321 = vpop.permute.xlu0 %2320
      %2322 = vrot.lane.b32.xlu0 %v2267, 4
      %v2323 = vpop.permute.xlu0 %2322
      %vm2324 = vcmask 1046528
      %v2325 = vrot.slane %v1819, 1
      %v2326 = vrot.slane %v1903, 1
      %v2327 = vsel %vm2324, %v2325, %v2326
      %v2328 = vrot.slane %v1820, 1
      %v2329 = vrot.slane %v1904, 1
      %v2330 = vsel %vm2324, %v2328, %v2329
      %v2331 = vrot.slane %v1821, 1
      %v2332 = vrot.slane %v1905, 1
      %v2333 = vsel %vm2324, %v2331, %v2332
      %v2334 = vrot.slane %v1822, 1
      %v2335 = vrot.slane %v1906, 1
      %v2336 = vsel %vm2324, %v2334, %v2335
      %v2337 = vrot.slane %v1823, 1
      %v2338 = vrot.slane %v1907, 1
      %v2339 = vsel %vm2324, %v2337, %v2338
      %v2340 = vrot.slane %v1824, 1
      %v2341 = vrot.slane %v1908, 1
      %v2342 = vsel %vm2324, %v2340, %v2341
      %v2343 = vrot.slane %v1825, 1
      %v2344 = vrot.slane %v1909, 1
      %v2345 = vsel %vm2324, %v2343, %v2344
      %v2346 = vrot.slane %v1826, 1
      %v2347 = vrot.slane %v1910, 1
      %v2348 = vsel %vm2324, %v2346, %v2347
      %v2349 = vrot.slane %v1827, 1
      %v2350 = vrot.slane %v1911, 1
      %v2351 = vsel %vm2324, %v2349, %v2350
      %v2352 = vrot.slane %v1828, 1
      %v2353 = vrot.slane %v1912, 1
      %v2354 = vsel %vm2324, %v2352, %v2353
      %v2355 = vrot.slane %v1829, 1
      %v2356 = vrot.slane %v1913, 1
      %v2357 = vsel %vm2324, %v2355, %v2356
      %v2358 = vrot.slane %v1830, 1
      %v2359 = vrot.slane %v1914, 1
      %v2360 = vsel %vm2324, %v2358, %v2359
      %v2361 = vrot.slane %v1831, 1
      %v2362 = vrot.slane %v1915, 1
      %v2363 = vsel %vm2324, %v2361, %v2362
      %v2364 = vrot.slane %v1832, 1
      %v2365 = vrot.slane %v1916, 1
      %v2366 = vsel %vm2324, %v2364, %v2365
      %v2367 = vrot.slane %v1833, 1
      %v2368 = vrot.slane %v1917, 1
      %v2369 = vsel %vm2324, %v2367, %v2368
      %v2370 = vrot.slane %v1834, 1
      %v2371 = vrot.slane %v1918, 1
      %v2372 = vsel %vm2324, %v2370, %v2371
      %v2373 = vrot.slane %v1835, 1
      %v2374 = vrot.slane %v1919, 1
      %v2375 = vsel %vm2324, %v2373, %v2374
      %v2376 = vrot.slane %v1836, 1
      %v2377 = vrot.slane %v1920, 1
      %v2378 = vsel %vm2324, %v2376, %v2377
      %v2379 = vrot.slane %v1837, 1
      %v2380 = vrot.slane %v1921, 1
      %v2381 = vsel %vm2324, %v2379, %v2380
      %v2382 = vrot.slane %v1838, 1
      %v2383 = vrot.slane %v1922, 1
      %v2384 = vsel %vm2324, %v2382, %v2383
      %v2385 = vrot.slane %v1839, 1
      %v2386 = vrot.slane %v1923, 1
      %v2387 = vsel %vm2324, %v2385, %v2386
      %v2388 = vrot.slane %v1840, 1
      %v2389 = vrot.slane %v1924, 1
      %v2390 = vsel %vm2324, %v2388, %v2389
      %v2391 = vrot.slane %v1841, 1
      %v2392 = vrot.slane %v1925, 1
      %v2393 = vsel %vm2324, %v2391, %v2392
      %v2394 = vrot.slane %v1842, 1
      %v2395 = vrot.slane %v1926, 1
      %v2396 = vsel %vm2324, %v2394, %v2395
      %v2397 = vrot.slane %v1843, 1
      %v2398 = vrot.slane %v1927, 1
      %v2399 = vsel %vm2324, %v2397, %v2398
      %v2400 = vrot.slane %v1844, 1
      %v2401 = vrot.slane %v1928, 1
      %v2402 = vsel %vm2324, %v2400, %v2401
      %v2403 = vrot.slane %v1845, 1
      %v2404 = vrot.slane %v1929, 1
      %v2405 = vsel %vm2324, %v2403, %v2404
      %v2406 = vrot.slane %v1846, 1
      %v2407 = vrot.slane %v1930, 1
      %v2408 = vsel %vm2324, %v2406, %v2407
      %2409 = vrot.lane.b32.xlu0 %v2327, 8
      %v2410 = vpop.permute.xlu0 %2409
      %2411 = vrot.lane.b32.xlu0 %v2330, 8
      %v2412 = vpop.permute.xlu0 %2411
      %2413 = vrot.lane.b32.xlu0 %v2333, 8
      %v2414 = vpop.permute.xlu0 %2413
      %2415 = vrot.lane.b32.xlu0 %v2336, 8
      %v2416 = vpop.permute.xlu0 %2415
      %2417 = vrot.lane.b32.xlu0 %v2339, 8
      %v2418 = vpop.permute.xlu0 %2417
      %2419 = vrot.lane.b32.xlu0 %v2342, 8
      %v2420 = vpop.permute.xlu0 %2419
      %2421 = vrot.lane.b32.xlu0 %v2345, 8
      %v2422 = vpop.permute.xlu0 %2421
      %2423 = vrot.lane.b32.xlu0 %v2348, 8
      %v2424 = vpop.permute.xlu0 %2423
      %2425 = vrot.lane.b32.xlu0 %v2351, 8
      %v2426 = vpop.permute.xlu0 %2425
      %2427 = vrot.lane.b32.xlu0 %v2354, 8
      %v2428 = vpop.permute.xlu0 %2427
      %2429 = vrot.lane.b32.xlu0 %v2357, 8
      %v2430 = vpop.permute.xlu0 %2429
      %2431 = vrot.lane.b32.xlu0 %v2360, 8
      %v2432 = vpop.permute.xlu0 %2431
      %2433 = vrot.lane.b32.xlu0 %v2363, 8
      %v2434 = vpop.permute.xlu0 %2433
      %2435 = vrot.lane.b32.xlu0 %v2366, 8
      %v2436 = vpop.permute.xlu0 %2435
      %2437 = vrot.lane.b32.xlu0 %v2369, 8
      %v2438 = vpop.permute.xlu0 %2437
      %2439 = vrot.lane.b32.xlu0 %v2372, 8
      %v2440 = vpop.permute.xlu0 %2439
      %2441 = vrot.lane.b32.xlu0 %v2375, 8
      %v2442 = vpop.permute.xlu0 %2441
      %2443 = vrot.lane.b32.xlu0 %v2378, 8
      %v2444 = vpop.permute.xlu0 %2443
      %2445 = vrot.lane.b32.xlu0 %v2381, 8
      %v2446 = vpop.permute.xlu0 %2445
      %2447 = vrot.lane.b32.xlu0 %v2384, 8
      %v2448 = vpop.permute.xlu0 %2447
      %2449 = vrot.lane.b32.xlu0 %v2387, 8
      %v2450 = vpop.permute.xlu0 %2449
      %2451 = vrot.lane.b32.xlu0 %v2390, 8
      %v2452 = vpop.permute.xlu0 %2451
      %2453 = vrot.lane.b32.xlu0 %v2393, 8
      %v2454 = vpop.permute.xlu0 %2453
      %2455 = vrot.lane.b32.xlu0 %v2396, 8
      %v2456 = vpop.permute.xlu0 %2455
      %2457 = vrot.lane.b32.xlu0 %v2399, 8
      %v2458 = vpop.permute.xlu0 %2457
      %2459 = vrot.lane.b32.xlu0 %v2402, 8
      %v2460 = vpop.permute.xlu0 %2459
      %2461 = vrot.lane.b32.xlu0 %v2405, 8
      %v2462 = vpop.permute.xlu0 %2461
      %2463 = vrot.lane.b32.xlu0 %v2408, 8
      %v2464 = vpop.permute.xlu0 %2463
      %vm2465 = vcmask 31744
      %v2467 = vsel %vm2465, %v1819, %v2269
      %v2469 = vsel %vm2465, %v1820, %v2271
      %v2471 = vsel %vm2465, %v1821, %v2273
      %v2473 = vsel %vm2465, %v1822, %v2275
      %v2475 = vsel %vm2465, %v1823, %v2277
      %v2477 = vsel %vm2465, %v1824, %v2279
      %v2479 = vsel %vm2465, %v1825, %v2281
      %v2481 = vsel %vm2465, %v1826, %v2283
      %v2483 = vsel %vm2465, %v1827, %v2285
      %v2485 = vsel %vm2465, %v1828, %v2287
      %v2487 = vsel %vm2465, %v1829, %v2289
      %v2489 = vsel %vm2465, %v1830, %v2291
      %v2491 = vsel %vm2465, %v1831, %v2293
      %v2493 = vsel %vm2465, %v1832, %v2295
      %v2495 = vsel %vm2465, %v1833, %v2297
      %v2497 = vsel %vm2465, %v1834, %v2299
      %v2499 = vsel %vm2465, %v1835, %v2301
      %v2501 = vsel %vm2465, %v1836, %v2303
      %v2503 = vsel %vm2465, %v1837, %v2305
      %v2505 = vsel %vm2465, %v1838, %v2307
      %v2507 = vsel %vm2465, %v1839, %v2309
      %v2509 = vsel %vm2465, %v1840, %v2311
      %v2511 = vsel %vm2465, %v1841, %v2313
      %v2513 = vsel %vm2465, %v1842, %v2315
      %v2515 = vsel %vm2465, %v1843, %v2317
      %v2517 = vsel %vm2465, %v1844, %v2319
      %v2519 = vsel %vm2465, %v1845, %v2321
      %v2521 = vsel %vm2465, %v1846, %v2323
      %vm2522 = vcmask 64512
      %v2524 = vsel %vm2522, %v2467, %v2410
      %v2526 = vsel %vm2522, %v2469, %v2412
      %v2528 = vsel %vm2522, %v2471, %v2414
      %v2530 = vsel %vm2522, %v2473, %v2416
      %v2532 = vsel %vm2522, %v2475, %v2418
      %v2534 = vsel %vm2522, %v2477, %v2420
      %v2536 = vsel %vm2522, %v2479, %v2422
      %v2538 = vsel %vm2522, %v2481, %v2424
      %v2540 = vsel %vm2522, %v2483, %v2426
      %v2542 = vsel %vm2522, %v2485, %v2428
      %v2544 = vsel %vm2522, %v2487, %v2430
      %v2546 = vsel %vm2522, %v2489, %v2432
      %v2548 = vsel %vm2522, %v2491, %v2434
      %v2550 = vsel %vm2522, %v2493, %v2436
      %v2552 = vsel %vm2522, %v2495, %v2438
      %v2554 = vsel %vm2522, %v2497, %v2440
      %v2556 = vsel %vm2522, %v2499, %v2442
      %v2558 = vsel %vm2522, %v2501, %v2444
      %v2560 = vsel %vm2522, %v2503, %v2446
      %v2562 = vsel %vm2522, %v2505, %v2448
      %v2564 = vsel %vm2522, %v2507, %v2450
      %v2566 = vsel %vm2522, %v2509, %v2452
      %v2568 = vsel %vm2522, %v2511, %v2454
      %v2570 = vsel %vm2522, %v2513, %v2456
      %v2572 = vsel %vm2522, %v2515, %v2458
      %v2574 = vsel %vm2522, %v2517, %v2460
      %v2576 = vsel %vm2522, %v2519, %v2462
      %v2578 = vsel %vm2522, %v2521, %v2464
      %v2579 = vld [vmem:[%s1] sm:$0xf]
      %v2580 = vld [vmem:[%s1 + $0x4] sm:$0x3]
      %v2585 = vunpack.c.l.b16 %v1653
      %v2586 = vunpack.c.l.b16 %v1654
      %v2587 = vunpack.c.l.b16 %v1701
      %v2588 = vunpack.c.l.b16 %v1702
      %v2589 = vpack.c.b16 %v2586, %v2585
      %v2590 = vpack.c.b16 %v2588, %v2587
      %v2593 = vunpack.c.l.b16 %v1655
      %v2594 = vunpack.c.l.b16 %v1703
      %v2595 = vpack.c.b16 %v2593, %v2593
      %v2596 = vpack.c.b16 %v2594, %v2594
      %v2598 = vshrl.u32 %v2589, 16
      %v2600 = vshll.u32 %v2589, 16
      %v2602 = vrot.slane %v2600, 1
      %v2603 = vor.u32 %v2598, %v2602
      %v2605 = vshll.u32 %v2595, 16
      %v2607 = vrot.slane %v2605, 1
      %v2608 = vsel %vm1931, %v2603, %v2607
      %v2610 = vshrl.u32 %v2590, 16
      %v2612 = vshll.u32 %v2590, 16
      %v2614 = vrot.slane %v2612, 1
      %v2615 = vor.u32 %v2610, %v2614
      %v2617 = vshll.u32 %v2596, 16
      %v2619 = vrot.slane %v2617, 1
      %v2620 = vsel %vm1931, %v2615, %v2619
      %2621 = vrot.lane.b32.xlu0 %v2608, 4
      %v2622 = vpop.permute.xlu0 %2621
      %2623 = vrot.lane.b32.xlu0 %v2620, 4
      %v2624 = vpop.permute.xlu0 %2623
      %v2625 = vrot.slane %v2589, 1
      %v2626 = vrot.slane %v2595, 1
      %v2627 = vsel %vm2324, %v2625, %v2626
      %v2628 = vrot.slane %v2590, 1
      %v2629 = vrot.slane %v2596, 1
      %v2630 = vsel %vm2324, %v2628, %v2629
      %2631 = vrot.lane.b32.xlu0 %v2627, 8
      %v2632 = vpop.permute.xlu0 %2631
      %2633 = vrot.lane.b32.xlu0 %v2630, 8
      %v2634 = vpop.permute.xlu0 %2633
      %v2636 = vsel %vm2465, %v2589, %v2622
      %v2638 = vsel %vm2465, %v2590, %v2624
      %v2640 = vsel %vm2522, %v2636, %v2632
      %v2642 = vsel %vm2522, %v2638, %v2634
      %s2643 = scalar_lea.vmem %s1, 8
      %v2644 = vld [vmem:[%s2643] sm:$0xf]
      %v2645 = vld [vmem:[%s2643 + $0x4] sm:$0x3]
      %v2648 = vunpack.c.l.b16 %v2644
      %v2649 = vunpack.c.l.b16 %v2645
      %v2650 = vpack.c.b16 %v2649, %v2648
      %vm2651 = vcmask 97280
      %v2652 = vsel %vm2651, %v2526, 0
      %v2654 = vsel %vm2651, %v2528, 0
      %v2656 = vsel %vm2651, %v2530, 0
      %v2658 = vsel %vm2651, %v2532, 0
      %v2660 = vsel %vm2651, %v2534, 0
      %v2662 = vsel %vm2651, %v2536, 0
      %v2664 = vsel %vm2651, %v2538, 0
      %v2666 = vsel %vm2651, %v2540, 0
      %v2668 = vsel %vm2651, %v2542, 0
      %v2670 = vsel %vm2651, %v2544, 0
      %v2672 = vsel %vm2651, %v2546, 0
      %v2674 = vsel %vm2651, %v2548, 0
      %v2676 = vsel %vm2651, %v2550, 0
      %v2678 = vsel %vm2651, %v2640, 0
      %v2680 = vsel %vm2651, %v2554, 0
      %v2682 = vsel %vm2651, %v2556, 0
      %v2684 = vsel %vm2651, %v2558, 0
      %v2686 = vsel %vm2651, %v2560, 0
      %v2688 = vsel %vm2651, %v2562, 0
      %v2690 = vsel %vm2651, %v2564, 0
      %v2692 = vsel %vm2651, %v2566, 0
      %v2694 = vsel %vm2651, %v2568, 0
      %v2696 = vsel %vm2651, %v2570, 0
      %v2698 = vsel %vm2651, %v2572, 0
      %v2700 = vsel %vm2651, %v2574, 0
      %v2702 = vsel %vm2651, %v2576, 0
      %v2704 = vsel %vm2651, %v2578, 0
      %v2706 = vsel %vm2651, %v2642, 0
      %vm2708 = vcmask 1045504
      %v2710 = vsel %vm2708, %v2650, 0
      %2712 = vmatprep.subr.bf16.mxu0 0
      %2713 = vmatpush1.bf16.msra.mxu0 %v2710
      %2714 = vmatprep.subr.bf16.mxu0 0
      %2715 = vmatpush1.bf16.msra.mxu0 0
      %2716 = vmatprep.subr.bf16.mxu0 0
      %2717 = vmatpush1.bf16.msra.mxu0 0
      %2718 = vmatprep.subr.bf16.mxu0 0
      %2719 = vmatpush1.bf16.msra.mxu0 0
      %2720 = vmatprep.subr.bf16.mxu0 0
      %2721 = vmatpush1.bf16.msra.mxu0 0
      %2722 = vmatprep.subr.bf16.mxu0 0
      %2723 = vmatpush1.bf16.msra.mxu0 0
      %2724 = vmatprep.subr.bf16.mxu0 0
      %2725 = vmatpush1.bf16.msra.mxu0 0
      %2726 = vmatprep.subr.bf16.mxu0 0
      %2727 = vmatpush1.bf16.msra.mxu0 0
      %2728 = vmatprep.subr.bf16.mxu0 0
      %2729 = vmatpush1.bf16.msra.mxu0 0
      %2730 = vmatprep.subr.bf16.mxu0 0
      %2731 = vmatpush1.bf16.msra.mxu0 0
      %2732 = vmatprep.subr.bf16.mxu0 0
      %2733 = vmatpush1.bf16.msra.mxu0 0
      %2734 = vmatprep.subr.bf16.mxu0 0
      %2735 = vmatpush1.bf16.msra.mxu0 0
      %2736 = vmatprep.subr.bf16.mxu0 0
      %2737 = vmatpush1.bf16.msra.mxu0 0
      %2738 = vmatprep.subr.bf16.mxu0 0
      %2739 = vmatpush1.bf16.msra.mxu0 0
      %2740 = vmatprep.subr.bf16.mxu0 0
      %2741 = vmatpush1.bf16.msra.mxu0 0
      %2742 = vmatprep.subr.bf16.mxu0 0
      %2743 = vmatpush1.bf16.msra.mxu0 0
      %2744 = vmatprep.mubr.bf16.mxu0 0
      %2745 = vmatmul.mubr.bf16.gmra.mrb[0].mxu0 %v2652
      %v2746 = vpop.f32.mrb[0].mxu0
      %v2747 = vadd.f32 0.0, %v2746
      %v2748 = vpop.f32.mrb[0].mxu0
      %v2749 = vpop.f32.mrb[0].mxu0
      %v2750 = vadd.f32 0.0, %v2749
      %v2751 = vpop.f32.mrb[0].mxu0
      %2752 = vmatprep.mubr.bf16.mxu0 0
      %2753 = vmatmul.mubr.bf16.gmra.mrb[0].mxu0 %v2654
      %v2754 = vpop.f32.mrb[0].mxu0
      %v2755 = vadd.f32 0.0, %v2754
      %v2756 = vpop.f32.mrb[0].mxu0
      %v2757 = vpop.f32.mrb[0].mxu0
      %v2758 = vadd.f32 0.0, %v2757
      %v2759 = vpop.f32.mrb[0].mxu0
      %2760 = vmatprep.mubr.bf16.mxu0 0
      %2761 = vmatmul.mubr.bf16.gmra.mrb[0].mxu0 %v2656
      %v2762 = vpop.f32.mrb[0].mxu0
      %v2763 = vadd.f32 0.0, %v2762
      %v2764 = vpop.f32.mrb[0].mxu0
      %v2765 = vpop.f32.mrb[0].mxu0
      %v2766 = vadd.f32 0.0, %v2765
      %v2767 = vpop.f32.mrb[0].mxu0
      %2768 = vmatprep.mubr.bf16.mxu0 0
      %2769 = vmatmul.mubr.bf16.gmra.mrb[0].mxu0 %v2658
      %v2770 = vpop.f32.mrb[0].mxu0
      %v2771 = vadd.f32 0.0, %v2770
      %v2772 = vpop.f32.mrb[0].mxu0
      %v2773 = vpop.f32.mrb[0].mxu0
      %v2774 = vadd.f32 0.0, %v2773
      %v2775 = vpop.f32.mrb[0].mxu0
      %2776 = vmatprep.mubr.bf16.mxu0 0
      %2777 = vmatmul.mubr.bf16.gmra.mrb[0].mxu0 %v2660
      %v2778 = vpop.f32.mrb[0].mxu0
      %v2779 = vadd.f32 0.0, %v2778
      %v2780 = vpop.f32.mrb[0].mxu0
      %v2781 = vpop.f32.mrb[0].mxu0
      %v2782 = vadd.f32 0.0, %v2781
      %v2783 = vpop.f32.mrb[0].mxu0
      %2784 = vmatprep.mubr.bf16.mxu0 0
      %2785 = vmatmul.mubr.bf16.gmra.mrb[0].mxu0 %v2662
      %v2786 = vpop.f32.mrb[0].mxu0
      %v2787 = vadd.f32 0.0, %v2786
      %v2788 = vpop.f32.mrb[0].mxu0
      %v2789 = vpop.f32.mrb[0].mxu0
      %v2790 = vadd.f32 0.0, %v2789
      %v2791 = vpop.f32.mrb[0].mxu0
      %2792 = vmatprep.mubr.bf16.mxu0 0
      %2793 = vmatmul.mubr.bf16.gmra.mrb[0].mxu0 %v2664
      %v2794 = vpop.f32.mrb[0].mxu0
      %v2795 = vadd.f32 0.0, %v2794
      %v2796 = vpop.f32.mrb[0].mxu0
      %v2797 = vpop.f32.mrb[0].mxu0
      %v2798 = vadd.f32 0.0, %v2797
      %v2799 = vpop.f32.mrb[0].mxu0
      %2800 = vmatprep.mubr.bf16.mxu0 0
      %2801 = vmatmul.mubr.bf16.gmra.mrb[0].mxu0 %v2666
      %v2802 = vpop.f32.mrb[0].mxu0
      %v2803 = vadd.f32 0.0, %v2802
      %v2804 = vpop.f32.mrb[0].mxu0
      %v2805 = vpop.f32.mrb[0].mxu0
      %v2806 = vadd.f32 0.0, %v2805
      %v2807 = vpop.f32.mrb[0].mxu0
      %2808 = vmatprep.mubr.bf16.mxu0 0
      %2809 = vmatmul.mubr.bf16.gmra.mrb[0].mxu0 %v2668
      %v2810 = vpop.f32.mrb[0].mxu0
      %v2811 = vadd.f32 0.0, %v2810
      %v2812 = vpop.f32.mrb[0].mxu0
      %v2813 = vpop.f32.mrb[0].mxu0
      %v2814 = vadd.f32 0.0, %v2813
      %v2815 = vpop.f32.mrb[0].mxu0
      %2816 = vmatprep.mubr.bf16.mxu0 0
      %2817 = vmatmul.mubr.bf16.gmra.mrb[0].mxu0 %v2670
      %v2818 = vpop.f32.mrb[0].mxu0
      %v2819 = vadd.f32 0.0, %v2818
      %v2820 = vpop.f32.mrb[0].mxu0
      %v2821 = vpop.f32.mrb[0].mxu0
      %v2822 = vadd.f32 0.0, %v2821
      %v2823 = vpop.f32.mrb[0].mxu0
      %2824 = vmatprep.mubr.bf16.mxu0 0
      %2825 = vmatmul.mubr.bf16.gmra.mrb[0].mxu0 %v2672
      %v2826 = vpop.f32.mrb[0].mxu0
      %v2827 = vadd.f32 0.0, %v2826
      %v2828 = vpop.f32.mrb[0].mxu0
      %v2829 = vpop.f32.mrb[0].mxu0
      %v2830 = vadd.f32 0.0, %v2829
      %v2831 = vpop.f32.mrb[0].mxu0
      %2832 = vmatprep.mubr.bf16.mxu0 0
      %2833 = vmatmul.mubr.bf16.gmra.mrb[0].mxu0 %v2674
      %v2834 = vpop.f32.mrb[0].mxu0
      %v2835 = vadd.f32 0.0, %v2834
      %v2836 = vpop.f32.mrb[0].mxu0
      %v2837 = vpop.f32.mrb[0].mxu0
      %v2838 = vadd.f32 0.0, %v2837
      %v2839 = vpop.f32.mrb[0].mxu0
      %2840 = vmatprep.mubr.bf16.mxu0 0
      %2841 = vmatmul.mubr.bf16.gmra.mrb[0].mxu0 %v2676
      %v2842 = vpop.f32.mrb[0].mxu0
      %v2843 = vadd.f32 0.0, %v2842
      %v2844 = vpop.f32.mrb[0].mxu0
      %v2845 = vpop.f32.mrb[0].mxu0
      %v2846 = vadd.f32 0.0, %v2845
      %v2847 = vpop.f32.mrb[0].mxu0
      %2848 = vmatprep.mubr.bf16.mxu0 0
      %2849 = vmatmul.mubr.bf16.gmra.mrb[0].mxu0 %v2678
      %v2850 = vpop.f32.mrb[0].mxu0
      %v2851 = vadd.f32 0.0, %v2850
      %v2852 = vpop.f32.mrb[0].mxu0
      %v2853 = vpop.f32.mrb[0].mxu0
      %v2854 = vadd.f32 0.0, %v2853
      %v2855 = vpop.f32.mrb[0].mxu0
      %2856 = vmatprep.mubr.bf16.mxu0 0
      %2857 = vmatmul.mubr.bf16.gmra.mrb[0].mxu0 %v2680
      %v2858 = vpop.f32.mrb[0].mxu0
      %v2859 = vadd.f32 0.0, %v2858
      %v2860 = vpop.f32.mrb[0].mxu0
      %v2861 = vpop.f32.mrb[0].mxu0
      %v2862 = vadd.f32 0.0, %v2861
      %v2863 = vpop.f32.mrb[0].mxu0
      %2864 = vmatprep.mubr.bf16.mxu0 0
      %2865 = vmatmul.mubr.bf16.gmra.mrb[0].mxu0 %v2682
      %v2866 = vpop.f32.mrb[0].mxu0
      %v2867 = vadd.f32 0.0, %v2866
      %v2868 = vpop.f32.mrb[0].mxu0
      %v2869 = vpop.f32.mrb[0].mxu0
      %v2870 = vadd.f32 0.0, %v2869
      %v2871 = vpop.f32.mrb[0].mxu0
      %2872 = vmatprep.mubr.bf16.mxu0 0
      %2873 = vmatmul.mubr.bf16.gmra.mrb[0].mxu0 %v2684
      %v2874 = vpop.f32.mrb[0].mxu0
      %v2875 = vadd.f32 0.0, %v2874
      %v2876 = vpop.f32.mrb[0].mxu0
      %v2877 = vpop.f32.mrb[0].mxu0
      %v2878 = vadd.f32 0.0, %v2877
      %v2879 = vpop.f32.mrb[0].mxu0
      %2880 = vmatprep.mubr.bf16.mxu0 0
      %2881 = vmatmul.mubr.bf16.gmra.mrb[0].mxu0 %v2686
      %v2882 = vpop.f32.mrb[0].mxu0
      %v2883 = vadd.f32 0.0, %v2882
      %v2884 = vpop.f32.mrb[0].mxu0
      %v2885 = vpop.f32.mrb[0].mxu0
      %v2886 = vadd.f32 0.0, %v2885
      %v2887 = vpop.f32.mrb[0].mxu0
      %2888 = vmatprep.mubr.bf16.mxu0 0
      %2889 = vmatmul.mubr.bf16.gmra.mrb[0].mxu0 %v2688
      %v2890 = vpop.f32.mrb[0].mxu0
      %v2891 = vadd.f32 0.0, %v2890
      %v2892 = vpop.f32.mrb[0].mxu0
      %v2893 = vpop.f32.mrb[0].mxu0
      %v2894 = vadd.f32 0.0, %v2893
      %v2895 = vpop.f32.mrb[0].mxu0
      %2896 = vmatprep.mubr.bf16.mxu0 0
      %2897 = vmatmul.mubr.bf16.gmra.mrb[0].mxu0 %v2690
      %v2898 = vpop.f32.mrb[0].mxu0
      %v2899 = vadd.f32 0.0, %v2898
      %v2900 = vpop.f32.mrb[0].mxu0
      %v2901 = vpop.f32.mrb[0].mxu0
      %v2902 = vadd.f32 0.0, %v2901
      %v2903 = vpop.f32.mrb[0].mxu0
      %2904 = vmatprep.mubr.bf16.mxu0 0
      %2905 = vmatmul.mubr.bf16.gmra.mrb[0].mxu0 %v2692
      %v2906 = vpop.f32.mrb[0].mxu0
      %v2907 = vadd.f32 0.0, %v2906
      %v2908 = vpop.f32.mrb[0].mxu0
      %v2909 = vpop.f32.mrb[0].mxu0
      %v2910 = vadd.f32 0.0, %v2909
      %v2911 = vpop.f32.mrb[0].mxu0
      %2912 = vmatprep.mubr.bf16.mxu0 0
      %2913 = vmatmul.mubr.bf16.gmra.mrb[0].mxu0 %v2694
      %v2914 = vpop.f32.mrb[0].mxu0
      %v2915 = vadd.f32 0.0, %v2914
      %v2916 = vpop.f32.mrb[0].mxu0
      %v2917 = vpop.f32.mrb[0].mxu0
      %v2918 = vadd.f32 0.0, %v2917
      %v2919 = vpop.f32.mrb[0].mxu0
      %2920 = vmatprep.mubr.bf16.mxu0 0
      %2921 = vmatmul.mubr.bf16.gmra.mrb[0].mxu0 %v2696
      %v2922 = vpop.f32.mrb[0].mxu0
      %v2923 = vadd.f32 0.0, %v2922
      %v2924 = vpop.f32.mrb[0].mxu0
      %v2925 = vpop.f32.mrb[0].mxu0
      %v2926 = vadd.f32 0.0, %v2925
      %v2927 = vpop.f32.mrb[0].mxu0
      %2928 = vmatprep.mubr.bf16.mxu0 0
      %2929 = vmatmul.mubr.bf16.gmra.mrb[0].mxu0 %v2698
      %v2930 = vpop.f32.mrb[0].mxu0
      %v2931 = vadd.f32 0.0, %v2930
      %v2932 = vpop.f32.mrb[0].mxu0
      %v2933 = vpop.f32.mrb[0].mxu0
      %v2934 = vadd.f32 0.0, %v2933
      %v2935 = vpop.f32.mrb[0].mxu0
      %2936 = vmatprep.mubr.bf16.mxu0 0
      %2937 = vmatmul.mubr.bf16.gmra.mrb[0].mxu0 %v2700
      %v2938 = vpop.f32.mrb[0].mxu0
      %v2939 = vadd.f32 0.0, %v2938
      %v2940 = vpop.f32.mrb[0].mxu0
      %v2941 = vpop.f32.mrb[0].mxu0
      %v2942 = vadd.f32 0.0, %v2941
      %v2943 = vpop.f32.mrb[0].mxu0
      %2944 = vmatprep.mubr.bf16.mxu0 0
      %2945 = vmatmul.mubr.bf16.gmra.mrb[0].mxu0 %v2702
      %v2946 = vpop.f32.mrb[0].mxu0
      %v2947 = vadd.f32 0.0, %v2946
      %v2948 = vpop.f32.mrb[0].mxu0
      %v2949 = vpop.f32.mrb[0].mxu0
      %v2950 = vadd.f32 0.0, %v2949
      %v2951 = vpop.f32.mrb[0].mxu0
      %2952 = vmatprep.mubr.bf16.mxu0 0
      %2953 = vmatmul.mubr.bf16.gmra.mrb[0].mxu0 %v2704
      %v2954 = vpop.f32.mrb[0].mxu0
      %v2955 = vadd.f32 0.0, %v2954
      %v2956 = vpop.f32.mrb[0].mxu0
      %v2957 = vpop.f32.mrb[0].mxu0
      %v2958 = vadd.f32 0.0, %v2957
      %v2959 = vpop.f32.mrb[0].mxu0
      %2960 = vmatprep.mubr.bf16.mxu0 0
      %2961 = vmatmul.mubr.bf16.gmra.mrb[0].mxu0 %v2706
      %v2962 = vpop.f32.mrb[0].mxu0
      %v2963 = vadd.f32 0.0, %v2962
      %v2964 = vpop.f32.mrb[0].mxu0
      %v2965 = vpop.f32.mrb[0].mxu0
      %v2966 = vadd.f32 0.0, %v2965
      %v2967 = vpop.f32.mrb[0].mxu0
      %2968 = vdwg.mxu0
      %v2971 = vunpack.c.l.b16 %v2579
      %v2972 = vunpack.c.l.b16 %v2580
      %v2973 = vpack.c.b16 %v2972, %v2971
      %v2974 = vsel %vm2651, %v2524, 0
      %v2976 = vsel %vm2651, %v2552, 0
      %v2979 = vsel %vm2708, %v2973, 0
      %2981 = vmatprep.subr.bf16.mxu0 0
      %2982 = vmatpush1.bf16.msra.mxu0 %v2979
      %2983 = vmatprep.subr.bf16.mxu0 0
      %2984 = vmatpush1.bf16.msra.mxu0 0
      %2985 = vmatprep.subr.bf16.mxu0 0
      %2986 = vmatpush1.bf16.msra.mxu0 0
      %2987 = vmatprep.subr.bf16.mxu0 0
      %2988 = vmatpush1.bf16.msra.mxu0 0
      %2989 = vmatprep.subr.bf16.mxu0 0
      %2990 = vmatpush1.bf16.msra.mxu0 0
      %2991 = vmatprep.subr.bf16.mxu0 0
      %2992 = vmatpush1.bf16.msra.mxu0 0
      %2993 = vmatprep.subr.bf16.mxu0 0
      %2994 = vmatpush1.bf16.msra.mxu0 0
      %2995 = vmatprep.subr.bf16.mxu0 0
      %2996 = vmatpush1.bf16.msra.mxu0 0
      %2997 = vmatprep.subr.bf16.mxu0 0
      %2998 = vmatpush1.bf16.msra.mxu0 0
      %2999 = vmatprep.subr.bf16.mxu0 0
      %3000 = vmatpush1.bf16.msra.mxu0 0
      %3001 = vmatprep.subr.bf16.mxu0 0
      %3002 = vmatpush1.bf16.msra.mxu0 0
      %3003 = vmatprep.subr.bf16.mxu0 0
      %3004 = vmatpush1.bf16.msra.mxu0 0
      %3005 = vmatprep.subr.bf16.mxu0 0
      %3006 = vmatpush1.bf16.msra.mxu0 0
      %3007 = vmatprep.subr.bf16.mxu0 0
      %3008 = vmatpush1.bf16.msra.mxu0 0
      %3009 = vmatprep.subr.bf16.mxu0 0
      %3010 = vmatpush1.bf16.msra.mxu0 0
      %3011 = vmatprep.subr.bf16.mxu0 0
      %3012 = vmatpush1.bf16.msra.mxu0 0
      %3013 = vmatprep.mubr.bf16.mxu0 0
      %3014 = vmatmul.mubr.bf16.gmra.mrb[0].mxu0 %v2974
      %v3015 = vpop.f32.mrb[0].mxu0
      %v3016 = vadd.f32 %v2747, %v3015
      %v3017 = vpop.f32.mrb[0].mxu0
      %v3018 = vpop.f32.mrb[0].mxu0
      %v3019 = vadd.f32 %v2750, %v3018
      %v3020 = vpop.f32.mrb[0].mxu0
      %3021 = vmatprep.mubr.bf16.mxu0 0
      %3022 = vmatmul.mubr.bf16.gmra.mrb[0].mxu0 %v2652
      %v3023 = vpop.f32.mrb[0].mxu0
      %v3024 = vadd.f32 %v2755, %v3023
      %v3025 = vpop.f32.mrb[0].mxu0
      %v3026 = vpop.f32.mrb[0].mxu0
      %v3027 = vadd.f32 %v2758, %v3026
      %v3028 = vpop.f32.mrb[0].mxu0
      %3029 = vmatprep.mubr.bf16.mxu0 0
      %3030 = vmatmul.mubr.bf16.gmra.mrb[0].mxu0 %v2654
      %v3031 = vpop.f32.mrb[0].mxu0
      %v3032 = vadd.f32 %v2763, %v3031
      %v3033 = vpop.f32.mrb[0].mxu0
      %v3034 = vpop.f32.mrb[0].mxu0
      %v3035 = vadd.f32 %v2766, %v3034
      %v3036 = vpop.f32.mrb[0].mxu0
      %3037 = vmatprep.mubr.bf16.mxu0 0
      %3038 = vmatmul.mubr.bf16.gmra.mrb[0].mxu0 %v2656
      %v3039 = vpop.f32.mrb[0].mxu0
      %v3040 = vadd.f32 %v2771, %v3039
      %v3041 = vpop.f32.mrb[0].mxu0
      %v3042 = vpop.f32.mrb[0].mxu0
      %v3043 = vadd.f32 %v2774, %v3042
      %v3044 = vpop.f32.mrb[0].mxu0
      %3045 = vmatprep.mubr.bf16.mxu0 0
      %3046 = vmatmul.mubr.bf16.gmra.mrb[0].mxu0 %v2658
      %v3047 = vpop.f32.mrb[0].mxu0
      %v3048 = vadd.f32 %v2779, %v3047
      %v3049 = vpop.f32.mrb[0].mxu0
      %v3050 = vpop.f32.mrb[0].mxu0
      %v3051 = vadd.f32 %v2782, %v3050
      %v3052 = vpop.f32.mrb[0].mxu0
      %3053 = vmatprep.mubr.bf16.mxu0 0
      %3054 = vmatmul.mubr.bf16.gmra.mrb[0].mxu0 %v2660
      %v3055 = vpop.f32.mrb[0].mxu0
      %v3056 = vadd.f32 %v2787, %v3055
      %v3057 = vpop.f32.mrb[0].mxu0
      %v3058 = vpop.f32.mrb[0].mxu0
      %v3059 = vadd.f32 %v2790, %v3058
      %v3060 = vpop.f32.mrb[0].mxu0
      %3061 = vmatprep.mubr.bf16.mxu0 0
      %3062 = vmatmul.mubr.bf16.gmra.mrb[0].mxu0 %v2662
      %v3063 = vpop.f32.mrb[0].mxu0
      %v3064 = vadd.f32 %v2795, %v3063
      %v3065 = vpop.f32.mrb[0].mxu0
      %v3066 = vpop.f32.mrb[0].mxu0
      %v3067 = vadd.f32 %v2798, %v3066
      %v3068 = vpop.f32.mrb[0].mxu0
      %3069 = vmatprep.mubr.bf16.mxu0 0
      %3070 = vmatmul.mubr.bf16.gmra.mrb[0].mxu0 %v2664
      %v3071 = vpop.f32.mrb[0].mxu0
      %v3072 = vadd.f32 %v2803, %v3071
      %v3073 = vpop.f32.mrb[0].mxu0
      %v3074 = vpop.f32.mrb[0].mxu0
      %v3075 = vadd.f32 %v2806, %v3074
      %v3076 = vpop.f32.mrb[0].mxu0
      %3077 = vmatprep.mubr.bf16.mxu0 0
      %3078 = vmatmul.mubr.bf16.gmra.mrb[0].mxu0 %v2666
      %v3079 = vpop.f32.mrb[0].mxu0
      %v3080 = vadd.f32 %v2811, %v3079
      %v3081 = vpop.f32.mrb[0].mxu0
      %v3082 = vpop.f32.mrb[0].mxu0
      %v3083 = vadd.f32 %v2814, %v3082
      %v3084 = vpop.f32.mrb[0].mxu0
      %3085 = vmatprep.mubr.bf16.mxu0 0
      %3086 = vmatmul.mubr.bf16.gmra.mrb[0].mxu0 %v2668
      %v3087 = vpop.f32.mrb[0].mxu0
      %v3088 = vadd.f32 %v2819, %v3087
      %v3089 = vpop.f32.mrb[0].mxu0
      %v3090 = vpop.f32.mrb[0].mxu0
      %v3091 = vadd.f32 %v2822, %v3090
      %v3092 = vpop.f32.mrb[0].mxu0
      %3093 = vmatprep.mubr.bf16.mxu0 0
      %3094 = vmatmul.mubr.bf16.gmra.mrb[0].mxu0 %v2670
      %v3095 = vpop.f32.mrb[0].mxu0
      %v3096 = vadd.f32 %v2827, %v3095
      %v3097 = vpop.f32.mrb[0].mxu0
      %v3098 = vpop.f32.mrb[0].mxu0
      %v3099 = vadd.f32 %v2830, %v3098
      %v3100 = vpop.f32.mrb[0].mxu0
      %3101 = vmatprep.mubr.bf16.mxu0 0
      %3102 = vmatmul.mubr.bf16.gmra.mrb[0].mxu0 %v2672
      %v3103 = vpop.f32.mrb[0].mxu0
      %v3104 = vadd.f32 %v2835, %v3103
      %v3105 = vpop.f32.mrb[0].mxu0
      %v3106 = vpop.f32.mrb[0].mxu0
      %v3107 = vadd.f32 %v2838, %v3106
      %v3108 = vpop.f32.mrb[0].mxu0
      %3109 = vmatprep.mubr.bf16.mxu0 0
      %3110 = vmatmul.mubr.bf16.gmra.mrb[0].mxu0 %v2674
      %v3111 = vpop.f32.mrb[0].mxu0
      %v3112 = vadd.f32 %v2843, %v3111
      %v3113 = vpop.f32.mrb[0].mxu0
      %v3114 = vpop.f32.mrb[0].mxu0
      %v3115 = vadd.f32 %v2846, %v3114
      %v3116 = vpop.f32.mrb[0].mxu0
      %3117 = vmatprep.mubr.bf16.mxu0 0
      %3118 = vmatmul.mubr.bf16.gmra.mrb[0].mxu0 %v2676
      %v3119 = vpop.f32.mrb[0].mxu0
      %v3120 = vadd.f32 %v2851, %v3119
      %v3121 = vpop.f32.mrb[0].mxu0
      %v3122 = vpop.f32.mrb[0].mxu0
      %v3123 = vadd.f32 %v2854, %v3122
      %v3124 = vpop.f32.mrb[0].mxu0
      %3125 = vmatprep.mubr.bf16.mxu0 0
      %3126 = vmatmul.mubr.bf16.gmra.mrb[0].mxu0 %v2976
      %v3127 = vpop.f32.mrb[0].mxu0
      %v3128 = vadd.f32 %v2859, %v3127
      %v3129 = vpop.f32.mrb[0].mxu0
      %v3130 = vpop.f32.mrb[0].mxu0
      %v3131 = vadd.f32 %v2862, %v3130
      %v3132 = vpop.f32.mrb[0].mxu0
      %3133 = vmatprep.mubr.bf16.mxu0 0
      %3134 = vmatmul.mubr.bf16.gmra.mrb[0].mxu0 %v2680
      %v3135 = vpop.f32.mrb[0].mxu0
      %v3136 = vadd.f32 %v2867, %v3135
      %v3137 = vpop.f32.mrb[0].mxu0
      %v3138 = vpop.f32.mrb[0].mxu0
      %v3139 = vadd.f32 %v2870, %v3138
      %v3140 = vpop.f32.mrb[0].mxu0
      %3141 = vmatprep.mubr.bf16.mxu0 0
      %3142 = vmatmul.mubr.bf16.gmra.mrb[0].mxu0 %v2682
      %v3143 = vpop.f32.mrb[0].mxu0
      %v3144 = vadd.f32 %v2875, %v3143
      %v3145 = vpop.f32.mrb[0].mxu0
      %v3146 = vpop.f32.mrb[0].mxu0
      %v3147 = vadd.f32 %v2878, %v3146
      %v3148 = vpop.f32.mrb[0].mxu0
      %3149 = vmatprep.mubr.bf16.mxu0 0
      %3150 = vmatmul.mubr.bf16.gmra.mrb[0].mxu0 %v2684
      %v3151 = vpop.f32.mrb[0].mxu0
      %v3152 = vadd.f32 %v2883, %v3151
      %v3153 = vpop.f32.mrb[0].mxu0
      %v3154 = vpop.f32.mrb[0].mxu0
      %v3155 = vadd.f32 %v2886, %v3154
      %v3156 = vpop.f32.mrb[0].mxu0
      %3157 = vmatprep.mubr.bf16.mxu0 0
      %3158 = vmatmul.mubr.bf16.gmra.mrb[0].mxu0 %v2686
      %v3159 = vpop.f32.mrb[0].mxu0
      %v3160 = vadd.f32 %v2891, %v3159
      %v3161 = vpop.f32.mrb[0].mxu0
      %v3162 = vpop.f32.mrb[0].mxu0
      %v3163 = vadd.f32 %v2894, %v3162
      %v3164 = vpop.f32.mrb[0].mxu0
      %3165 = vmatprep.mubr.bf16.mxu0 0
      %3166 = vmatmul.mubr.bf16.gmra.mrb[0].mxu0 %v2688
      %v3167 = vpop.f32.mrb[0].mxu0
      %v3168 = vadd.f32 %v2899, %v3167
      %v3169 = vpop.f32.mrb[0].mxu0
      %v3170 = vpop.f32.mrb[0].mxu0
      %v3171 = vadd.f32 %v2902, %v3170
      %v3172 = vpop.f32.mrb[0].mxu0
      %3173 = vmatprep.mubr.bf16.mxu0 0
      %3174 = vmatmul.mubr.bf16.gmra.mrb[0].mxu0 %v2690
      %v3175 = vpop.f32.mrb[0].mxu0
      %v3176 = vadd.f32 %v2907, %v3175
      %v3177 = vpop.f32.mrb[0].mxu0
      %v3178 = vpop.f32.mrb[0].mxu0
      %v3179 = vadd.f32 %v2910, %v3178
      %v3180 = vpop.f32.mrb[0].mxu0
      %3181 = vmatprep.mubr.bf16.mxu0 0
      %3182 = vmatmul.mubr.bf16.gmra.mrb[0].mxu0 %v2692
      %v3183 = vpop.f32.mrb[0].mxu0
      %v3184 = vadd.f32 %v2915, %v3183
      %v3185 = vpop.f32.mrb[0].mxu0
      %v3186 = vpop.f32.mrb[0].mxu0
      %v3187 = vadd.f32 %v2918, %v3186
      %v3188 = vpop.f32.mrb[0].mxu0
      %3189 = vmatprep.mubr.bf16.mxu0 0
      %3190 = vmatmul.mubr.bf16.gmra.mrb[0].mxu0 %v2694
      %v3191 = vpop.f32.mrb[0].mxu0
      %v3192 = vadd.f32 %v2923, %v3191
      %v3193 = vpop.f32.mrb[0].mxu0
      %v3194 = vpop.f32.mrb[0].mxu0
      %v3195 = vadd.f32 %v2926, %v3194
      %v3196 = vpop.f32.mrb[0].mxu0
      %3197 = vmatprep.mubr.bf16.mxu0 0
      %3198 = vmatmul.mubr.bf16.gmra.mrb[0].mxu0 %v2696
      %v3199 = vpop.f32.mrb[0].mxu0
      %v3200 = vadd.f32 %v2931, %v3199
      %v3201 = vpop.f32.mrb[0].mxu0
      %v3202 = vpop.f32.mrb[0].mxu0
      %v3203 = vadd.f32 %v2934, %v3202
      %v3204 = vpop.f32.mrb[0].mxu0
      %3205 = vmatprep.mubr.bf16.mxu0 0
      %3206 = vmatmul.mubr.bf16.gmra.mrb[0].mxu0 %v2698
      %v3207 = vpop.f32.mrb[0].mxu0
      %v3208 = vadd.f32 %v2939, %v3207
      %v3209 = vpop.f32.mrb[0].mxu0
      %v3210 = vpop.f32.mrb[0].mxu0
      %v3211 = vadd.f32 %v2942, %v3210
      %v3212 = vpop.f32.mrb[0].mxu0
      %3213 = vmatprep.mubr.bf16.mxu0 0
      %3214 = vmatmul.mubr.bf16.gmra.mrb[0].mxu0 %v2700
      %v3215 = vpop.f32.mrb[0].mxu0
      %v3216 = vadd.f32 %v2947, %v3215
      %v3217 = vpop.f32.mrb[0].mxu0
      %v3218 = vpop.f32.mrb[0].mxu0
      %v3219 = vadd.f32 %v2950, %v3218
      %v3220 = vpop.f32.mrb[0].mxu0
      %3221 = vmatprep.mubr.bf16.mxu0 0
      %3222 = vmatmul.mubr.bf16.gmra.mrb[0].mxu0 %v2702
      %v3223 = vpop.f32.mrb[0].mxu0
      %v3224 = vadd.f32 %v2955, %v3223
      %v3225 = vpop.f32.mrb[0].mxu0
      %v3226 = vpop.f32.mrb[0].mxu0
      %v3227 = vadd.f32 %v2958, %v3226
      %v3228 = vpop.f32.mrb[0].mxu0
      %3229 = vmatprep.mubr.bf16.mxu0 0
      %3230 = vmatmul.mubr.bf16.gmra.mrb[0].mxu0 %v2704
      %v3231 = vpop.f32.mrb[0].mxu0
      %v3232 = vadd.f32 %v2963, %v3231
      %v3233 = vpop.f32.mrb[0].mxu0
      %v3234 = vpop.f32.mrb[0].mxu0
      %v3235 = vadd.f32 %v2966, %v3234
      %v3236 = vpop.f32.mrb[0].mxu0
      %3237 = vdwg.mxu0
      %v3242 = vunpack.c.l.b16 %v1656
      %v3243 = vunpack.c.l.b16 %v1657
      %v3244 = vunpack.c.l.b16 %v1704
      %v3245 = vunpack.c.l.b16 %v1705
      %v3246 = vpack.c.b16 %v3243, %v3242
      %v3247 = vpack.c.b16 %v3245, %v3244
      %v3250 = vunpack.c.l.b16 %v1658
      %v3251 = vunpack.c.l.b16 %v1706
      %v3252 = vpack.c.b16 %v3250, %v3250
      %v3253 = vpack.c.b16 %v3251, %v3251
      %v3255 = vshrl.u32 %v3246, 16
      %v3257 = vshll.u32 %v3246, 16
      %v3259 = vrot.slane %v3257, 1
      %v3260 = vor.u32 %v3255, %v3259
      %v3262 = vshll.u32 %v3252, 16
      %v3264 = vrot.slane %v3262, 1
      %v3265 = vsel %vm1931, %v3260, %v3264
      %v3267 = vshrl.u32 %v3247, 16
      %v3269 = vshll.u32 %v3247, 16
      %v3271 = vrot.slane %v3269, 1
      %v3272 = vor.u32 %v3267, %v3271
      %v3274 = vshll.u32 %v3253, 16
      %v3276 = vrot.slane %v3274, 1
      %v3277 = vsel %vm1931, %v3272, %v3276
      %3278 = vrot.lane.b32.xlu0 %v3265, 4
      %v3279 = vpop.permute.xlu0 %3278
      %3280 = vrot.lane.b32.xlu0 %v3277, 4
      %v3281 = vpop.permute.xlu0 %3280
      %v3282 = vrot.slane %v3246, 1
      %v3283 = vrot.slane %v3252, 1
      %v3284 = vsel %vm2324, %v3282, %v3283
      %v3285 = vrot.slane %v3247, 1
      %v3286 = vrot.slane %v3253, 1
      %v3287 = vsel %vm2324, %v3285, %v3286
      %3288 = vrot.lane.b32.xlu0 %v3284, 8
      %v3289 = vpop.permute.xlu0 %3288
      %3290 = vrot.lane.b32.xlu0 %v3287, 8
      %v3291 = vpop.permute.xlu0 %3290
      %v3293 = vsel %vm2465, %v3246, %v3279
      %v3295 = vsel %vm2465, %v3247, %v3281
      %v3297 = vsel %vm2522, %v3293, %v3289
      %v3299 = vsel %vm2522, %v3295, %v3291
      %s3300 = scalar_lea.vmem %s1, 16
      %v3301 = vld [vmem:[%s3300] sm:$0xf]
      %v3302 = vld [vmem:[%s3300 + $0x4] sm:$0x3]
      %v3305 = vunpack.c.l.b16 %v3301
      %v3306 = vunpack.c.l.b16 %v3302
      %v3307 = vpack.c.b16 %v3306, %v3305
      %v3308 = vsel %vm2651, %v3297, 0
      %v3310 = vsel %vm2651, %v3299, 0
      %v3313 = vsel %vm2708, %v3307, 0
      %3315 = vmatprep.subr.bf16.mxu0 0
      %3316 = vmatpush1.bf16.msra.mxu0 %v3313
      %3317 = vmatprep.subr.bf16.mxu0 0
      %3318 = vmatpush1.bf16.msra.mxu0 0
      %3319 = vmatprep.subr.bf16.mxu0 0
      %3320 = vmatpush1.bf16.msra.mxu0 0
      %3321 = vmatprep.subr.bf16.mxu0 0
      %3322 = vmatpush1.bf16.msra.mxu0 0
      %3323 = vmatprep.subr.bf16.mxu0 0
      %3324 = vmatpush1.bf16.msra.mxu0 0
      %3325 = vmatprep.subr.bf16.mxu0 0
      %3326 = vmatpush1.bf16.msra.mxu0 0
      %3327 = vmatprep.subr.bf16.mxu0 0
      %3328 = vmatpush1.bf16.msra.mxu0 0
      %3329 = vmatprep.subr.bf16.mxu0 0
      %3330 = vmatpush1.bf16.msra.mxu0 0
      %3331 = vmatprep.subr.bf16.mxu0 0
      %3332 = vmatpush1.bf16.msra.mxu0 0
      %3333 = vmatprep.subr.bf16.mxu0 0
      %3334 = vmatpush1.bf16.msra.mxu0 0
      %3335 = vmatprep.subr.bf16.mxu0 0
      %3336 = vmatpush1.bf16.msra.mxu0 0
      %3337 = vmatprep.subr.bf16.mxu0 0
      %3338 = vmatpush1.bf16.msra.mxu0 0
      %3339 = vmatprep.subr.bf16.mxu0 0
      %3340 = vmatpush1.bf16.msra.mxu0 0
      %3341 = vmatprep.subr.bf16.mxu0 0
      %3342 = vmatpush1.bf16.msra.mxu0 0
      %3343 = vmatprep.subr.bf16.mxu0 0
      %3344 = vmatpush1.bf16.msra.mxu0 0
      %3345 = vmatprep.subr.bf16.mxu0 0
      %3346 = vmatpush1.bf16.msra.mxu0 0
      %3347 = vmatprep.mubr.bf16.mxu0 0
      %3348 = vmatmul.mubr.bf16.gmra.mrb[0].mxu0 %v2654
      %v3349 = vpop.f32.mrb[0].mxu0
      %v3350 = vadd.f32 0.0, %v3349
      %v3351 = vpop.f32.mrb[0].mxu0
      %v3352 = vpop.f32.mrb[0].mxu0
      %v3353 = vadd.f32 0.0, %v3352
      %v3354 = vpop.f32.mrb[0].mxu0
      %3355 = vmatprep.mubr.bf16.mxu0 0
      %3356 = vmatmul.mubr.bf16.gmra.mrb[0].mxu0 %v2656
      %v3357 = vpop.f32.mrb[0].mxu0
      %v3358 = vadd.f32 0.0, %v3357
      %v3359 = vpop.f32.mrb[0].mxu0
      %v3360 = vpop.f32.mrb[0].mxu0
      %v3361 = vadd.f32 0.0, %v3360
      %v3362 = vpop.f32.mrb[0].mxu0
      %3363 = vmatprep.mubr.bf16.mxu0 0
      %3364 = vmatmul.mubr.bf16.gmra.mrb[0].mxu0 %v2658
      %v3365 = vpop.f32.mrb[0].mxu0
      %v3366 = vadd.f32 0.0, %v3365
      %v3367 = vpop.f32.mrb[0].mxu0
      %v3368 = vpop.f32.mrb[0].mxu0
      %v3369 = vadd.f32 0.0, %v3368
      %v3370 = vpop.f32.mrb[0].mxu0
      %3371 = vmatprep.mubr.bf16.mxu0 0
      %3372 = vmatmul.mubr.bf16.gmra.mrb[0].mxu0 %v2660
      %v3373 = vpop.f32.mrb[0].mxu0
      %v3374 = vadd.f32 0.0, %v3373
      %v3375 = vpop.f32.mrb[0].mxu0
      %v3376 = vpop.f32.mrb[0].mxu0
      %v3377 = vadd.f32 0.0, %v3376
      %v3378 = vpop.f32.mrb[0].mxu0
      %3379 = vmatprep.mubr.bf16.mxu0 0
      %3380 = vmatmul.mubr.bf16.gmra.mrb[0].mxu0 %v2662
      %v3381 = vpop.f32.mrb[0].mxu0
      %v3382 = vadd.f32 0.0, %v3381
      %v3383 = vpop.f32.mrb[0].mxu0
      %v3384 = vpop.f32.mrb[0].mxu0
      %v3385 = vadd.f32 0.0, %v3384
      %v3386 = vpop.f32.mrb[0].mxu0
      %3387 = vmatprep.mubr.bf16.mxu0 0
      %3388 = vmatmul.mubr.bf16.gmra.mrb[0].mxu0 %v2664
      %v3389 = vpop.f32.mrb[0].mxu0
      %v3390 = vadd.f32 0.0, %v3389
      %v3391 = vpop.f32.mrb[0].mxu0
      %v3392 = vpop.f32.mrb[0].mxu0
      %v3393 = vadd.f32 0.0, %v3392
      %v3394 = vpop.f32.mrb[0].mxu0
      %3395 = vmatprep.mubr.bf16.mxu0 0
      %3396 = vmatmul.mubr.bf16.gmra.mrb[0].mxu0 %v2666
      %v3397 = vpop.f32.mrb[0].mxu0
      %v3398 = vadd.f32 0.0, %v3397
      %v3399 = vpop.f32.mrb[0].mxu0
      %v3400 = vpop.f32.mrb[0].mxu0
      %v3401 = vadd.f32 0.0, %v3400
      %v3402 = vpop.f32.mrb[0].mxu0
      %3403 = vmatprep.mubr.bf16.mxu0 0
      %3404 = vmatmul.mubr.bf16.gmra.mrb[0].mxu0 %v2668
      %v3405 = vpop.f32.mrb[0].mxu0
      %v3406 = vadd.f32 0.0, %v3405
      %v3407 = vpop.f32.mrb[0].mxu0
      %v3408 = vpop.f32.mrb[0].mxu0
      %v3409 = vadd.f32 0.0, %v3408
      %v3410 = vpop.f32.mrb[0].mxu0
      %3411 = vmatprep.mubr.bf16.mxu0 0
      %3412 = vmatmul.mubr.bf16.gmra.mrb[0].mxu0 %v2670
      %v3413 = vpop.f32.mrb[0].mxu0
      %v3414 = vadd.f32 0.0, %v3413
      %v3415 = vpop.f32.mrb[0].mxu0
      %v3416 = vpop.f32.mrb[0].mxu0
      %v3417 = vadd.f32 0.0, %v3416
      %v3418 = vpop.f32.mrb[0].mxu0
      %3419 = vmatprep.mubr.bf16.mxu0 0
      %3420 = vmatmul.mubr.bf16.gmra.mrb[0].mxu0 %v2672
      %v3421 = vpop.f32.mrb[0].mxu0
      %v3422 = vadd.f32 0.0, %v3421
      %v3423 = vpop.f32.mrb[0].mxu0
      %v3424 = vpop.f32.mrb[0].mxu0
      %v3425 = vadd.f32 0.0, %v3424
      %v3426 = vpop.f32.mrb[0].mxu0
      %3427 = vmatprep.mubr.bf16.mxu0 0
      %3428 = vmatmul.mubr.bf16.gmra.mrb[0].mxu0 %v2674
      %v3429 = vpop.f32.mrb[0].mxu0
      %v3430 = vadd.f32 0.0, %v3429
      %v3431 = vpop.f32.mrb[0].mxu0
      %v3432 = vpop.f32.mrb[0].mxu0
      %v3433 = vadd.f32 0.0, %v3432
      %v3434 = vpop.f32.mrb[0].mxu0
      %3435 = vmatprep.mubr.bf16.mxu0 0
      %3436 = vmatmul.mubr.bf16.gmra.mrb[0].mxu0 %v2676
      %v3437 = vpop.f32.mrb[0].mxu0
      %v3438 = vadd.f32 0.0, %v3437
      %v3439 = vpop.f32.mrb[0].mxu0
      %v3440 = vpop.f32.mrb[0].mxu0
      %v3441 = vadd.f32 0.0, %v3440
      %v3442 = vpop.f32.mrb[0].mxu0
      %3443 = vmatprep.mubr.bf16.mxu0 0
      %3444 = vmatmul.mubr.bf16.gmra.mrb[0].mxu0 %v2678
      %v3445 = vpop.f32.mrb[0].mxu0
      %v3446 = vadd.f32 0.0, %v3445
      %v3447 = vpop.f32.mrb[0].mxu0
      %v3448 = vpop.f32.mrb[0].mxu0
      %v3449 = vadd.f32 0.0, %v3448
      %v3450 = vpop.f32.mrb[0].mxu0
      %3451 = vmatprep.mubr.bf16.mxu0 0
      %3452 = vmatmul.mubr.bf16.gmra.mrb[0].mxu0 %v3308
      %v3453 = vpop.f32.mrb[0].mxu0
      %v3454 = vadd.f32 0.0, %v3453
      %v3455 = vpop.f32.mrb[0].mxu0
      %v3456 = vpop.f32.mrb[0].mxu0
      %v3457 = vadd.f32 0.0, %v3456
      %v3458 = vpop.f32.mrb[0].mxu0
      %3459 = vmatprep.mubr.bf16.mxu0 0
      %3460 = vmatmul.mubr.bf16.gmra.mrb[0].mxu0 %v2682
      %v3461 = vpop.f32.mrb[0].mxu0
      %v3462 = vadd.f32 0.0, %v3461
      %v3463 = vpop.f32.mrb[0].mxu0
      %v3464 = vpop.f32.mrb[0].mxu0
      %v3465 = vadd.f32 0.0, %v3464
      %v3466 = vpop.f32.mrb[0].mxu0
      %3467 = vmatprep.mubr.bf16.mxu0 0
      %3468 = vmatmul.mubr.bf16.gmra.mrb[0].mxu0 %v2684
      %v3469 = vpop.f32.mrb[0].mxu0
      %v3470 = vadd.f32 0.0, %v3469
      %v3471 = vpop.f32.mrb[0].mxu0
      %v3472 = vpop.f32.mrb[0].mxu0
      %v3473 = vadd.f32 0.0, %v3472
      %v3474 = vpop.f32.mrb[0].mxu0
      %3475 = vmatprep.mubr.bf16.mxu0 0
      %3476 = vmatmul.mubr.bf16.gmra.mrb[0].mxu0 %v2686
      %v3477 = vpop.f32.mrb[0].mxu0
      %v3478 = vadd.f32 0.0, %v3477
      %v3479 = vpop.f32.mrb[0].mxu0
      %v3480 = vpop.f32.mrb[0].mxu0
      %v3481 = vadd.f32 0.0, %v3480
      %v3482 = vpop.f32.mrb[0].mxu0
      %3483 = vmatprep.mubr.bf16.mxu0 0
      %3484 = vmatmul.mubr.bf16.gmra.mrb[0].mxu0 %v2688
      %v3485 = vpop.f32.mrb[0].mxu0
      %v3486 = vadd.f32 0.0, %v3485
      %v3487 = vpop.f32.mrb[0].mxu0
      %v3488 = vpop.f32.mrb[0].mxu0
      %v3489 = vadd.f32 0.0, %v3488
      %v3490 = vpop.f32.mrb[0].mxu0
      %3491 = vmatprep.mubr.bf16.mxu0 0
      %3492 = vmatmul.mubr.bf16.gmra.mrb[0].mxu0 %v2690
      %v3493 = vpop.f32.mrb[0].mxu0
      %v3494 = vadd.f32 0.0, %v3493
      %v3495 = vpop.f32.mrb[0].mxu0
      %v3496 = vpop.f32.mrb[0].mxu0
      %v3497 = vadd.f32 0.0, %v3496
      %v3498 = vpop.f32.mrb[0].mxu0
      %3499 = vmatprep.mubr.bf16.mxu0 0
      %3500 = vmatmul.mubr.bf16.gmra.mrb[0].mxu0 %v2692
      %v3501 = vpop.f32.mrb[0].mxu0
      %v3502 = vadd.f32 0.0, %v3501
      %v3503 = vpop.f32.mrb[0].mxu0
      %v3504 = vpop.f32.mrb[0].mxu0
      %v3505 = vadd.f32 0.0, %v3504
      %v3506 = vpop.f32.mrb[0].mxu0
      %3507 = vmatprep.mubr.bf16.mxu0 0
      %3508 = vmatmul.mubr.bf16.gmra.mrb[0].mxu0 %v2694
      %v3509 = vpop.f32.mrb[0].mxu0
      %v3510 = vadd.f32 0.0, %v3509
      %v3511 = vpop.f32.mrb[0].mxu0
      %v3512 = vpop.f32.mrb[0].mxu0
      %v3513 = vadd.f32 0.0, %v3512
      %v3514 = vpop.f32.mrb[0].mxu0
      %3515 = vmatprep.mubr.bf16.mxu0 0
      %3516 = vmatmul.mubr.bf16.gmra.mrb[0].mxu0 %v2696
      %v3517 = vpop.f32.mrb[0].mxu0
      %v3518 = vadd.f32 0.0, %v3517
      %v3519 = vpop.f32.mrb[0].mxu0
      %v3520 = vpop.f32.mrb[0].mxu0
      %v3521 = vadd.f32 0.0, %v3520
      %v3522 = vpop.f32.mrb[0].mxu0
      %3523 = vmatprep.mubr.bf16.mxu0 0
      %3524 = vmatmul.mubr.bf16.gmra.mrb[0].mxu0 %v2698
      %v3525 = vpop.f32.mrb[0].mxu0
      %v3526 = vadd.f32 0.0, %v3525
      %v3527 = vpop.f32.mrb[0].mxu0
      %v3528 = vpop.f32.mrb[0].mxu0
      %v3529 = vadd.f32 0.0, %v3528
      %v3530 = vpop.f32.mrb[0].mxu0
      %3531 = vmatprep.mubr.bf16.mxu0 0
      %3532 = vmatmul.mubr.bf16.gmra.mrb[0].mxu0 %v2700
      %v3533 = vpop.f32.mrb[0].mxu0
      %v3534 = vadd.f32 0.0, %v3533
      %v3535 = vpop.f32.mrb[0].mxu0
      %v3536 = vpop.f32.mrb[0].mxu0
      %v3537 = vadd.f32 0.0, %v3536
      %v3538 = vpop.f32.mrb[0].mxu0
      %3539 = vmatprep.mubr.bf16.mxu0 0
      %3540 = vmatmul.mubr.bf16.gmra.mrb[0].mxu0 %v2702
      %v3541 = vpop.f32.mrb[0].mxu0
      %v3542 = vadd.f32 0.0, %v3541
      %v3543 = vpop.f32.mrb[0].mxu0
      %v3544 = vpop.f32.mrb[0].mxu0
      %v3545 = vadd.f32 0.0, %v3544
      %v3546 = vpop.f32.mrb[0].mxu0
      %3547 = vmatprep.mubr.bf16.mxu0 0
      %3548 = vmatmul.mubr.bf16.gmra.mrb[0].mxu0 %v2704
      %v3549 = vpop.f32.mrb[0].mxu0
      %v3550 = vadd.f32 0.0, %v3549
      %v3551 = vpop.f32.mrb[0].mxu0
      %v3552 = vpop.f32.mrb[0].mxu0
      %v3553 = vadd.f32 0.0, %v3552
      %v3554 = vpop.f32.mrb[0].mxu0
      %3555 = vmatprep.mubr.bf16.mxu0 0
      %3556 = vmatmul.mubr.bf16.gmra.mrb[0].mxu0 %v2706
      %v3557 = vpop.f32.mrb[0].mxu0
      %v3558 = vadd.f32 0.0, %v3557
      %v3559 = vpop.f32.mrb[0].mxu0
      %v3560 = vpop.f32.mrb[0].mxu0
      %v3561 = vadd.f32 0.0, %v3560
      %v3562 = vpop.f32.mrb[0].mxu0
      %3563 = vmatprep.mubr.bf16.mxu0 0
      %3564 = vmatmul.mubr.bf16.gmra.mrb[0].mxu0 %v3310
      %v3565 = vpop.f32.mrb[0].mxu0
      %v3566 = vadd.f32 0.0, %v3565
      %v3567 = vpop.f32.mrb[0].mxu0
      %v3568 = vpop.f32.mrb[0].mxu0
      %v3569 = vadd.f32 0.0, %v3568
      %v3570 = vpop.f32.mrb[0].mxu0
      %3571 = vdwg.mxu0
      %v3572 = vadd.f32 %v3016, %v3350
      %v3573 = vadd.f32 %v3019, %v3353
      %v3574 = vadd.f32 %v3024, %v3358
      %v3575 = vadd.f32 %v3027, %v3361
      %v3576 = vadd.f32 %v3032, %v3366
      %v3577 = vadd.f32 %v3035, %v3369
      %v3578 = vadd.f32 %v3040, %v3374
      %v3579 = vadd.f32 %v3043, %v3377
      %v3580 = vadd.f32 %v3048, %v3382
      %v3581 = vadd.f32 %v3051, %v3385
      %v3582 = vadd.f32 %v3056, %v3390
      %v3583 = vadd.f32 %v3059, %v3393
      %v3584 = vadd.f32 %v3064, %v3398
      %v3585 = vadd.f32 %v3067, %v3401
      %v3586 = vadd.f32 %v3072, %v3406
      %v3587 = vadd.f32 %v3075, %v3409
      %v3588 = vadd.f32 %v3080, %v3414
      %v3589 = vadd.f32 %v3083, %v3417
      %v3590 = vadd.f32 %v3088, %v3422
      %v3591 = vadd.f32 %v3091, %v3425
      %v3592 = vadd.f32 %v3096, %v3430
      %v3593 = vadd.f32 %v3099, %v3433
      %v3594 = vadd.f32 %v3104, %v3438
      %v3595 = vadd.f32 %v3107, %v3441
      %v3596 = vadd.f32 %v3112, %v3446
      %v3597 = vadd.f32 %v3115, %v3449
      %v3598 = vadd.f32 %v3120, %v3454
      %v3599 = vadd.f32 %v3123, %v3457
      %v3600 = vadd.f32 %v3128, %v3462
      %v3601 = vadd.f32 %v3131, %v3465
      %v3602 = vadd.f32 %v3136, %v3470
      %v3603 = vadd.f32 %v3139, %v3473
      %v3604 = vadd.f32 %v3144, %v3478
      %v3605 = vadd.f32 %v3147, %v3481
      %v3606 = vadd.f32 %v3152, %v3486
      %v3607 = vadd.f32 %v3155, %v3489
      %v3608 = vadd.f32 %v3160, %v3494
      %v3609 = vadd.f32 %v3163, %v3497
      %v3610 = vadd.f32 %v3168, %v3502
      %v3611 = vadd.f32 %v3171, %v3505
      %v3612 = vadd.f32 %v3176, %v3510
      %v3613 = vadd.f32 %v3179, %v3513
      %v3614 = vadd.f32 %v3184, %v3518
      %v3615 = vadd.f32 %v3187, %v3521
      %v3616 = vadd.f32 %v3192, %v3526
      %v3617 = vadd.f32 %v3195, %v3529
      %v3618 = vadd.f32 %v3200, %v3534
      %v3619 = vadd.f32 %v3203, %v3537
      %v3620 = vadd.f32 %v3208, %v3542
      %v3621 = vadd.f32 %v3211, %v3545
      %v3622 = vadd.f32 %v3216, %v3550
      %v3623 = vadd.f32 %v3219, %v3553
      %v3624 = vadd.f32 %v3224, %v3558
      %v3625 = vadd.f32 %v3227, %v3561
      %v3626 = vadd.f32 %v3232, %v3566
      %v3627 = vadd.f32 %v3235, %v3569
      %v3628 = vld [vmem:[%s2] sm:$0x1]
      %v3630 = vlaneseq
      %v3631 = vshrl.u32 %v3630, 7
      %v3632 = vsub.s32 0, %v3631
      %v3633 = vrot.slane %v3628, %v3632
      %v3635 = vadd.f32 %v3572, %v3633
      %v3636 = vadd.f32 %v3573, %v3633
      %v3637 = vadd.f32 %v3574, %v3633
      %v3638 = vadd.f32 %v3575, %v3633
      %v3639 = vadd.f32 %v3576, %v3633
      %v3640 = vadd.f32 %v3577, %v3633
      %v3641 = vadd.f32 %v3578, %v3633
      %v3642 = vadd.f32 %v3579, %v3633
      %v3643 = vadd.f32 %v3580, %v3633
      %v3644 = vadd.f32 %v3581, %v3633
      %v3645 = vadd.f32 %v3582, %v3633
      %v3646 = vadd.f32 %v3583, %v3633
      %v3647 = vadd.f32 %v3584, %v3633
      %v3648 = vadd.f32 %v3585, %v3633
      %v3649 = vadd.f32 %v3586, %v3633
      %v3650 = vadd.f32 %v3587, %v3633
      %v3651 = vadd.f32 %v3588, %v3633
      %v3652 = vadd.f32 %v3589, %v3633
      %v3653 = vadd.f32 %v3590, %v3633
      %v3654 = vadd.f32 %v3591, %v3633
      %v3655 = vadd.f32 %v3592, %v3633
      %v3656 = vadd.f32 %v3593, %v3633
      %v3657 = vadd.f32 %v3594, %v3633
      %v3658 = vadd.f32 %v3595, %v3633
      %v3659 = vadd.f32 %v3596, %v3633
      %v3660 = vadd.f32 %v3597, %v3633
      %v3661 = vadd.f32 %v3598, %v3633
      %v3662 = vadd.f32 %v3599, %v3633
      %v3663 = vadd.f32 %v3600, %v3633
      %v3664 = vadd.f32 %v3601, %v3633
      %v3665 = vadd.f32 %v3602, %v3633
      %v3666 = vadd.f32 %v3603, %v3633
      %v3667 = vadd.f32 %v3604, %v3633
      %v3668 = vadd.f32 %v3605, %v3633
      %v3669 = vadd.f32 %v3606, %v3633
      %v3670 = vadd.f32 %v3607, %v3633
      %v3671 = vadd.f32 %v3608, %v3633
      %v3672 = vadd.f32 %v3609, %v3633
      %v3673 = vadd.f32 %v3610, %v3633
      %v3674 = vadd.f32 %v3611, %v3633
      %v3675 = vadd.f32 %v3612, %v3633
      %v3676 = vadd.f32 %v3613, %v3633
      %v3677 = vadd.f32 %v3614, %v3633
      %v3678 = vadd.f32 %v3615, %v3633
      %v3679 = vadd.f32 %v3616, %v3633
      %v3680 = vadd.f32 %v3617, %v3633
      %v3681 = vadd.f32 %v3618, %v3633
      %v3682 = vadd.f32 %v3619, %v3633
      %v3683 = vadd.f32 %v3620, %v3633
      %v3684 = vadd.f32 %v3621, %v3633
      %v3685 = vadd.f32 %v3622, %v3633
      %v3686 = vadd.f32 %v3623, %v3633
      %v3687 = vadd.f32 %v3624, %v3633
      %v3688 = vadd.f32 %v3625, %v3633
      %v3689 = vadd.f32 %v3626, %v3633
      %v3690 = vadd.f32 %v3627, %v3633
      %vm3691 = vcmp.gt.f32.partialorder %v3635, 0.0
      %vm3692 = vcmp.gt.f32.partialorder %v3636, 0.0
      %vm3693 = vcmp.gt.f32.partialorder %v3637, 0.0
      %vm3694 = vcmp.gt.f32.partialorder %v3638, 0.0
      %vm3695 = vcmp.gt.f32.partialorder %v3639, 0.0
      %vm3696 = vcmp.gt.f32.partialorder %v3640, 0.0
      %vm3697 = vcmp.gt.f32.partialorder %v3641, 0.0
      %vm3698 = vcmp.gt.f32.partialorder %v3642, 0.0
      %vm3699 = vcmp.gt.f32.partialorder %v3643, 0.0
      %vm3700 = vcmp.gt.f32.partialorder %v3644, 0.0
      %vm3701 = vcmp.gt.f32.partialorder %v3645, 0.0
      %vm3702 = vcmp.gt.f32.partialorder %v3646, 0.0
      %vm3703 = vcmp.gt.f32.partialorder %v3647, 0.0
      %vm3704 = vcmp.gt.f32.partialorder %v3648, 0.0
      %vm3705 = vcmp.gt.f32.partialorder %v3649, 0.0
      %vm3706 = vcmp.gt.f32.partialorder %v3650, 0.0
      %vm3707 = vcmp.gt.f32.partialorder %v3651, 0.0
      %vm3708 = vcmp.gt.f32.partialorder %v3652, 0.0
      %vm3709 = vcmp.gt.f32.partialorder %v3653, 0.0
      %vm3710 = vcmp.gt.f32.partialorder %v3654, 0.0
      %vm3711 = vcmp.gt.f32.partialorder %v3655, 0.0
      %vm3712 = vcmp.gt.f32.partialorder %v3656, 0.0
      %vm3713 = vcmp.gt.f32.partialorder %v3657, 0.0
      %vm3714 = vcmp.gt.f32.partialorder %v3658, 0.0
      %vm3715 = vcmp.gt.f32.partialorder %v3659, 0.0
      %vm3716 = vcmp.gt.f32.partialorder %v3660, 0.0
      %vm3717 = vcmp.gt.f32.partialorder %v3661, 0.0
      %vm3718 = vcmp.gt.f32.partialorder %v3662, 0.0
      %vm3719 = vcmp.gt.f32.partialorder %v3663, 0.0
      %vm3720 = vcmp.gt.f32.partialorder %v3664, 0.0
      %vm3721 = vcmp.gt.f32.partialorder %v3665, 0.0
      %vm3722 = vcmp.gt.f32.partialorder %v3666, 0.0
      %vm3723 = vcmp.gt.f32.partialorder %v3667, 0.0
      %vm3724 = vcmp.gt.f32.partialorder %v3668, 0.0
      %vm3725 = vcmp.gt.f32.partialorder %v3669, 0.0
      %vm3726 = vcmp.gt.f32.partialorder %v3670, 0.0
      %vm3727 = vcmp.gt.f32.partialorder %v3671, 0.0
      %vm3728 = vcmp.gt.f32.partialorder %v3672, 0.0
      %vm3729 = vcmp.gt.f32.partialorder %v3673, 0.0
      %vm3730 = vcmp.gt.f32.partialorder %v3674, 0.0
      %vm3731 = vcmp.gt.f32.partialorder %v3675, 0.0
      %vm3732 = vcmp.gt.f32.partialorder %v3676, 0.0
      %vm3733 = vcmp.gt.f32.partialorder %v3677, 0.0
      %vm3734 = vcmp.gt.f32.partialorder %v3678, 0.0
      %vm3735 = vcmp.gt.f32.partialorder %v3679, 0.0
      %vm3736 = vcmp.gt.f32.partialorder %v3680, 0.0
      %vm3737 = vcmp.gt.f32.partialorder %v3681, 0.0
      %vm3738 = vcmp.gt.f32.partialorder %v3682, 0.0
      %vm3739 = vcmp.gt.f32.partialorder %v3683, 0.0
      %vm3740 = vcmp.gt.f32.partialorder %v3684, 0.0
      %vm3741 = vcmp.gt.f32.partialorder %v3685, 0.0
      %vm3742 = vcmp.gt.f32.partialorder %v3686, 0.0
      %vm3743 = vcmp.gt.f32.partialorder %v3687, 0.0
      %vm3744 = vcmp.gt.f32.partialorder %v3688, 0.0
      %vm3745 = vcmp.gt.f32.partialorder %v3689, 0.0
      %vm3746 = vcmp.gt.f32.partialorder %v3690, 0.0
      %v3747 = vmul.f32 %v3635, 0.2
      %v3748 = vmul.f32 %v3636, 0.2
      %v3749 = vmul.f32 %v3637, 0.2
      %v3750 = vmul.f32 %v3638, 0.2
      %v3751 = vmul.f32 %v3639, 0.2
      %v3752 = vmul.f32 %v3640, 0.2
      %v3753 = vmul.f32 %v3641, 0.2
      %v3754 = vmul.f32 %v3642, 0.2
      %v3755 = vmul.f32 %v3643, 0.2
      %v3756 = vmul.f32 %v3644, 0.2
      %v3757 = vmul.f32 %v3645, 0.2
      %v3758 = vmul.f32 %v3646, 0.2
      %v3759 = vmul.f32 %v3647, 0.2
      %v3760 = vmul.f32 %v3648, 0.2
      %v3761 = vmul.f32 %v3649, 0.2
      %v3762 = vmul.f32 %v3650, 0.2
      %v3763 = vmul.f32 %v3651, 0.2
      %v3764 = vmul.f32 %v3652, 0.2
      %v3765 = vmul.f32 %v3653, 0.2
      %v3766 = vmul.f32 %v3654, 0.2
      %v3767 = vmul.f32 %v3655, 0.2
      %v3768 = vmul.f32 %v3656, 0.2
      %v3769 = vmul.f32 %v3657, 0.2
      %v3770 = vmul.f32 %v3658, 0.2
      %v3771 = vmul.f32 %v3659, 0.2
      %v3772 = vmul.f32 %v3660, 0.2
      %v3773 = vmul.f32 %v3661, 0.2
      %v3774 = vmul.f32 %v3662, 0.2
      %v3775 = vmul.f32 %v3663, 0.2
      %v3776 = vmul.f32 %v3664, 0.2
      %v3777 = vmul.f32 %v3665, 0.2
      %v3778 = vmul.f32 %v3666, 0.2
      %v3779 = vmul.f32 %v3667, 0.2
      %v3780 = vmul.f32 %v3668, 0.2
      %v3781 = vmul.f32 %v3669, 0.2
      %v3782 = vmul.f32 %v3670, 0.2
      %v3783 = vmul.f32 %v3671, 0.2
      %v3784 = vmul.f32 %v3672, 0.2
      %v3785 = vmul.f32 %v3673, 0.2
      %v3786 = vmul.f32 %v3674, 0.2
      %v3787 = vmul.f32 %v3675, 0.2
      %v3788 = vmul.f32 %v3676, 0.2
      %v3789 = vmul.f32 %v3677, 0.2
      %v3790 = vmul.f32 %v3678, 0.2
      %v3791 = vmul.f32 %v3679, 0.2
      %v3792 = vmul.f32 %v3680, 0.2
      %v3793 = vmul.f32 %v3681, 0.2
      %v3794 = vmul.f32 %v3682, 0.2
      %v3795 = vmul.f32 %v3683, 0.2
      %v3796 = vmul.f32 %v3684, 0.2
      %v3797 = vmul.f32 %v3685, 0.2
      %v3798 = vmul.f32 %v3686, 0.2
      %v3799 = vmul.f32 %v3687, 0.2
      %v3800 = vmul.f32 %v3688, 0.2
      %v3801 = vmul.f32 %v3689, 0.2
      %v3802 = vmul.f32 %v3690, 0.2
      %v3803 = vsel %vm3691, %v3635, %v3747
      %v3804 = vsel %vm3692, %v3636, %v3748
      %v3805 = vsel %vm3693, %v3637, %v3749
      %v3806 = vsel %vm3694, %v3638, %v3750
      %v3807 = vsel %vm3695, %v3639, %v3751
      %v3808 = vsel %vm3696, %v3640, %v3752
      %v3809 = vsel %vm3697, %v3641, %v3753
      %v3810 = vsel %vm3698, %v3642, %v3754
      %v3811 = vsel %vm3699, %v3643, %v3755
      %v3812 = vsel %vm3700, %v3644, %v3756
      %v3813 = vsel %vm3701, %v3645, %v3757
      %v3814 = vsel %vm3702, %v3646, %v3758
      %v3815 = vsel %vm3703, %v3647, %v3759
      %v3816 = vsel %vm3704, %v3648, %v3760
      %v3817 = vsel %vm3705, %v3649, %v3761
      %v3818 = vsel %vm3706, %v3650, %v3762
      %v3819 = vsel %vm3707, %v3651, %v3763
      %v3820 = vsel %vm3708, %v3652, %v3764
      %v3821 = vsel %vm3709, %v3653, %v3765
      %v3822 = vsel %vm3710, %v3654, %v3766
      %v3823 = vsel %vm3711, %v3655, %v3767
      %v3824 = vsel %vm3712, %v3656, %v3768
      %v3825 = vsel %vm3713, %v3657, %v3769
      %v3826 = vsel %vm3714, %v3658, %v3770
      %v3827 = vsel %vm3715, %v3659, %v3771
      %v3828 = vsel %vm3716, %v3660, %v3772
      %v3829 = vsel %vm3717, %v3661, %v3773
      %v3830 = vsel %vm3718, %v3662, %v3774
      %v3831 = vsel %vm3719, %v3663, %v3775
      %v3832 = vsel %vm3720, %v3664, %v3776
      %v3833 = vsel %vm3721, %v3665, %v3777
      %v3834 = vsel %vm3722, %v3666, %v3778
      %v3835 = vsel %vm3723, %v3667, %v3779
      %v3836 = vsel %vm3724, %v3668, %v3780
      %v3837 = vsel %vm3725, %v3669, %v3781
      %v3838 = vsel %vm3726, %v3670, %v3782
      %v3839 = vsel %vm3727, %v3671, %v3783
      %v3840 = vsel %vm3728, %v3672, %v3784
      %v3841 = vsel %vm3729, %v3673, %v3785
      %v3842 = vsel %vm3730, %v3674, %v3786
      %v3843 = vsel %vm3731, %v3675, %v3787
      %v3844 = vsel %vm3732, %v3676, %v3788
      %v3845 = vsel %vm3733, %v3677, %v3789
      %v3846 = vsel %vm3734, %v3678, %v3790
      %v3847 = vsel %vm3735, %v3679, %v3791
      %v3848 = vsel %vm3736, %v3680, %v3792
      %v3849 = vsel %vm3737, %v3681, %v3793
      %v3850 = vsel %vm3738, %v3682, %v3794
      %v3851 = vsel %vm3739, %v3683, %v3795
      %v3852 = vsel %vm3740, %v3684, %v3796
      %v3853 = vsel %vm3741, %v3685, %v3797
      %v3854 = vsel %vm3742, %v3686, %v3798
      %v3855 = vsel %vm3743, %v3687, %v3799
      %v3856 = vsel %vm3744, %v3688, %v3800
      %v3857 = vsel %vm3745, %v3689, %v3801
      %v3858 = vsel %vm3746, %v3690, %v3802
      %v3859 = vpack.c.bf16 %v3804, %v3803
      %v3860 = vpack.c.bf16 %v3806, %v3805
      %v3861 = vpack.c.bf16 %v3808, %v3807
      %v3862 = vpack.c.bf16 %v3810, %v3809
      %v3863 = vpack.c.bf16 %v3812, %v3811
      %v3864 = vpack.c.bf16 %v3814, %v3813
      %v3865 = vpack.c.bf16 %v3816, %v3815
      %v3866 = vpack.c.bf16 %v3818, %v3817
      %v3867 = vpack.c.bf16 %v3820, %v3819
      %v3868 = vpack.c.bf16 %v3822, %v3821
      %v3869 = vpack.c.bf16 %v3824, %v3823
      %v3870 = vpack.c.bf16 %v3826, %v3825
      %v3871 = vpack.c.bf16 %v3828, %v3827
      %v3872 = vpack.c.bf16 %v3830, %v3829
      %v3873 = vpack.c.bf16 %v3832, %v3831
      %v3874 = vpack.c.bf16 %v3834, %v3833
      %v3875 = vpack.c.bf16 %v3836, %v3835
      %v3876 = vpack.c.bf16 %v3838, %v3837
      %v3877 = vpack.c.bf16 %v3840, %v3839
      %v3878 = vpack.c.bf16 %v3842, %v3841
      %v3879 = vpack.c.bf16 %v3844, %v3843
      %v3880 = vpack.c.bf16 %v3846, %v3845
      %v3881 = vpack.c.bf16 %v3848, %v3847
      %v3882 = vpack.c.bf16 %v3850, %v3849
      %v3883 = vpack.c.bf16 %v3852, %v3851
      %v3884 = vpack.c.bf16 %v3854, %v3853
      %v3885 = vpack.c.bf16 %v3856, %v3855
      %v3886 = vpack.c.bf16 %v3858, %v3857
      %vm3887 = vcmask 57344
      %vm3888 = vmand %vm3887, %vm354
      %v3889 = vld [vmem:[#allocation3] sm:$0x1]
      %v3890 = vsel %vm3888, 0, %v3889
      %3891 = vst [vmem:[#allocation3] sm:$0x1] %v3890
      %v3892 = vld [vmem:[#allocation3 + $0xc] sm:$0x1]
      %v3893 = vsel %vm3888, 0, %v3892
      %3894 = vst [vmem:[#allocation3 + $0xc] sm:$0x1] %v3893
      %v3895 = vld [vmem:[#allocation3 + $0x18] sm:$0x1]
      %v3896 = vsel %vm3888, 0, %v3895
      %3897 = vst [vmem:[#allocation3 + $0x18] sm:$0x1] %v3896
      %v3898 = vld [vmem:[#allocation3 + $0x24] sm:$0x1]
      %v3899 = vsel %vm3888, 0, %v3898
      %3900 = vst [vmem:[#allocation3 + $0x24] sm:$0x1] %v3899
      %v3901 = vld [vmem:[#allocation3 + $0x30] sm:$0x1]
      %v3902 = vsel %vm3888, 0, %v3901
      %3903 = vst [vmem:[#allocation3 + $0x30] sm:$0x1] %v3902
      %v3904 = vld [vmem:[#allocation3 + $0x3c] sm:$0x1]
      %v3905 = vsel %vm3888, 0, %v3904
      %3906 = vst [vmem:[#allocation3 + $0x3c] sm:$0x1] %v3905
      %v3907 = vld [vmem:[#allocation3 + $0x48] sm:$0x1]
      %v3908 = vsel %vm3888, 0, %v3907
      %3909 = vst [vmem:[#allocation3 + $0x48] sm:$0x1] %v3908
      %v3910 = vld [vmem:[#allocation3 + $0x54] sm:$0x1]
      %v3911 = vsel %vm3888, 0, %v3910
      %3912 = vst [vmem:[#allocation3 + $0x54] sm:$0x1] %v3911
      %v3913 = vld [vmem:[#allocation3 + $0x60] sm:$0x1]
      %v3914 = vsel %vm3888, 0, %v3913
      %3915 = vst [vmem:[#allocation3 + $0x60] sm:$0x1] %v3914
      %v3916 = vld [vmem:[#allocation3 + $0x6c] sm:$0x1]
      %v3917 = vsel %vm3888, 0, %v3916
      %3918 = vst [vmem:[#allocation3 + $0x6c] sm:$0x1] %v3917
      %v3919 = vld [vmem:[#allocation3 + $0x78] sm:$0x1]
      %v3920 = vsel %vm3888, 0, %v3919
      %3921 = vst [vmem:[#allocation3 + $0x78] sm:$0x1] %v3920
      %v3922 = vld [vmem:[#allocation3 + $0x84] sm:$0x1]
      %v3923 = vsel %vm3888, 0, %v3922
      %3924 = vst [vmem:[#allocation3 + $0x84] sm:$0x1] %v3923
      %v3925 = vld [vmem:[#allocation3 + $0x90] sm:$0x1]
      %v3926 = vsel %vm3888, 0, %v3925
      %3927 = vst [vmem:[#allocation3 + $0x90] sm:$0x1] %v3926
      %v3928 = vld [vmem:[#allocation3 + $0x9c] sm:$0x1]
      %v3929 = vsel %vm3888, 0, %v3928
      %3930 = vst [vmem:[#allocation3 + $0x9c] sm:$0x1] %v3929
      %v3931 = vld [vmem:[#allocation3 + $0xa8] sm:$0x1]
      %v3932 = vsel %vm3888, 0, %v3931
      %3933 = vst [vmem:[#allocation3 + $0xa8] sm:$0x1] %v3932
      %v3934 = vld [vmem:[#allocation3 + $0xb4] sm:$0x1]
      %v3935 = vsel %vm3888, 0, %v3934
      %3936 = vst [vmem:[#allocation3 + $0xb4] sm:$0x1] %v3935
      %v3937 = vld [vmem:[#allocation3 + $0xc0] sm:$0x1]
      %v3938 = vsel %vm3888, 0, %v3937
      %3939 = vst [vmem:[#allocation3 + $0xc0] sm:$0x1] %v3938
      %v3940 = vld [vmem:[#allocation3 + $0xcc] sm:$0x1]
      %v3941 = vsel %vm3888, 0, %v3940
      %3942 = vst [vmem:[#allocation3 + $0xcc] sm:$0x1] %v3941
      %v3943 = vld [vmem:[#allocation3 + $0xd8] sm:$0x1]
      %v3944 = vsel %vm3888, 0, %v3943
      %3945 = vst [vmem:[#allocation3 + $0xd8] sm:$0x1] %v3944
      %v3946 = vld [vmem:[#allocation3 + $0xe4] sm:$0x1]
      %v3947 = vsel %vm3888, 0, %v3946
      %3948 = vst [vmem:[#allocation3 + $0xe4] sm:$0x1] %v3947
      %v3949 = vld [vmem:[#allocation3 + $0xf0] sm:$0x1]
      %v3950 = vsel %vm3888, 0, %v3949
      %3951 = vst [vmem:[#allocation3 + $0xf0] sm:$0x1] %v3950
      %v3952 = vld [vmem:[#allocation3 + $0xfc] sm:$0x1]
      %v3953 = vsel %vm3888, 0, %v3952
      %3954 = vst [vmem:[#allocation3 + $0xfc] sm:$0x1] %v3953
      %v3955 = vld [vmem:[#allocation3 + $0x108] sm:$0x1]
      %v3956 = vsel %vm3888, 0, %v3955
      %3957 = vst [vmem:[#allocation3 + $0x108] sm:$0x1] %v3956
      %v3958 = vld [vmem:[#allocation3 + $0x114] sm:$0x1]
      %v3959 = vsel %vm3888, 0, %v3958
      %3960 = vst [vmem:[#allocation3 + $0x114] sm:$0x1] %v3959
      %v3961 = vld [vmem:[#allocation3 + $0x120] sm:$0x1]
      %v3962 = vsel %vm3888, 0, %v3961
      %3963 = vst [vmem:[#allocation3 + $0x120] sm:$0x1] %v3962
      %v3964 = vld [vmem:[#allocation3 + $0x12c] sm:$0x1]
      %v3965 = vsel %vm3888, 0, %v3964
      %3966 = vst [vmem:[#allocation3 + $0x12c] sm:$0x1] %v3965
      %v3967 = vld [vmem:[#allocation3 + $0x138] sm:$0x1]
      %v3968 = vsel %vm3888, 0, %v3967
      %3969 = vst [vmem:[#allocation3 + $0x138] sm:$0x1] %v3968
      %v3970 = vld [vmem:[#allocation3 + $0x144] sm:$0x1]
      %v3971 = vsel %vm3888, 0, %v3970
      %3972 = vst [vmem:[#allocation3 + $0x144] sm:$0x1] %v3971
      %vm3973 = vmand %vm3887, %vm452
      %v3974 = vld [vmem:[#allocation3 + $0x8] sm:$0x1]
      %v3975 = vsel %vm3973, 0, %v3974
      %3976 = vst [vmem:[#allocation3 + $0x8] sm:$0x1] %v3975
      %v3977 = vld [vmem:[#allocation3 + $0x14] sm:$0x1]
      %v3978 = vsel %vm3973, 0, %v3977
      %3979 = vst [vmem:[#allocation3 + $0x14] sm:$0x1] %v3978
      %v3980 = vld [vmem:[#allocation3 + $0x20] sm:$0x1]
      %v3981 = vsel %vm3973, 0, %v3980
      %3982 = vst [vmem:[#allocation3 + $0x20] sm:$0x1] %v3981
      %v3983 = vld [vmem:[#allocation3 + $0x2c] sm:$0x1]
      %v3984 = vsel %vm3973, 0, %v3983
      %3985 = vst [vmem:[#allocation3 + $0x2c] sm:$0x1] %v3984
      %v3986 = vld [vmem:[#allocation3 + $0x38] sm:$0x1]
      %v3987 = vsel %vm3973, 0, %v3986
      %3988 = vst [vmem:[#allocation3 + $0x38] sm:$0x1] %v3987
      %v3989 = vld [vmem:[#allocation3 + $0x44] sm:$0x1]
      %v3990 = vsel %vm3973, 0, %v3989
      %3991 = vst [vmem:[#allocation3 + $0x44] sm:$0x1] %v3990
      %v3992 = vld [vmem:[#allocation3 + $0x50] sm:$0x1]
      %v3993 = vsel %vm3973, 0, %v3992
      %3994 = vst [vmem:[#allocation3 + $0x50] sm:$0x1] %v3993
      %v3995 = vld [vmem:[#allocation3 + $0x5c] sm:$0x1]
      %v3996 = vsel %vm3973, 0, %v3995
      %3997 = vst [vmem:[#allocation3 + $0x5c] sm:$0x1] %v3996
      %v3998 = vld [vmem:[#allocation3 + $0x68] sm:$0x1]
      %v3999 = vsel %vm3973, 0, %v3998
      %4000 = vst [vmem:[#allocation3 + $0x68] sm:$0x1] %v3999
      %v4001 = vld [vmem:[#allocation3 + $0x74] sm:$0x1]
      %v4002 = vsel %vm3973, 0, %v4001
      %4003 = vst [vmem:[#allocation3 + $0x74] sm:$0x1] %v4002
      %v4004 = vld [vmem:[#allocation3 + $0x80] sm:$0x1]
      %v4005 = vsel %vm3973, 0, %v4004
      %4006 = vst [vmem:[#allocation3 + $0x80] sm:$0x1] %v4005
      %v4007 = vld [vmem:[#allocation3 + $0x8c] sm:$0x1]
      %v4008 = vsel %vm3973, 0, %v4007
      %4009 = vst [vmem:[#allocation3 + $0x8c] sm:$0x1] %v4008
      %v4010 = vld [vmem:[#allocation3 + $0x98] sm:$0x1]
      %v4011 = vsel %vm3973, 0, %v4010
      %4012 = vst [vmem:[#allocation3 + $0x98] sm:$0x1] %v4011
      %v4013 = vld [vmem:[#allocation3 + $0xa4] sm:$0x1]
      %v4014 = vsel %vm3973, 0, %v4013
      %4015 = vst [vmem:[#allocation3 + $0xa4] sm:$0x1] %v4014
      %v4016 = vld [vmem:[#allocation3 + $0xb0] sm:$0x1]
      %v4017 = vsel %vm3973, 0, %v4016
      %4018 = vst [vmem:[#allocation3 + $0xb0] sm:$0x1] %v4017
      %v4019 = vld [vmem:[#allocation3 + $0xbc] sm:$0x1]
      %v4020 = vsel %vm3973, 0, %v4019
      %4021 = vst [vmem:[#allocation3 + $0xbc] sm:$0x1] %v4020
      %v4022 = vld [vmem:[#allocation3 + $0xc8] sm:$0x1]
      %v4023 = vsel %vm3973, 0, %v4022
      %4024 = vst [vmem:[#allocation3 + $0xc8] sm:$0x1] %v4023
      %v4025 = vld [vmem:[#allocation3 + $0xd4] sm:$0x1]
      %v4026 = vsel %vm3973, 0, %v4025
      %4027 = vst [vmem:[#allocation3 + $0xd4] sm:$0x1] %v4026
      %v4028 = vld [vmem:[#allocation3 + $0xe0] sm:$0x1]
      %v4029 = vsel %vm3973, 0, %v4028
      %4030 = vst [vmem:[#allocation3 + $0xe0] sm:$0x1] %v4029
      %v4031 = vld [vmem:[#allocation3 + $0xec] sm:$0x1]
      %v4032 = vsel %vm3973, 0, %v4031
      %4033 = vst [vmem:[#allocation3 + $0xec] sm:$0x1] %v4032
      %v4034 = vld [vmem:[#allocation3 + $0xf8] sm:$0x1]
      %v4035 = vsel %vm3973, 0, %v4034
      %4036 = vst [vmem:[#allocation3 + $0xf8] sm:$0x1] %v4035
      %v4037 = vld [vmem:[#allocation3 + $0x104] sm:$0x1]
      %v4038 = vsel %vm3973, 0, %v4037
      %4039 = vst [vmem:[#allocation3 + $0x104] sm:$0x1] %v4038
      %v4040 = vld [vmem:[#allocation3 + $0x110] sm:$0x1]
      %v4041 = vsel %vm3973, 0, %v4040
      %4042 = vst [vmem:[#allocation3 + $0x110] sm:$0x1] %v4041
      %v4043 = vld [vmem:[#allocation3 + $0x11c] sm:$0x1]
      %v4044 = vsel %vm3973, 0, %v4043
      %4045 = vst [vmem:[#allocation3 + $0x11c] sm:$0x1] %v4044
      %v4046 = vld [vmem:[#allocation3 + $0x128] sm:$0x1]
      %v4047 = vsel %vm3973, 0, %v4046
      %4048 = vst [vmem:[#allocation3 + $0x128] sm:$0x1] %v4047
      %v4049 = vld [vmem:[#allocation3 + $0x134] sm:$0x1]
      %v4050 = vsel %vm3973, 0, %v4049
      %4051 = vst [vmem:[#allocation3 + $0x134] sm:$0x1] %v4050
      %v4052 = vld [vmem:[#allocation3 + $0x140] sm:$0x1]
      %v4053 = vsel %vm3973, 0, %v4052
      %4054 = vst [vmem:[#allocation3 + $0x140] sm:$0x1] %v4053
      %v4055 = vld [vmem:[#allocation3 + $0x14c] sm:$0x1]
      %v4056 = vsel %vm3973, 0, %v4055
      %4057 = vst [vmem:[#allocation3 + $0x14c] sm:$0x1] %v4056
      %v4086 = vunpack.c.l.b16 %v3859
      %v4087 = vunpack.c.h.b16 %v3859
      %v4088 = vunpack.c.l.b16 %v3860
      %v4089 = vunpack.c.h.b16 %v3860
      %v4090 = vunpack.c.l.b16 %v3861
      %v4091 = vunpack.c.h.b16 %v3861
      %v4092 = vunpack.c.l.b16 %v3862
      %v4093 = vunpack.c.h.b16 %v3862
      %v4094 = vunpack.c.l.b16 %v3863
      %v4095 = vunpack.c.h.b16 %v3863
      %v4096 = vunpack.c.l.b16 %v3864
      %v4097 = vunpack.c.h.b16 %v3864
      %v4098 = vunpack.c.l.b16 %v3865
      %v4099 = vunpack.c.h.b16 %v3865
      %v4100 = vunpack.c.l.b16 %v3866
      %v4101 = vunpack.c.h.b16 %v3866
      %v4102 = vunpack.c.l.b16 %v3867
      %v4103 = vunpack.c.h.b16 %v3867
      %v4104 = vunpack.c.l.b16 %v3868
      %v4105 = vunpack.c.h.b16 %v3868
      %v4106 = vunpack.c.l.b16 %v3869
      %v4107 = vunpack.c.h.b16 %v3869
      %v4108 = vunpack.c.l.b16 %v3870
      %v4109 = vunpack.c.h.b16 %v3870
      %v4110 = vunpack.c.l.b16 %v3871
      %v4111 = vunpack.c.h.b16 %v3871
      %v4112 = vunpack.c.l.b16 %v3872
      %v4113 = vunpack.c.h.b16 %v3872
      %v4114 = vunpack.c.l.b16 %v3873
      %v4115 = vunpack.c.h.b16 %v3873
      %v4116 = vunpack.c.l.b16 %v3874
      %v4117 = vunpack.c.h.b16 %v3874
      %v4118 = vunpack.c.l.b16 %v3875
      %v4119 = vunpack.c.h.b16 %v3875
      %v4120 = vunpack.c.l.b16 %v3876
      %v4121 = vunpack.c.h.b16 %v3876
      %v4122 = vunpack.c.l.b16 %v3877
      %v4123 = vunpack.c.h.b16 %v3877
      %v4124 = vunpack.c.l.b16 %v3878
      %v4125 = vunpack.c.h.b16 %v3878
      %v4126 = vunpack.c.l.b16 %v3879
      %v4127 = vunpack.c.h.b16 %v3879
      %v4128 = vunpack.c.l.b16 %v3880
      %v4129 = vunpack.c.h.b16 %v3880
      %v4130 = vunpack.c.l.b16 %v3881
      %v4131 = vunpack.c.h.b16 %v3881
      %v4132 = vunpack.c.l.b16 %v3882
      %v4133 = vunpack.c.h.b16 %v3882
      %v4134 = vunpack.c.l.b16 %v3883
      %v4135 = vunpack.c.h.b16 %v3883
      %v4136 = vunpack.c.l.b16 %v3884
      %v4137 = vunpack.c.h.b16 %v3884
      %v4138 = vunpack.c.l.b16 %v3885
      %v4139 = vunpack.c.h.b16 %v3885
      %v4140 = vunpack.c.l.b16 %v3886
      %v4141 = vunpack.c.h.b16 %v3886
      %v4142 = vpack.c.b16 %v4086, %v4086
      %v4143 = vpack.c.b16 %v4087, %v4087
      %v4144 = vpack.c.b16 %v4088, %v4088
      %v4145 = vpack.c.b16 %v4089, %v4089
      %v4146 = vpack.c.b16 %v4090, %v4090
      %v4147 = vpack.c.b16 %v4091, %v4091
      %v4148 = vpack.c.b16 %v4092, %v4092
      %v4149 = vpack.c.b16 %v4093, %v4093
      %v4150 = vpack.c.b16 %v4094, %v4094
      %v4151 = vpack.c.b16 %v4095, %v4095
      %v4152 = vpack.c.b16 %v4096, %v4096
      %v4153 = vpack.c.b16 %v4097, %v4097
      %v4154 = vpack.c.b16 %v4098, %v4098
      %v4155 = vpack.c.b16 %v4099, %v4099
      %v4156 = vpack.c.b16 %v4100, %v4100
      %v4157 = vpack.c.b16 %v4101, %v4101
      %v4158 = vpack.c.b16 %v4102, %v4102
      %v4159 = vpack.c.b16 %v4103, %v4103
      %v4160 = vpack.c.b16 %v4104, %v4104
      %v4161 = vpack.c.b16 %v4105, %v4105
      %v4162 = vpack.c.b16 %v4106, %v4106
      %v4163 = vpack.c.b16 %v4107, %v4107
      %v4164 = vpack.c.b16 %v4108, %v4108
      %v4165 = vpack.c.b16 %v4109, %v4109
      %v4166 = vpack.c.b16 %v4110, %v4110
      %v4167 = vpack.c.b16 %v4111, %v4111
      %v4168 = vpack.c.b16 %v4112, %v4112
      %v4169 = vpack.c.b16 %v4113, %v4113
      %v4170 = vpack.c.b16 %v4114, %v4114
      %v4171 = vpack.c.b16 %v4115, %v4115
      %v4172 = vpack.c.b16 %v4116, %v4116
      %v4173 = vpack.c.b16 %v4117, %v4117
      %v4174 = vpack.c.b16 %v4118, %v4118
      %v4175 = vpack.c.b16 %v4119, %v4119
      %v4176 = vpack.c.b16 %v4120, %v4120
      %v4177 = vpack.c.b16 %v4121, %v4121
      %v4178 = vpack.c.b16 %v4122, %v4122
      %v4179 = vpack.c.b16 %v4123, %v4123
      %v4180 = vpack.c.b16 %v4124, %v4124
      %v4181 = vpack.c.b16 %v4125, %v4125
      %v4182 = vpack.c.b16 %v4126, %v4126
      %v4183 = vpack.c.b16 %v4127, %v4127
      %v4184 = vpack.c.b16 %v4128, %v4128
      %v4185 = vpack.c.b16 %v4129, %v4129
      %v4186 = vpack.c.b16 %v4130, %v4130
      %v4187 = vpack.c.b16 %v4131, %v4131
      %v4188 = vpack.c.b16 %v4132, %v4132
      %v4189 = vpack.c.b16 %v4133, %v4133
      %v4190 = vpack.c.b16 %v4134, %v4134
      %v4191 = vpack.c.b16 %v4135, %v4135
      %v4192 = vpack.c.b16 %v4136, %v4136
      %v4193 = vpack.c.b16 %v4137, %v4137
      %v4194 = vpack.c.b16 %v4138, %v4138
      %v4195 = vpack.c.b16 %v4139, %v4139
      %v4196 = vpack.c.b16 %v4140, %v4140
      %v4197 = vpack.c.b16 %v4141, %v4141
      %v4199 = vshrl.u32 %v4142, 16
      %v4201 = vrot.slane %v4199, 7
      %v4202 = vshll.u32 %v4142, 16
      %v4204 = vor.u32 %v4201, %v4202
      %v4205 = vrot.slane %v4201, 4
      %v4207 = vshrl.u32 %v4143, 16
      %v4209 = vrot.slane %v4207, 7
      %v4210 = vshll.u32 %v4143, 16
      %v4212 = vor.u32 %v4209, %v4210
      %v4213 = vsel %vm743, %v4205, %v4212
      %v4214 = vrot.slane %v4209, 4
      %v4216 = vshrl.u32 %v4144, 16
      %v4218 = vrot.slane %v4216, 7
      %v4219 = vshll.u32 %v4144, 16
      %v4221 = vor.u32 %v4218, %v4219
      %v4222 = vrot.slane %v4218, 4
      %v4224 = vshrl.u32 %v4145, 16
      %v4226 = vrot.slane %v4224, 7
      %v4227 = vshll.u32 %v4145, 16
      %v4229 = vor.u32 %v4226, %v4227
      %v4230 = vsel %vm743, %v4222, %v4229
      %v4231 = vrot.slane %v4226, 4
      %v4233 = vshrl.u32 %v4146, 16
      %v4235 = vrot.slane %v4233, 7
      %v4236 = vshll.u32 %v4146, 16
      %v4238 = vor.u32 %v4235, %v4236
      %v4239 = vrot.slane %v4235, 4
      %v4241 = vshrl.u32 %v4147, 16
      %v4243 = vrot.slane %v4241, 7
      %v4244 = vshll.u32 %v4147, 16
      %v4246 = vor.u32 %v4243, %v4244
      %v4247 = vsel %vm743, %v4239, %v4246
      %v4248 = vrot.slane %v4243, 4
      %v4250 = vshrl.u32 %v4148, 16
      %v4252 = vrot.slane %v4250, 7
      %v4253 = vshll.u32 %v4148, 16
      %v4255 = vor.u32 %v4252, %v4253
      %v4256 = vrot.slane %v4252, 4
      %v4258 = vshrl.u32 %v4149, 16
      %v4260 = vrot.slane %v4258, 7
      %v4261 = vshll.u32 %v4149, 16
      %v4263 = vor.u32 %v4260, %v4261
      %v4264 = vsel %vm743, %v4256, %v4263
      %v4265 = vrot.slane %v4260, 4
      %v4267 = vshrl.u32 %v4150, 16
      %v4269 = vrot.slane %v4267, 7
      %v4270 = vshll.u32 %v4150, 16
      %v4272 = vor.u32 %v4269, %v4270
      %v4273 = vrot.slane %v4269, 4
      %v4275 = vshrl.u32 %v4151, 16
      %v4277 = vrot.slane %v4275, 7
      %v4278 = vshll.u32 %v4151, 16
      %v4280 = vor.u32 %v4277, %v4278
      %v4281 = vsel %vm743, %v4273, %v4280
      %v4282 = vrot.slane %v4277, 4
      %v4284 = vshrl.u32 %v4152, 16
      %v4286 = vrot.slane %v4284, 7
      %v4287 = vshll.u32 %v4152, 16
      %v4289 = vor.u32 %v4286, %v4287
      %v4290 = vrot.slane %v4286, 4
      %v4292 = vshrl.u32 %v4153, 16
      %v4294 = vrot.slane %v4292, 7
      %v4295 = vshll.u32 %v4153, 16
      %v4297 = vor.u32 %v4294, %v4295
      %v4298 = vsel %vm743, %v4290, %v4297
      %v4299 = vrot.slane %v4294, 4
      %v4301 = vshrl.u32 %v4154, 16
      %v4303 = vrot.slane %v4301, 7
      %v4304 = vshll.u32 %v4154, 16
      %v4306 = vor.u32 %v4303, %v4304
      %v4307 = vrot.slane %v4303, 4
      %v4309 = vshrl.u32 %v4155, 16
      %v4311 = vrot.slane %v4309, 7
      %v4312 = vshll.u32 %v4155, 16
      %v4314 = vor.u32 %v4311, %v4312
      %v4315 = vsel %vm743, %v4307, %v4314
      %v4316 = vrot.slane %v4311, 4
      %v4318 = vshrl.u32 %v4156, 16
      %v4320 = vrot.slane %v4318, 7
      %v4321 = vshll.u32 %v4156, 16
      %v4323 = vor.u32 %v4320, %v4321
      %v4324 = vrot.slane %v4320, 4
      %v4326 = vshrl.u32 %v4157, 16
      %v4328 = vrot.slane %v4326, 7
      %v4329 = vshll.u32 %v4157, 16
      %v4331 = vor.u32 %v4328, %v4329
      %v4332 = vsel %vm743, %v4324, %v4331
      %v4333 = vrot.slane %v4328, 4
      %v4335 = vshrl.u32 %v4158, 16
      %v4337 = vrot.slane %v4335, 7
      %v4338 = vshll.u32 %v4158, 16
      %v4340 = vor.u32 %v4337, %v4338
      %v4341 = vrot.slane %v4337, 4
      %v4343 = vshrl.u32 %v4159, 16
      %v4345 = vrot.slane %v4343, 7
      %v4346 = vshll.u32 %v4159, 16
      %v4348 = vor.u32 %v4345, %v4346
      %v4349 = vsel %vm743, %v4341, %v4348
      %v4350 = vrot.slane %v4345, 4
      %v4352 = vshrl.u32 %v4160, 16
      %v4354 = vrot.slane %v4352, 7
      %v4355 = vshll.u32 %v4160, 16
      %v4357 = vor.u32 %v4354, %v4355
      %v4358 = vrot.slane %v4354, 4
      %v4360 = vshrl.u32 %v4161, 16
      %v4362 = vrot.slane %v4360, 7
      %v4363 = vshll.u32 %v4161, 16
      %v4365 = vor.u32 %v4362, %v4363
      %v4366 = vsel %vm743, %v4358, %v4365
      %v4367 = vrot.slane %v4362, 4
      %v4369 = vshrl.u32 %v4162, 16
      %v4371 = vrot.slane %v4369, 7
      %v4372 = vshll.u32 %v4162, 16
      %v4374 = vor.u32 %v4371, %v4372
      %v4375 = vrot.slane %v4371, 4
      %v4377 = vshrl.u32 %v4163, 16
      %v4379 = vrot.slane %v4377, 7
      %v4380 = vshll.u32 %v4163, 16
      %v4382 = vor.u32 %v4379, %v4380
      %v4383 = vsel %vm743, %v4375, %v4382
      %v4384 = vrot.slane %v4379, 4
      %v4386 = vshrl.u32 %v4164, 16
      %v4388 = vrot.slane %v4386, 7
      %v4389 = vshll.u32 %v4164, 16
      %v4391 = vor.u32 %v4388, %v4389
      %v4392 = vrot.slane %v4388, 4
      %v4394 = vshrl.u32 %v4165, 16
      %v4396 = vrot.slane %v4394, 7
      %v4397 = vshll.u32 %v4165, 16
      %v4399 = vor.u32 %v4396, %v4397
      %v4400 = vsel %vm743, %v4392, %v4399
      %v4401 = vrot.slane %v4396, 4
      %v4403 = vshrl.u32 %v4166, 16
      %v4405 = vrot.slane %v4403, 7
      %v4406 = vshll.u32 %v4166, 16
      %v4408 = vor.u32 %v4405, %v4406
      %v4409 = vrot.slane %v4405, 4
      %v4411 = vshrl.u32 %v4167, 16
      %v4413 = vrot.slane %v4411, 7
      %v4414 = vshll.u32 %v4167, 16
      %v4416 = vor.u32 %v4413, %v4414
      %v4417 = vsel %vm743, %v4409, %v4416
      %v4418 = vrot.slane %v4413, 4
      %v4420 = vshrl.u32 %v4168, 16
      %v4422 = vrot.slane %v4420, 7
      %v4423 = vshll.u32 %v4168, 16
      %v4425 = vor.u32 %v4422, %v4423
      %v4426 = vrot.slane %v4422, 4
      %v4428 = vshrl.u32 %v4169, 16
      %v4430 = vrot.slane %v4428, 7
      %v4431 = vshll.u32 %v4169, 16
      %v4433 = vor.u32 %v4430, %v4431
      %v4434 = vsel %vm743, %v4426, %v4433
      %v4435 = vrot.slane %v4430, 4
      %v4437 = vshrl.u32 %v4170, 16
      %v4439 = vrot.slane %v4437, 7
      %v4440 = vshll.u32 %v4170, 16
      %v4442 = vor.u32 %v4439, %v4440
      %v4443 = vrot.slane %v4439, 4
      %v4445 = vshrl.u32 %v4171, 16
      %v4447 = vrot.slane %v4445, 7
      %v4448 = vshll.u32 %v4171, 16
      %v4450 = vor.u32 %v4447, %v4448
      %v4451 = vsel %vm743, %v4443, %v4450
      %v4452 = vrot.slane %v4447, 4
      %v4454 = vshrl.u32 %v4172, 16
      %v4456 = vrot.slane %v4454, 7
      %v4457 = vshll.u32 %v4172, 16
      %v4459 = vor.u32 %v4456, %v4457
      %v4460 = vrot.slane %v4456, 4
      %v4462 = vshrl.u32 %v4173, 16
      %v4464 = vrot.slane %v4462, 7
      %v4465 = vshll.u32 %v4173, 16
      %v4467 = vor.u32 %v4464, %v4465
      %v4468 = vsel %vm743, %v4460, %v4467
      %v4469 = vrot.slane %v4464, 4
      %v4471 = vshrl.u32 %v4174, 16
      %v4473 = vrot.slane %v4471, 7
      %v4474 = vshll.u32 %v4174, 16
      %v4476 = vor.u32 %v4473, %v4474
      %v4477 = vrot.slane %v4473, 4
      %v4479 = vshrl.u32 %v4175, 16
      %v4481 = vrot.slane %v4479, 7
      %v4482 = vshll.u32 %v4175, 16
      %v4484 = vor.u32 %v4481, %v4482
      %v4485 = vsel %vm743, %v4477, %v4484
      %v4486 = vrot.slane %v4481, 4
      %v4488 = vshrl.u32 %v4176, 16
      %v4490 = vrot.slane %v4488, 7
      %v4491 = vshll.u32 %v4176, 16
      %v4493 = vor.u32 %v4490, %v4491
      %v4494 = vrot.slane %v4490, 4
      %v4496 = vshrl.u32 %v4177, 16
      %v4498 = vrot.slane %v4496, 7
      %v4499 = vshll.u32 %v4177, 16
      %v4501 = vor.u32 %v4498, %v4499
      %v4502 = vsel %vm743, %v4494, %v4501
      %v4503 = vrot.slane %v4498, 4
      %v4505 = vshrl.u32 %v4178, 16
      %v4507 = vrot.slane %v4505, 7
      %v4508 = vshll.u32 %v4178, 16
      %v4510 = vor.u32 %v4507, %v4508
      %v4511 = vrot.slane %v4507, 4
      %v4513 = vshrl.u32 %v4179, 16
      %v4515 = vrot.slane %v4513, 7
      %v4516 = vshll.u32 %v4179, 16
      %v4518 = vor.u32 %v4515, %v4516
      %v4519 = vsel %vm743, %v4511, %v4518
      %v4520 = vrot.slane %v4515, 4
      %v4522 = vshrl.u32 %v4180, 16
      %v4524 = vrot.slane %v4522, 7
      %v4525 = vshll.u32 %v4180, 16
      %v4527 = vor.u32 %v4524, %v4525
      %v4528 = vrot.slane %v4524, 4
      %v4530 = vshrl.u32 %v4181, 16
      %v4532 = vrot.slane %v4530, 7
      %v4533 = vshll.u32 %v4181, 16
      %v4535 = vor.u32 %v4532, %v4533
      %v4536 = vsel %vm743, %v4528, %v4535
      %v4537 = vrot.slane %v4532, 4
      %v4539 = vshrl.u32 %v4182, 16
      %v4541 = vrot.slane %v4539, 7
      %v4542 = vshll.u32 %v4182, 16
      %v4544 = vor.u32 %v4541, %v4542
      %v4545 = vrot.slane %v4541, 4
      %v4547 = vshrl.u32 %v4183, 16
      %v4549 = vrot.slane %v4547, 7
      %v4550 = vshll.u32 %v4183, 16
      %v4552 = vor.u32 %v4549, %v4550
      %v4553 = vsel %vm743, %v4545, %v4552
      %v4554 = vrot.slane %v4549, 4
      %v4556 = vshrl.u32 %v4184, 16
      %v4558 = vrot.slane %v4556, 7
      %v4559 = vshll.u32 %v4184, 16
      %v4561 = vor.u32 %v4558, %v4559
      %v4562 = vrot.slane %v4558, 4
      %v4564 = vshrl.u32 %v4185, 16
      %v4566 = vrot.slane %v4564, 7
      %v4567 = vshll.u32 %v4185, 16
      %v4569 = vor.u32 %v4566, %v4567
      %v4570 = vsel %vm743, %v4562, %v4569
      %v4571 = vrot.slane %v4566, 4
      %v4573 = vshrl.u32 %v4186, 16
      %v4575 = vrot.slane %v4573, 7
      %v4576 = vshll.u32 %v4186, 16
      %v4578 = vor.u32 %v4575, %v4576
      %v4579 = vrot.slane %v4575, 4
      %v4581 = vshrl.u32 %v4187, 16
      %v4583 = vrot.slane %v4581, 7
      %v4584 = vshll.u32 %v4187, 16
      %v4586 = vor.u32 %v4583, %v4584
      %v4587 = vsel %vm743, %v4579, %v4586
      %v4588 = vrot.slane %v4583, 4
      %v4590 = vshrl.u32 %v4188, 16
      %v4592 = vrot.slane %v4590, 7
      %v4593 = vshll.u32 %v4188, 16
      %v4595 = vor.u32 %v4592, %v4593
      %v4596 = vrot.slane %v4592, 4
      %v4598 = vshrl.u32 %v4189, 16
      %v4600 = vrot.slane %v4598, 7
      %v4601 = vshll.u32 %v4189, 16
      %v4603 = vor.u32 %v4600, %v4601
      %v4604 = vsel %vm743, %v4596, %v4603
      %v4605 = vrot.slane %v4600, 4
      %v4607 = vshrl.u32 %v4190, 16
      %v4609 = vrot.slane %v4607, 7
      %v4610 = vshll.u32 %v4190, 16
      %v4612 = vor.u32 %v4609, %v4610
      %v4613 = vrot.slane %v4609, 4
      %v4615 = vshrl.u32 %v4191, 16
      %v4617 = vrot.slane %v4615, 7
      %v4618 = vshll.u32 %v4191, 16
      %v4620 = vor.u32 %v4617, %v4618
      %v4621 = vsel %vm743, %v4613, %v4620
      %v4622 = vrot.slane %v4617, 4
      %v4624 = vshrl.u32 %v4192, 16
      %v4626 = vrot.slane %v4624, 7
      %v4627 = vshll.u32 %v4192, 16
      %v4629 = vor.u32 %v4626, %v4627
      %v4630 = vrot.slane %v4626, 4
      %v4632 = vshrl.u32 %v4193, 16
      %v4634 = vrot.slane %v4632, 7
      %v4635 = vshll.u32 %v4193, 16
      %v4637 = vor.u32 %v4634, %v4635
      %v4638 = vsel %vm743, %v4630, %v4637
      %v4639 = vrot.slane %v4634, 4
      %v4641 = vshrl.u32 %v4194, 16
      %v4643 = vrot.slane %v4641, 7
      %v4644 = vshll.u32 %v4194, 16
      %v4646 = vor.u32 %v4643, %v4644
      %v4647 = vrot.slane %v4643, 4
      %v4649 = vshrl.u32 %v4195, 16
      %v4651 = vrot.slane %v4649, 7
      %v4652 = vshll.u32 %v4195, 16
      %v4654 = vor.u32 %v4651, %v4652
      %v4655 = vsel %vm743, %v4647, %v4654
      %v4656 = vrot.slane %v4651, 4
      %v4658 = vshrl.u32 %v4196, 16
      %v4660 = vrot.slane %v4658, 7
      %v4661 = vshll.u32 %v4196, 16
      %v4663 = vor.u32 %v4660, %v4661
      %v4664 = vrot.slane %v4660, 4
      %v4666 = vshrl.u32 %v4197, 16
      %v4668 = vrot.slane %v4666, 7
      %v4669 = vshll.u32 %v4197, 16
      %v4671 = vor.u32 %v4668, %v4669
      %v4672 = vsel %vm743, %v4664, %v4671
      %v4673 = vrot.slane %v4668, 4
      %vm4758 = vcmask 60416
      %vm4759 = vmand %vm4758, %vm452
      %v4760 = vld [vmem:[#allocation3] sm:$0xf]
      %v4761 = vsel %vm4759, %v4204, %v4760
      %4762 = vst [vmem:[#allocation3] sm:$0xf] %v4761
      %vm4763 = vcmask 60416
      %4764 = vst.msk [vmem:[#allocation3 + $0x4] sm:$0xf] %vm4763, %v4213
      %v4765 = vld [vmem:[#allocation3 + $0x8] sm:$0x1]
      %v4766 = vsel %vm3888, %v4214, %v4765
      %4767 = vst [vmem:[#allocation3 + $0x8] sm:$0x1] %v4766
      %v4768 = vld [vmem:[#allocation3 + $0xc] sm:$0xf]
      %v4769 = vsel %vm4759, %v4221, %v4768
      %4770 = vst [vmem:[#allocation3 + $0xc] sm:$0xf] %v4769
      %4771 = vst.msk [vmem:[#allocation3 + $0x10] sm:$0xf] %vm4763, %v4230
      %v4772 = vld [vmem:[#allocation3 + $0x14] sm:$0x1]
      %v4773 = vsel %vm3888, %v4231, %v4772
      %4774 = vst [vmem:[#allocation3 + $0x14] sm:$0x1] %v4773
      %v4775 = vld [vmem:[#allocation3 + $0x18] sm:$0xf]
      %v4776 = vsel %vm4759, %v4238, %v4775
      %4777 = vst [vmem:[#allocation3 + $0x18] sm:$0xf] %v4776
      %4778 = vst.msk [vmem:[#allocation3 + $0x1c] sm:$0xf] %vm4763, %v4247
      %v4779 = vld [vmem:[#allocation3 + $0x20] sm:$0x1]
      %v4780 = vsel %vm3888, %v4248, %v4779
      %4781 = vst [vmem:[#allocation3 + $0x20] sm:$0x1] %v4780
      %v4782 = vld [vmem:[#allocation3 + $0x24] sm:$0xf]
      %v4783 = vsel %vm4759, %v4255, %v4782
      %4784 = vst [vmem:[#allocation3 + $0x24] sm:$0xf] %v4783
      %4785 = vst.msk [vmem:[#allocation3 + $0x28] sm:$0xf] %vm4763, %v4264
      %v4786 = vld [vmem:[#allocation3 + $0x2c] sm:$0x1]
      %v4787 = vsel %vm3888, %v4265, %v4786
      %4788 = vst [vmem:[#allocation3 + $0x2c] sm:$0x1] %v4787
      %v4789 = vld [vmem:[#allocation3 + $0x30] sm:$0xf]
      %v4790 = vsel %vm4759, %v4272, %v4789
      %4791 = vst [vmem:[#allocation3 + $0x30] sm:$0xf] %v4790
      %4792 = vst.msk [vmem:[#allocation3 + $0x34] sm:$0xf] %vm4763, %v4281
      %v4793 = vld [vmem:[#allocation3 + $0x38] sm:$0x1]
      %v4794 = vsel %vm3888, %v4282, %v4793
      %4795 = vst [vmem:[#allocation3 + $0x38] sm:$0x1] %v4794
      %v4796 = vld [vmem:[#allocation3 + $0x3c] sm:$0xf]
      %v4797 = vsel %vm4759, %v4289, %v4796
      %4798 = vst [vmem:[#allocation3 + $0x3c] sm:$0xf] %v4797
      %4799 = vst.msk [vmem:[#allocation3 + $0x40] sm:$0xf] %vm4763, %v4298
      %v4800 = vld [vmem:[#allocation3 + $0x44] sm:$0x1]
      %v4801 = vsel %vm3888, %v4299, %v4800
      %4802 = vst [vmem:[#allocation3 + $0x44] sm:$0x1] %v4801
      %v4803 = vld [vmem:[#allocation3 + $0x48] sm:$0xf]
      %v4804 = vsel %vm4759, %v4306, %v4803
      %4805 = vst [vmem:[#allocation3 + $0x48] sm:$0xf] %v4804
      %4806 = vst.msk [vmem:[#allocation3 + $0x4c] sm:$0xf] %vm4763, %v4315
      %v4807 = vld [vmem:[#allocation3 + $0x50] sm:$0x1]
      %v4808 = vsel %vm3888, %v4316, %v4807
      %4809 = vst [vmem:[#allocation3 + $0x50] sm:$0x1] %v4808
      %v4810 = vld [vmem:[#allocation3 + $0x54] sm:$0xf]
      %v4811 = vsel %vm4759, %v4323, %v4810
      %4812 = vst [vmem:[#allocation3 + $0x54] sm:$0xf] %v4811
      %4813 = vst.msk [vmem:[#allocation3 + $0x58] sm:$0xf] %vm4763, %v4332
      %v4814 = vld [vmem:[#allocation3 + $0x5c] sm:$0x1]
      %v4815 = vsel %vm3888, %v4333, %v4814
      %4816 = vst [vmem:[#allocation3 + $0x5c] sm:$0x1] %v4815
      %v4817 = vld [vmem:[#allocation3 + $0x60] sm:$0xf]
      %v4818 = vsel %vm4759, %v4340, %v4817
      %4819 = vst [vmem:[#allocation3 + $0x60] sm:$0xf] %v4818
      %4820 = vst.msk [vmem:[#allocation3 + $0x64] sm:$0xf] %vm4763, %v4349
      %v4821 = vld [vmem:[#allocation3 + $0x68] sm:$0x1]
      %v4822 = vsel %vm3888, %v4350, %v4821
      %4823 = vst [vmem:[#allocation3 + $0x68] sm:$0x1] %v4822
      %v4824 = vld [vmem:[#allocation3 + $0x6c] sm:$0xf]
      %v4825 = vsel %vm4759, %v4357, %v4824
      %4826 = vst [vmem:[#allocation3 + $0x6c] sm:$0xf] %v4825
      %4827 = vst.msk [vmem:[#allocation3 + $0x70] sm:$0xf] %vm4763, %v4366
      %v4828 = vld [vmem:[#allocation3 + $0x74] sm:$0x1]
      %v4829 = vsel %vm3888, %v4367, %v4828
      %4830 = vst [vmem:[#allocation3 + $0x74] sm:$0x1] %v4829
      %v4831 = vld [vmem:[#allocation3 + $0x78] sm:$0xf]
      %v4832 = vsel %vm4759, %v4374, %v4831
      %4833 = vst [vmem:[#allocation3 + $0x78] sm:$0xf] %v4832
      %4834 = vst.msk [vmem:[#allocation3 + $0x7c] sm:$0xf] %vm4763, %v4383
      %v4835 = vld [vmem:[#allocation3 + $0x80] sm:$0x1]
      %v4836 = vsel %vm3888, %v4384, %v4835
      %4837 = vst [vmem:[#allocation3 + $0x80] sm:$0x1] %v4836
      %v4838 = vld [vmem:[#allocation3 + $0x84] sm:$0xf]
      %v4839 = vsel %vm4759, %v4391, %v4838
      %4840 = vst [vmem:[#allocation3 + $0x84] sm:$0xf] %v4839
      %4841 = vst.msk [vmem:[#allocation3 + $0x88] sm:$0xf] %vm4763, %v4400
      %v4842 = vld [vmem:[#allocation3 + $0x8c] sm:$0x1]
      %v4843 = vsel %vm3888, %v4401, %v4842
      %4844 = vst [vmem:[#allocation3 + $0x8c] sm:$0x1] %v4843
      %v4845 = vld [vmem:[#allocation3 + $0x90] sm:$0xf]
      %v4846 = vsel %vm4759, %v4408, %v4845
      %4847 = vst [vmem:[#allocation3 + $0x90] sm:$0xf] %v4846
      %4848 = vst.msk [vmem:[#allocation3 + $0x94] sm:$0xf] %vm4763, %v4417
      %v4849 = vld [vmem:[#allocation3 + $0x98] sm:$0x1]
      %v4850 = vsel %vm3888, %v4418, %v4849
      %4851 = vst [vmem:[#allocation3 + $0x98] sm:$0x1] %v4850
      %v4852 = vld [vmem:[#allocation3 + $0x9c] sm:$0xf]
      %v4853 = vsel %vm4759, %v4425, %v4852
      %4854 = vst [vmem:[#allocation3 + $0x9c] sm:$0xf] %v4853
      %4855 = vst.msk [vmem:[#allocation3 + $0xa0] sm:$0xf] %vm4763, %v4434
      %v4856 = vld [vmem:[#allocation3 + $0xa4] sm:$0x1]
      %v4857 = vsel %vm3888, %v4435, %v4856
      %4858 = vst [vmem:[#allocation3 + $0xa4] sm:$0x1] %v4857
      %v4859 = vld [vmem:[#allocation3 + $0xa8] sm:$0xf]
      %v4860 = vsel %vm4759, %v4442, %v4859
      %4861 = vst [vmem:[#allocation3 + $0xa8] sm:$0xf] %v4860
      %4862 = vst.msk [vmem:[#allocation3 + $0xac] sm:$0xf] %vm4763, %v4451
      %v4863 = vld [vmem:[#allocation3 + $0xb0] sm:$0x1]
      %v4864 = vsel %vm3888, %v4452, %v4863
      %4865 = vst [vmem:[#allocation3 + $0xb0] sm:$0x1] %v4864
      %v4866 = vld [vmem:[#allocation3 + $0xb4] sm:$0xf]
      %v4867 = vsel %vm4759, %v4459, %v4866
      %4868 = vst [vmem:[#allocation3 + $0xb4] sm:$0xf] %v4867
      %4869 = vst.msk [vmem:[#allocation3 + $0xb8] sm:$0xf] %vm4763, %v4468
      %v4870 = vld [vmem:[#allocation3 + $0xbc] sm:$0x1]
      %v4871 = vsel %vm3888, %v4469, %v4870
      %4872 = vst [vmem:[#allocation3 + $0xbc] sm:$0x1] %v4871
      %v4873 = vld [vmem:[#allocation3 + $0xc0] sm:$0xf]
      %v4874 = vsel %vm4759, %v4476, %v4873
      %4875 = vst [vmem:[#allocation3 + $0xc0] sm:$0xf] %v4874
      %4876 = vst.msk [vmem:[#allocation3 + $0xc4] sm:$0xf] %vm4763, %v4485
      %v4877 = vld [vmem:[#allocation3 + $0xc8] sm:$0x1]
      %v4878 = vsel %vm3888, %v4486, %v4877
      %4879 = vst [vmem:[#allocation3 + $0xc8] sm:$0x1] %v4878
      %v4880 = vld [vmem:[#allocation3 + $0xcc] sm:$0xf]
      %v4881 = vsel %vm4759, %v4493, %v4880
      %4882 = vst [vmem:[#allocation3 + $0xcc] sm:$0xf] %v4881
      %4883 = vst.msk [vmem:[#allocation3 + $0xd0] sm:$0xf] %vm4763, %v4502
      %v4884 = vld [vmem:[#allocation3 + $0xd4] sm:$0x1]
      %v4885 = vsel %vm3888, %v4503, %v4884
      %4886 = vst [vmem:[#allocation3 + $0xd4] sm:$0x1] %v4885
      %v4887 = vld [vmem:[#allocation3 + $0xd8] sm:$0xf]
      %v4888 = vsel %vm4759, %v4510, %v4887
      %4889 = vst [vmem:[#allocation3 + $0xd8] sm:$0xf] %v4888
      %4890 = vst.msk [vmem:[#allocation3 + $0xdc] sm:$0xf] %vm4763, %v4519
      %v4891 = vld [vmem:[#allocation3 + $0xe0] sm:$0x1]
      %v4892 = vsel %vm3888, %v4520, %v4891
      %4893 = vst [vmem:[#allocation3 + $0xe0] sm:$0x1] %v4892
      %v4894 = vld [vmem:[#allocation3 + $0xe4] sm:$0xf]
      %v4895 = vsel %vm4759, %v4527, %v4894
      %4896 = vst [vmem:[#allocation3 + $0xe4] sm:$0xf] %v4895
      %4897 = vst.msk [vmem:[#allocation3 + $0xe8] sm:$0xf] %vm4763, %v4536
      %v4898 = vld [vmem:[#allocation3 + $0xec] sm:$0x1]
      %v4899 = vsel %vm3888, %v4537, %v4898
      %4900 = vst [vmem:[#allocation3 + $0xec] sm:$0x1] %v4899
      %v4901 = vld [vmem:[#allocation3 + $0xf0] sm:$0xf]
      %v4902 = vsel %vm4759, %v4544, %v4901
      %4903 = vst [vmem:[#allocation3 + $0xf0] sm:$0xf] %v4902
      %4904 = vst.msk [vmem:[#allocation3 + $0xf4] sm:$0xf] %vm4763, %v4553
      %v4905 = vld [vmem:[#allocation3 + $0xf8] sm:$0x1]
      %v4906 = vsel %vm3888, %v4554, %v4905
      %4907 = vst [vmem:[#allocation3 + $0xf8] sm:$0x1] %v4906
      %v4908 = vld [vmem:[#allocation3 + $0xfc] sm:$0xf]
      %v4909 = vsel %vm4759, %v4561, %v4908
      %4910 = vst [vmem:[#allocation3 + $0xfc] sm:$0xf] %v4909
      %4911 = vst.msk [vmem:[#allocation3 + $0x100] sm:$0xf] %vm4763, %v4570
      %v4912 = vld [vmem:[#allocation3 + $0x104] sm:$0x1]
      %v4913 = vsel %vm3888, %v4571, %v4912
      %4914 = vst [vmem:[#allocation3 + $0x104] sm:$0x1] %v4913
      %v4915 = vld [vmem:[#allocation3 + $0x108] sm:$0xf]
      %v4916 = vsel %vm4759, %v4578, %v4915
      %4917 = vst [vmem:[#allocation3 + $0x108] sm:$0xf] %v4916
      %4918 = vst.msk [vmem:[#allocation3 + $0x10c] sm:$0xf] %vm4763, %v4587
      %v4919 = vld [vmem:[#allocation3 + $0x110] sm:$0x1]
      %v4920 = vsel %vm3888, %v4588, %v4919
      %4921 = vst [vmem:[#allocation3 + $0x110] sm:$0x1] %v4920
      %v4922 = vld [vmem:[#allocation3 + $0x114] sm:$0xf]
      %v4923 = vsel %vm4759, %v4595, %v4922
      %4924 = vst [vmem:[#allocation3 + $0x114] sm:$0xf] %v4923
      %4925 = vst.msk [vmem:[#allocation3 + $0x118] sm:$0xf] %vm4763, %v4604
      %v4926 = vld [vmem:[#allocation3 + $0x11c] sm:$0x1]
      %v4927 = vsel %vm3888, %v4605, %v4926
      %4928 = vst [vmem:[#allocation3 + $0x11c] sm:$0x1] %v4927
      %v4929 = vld [vmem:[#allocation3 + $0x120] sm:$0xf]
      %v4930 = vsel %vm4759, %v4612, %v4929
      %4931 = vst [vmem:[#allocation3 + $0x120] sm:$0xf] %v4930
      %4932 = vst.msk [vmem:[#allocation3 + $0x124] sm:$0xf] %vm4763, %v4621
      %v4933 = vld [vmem:[#allocation3 + $0x128] sm:$0x1]
      %v4934 = vsel %vm3888, %v4622, %v4933
      %4935 = vst [vmem:[#allocation3 + $0x128] sm:$0x1] %v4934
      %v4936 = vld [vmem:[#allocation3 + $0x12c] sm:$0xf]
      %v4937 = vsel %vm4759, %v4629, %v4936
      %4938 = vst [vmem:[#allocation3 + $0x12c] sm:$0xf] %v4937
      %4939 = vst.msk [vmem:[#allocation3 + $0x130] sm:$0xf] %vm4763, %v4638
      %v4940 = vld [vmem:[#allocation3 + $0x134] sm:$0x1]
      %v4941 = vsel %vm3888, %v4639, %v4940
      %4942 = vst [vmem:[#allocation3 + $0x134] sm:$0x1] %v4941
      %v4943 = vld [vmem:[#allocation3 + $0x138] sm:$0xf]
      %v4944 = vsel %vm4759, %v4646, %v4943
      %4945 = vst [vmem:[#allocation3 + $0x138] sm:$0xf] %v4944
      %4946 = vst.msk [vmem:[#allocation3 + $0x13c] sm:$0xf] %vm4763, %v4655
      %v4947 = vld [vmem:[#allocation3 + $0x140] sm:$0x1]
      %v4948 = vsel %vm3888, %v4656, %v4947
      %4949 = vst [vmem:[#allocation3 + $0x140] sm:$0x1] %v4948
      %v4950 = vld [vmem:[#allocation3 + $0x144] sm:$0xf]
      %v4951 = vsel %vm4759, %v4663, %v4950
      %4952 = vst [vmem:[#allocation3 + $0x144] sm:$0xf] %v4951
      %4953 = vst.msk [vmem:[#allocation3 + $0x148] sm:$0xf] %vm4763, %v4672
      %v4954 = vld [vmem:[#allocation3 + $0x14c] sm:$0x1]
      %v4955 = vsel %vm3888, %v4673, %v4954
      %4956 = vst [vmem:[#allocation3 + $0x14c] sm:$0x1] %v4955
      %v4957 = vld [vmem:[#allocation3] sm:$0xf]
      %v4958 = vld [vmem:[#allocation3 + $0x4] sm:$0xf]
      %v4959 = vld [vmem:[#allocation3 + $0x8] sm:$0x1]
      %v4960 = vld [vmem:[#allocation3 + $0xc] sm:$0xf]
      %v4961 = vld [vmem:[#allocation3 + $0x10] sm:$0xf]
      %v4962 = vld [vmem:[#allocation3 + $0x14] sm:$0x1]
      %v4963 = vld [vmem:[#allocation3 + $0x18] sm:$0xf]
      %v4964 = vld [vmem:[#allocation3 + $0x1c] sm:$0xf]
      %v4965 = vld [vmem:[#allocation3 + $0x20] sm:$0x1]
      %v4966 = vld [vmem:[#allocation3 + $0x24] sm:$0xf]
      %v4967 = vld [vmem:[#allocation3 + $0x28] sm:$0xf]
      %v4968 = vld [vmem:[#allocation3 + $0x2c] sm:$0x1]
      %v4969 = vld [vmem:[#allocation3 + $0x30] sm:$0xf]
      %v4970 = vld [vmem:[#allocation3 + $0x34] sm:$0xf]
      %v4971 = vld [vmem:[#allocation3 + $0x38] sm:$0x1]
      %v4972 = vld [vmem:[#allocation3 + $0x3c] sm:$0xf]
      %v4973 = vld [vmem:[#allocation3 + $0x40] sm:$0xf]
      %v4974 = vld [vmem:[#allocation3 + $0x44] sm:$0x1]
      %v4975 = vld [vmem:[#allocation3 + $0x48] sm:$0xf]
      %v4976 = vld [vmem:[#allocation3 + $0x4c] sm:$0xf]
      %v4977 = vld [vmem:[#allocation3 + $0x50] sm:$0x1]
      %v4978 = vld [vmem:[#allocation3 + $0x54] sm:$0xf]
      %v4979 = vld [vmem:[#allocation3 + $0x58] sm:$0xf]
      %v4980 = vld [vmem:[#allocation3 + $0x5c] sm:$0x1]
      %v4981 = vld [vmem:[#allocation3 + $0x60] sm:$0xf]
      %v4982 = vld [vmem:[#allocation3 + $0x64] sm:$0xf]
      %v4983 = vld [vmem:[#allocation3 + $0x68] sm:$0x1]
      %v4984 = vld [vmem:[#allocation3 + $0x6c] sm:$0xf]
      %v4985 = vld [vmem:[#allocation3 + $0x70] sm:$0xf]
      %v4986 = vld [vmem:[#allocation3 + $0x74] sm:$0x1]
      %v4987 = vld [vmem:[#allocation3 + $0x78] sm:$0xf]
      %v4988 = vld [vmem:[#allocation3 + $0x7c] sm:$0xf]
      %v4989 = vld [vmem:[#allocation3 + $0x80] sm:$0x1]
      %v4990 = vld [vmem:[#allocation3 + $0x84] sm:$0xf]
      %v4991 = vld [vmem:[#allocation3 + $0x88] sm:$0xf]
      %v4992 = vld [vmem:[#allocation3 + $0x8c] sm:$0x1]
      %v4993 = vld [vmem:[#allocation3 + $0x90] sm:$0xf]
      %v4994 = vld [vmem:[#allocation3 + $0x94] sm:$0xf]
      %v4995 = vld [vmem:[#allocation3 + $0x98] sm:$0x1]
      %v4996 = vld [vmem:[#allocation3 + $0x9c] sm:$0xf]
      %v4997 = vld [vmem:[#allocation3 + $0xa0] sm:$0xf]
      %v4998 = vld [vmem:[#allocation3 + $0xa4] sm:$0x1]
      %v4999 = vld [vmem:[#allocation3 + $0xa8] sm:$0xf]
      %v5000 = vld [vmem:[#allocation3 + $0xac] sm:$0xf]
      %v5001 = vld [vmem:[#allocation3 + $0xb0] sm:$0x1]
      %v5002 = vld [vmem:[#allocation3 + $0xb4] sm:$0xf]
      %v5003 = vld [vmem:[#allocation3 + $0xb8] sm:$0xf]
      %v5004 = vld [vmem:[#allocation3 + $0xbc] sm:$0x1]
      %v5005 = vld [vmem:[#allocation3 + $0xc0] sm:$0xf]
      %v5006 = vld [vmem:[#allocation3 + $0xc4] sm:$0xf]
      %v5007 = vld [vmem:[#allocation3 + $0xc8] sm:$0x1]
      %v5008 = vld [vmem:[#allocation3 + $0xcc] sm:$0xf]
      %v5009 = vld [vmem:[#allocation3 + $0xd0] sm:$0xf]
      %v5010 = vld [vmem:[#allocation3 + $0xd4] sm:$0x1]
      %v5011 = vld [vmem:[#allocation3 + $0xd8] sm:$0xf]
      %v5012 = vld [vmem:[#allocation3 + $0xdc] sm:$0xf]
      %v5013 = vld [vmem:[#allocation3 + $0xe0] sm:$0x1]
      %v5014 = vld [vmem:[#allocation3 + $0xe4] sm:$0xf]
      %v5015 = vld [vmem:[#allocation3 + $0xe8] sm:$0xf]
      %v5016 = vld [vmem:[#allocation3 + $0xec] sm:$0x1]
      %v5017 = vld [vmem:[#allocation3 + $0xf0] sm:$0xf]
      %v5018 = vld [vmem:[#allocation3 + $0xf4] sm:$0xf]
      %v5019 = vld [vmem:[#allocation3 + $0xf8] sm:$0x1]
      %v5020 = vld [vmem:[#allocation3 + $0xfc] sm:$0xf]
      %v5021 = vld [vmem:[#allocation3 + $0x100] sm:$0xf]
      %v5022 = vld [vmem:[#allocation3 + $0x104] sm:$0x1]
      %v5023 = vld [vmem:[#allocation3 + $0x108] sm:$0xf]
      %v5024 = vld [vmem:[#allocation3 + $0x10c] sm:$0xf]
      %v5025 = vld [vmem:[#allocation3 + $0x110] sm:$0x1]
      %v5026 = vld [vmem:[#allocation3 + $0x114] sm:$0xf]
      %v5027 = vld [vmem:[#allocation3 + $0x118] sm:$0xf]
      %v5028 = vld [vmem:[#allocation3 + $0x11c] sm:$0x1]
      %v5029 = vld [vmem:[#allocation3 + $0x120] sm:$0xf]
      %v5030 = vld [vmem:[#allocation3 + $0x124] sm:$0xf]
      %v5031 = vld [vmem:[#allocation3 + $0x128] sm:$0x1]
      %v5032 = vld [vmem:[#allocation3 + $0x12c] sm:$0xf]
      %v5033 = vld [vmem:[#allocation3 + $0x130] sm:$0xf]
      %v5034 = vld [vmem:[#allocation3 + $0x134] sm:$0x1]
      %v5035 = vld [vmem:[#allocation3 + $0x138] sm:$0xf]
      %v5036 = vld [vmem:[#allocation3 + $0x13c] sm:$0xf]
      %v5037 = vld [vmem:[#allocation3 + $0x140] sm:$0x1]
      %v5038 = vld [vmem:[#allocation3 + $0x144] sm:$0xf]
      %v5039 = vld [vmem:[#allocation3 + $0x148] sm:$0xf]
      %v5040 = vld [vmem:[#allocation3 + $0x14c] sm:$0x1]
      %v5089 = vunpack.c.l.b16 %v4957
      %v5090 = vunpack.c.l.b16 %v4958
      %v5091 = vunpack.c.l.b16 %v4960
      %v5092 = vunpack.c.l.b16 %v4961
      %v5093 = vunpack.c.l.b16 %v4963
      %v5094 = vunpack.c.l.b16 %v4964
      %v5095 = vunpack.c.l.b16 %v4966
      %v5096 = vunpack.c.l.b16 %v4967
      %v5097 = vunpack.c.l.b16 %v4969
      %v5098 = vunpack.c.l.b16 %v4970
      %v5099 = vunpack.c.l.b16 %v4972
      %v5100 = vunpack.c.l.b16 %v4973
      %v5101 = vunpack.c.l.b16 %v4975
      %v5102 = vunpack.c.l.b16 %v4976
      %v5103 = vunpack.c.l.b16 %v4978
      %v5104 = vunpack.c.l.b16 %v4979
      %v5105 = vunpack.c.l.b16 %v4981
      %v5106 = vunpack.c.l.b16 %v4982
      %v5107 = vunpack.c.l.b16 %v4984
      %v5108 = vunpack.c.l.b16 %v4985
      %v5109 = vunpack.c.l.b16 %v4987
      %v5110 = vunpack.c.l.b16 %v4988
      %v5111 = vunpack.c.l.b16 %v4990
      %v5112 = vunpack.c.l.b16 %v4991
      %v5113 = vunpack.c.l.b16 %v4999
      %v5114 = vunpack.c.l.b16 %v5000
      %v5115 = vunpack.c.l.b16 %v5002
      %v5116 = vunpack.c.l.b16 %v5003
      %v5117 = vunpack.c.l.b16 %v5005
      %v5118 = vunpack.c.l.b16 %v5006
      %v5119 = vunpack.c.l.b16 %v5008
      %v5120 = vunpack.c.l.b16 %v5009
      %v5121 = vunpack.c.l.b16 %v5011
      %v5122 = vunpack.c.l.b16 %v5012
      %v5123 = vunpack.c.l.b16 %v5014
      %v5124 = vunpack.c.l.b16 %v5015
      %v5125 = vunpack.c.l.b16 %v5017
      %v5126 = vunpack.c.l.b16 %v5018
      %v5127 = vunpack.c.l.b16 %v5020
      %v5128 = vunpack.c.l.b16 %v5021
      %v5129 = vunpack.c.l.b16 %v5023
      %v5130 = vunpack.c.l.b16 %v5024
      %v5131 = vunpack.c.l.b16 %v5026
      %v5132 = vunpack.c.l.b16 %v5027
      %v5133 = vunpack.c.l.b16 %v5029
      %v5134 = vunpack.c.l.b16 %v5030
      %v5135 = vunpack.c.l.b16 %v5032
      %v5136 = vunpack.c.l.b16 %v5033
      %v5137 = vpack.c.b16 %v5090, %v5089
      %v5138 = vpack.c.b16 %v5092, %v5091
      %v5139 = vpack.c.b16 %v5094, %v5093
      %v5140 = vpack.c.b16 %v5096, %v5095
      %v5141 = vpack.c.b16 %v5098, %v5097
      %v5142 = vpack.c.b16 %v5100, %v5099
      %v5143 = vpack.c.b16 %v5102, %v5101
      %v5144 = vpack.c.b16 %v5104, %v5103
      %v5145 = vpack.c.b16 %v5106, %v5105
      %v5146 = vpack.c.b16 %v5108, %v5107
      %v5147 = vpack.c.b16 %v5110, %v5109
      %v5148 = vpack.c.b16 %v5112, %v5111
      %v5149 = vpack.c.b16 %v5114, %v5113
      %v5150 = vpack.c.b16 %v5116, %v5115
      %v5151 = vpack.c.b16 %v5118, %v5117
      %v5152 = vpack.c.b16 %v5120, %v5119
      %v5153 = vpack.c.b16 %v5122, %v5121
      %v5154 = vpack.c.b16 %v5124, %v5123
      %v5155 = vpack.c.b16 %v5126, %v5125
      %v5156 = vpack.c.b16 %v5128, %v5127
      %v5157 = vpack.c.b16 %v5130, %v5129
      %v5158 = vpack.c.b16 %v5132, %v5131
      %v5159 = vpack.c.b16 %v5134, %v5133
      %v5160 = vpack.c.b16 %v5136, %v5135
      %v5185 = vunpack.c.l.b16 %v4959
      %v5186 = vunpack.c.l.b16 %v4962
      %v5187 = vunpack.c.l.b16 %v4965
      %v5188 = vunpack.c.l.b16 %v4968
      %v5189 = vunpack.c.l.b16 %v4971
      %v5190 = vunpack.c.l.b16 %v4974
      %v5191 = vunpack.c.l.b16 %v4977
      %v5192 = vunpack.c.l.b16 %v4980
      %v5193 = vunpack.c.l.b16 %v4983
      %v5194 = vunpack.c.l.b16 %v4986
      %v5195 = vunpack.c.l.b16 %v4989
      %v5196 = vunpack.c.l.b16 %v4992
      %v5197 = vunpack.c.l.b16 %v5001
      %v5198 = vunpack.c.l.b16 %v5004
      %v5199 = vunpack.c.l.b16 %v5007
      %v5200 = vunpack.c.l.b16 %v5010
      %v5201 = vunpack.c.l.b16 %v5013
      %v5202 = vunpack.c.l.b16 %v5016
      %v5203 = vunpack.c.l.b16 %v5019
      %v5204 = vunpack.c.l.b16 %v5022
      %v5205 = vunpack.c.l.b16 %v5025
      %v5206 = vunpack.c.l.b16 %v5028
      %v5207 = vunpack.c.l.b16 %v5031
      %v5208 = vunpack.c.l.b16 %v5034
      %v5209 = vpack.c.b16 %v5185, %v5185
      %v5210 = vpack.c.b16 %v5186, %v5186
      %v5211 = vpack.c.b16 %v5187, %v5187
      %v5212 = vpack.c.b16 %v5188, %v5188
      %v5213 = vpack.c.b16 %v5189, %v5189
      %v5214 = vpack.c.b16 %v5190, %v5190
      %v5215 = vpack.c.b16 %v5191, %v5191
      %v5216 = vpack.c.b16 %v5192, %v5192
      %v5217 = vpack.c.b16 %v5193, %v5193
      %v5218 = vpack.c.b16 %v5194, %v5194
      %v5219 = vpack.c.b16 %v5195, %v5195
      %v5220 = vpack.c.b16 %v5196, %v5196
      %v5221 = vpack.c.b16 %v5197, %v5197
      %v5222 = vpack.c.b16 %v5198, %v5198
      %v5223 = vpack.c.b16 %v5199, %v5199
      %v5224 = vpack.c.b16 %v5200, %v5200
      %v5225 = vpack.c.b16 %v5201, %v5201
      %v5226 = vpack.c.b16 %v5202, %v5202
      %v5227 = vpack.c.b16 %v5203, %v5203
      %v5228 = vpack.c.b16 %v5204, %v5204
      %v5229 = vpack.c.b16 %v5205, %v5205
      %v5230 = vpack.c.b16 %v5206, %v5206
      %v5231 = vpack.c.b16 %v5207, %v5207
      %v5232 = vpack.c.b16 %v5208, %v5208
      %v5234 = vshrl.u32 %v5137, 16
      %v5236 = vshll.u32 %v5137, 16
      %v5238 = vrot.slane %v5236, 1
      %v5239 = vor.u32 %v5234, %v5238
      %v5241 = vshll.u32 %v5209, 16
      %v5243 = vrot.slane %v5241, 1
      %v5244 = vsel %vm1931, %v5239, %v5243
      %v5246 = vshrl.u32 %v5138, 16
      %v5248 = vshll.u32 %v5138, 16
      %v5250 = vrot.slane %v5248, 1
      %v5251 = vor.u32 %v5246, %v5250
      %v5253 = vshll.u32 %v5210, 16
      %v5255 = vrot.slane %v5253, 1
      %v5256 = vsel %vm1931, %v5251, %v5255
      %v5258 = vshrl.u32 %v5139, 16
      %v5260 = vshll.u32 %v5139, 16
      %v5262 = vrot.slane %v5260, 1
      %v5263 = vor.u32 %v5258, %v5262
      %v5265 = vshll.u32 %v5211, 16
      %v5267 = vrot.slane %v5265, 1
      %v5268 = vsel %vm1931, %v5263, %v5267
      %v5270 = vshrl.u32 %v5140, 16
      %v5272 = vshll.u32 %v5140, 16
      %v5274 = vrot.slane %v5272, 1
      %v5275 = vor.u32 %v5270, %v5274
      %v5277 = vshll.u32 %v5212, 16
      %v5279 = vrot.slane %v5277, 1
      %v5280 = vsel %vm1931, %v5275, %v5279
      %v5282 = vshrl.u32 %v5141, 16
      %v5284 = vshll.u32 %v5141, 16
      %v5286 = vrot.slane %v5284, 1
      %v5287 = vor.u32 %v5282, %v5286
      %v5289 = vshll.u32 %v5213, 16
      %v5291 = vrot.slane %v5289, 1
      %v5292 = vsel %vm1931, %v5287, %v5291
      %v5294 = vshrl.u32 %v5142, 16
      %v5296 = vshll.u32 %v5142, 16
      %v5298 = vrot.slane %v5296, 1
      %v5299 = vor.u32 %v5294, %v5298
      %v5301 = vshll.u32 %v5214, 16
      %v5303 = vrot.slane %v5301, 1
      %v5304 = vsel %vm1931, %v5299, %v5303
      %v5306 = vshrl.u32 %v5143, 16
      %v5308 = vshll.u32 %v5143, 16
      %v5310 = vrot.slane %v5308, 1
      %v5311 = vor.u32 %v5306, %v5310
      %v5313 = vshll.u32 %v5215, 16
      %v5315 = vrot.slane %v5313, 1
      %v5316 = vsel %vm1931, %v5311, %v5315
      %v5318 = vshrl.u32 %v5144, 16
      %v5320 = vshll.u32 %v5144, 16
      %v5322 = vrot.slane %v5320, 1
      %v5323 = vor.u32 %v5318, %v5322
      %v5325 = vshll.u32 %v5216, 16
      %v5327 = vrot.slane %v5325, 1
      %v5328 = vsel %vm1931, %v5323, %v5327
      %v5330 = vshrl.u32 %v5145, 16
      %v5332 = vshll.u32 %v5145, 16
      %v5334 = vrot.slane %v5332, 1
      %v5335 = vor.u32 %v5330, %v5334
      %v5337 = vshll.u32 %v5217, 16
      %v5339 = vrot.slane %v5337, 1
      %v5340 = vsel %vm1931, %v5335, %v5339
      %v5342 = vshrl.u32 %v5146, 16
      %v5344 = vshll.u32 %v5146, 16
      %v5346 = vrot.slane %v5344, 1
      %v5347 = vor.u32 %v5342, %v5346
      %v5349 = vshll.u32 %v5218, 16
      %v5351 = vrot.slane %v5349, 1
      %v5352 = vsel %vm1931, %v5347, %v5351
      %v5354 = vshrl.u32 %v5147, 16
      %v5356 = vshll.u32 %v5147, 16
      %v5358 = vrot.slane %v5356, 1
      %v5359 = vor.u32 %v5354, %v5358
      %v5361 = vshll.u32 %v5219, 16
      %v5363 = vrot.slane %v5361, 1
      %v5364 = vsel %vm1931, %v5359, %v5363
      %v5366 = vshrl.u32 %v5148, 16
      %v5368 = vshll.u32 %v5148, 16
      %v5370 = vrot.slane %v5368, 1
      %v5371 = vor.u32 %v5366, %v5370
      %v5373 = vshll.u32 %v5220, 16
      %v5375 = vrot.slane %v5373, 1
      %v5376 = vsel %vm1931, %v5371, %v5375
      %v5378 = vshrl.u32 %v5149, 16
      %v5380 = vshll.u32 %v5149, 16
      %v5382 = vrot.slane %v5380, 1
      %v5383 = vor.u32 %v5378, %v5382
      %v5385 = vshll.u32 %v5221, 16
      %v5387 = vrot.slane %v5385, 1
      %v5388 = vsel %vm1931, %v5383, %v5387
      %v5390 = vshrl.u32 %v5150, 16
      %v5392 = vshll.u32 %v5150, 16
      %v5394 = vrot.slane %v5392, 1
      %v5395 = vor.u32 %v5390, %v5394
      %v5397 = vshll.u32 %v5222, 16
      %v5399 = vrot.slane %v5397, 1
      %v5400 = vsel %vm1931, %v5395, %v5399
      %v5402 = vshrl.u32 %v5151, 16
      %v5404 = vshll.u32 %v5151, 16
      %v5406 = vrot.slane %v5404, 1
      %v5407 = vor.u32 %v5402, %v5406
      %v5409 = vshll.u32 %v5223, 16
      %v5411 = vrot.slane %v5409, 1
      %v5412 = vsel %vm1931, %v5407, %v5411
      %v5414 = vshrl.u32 %v5152, 16
      %v5416 = vshll.u32 %v5152, 16
      %v5418 = vrot.slane %v5416, 1
      %v5419 = vor.u32 %v5414, %v5418
      %v5421 = vshll.u32 %v5224, 16
      %v5423 = vrot.slane %v5421, 1
      %v5424 = vsel %vm1931, %v5419, %v5423
      %v5426 = vshrl.u32 %v5153, 16
      %v5428 = vshll.u32 %v5153, 16
      %v5430 = vrot.slane %v5428, 1
      %v5431 = vor.u32 %v5426, %v5430
      %v5433 = vshll.u32 %v5225, 16
      %v5435 = vrot.slane %v5433, 1
      %v5436 = vsel %vm1931, %v5431, %v5435
      %v5438 = vshrl.u32 %v5154, 16
      %v5440 = vshll.u32 %v5154, 16
      %v5442 = vrot.slane %v5440, 1
      %v5443 = vor.u32 %v5438, %v5442
      %v5445 = vshll.u32 %v5226, 16
      %v5447 = vrot.slane %v5445, 1
      %v5448 = vsel %vm1931, %v5443, %v5447
      %v5450 = vshrl.u32 %v5155, 16
      %v5452 = vshll.u32 %v5155, 16
      %v5454 = vrot.slane %v5452, 1
      %v5455 = vor.u32 %v5450, %v5454
      %v5457 = vshll.u32 %v5227, 16
      %v5459 = vrot.slane %v5457, 1
      %v5460 = vsel %vm1931, %v5455, %v5459
      %v5462 = vshrl.u32 %v5156, 16
      %v5464 = vshll.u32 %v5156, 16
      %v5466 = vrot.slane %v5464, 1
      %v5467 = vor.u32 %v5462, %v5466
      %v5469 = vshll.u32 %v5228, 16
      %v5471 = vrot.slane %v5469, 1
      %v5472 = vsel %vm1931, %v5467, %v5471
      %v5474 = vshrl.u32 %v5157, 16
      %v5476 = vshll.u32 %v5157, 16
      %v5478 = vrot.slane %v5476, 1
      %v5479 = vor.u32 %v5474, %v5478
      %v5481 = vshll.u32 %v5229, 16
      %v5483 = vrot.slane %v5481, 1
      %v5484 = vsel %vm1931, %v5479, %v5483
      %v5486 = vshrl.u32 %v5158, 16
      %v5488 = vshll.u32 %v5158, 16
      %v5490 = vrot.slane %v5488, 1
      %v5491 = vor.u32 %v5486, %v5490
      %v5493 = vshll.u32 %v5230, 16
      %v5495 = vrot.slane %v5493, 1
      %v5496 = vsel %vm1931, %v5491, %v5495
      %v5498 = vshrl.u32 %v5159, 16
      %v5500 = vshll.u32 %v5159, 16
      %v5502 = vrot.slane %v5500, 1
      %v5503 = vor.u32 %v5498, %v5502
      %v5505 = vshll.u32 %v5231, 16
      %v5507 = vrot.slane %v5505, 1
      %v5508 = vsel %vm1931, %v5503, %v5507
      %v5510 = vshrl.u32 %v5160, 16
      %v5512 = vshll.u32 %v5160, 16
      %v5514 = vrot.slane %v5512, 1
      %v5515 = vor.u32 %v5510, %v5514
      %v5517 = vshll.u32 %v5232, 16
      %v5519 = vrot.slane %v5517, 1
      %v5520 = vsel %vm1931, %v5515, %v5519
      %5521 = vrot.lane.b32.xlu0 %v5244, 8
      %v5522 = vpop.permute.xlu0 %5521
      %5523 = vrot.lane.b32.xlu0 %v5256, 8
      %v5524 = vpop.permute.xlu0 %5523
      %5525 = vrot.lane.b32.xlu0 %v5268, 8
      %v5526 = vpop.permute.xlu0 %5525
      %5527 = vrot.lane.b32.xlu0 %v5280, 8
      %v5528 = vpop.permute.xlu0 %5527
      %5529 = vrot.lane.b32.xlu0 %v5292, 8
      %v5530 = vpop.permute.xlu0 %5529
      %5531 = vrot.lane.b32.xlu0 %v5304, 8
      %v5532 = vpop.permute.xlu0 %5531
      %5533 = vrot.lane.b32.xlu0 %v5316, 8
      %v5534 = vpop.permute.xlu0 %5533
      %5535 = vrot.lane.b32.xlu0 %v5328, 8
      %v5536 = vpop.permute.xlu0 %5535
      %5537 = vrot.lane.b32.xlu0 %v5340, 8
      %v5538 = vpop.permute.xlu0 %5537
      %5539 = vrot.lane.b32.xlu0 %v5352, 8
      %v5540 = vpop.permute.xlu0 %5539
      %5541 = vrot.lane.b32.xlu0 %v5364, 8
      %v5542 = vpop.permute.xlu0 %5541
      %5543 = vrot.lane.b32.xlu0 %v5376, 8
      %v5544 = vpop.permute.xlu0 %5543
      %5545 = vrot.lane.b32.xlu0 %v5388, 8
      %v5546 = vpop.permute.xlu0 %5545
      %5547 = vrot.lane.b32.xlu0 %v5400, 8
      %v5548 = vpop.permute.xlu0 %5547
      %5549 = vrot.lane.b32.xlu0 %v5412, 8
      %v5550 = vpop.permute.xlu0 %5549
      %5551 = vrot.lane.b32.xlu0 %v5424, 8
      %v5552 = vpop.permute.xlu0 %5551
      %5553 = vrot.lane.b32.xlu0 %v5436, 8
      %v5554 = vpop.permute.xlu0 %5553
      %5555 = vrot.lane.b32.xlu0 %v5448, 8
      %v5556 = vpop.permute.xlu0 %5555
      %5557 = vrot.lane.b32.xlu0 %v5460, 8
      %v5558 = vpop.permute.xlu0 %5557
      %5559 = vrot.lane.b32.xlu0 %v5472, 8
      %v5560 = vpop.permute.xlu0 %5559
      %5561 = vrot.lane.b32.xlu0 %v5484, 8
      %v5562 = vpop.permute.xlu0 %5561
      %5563 = vrot.lane.b32.xlu0 %v5496, 8
      %v5564 = vpop.permute.xlu0 %5563
      %5565 = vrot.lane.b32.xlu0 %v5508, 8
      %v5566 = vpop.permute.xlu0 %5565
      %5567 = vrot.lane.b32.xlu0 %v5520, 8
      %v5568 = vpop.permute.xlu0 %5567
      %v5569 = vrot.slane %v5137, 1
      %v5570 = vrot.slane %v5209, 1
      %v5571 = vsel %vm2324, %v5569, %v5570
      %v5572 = vrot.slane %v5138, 1
      %v5573 = vrot.slane %v5210, 1
      %v5574 = vsel %vm2324, %v5572, %v5573
      %v5575 = vrot.slane %v5139, 1
      %v5576 = vrot.slane %v5211, 1
      %v5577 = vsel %vm2324, %v5575, %v5576
      %v5578 = vrot.slane %v5140, 1
      %v5579 = vrot.slane %v5212, 1
      %v5580 = vsel %vm2324, %v5578, %v5579
      %v5581 = vrot.slane %v5141, 1
      %v5582 = vrot.slane %v5213, 1
      %v5583 = vsel %vm2324, %v5581, %v5582
      %v5584 = vrot.slane %v5142, 1
      %v5585 = vrot.slane %v5214, 1
      %v5586 = vsel %vm2324, %v5584, %v5585
      %v5587 = vrot.slane %v5143, 1
      %v5588 = vrot.slane %v5215, 1
      %v5589 = vsel %vm2324, %v5587, %v5588
      %v5590 = vrot.slane %v5144, 1
      %v5591 = vrot.slane %v5216, 1
      %v5592 = vsel %vm2324, %v5590, %v5591
      %v5593 = vrot.slane %v5145, 1
      %v5594 = vrot.slane %v5217, 1
      %v5595 = vsel %vm2324, %v5593, %v5594
      %v5596 = vrot.slane %v5146, 1
      %v5597 = vrot.slane %v5218, 1
      %v5598 = vsel %vm2324, %v5596, %v5597
      %v5599 = vrot.slane %v5147, 1
      %v5600 = vrot.slane %v5219, 1
      %v5601 = vsel %vm2324, %v5599, %v5600
      %v5602 = vrot.slane %v5148, 1
      %v5603 = vrot.slane %v5220, 1
      %v5604 = vsel %vm2324, %v5602, %v5603
      %v5605 = vrot.slane %v5149, 1
      %v5606 = vrot.slane %v5221, 1
      %v5607 = vsel %vm2324, %v5605, %v5606
      %v5608 = vrot.slane %v5150, 1
      %v5609 = vrot.slane %v5222, 1
      %v5610 = vsel %vm2324, %v5608, %v5609
      %v5611 = vrot.slane %v5151, 1
      %v5612 = vrot.slane %v5223, 1
      %v5613 = vsel %vm2324, %v5611, %v5612
      %v5614 = vrot.slane %v5152, 1
      %v5615 = vrot.slane %v5224, 1
      %v5616 = vsel %vm2324, %v5614, %v5615
      %v5617 = vrot.slane %v5153, 1
      %v5618 = vrot.slane %v5225, 1
      %v5619 = vsel %vm2324, %v5617, %v5618
      %v5620 = vrot.slane %v5154, 1
      %v5621 = vrot.slane %v5226, 1
      %v5622 = vsel %vm2324, %v5620, %v5621
      %v5623 = vrot.slane %v5155, 1
      %v5624 = vrot.slane %v5227, 1
      %v5625 = vsel %vm2324, %v5623, %v5624
      %v5626 = vrot.slane %v5156, 1
      %v5627 = vrot.slane %v5228, 1
      %v5628 = vsel %vm2324, %v5626, %v5627
      %v5629 = vrot.slane %v5157, 1
      %v5630 = vrot.slane %v5229, 1
      %v5631 = vsel %vm2324, %v5629, %v5630
      %v5632 = vrot.slane %v5158, 1
      %v5633 = vrot.slane %v5230, 1
      %v5634 = vsel %vm2324, %v5632, %v5633
      %v5635 = vrot.slane %v5159, 1
      %v5636 = vrot.slane %v5231, 1
      %v5637 = vsel %vm2324, %v5635, %v5636
      %v5638 = vrot.slane %v5160, 1
      %v5639 = vrot.slane %v5232, 1
      %v5640 = vsel %vm2324, %v5638, %v5639
      %5641 = vrot.lane.b32.xlu0 %v5571, 16
      %v5642 = vpop.permute.xlu0 %5641
      %5643 = vrot.lane.b32.xlu0 %v5574, 16
      %v5644 = vpop.permute.xlu0 %5643
      %5645 = vrot.lane.b32.xlu0 %v5577, 16
      %v5646 = vpop.permute.xlu0 %5645
      %5647 = vrot.lane.b32.xlu0 %v5580, 16
      %v5648 = vpop.permute.xlu0 %5647
      %5649 = vrot.lane.b32.xlu0 %v5583, 16
      %v5650 = vpop.permute.xlu0 %5649
      %5651 = vrot.lane.b32.xlu0 %v5586, 16
      %v5652 = vpop.permute.xlu0 %5651
      %5653 = vrot.lane.b32.xlu0 %v5589, 16
      %v5654 = vpop.permute.xlu0 %5653
      %5655 = vrot.lane.b32.xlu0 %v5592, 16
      %v5656 = vpop.permute.xlu0 %5655
      %5657 = vrot.lane.b32.xlu0 %v5595, 16
      %v5658 = vpop.permute.xlu0 %5657
      %5659 = vrot.lane.b32.xlu0 %v5598, 16
      %v5660 = vpop.permute.xlu0 %5659
      %5661 = vrot.lane.b32.xlu0 %v5601, 16
      %v5662 = vpop.permute.xlu0 %5661
      %5663 = vrot.lane.b32.xlu0 %v5604, 16
      %v5664 = vpop.permute.xlu0 %5663
      %5665 = vrot.lane.b32.xlu0 %v5607, 16
      %v5666 = vpop.permute.xlu0 %5665
      %5667 = vrot.lane.b32.xlu0 %v5610, 16
      %v5668 = vpop.permute.xlu0 %5667
      %5669 = vrot.lane.b32.xlu0 %v5613, 16
      %v5670 = vpop.permute.xlu0 %5669
      %5671 = vrot.lane.b32.xlu0 %v5616, 16
      %v5672 = vpop.permute.xlu0 %5671
      %5673 = vrot.lane.b32.xlu0 %v5619, 16
      %v5674 = vpop.permute.xlu0 %5673
      %5675 = vrot.lane.b32.xlu0 %v5622, 16
      %v5676 = vpop.permute.xlu0 %5675
      %5677 = vrot.lane.b32.xlu0 %v5625, 16
      %v5678 = vpop.permute.xlu0 %5677
      %5679 = vrot.lane.b32.xlu0 %v5628, 16
      %v5680 = vpop.permute.xlu0 %5679
      %5681 = vrot.lane.b32.xlu0 %v5631, 16
      %v5682 = vpop.permute.xlu0 %5681
      %5683 = vrot.lane.b32.xlu0 %v5634, 16
      %v5684 = vpop.permute.xlu0 %5683
      %5685 = vrot.lane.b32.xlu0 %v5637, 16
      %v5686 = vpop.permute.xlu0 %5685
      %5687 = vrot.lane.b32.xlu0 %v5640, 16
      %v5688 = vpop.permute.xlu0 %5687
      %v5690 = vsel %vm2522, %v5137, %v5522
      %v5692 = vsel %vm2522, %v5138, %v5524
      %v5694 = vsel %vm2522, %v5139, %v5526
      %v5696 = vsel %vm2522, %v5140, %v5528
      %v5698 = vsel %vm2522, %v5141, %v5530
      %v5700 = vsel %vm2522, %v5142, %v5532
      %v5702 = vsel %vm2522, %v5143, %v5534
      %v5704 = vsel %vm2522, %v5144, %v5536
      %v5706 = vsel %vm2522, %v5145, %v5538
      %v5708 = vsel %vm2522, %v5146, %v5540
      %v5710 = vsel %vm2522, %v5147, %v5542
      %v5712 = vsel %vm2522, %v5148, %v5544
      %v5714 = vsel %vm2522, %v5149, %v5546
      %v5716 = vsel %vm2522, %v5150, %v5548
      %v5718 = vsel %vm2522, %v5151, %v5550
      %v5720 = vsel %vm2522, %v5152, %v5552
      %v5722 = vsel %vm2522, %v5153, %v5554
      %v5724 = vsel %vm2522, %v5154, %v5556
      %v5726 = vsel %vm2522, %v5155, %v5558
      %v5728 = vsel %vm2522, %v5156, %v5560
      %v5730 = vsel %vm2522, %v5157, %v5562
      %v5732 = vsel %vm2522, %v5158, %v5564
      %v5734 = vsel %vm2522, %v5159, %v5566
      %v5736 = vsel %vm2522, %v5160, %v5568
      %vm5737 = vcmask 130048
      %v5739 = vsel %vm5737, %v5690, %v5642
      %v5741 = vsel %vm5737, %v5692, %v5644
      %v5743 = vsel %vm5737, %v5694, %v5646
      %v5745 = vsel %vm5737, %v5696, %v5648
      %v5747 = vsel %vm5737, %v5698, %v5650
      %v5749 = vsel %vm5737, %v5700, %v5652
      %v5751 = vsel %vm5737, %v5702, %v5654
      %v5753 = vsel %vm5737, %v5704, %v5656
      %v5755 = vsel %vm5737, %v5706, %v5658
      %v5757 = vsel %vm5737, %v5708, %v5660
      %v5759 = vsel %vm5737, %v5710, %v5662
      %v5761 = vsel %vm5737, %v5712, %v5664
      %v5763 = vsel %vm5737, %v5714, %v5666
      %v5765 = vsel %vm5737, %v5716, %v5668
      %v5767 = vsel %vm5737, %v5718, %v5670
      %v5769 = vsel %vm5737, %v5720, %v5672
      %v5771 = vsel %vm5737, %v5722, %v5674
      %v5773 = vsel %vm5737, %v5724, %v5676
      %v5775 = vsel %vm5737, %v5726, %v5678
      %v5777 = vsel %vm5737, %v5728, %v5680
      %v5779 = vsel %vm5737, %v5730, %v5682
      %v5781 = vsel %vm5737, %v5732, %v5684
      %v5783 = vsel %vm5737, %v5734, %v5686
      %v5785 = vsel %vm5737, %v5736, %v5688
      %v5786 = vld [vmem:[%s3] sm:$0xf]
      %v5787 = vld [vmem:[%s3 + $0x4] sm:$0xf]
      %v5788 = vld [vmem:[%s3 + $0x8] sm:$0xf]
      %v5793 = vunpack.c.l.b16 %v4993
      %v5794 = vunpack.c.l.b16 %v4994
      %v5795 = vunpack.c.l.b16 %v5035
      %v5796 = vunpack.c.l.b16 %v5036
      %v5797 = vpack.c.b16 %v5794, %v5793
      %v5798 = vpack.c.b16 %v5796, %v5795
      %v5801 = vunpack.c.l.b16 %v4995
      %v5802 = vunpack.c.l.b16 %v5037
      %v5803 = vpack.c.b16 %v5801, %v5801
      %v5804 = vpack.c.b16 %v5802, %v5802
      %v5806 = vshrl.u32 %v5797, 16
      %v5808 = vshll.u32 %v5797, 16
      %v5810 = vrot.slane %v5808, 1
      %v5811 = vor.u32 %v5806, %v5810
      %v5813 = vshll.u32 %v5803, 16
      %v5815 = vrot.slane %v5813, 1
      %v5816 = vsel %vm1931, %v5811, %v5815
      %v5818 = vshrl.u32 %v5798, 16
      %v5820 = vshll.u32 %v5798, 16
      %v5822 = vrot.slane %v5820, 1
      %v5823 = vor.u32 %v5818, %v5822
      %v5825 = vshll.u32 %v5804, 16
      %v5827 = vrot.slane %v5825, 1
      %v5828 = vsel %vm1931, %v5823, %v5827
      %5829 = vrot.lane.b32.xlu0 %v5816, 8
      %v5830 = vpop.permute.xlu0 %5829
      %5831 = vrot.lane.b32.xlu0 %v5828, 8
      %v5832 = vpop.permute.xlu0 %5831
      %v5833 = vrot.slane %v5797, 1
      %v5834 = vrot.slane %v5803, 1
      %v5835 = vsel %vm2324, %v5833, %v5834
      %v5836 = vrot.slane %v5798, 1
      %v5837 = vrot.slane %v5804, 1
      %v5838 = vsel %vm2324, %v5836, %v5837
      %5839 = vrot.lane.b32.xlu0 %v5835, 16
      %v5840 = vpop.permute.xlu0 %5839
      %5841 = vrot.lane.b32.xlu0 %v5838, 16
      %v5842 = vpop.permute.xlu0 %5841
      %v5844 = vsel %vm2522, %v5797, %v5830
      %v5846 = vsel %vm2522, %v5798, %v5832
      %v5848 = vsel %vm5737, %v5844, %v5840
      %v5850 = vsel %vm5737, %v5846, %v5842
      %s5851 = scalar_lea.vmem %s3, 12
      %v5852 = vld [vmem:[%s5851] sm:$0xf]
      %v5853 = vld [vmem:[%s5851 + $0x4] sm:$0xf]
      %v5854 = vld [vmem:[%s5851 + $0x8] sm:$0xf]
      %v5858 = vunpack.c.l.b16 %v5852
      %v5859 = vunpack.c.l.b16 %v5853
      %v5860 = vunpack.c.l.b16 %v5854
      %v5861 = vpack.c.b16 %v5859, %v5858
      %v5862 = vpack.c.b16 %v5860, %v5860
      %vm5864 = vcmask 195584
      %v5865 = vsel %vm5864, %v5741, 0
      %v5867 = vsel %vm5864, %v5743, 0
      %v5869 = vsel %vm5864, %v5745, 0
      %v5871 = vsel %vm5864, %v5747, 0
      %v5873 = vsel %vm5864, %v5749, 0
      %v5875 = vsel %vm5864, %v5751, 0
      %v5877 = vsel %vm5864, %v5753, 0
      %v5879 = vsel %vm5864, %v5755, 0
      %v5881 = vsel %vm5864, %v5757, 0
      %v5883 = vsel %vm5864, %v5759, 0
      %v5885 = vsel %vm5864, %v5761, 0
      %v5887 = vsel %vm5864, %v5848, 0
      %v5889 = vsel %vm5864, %v5765, 0
      %v5891 = vsel %vm5864, %v5767, 0
      %v5893 = vsel %vm5864, %v5769, 0
      %v5895 = vsel %vm5864, %v5771, 0
      %v5897 = vsel %vm5864, %v5773, 0
      %v5899 = vsel %vm5864, %v5775, 0
      %v5901 = vsel %vm5864, %v5777, 0
      %v5903 = vsel %vm5864, %v5779, 0
      %v5905 = vsel %vm5864, %v5781, 0
      %v5907 = vsel %vm5864, %v5783, 0
      %v5909 = vsel %vm5864, %v5785, 0
      %v5911 = vsel %vm5864, %v5850, 0
      %vm5913 = vcmask 1043456
      %v5915 = vsel %vm5913, %v5862, 0
      %5917 = vmatprep.subr.bf16.mxu0 0
      %5918 = vmatpush1.bf16.msra.mxu0 %v5861
      %5919 = vmatprep.subr.bf16.mxu0 0
      %5920 = vmatpush1.bf16.msra.mxu0 %v5915
      %5921 = vmatprep.subr.bf16.mxu0 0
      %5922 = vmatpush1.bf16.msra.mxu0 0
      %5923 = vmatprep.subr.bf16.mxu0 0
      %5924 = vmatpush1.bf16.msra.mxu0 0
      %5925 = vmatprep.subr.bf16.mxu0 0
      %5926 = vmatpush1.bf16.msra.mxu0 0
      %5927 = vmatprep.subr.bf16.mxu0 0
      %5928 = vmatpush1.bf16.msra.mxu0 0
      %5929 = vmatprep.subr.bf16.mxu0 0
      %5930 = vmatpush1.bf16.msra.mxu0 0
      %5931 = vmatprep.subr.bf16.mxu0 0
      %5932 = vmatpush1.bf16.msra.mxu0 0
      %5933 = vmatprep.subr.bf16.mxu0 0
      %5934 = vmatpush1.bf16.msra.mxu0 0
      %5935 = vmatprep.subr.bf16.mxu0 0
      %5936 = vmatpush1.bf16.msra.mxu0 0
      %5937 = vmatprep.subr.bf16.mxu0 0
      %5938 = vmatpush1.bf16.msra.mxu0 0
      %5939 = vmatprep.subr.bf16.mxu0 0
      %5940 = vmatpush1.bf16.msra.mxu0 0
      %5941 = vmatprep.subr.bf16.mxu0 0
      %5942 = vmatpush1.bf16.msra.mxu0 0
      %5943 = vmatprep.subr.bf16.mxu0 0
      %5944 = vmatpush1.bf16.msra.mxu0 0
      %5945 = vmatprep.subr.bf16.mxu0 0
      %5946 = vmatpush1.bf16.msra.mxu0 0
      %5947 = vmatprep.subr.bf16.mxu0 0
      %5948 = vmatpush1.bf16.msra.mxu0 0
      %5949 = vmatprep.mubr.bf16.mxu0 0
      %5950 = vmatmul.mubr.bf16.gmra.mrb[0].mxu0 %v5865
      %v5951 = vpop.f32.mrb[0].mxu0
      %v5952 = vadd.f32 0.0, %v5951
      %v5953 = vpop.f32.mrb[0].mxu0
      %v5954 = vpop.f32.mrb[0].mxu0
      %v5955 = vadd.f32 0.0, %v5954
      %v5956 = vpop.f32.mrb[0].mxu0
      %5957 = vmatprep.mubr.bf16.mxu0 0
      %5958 = vmatmul.mubr.bf16.gmra.mrb[0].mxu0 %v5867
      %v5959 = vpop.f32.mrb[0].mxu0
      %v5960 = vadd.f32 0.0, %v5959
      %v5961 = vpop.f32.mrb[0].mxu0
      %v5962 = vpop.f32.mrb[0].mxu0
      %v5963 = vadd.f32 0.0, %v5962
      %v5964 = vpop.f32.mrb[0].mxu0
      %5965 = vmatprep.mubr.bf16.mxu0 0
      %5966 = vmatmul.mubr.bf16.gmra.mrb[0].mxu0 %v5869
      %v5967 = vpop.f32.mrb[0].mxu0
      %v5968 = vadd.f32 0.0, %v5967
      %v5969 = vpop.f32.mrb[0].mxu0
      %v5970 = vpop.f32.mrb[0].mxu0
      %v5971 = vadd.f32 0.0, %v5970
      %v5972 = vpop.f32.mrb[0].mxu0
      %5973 = vmatprep.mubr.bf16.mxu0 0
      %5974 = vmatmul.mubr.bf16.gmra.mrb[0].mxu0 %v5871
      %v5975 = vpop.f32.mrb[0].mxu0
      %v5976 = vadd.f32 0.0, %v5975
      %v5977 = vpop.f32.mrb[0].mxu0
      %v5978 = vpop.f32.mrb[0].mxu0
      %v5979 = vadd.f32 0.0, %v5978
      %v5980 = vpop.f32.mrb[0].mxu0
      %5981 = vmatprep.mubr.bf16.mxu0 0
      %5982 = vmatmul.mubr.bf16.gmra.mrb[0].mxu0 %v5873
      %v5983 = vpop.f32.mrb[0].mxu0
      %v5984 = vadd.f32 0.0, %v5983
      %v5985 = vpop.f32.mrb[0].mxu0
      %v5986 = vpop.f32.mrb[0].mxu0
      %v5987 = vadd.f32 0.0, %v5986
      %v5988 = vpop.f32.mrb[0].mxu0
      %5989 = vmatprep.mubr.bf16.mxu0 0
      %5990 = vmatmul.mubr.bf16.gmra.mrb[0].mxu0 %v5875
      %v5991 = vpop.f32.mrb[0].mxu0
      %v5992 = vadd.f32 0.0, %v5991
      %v5993 = vpop.f32.mrb[0].mxu0
      %v5994 = vpop.f32.mrb[0].mxu0
      %v5995 = vadd.f32 0.0, %v5994
      %v5996 = vpop.f32.mrb[0].mxu0
      %5997 = vmatprep.mubr.bf16.mxu0 0
      %5998 = vmatmul.mubr.bf16.gmra.mrb[0].mxu0 %v5877
      %v5999 = vpop.f32.mrb[0].mxu0
      %v6000 = vadd.f32 0.0, %v5999
      %v6001 = vpop.f32.mrb[0].mxu0
      %v6002 = vpop.f32.mrb[0].mxu0
      %v6003 = vadd.f32 0.0, %v6002
      %v6004 = vpop.f32.mrb[0].mxu0
      %6005 = vmatprep.mubr.bf16.mxu0 0
      %6006 = vmatmul.mubr.bf16.gmra.mrb[0].mxu0 %v5879
      %v6007 = vpop.f32.mrb[0].mxu0
      %v6008 = vadd.f32 0.0, %v6007
      %v6009 = vpop.f32.mrb[0].mxu0
      %v6010 = vpop.f32.mrb[0].mxu0
      %v6011 = vadd.f32 0.0, %v6010
      %v6012 = vpop.f32.mrb[0].mxu0
      %6013 = vmatprep.mubr.bf16.mxu0 0
      %6014 = vmatmul.mubr.bf16.gmra.mrb[0].mxu0 %v5881
      %v6015 = vpop.f32.mrb[0].mxu0
      %v6016 = vadd.f32 0.0, %v6015
      %v6017 = vpop.f32.mrb[0].mxu0
      %v6018 = vpop.f32.mrb[0].mxu0
      %v6019 = vadd.f32 0.0, %v6018
      %v6020 = vpop.f32.mrb[0].mxu0
      %6021 = vmatprep.mubr.bf16.mxu0 0
      %6022 = vmatmul.mubr.bf16.gmra.mrb[0].mxu0 %v5883
      %v6023 = vpop.f32.mrb[0].mxu0
      %v6024 = vadd.f32 0.0, %v6023
      %v6025 = vpop.f32.mrb[0].mxu0
      %v6026 = vpop.f32.mrb[0].mxu0
      %v6027 = vadd.f32 0.0, %v6026
      %v6028 = vpop.f32.mrb[0].mxu0
      %6029 = vmatprep.mubr.bf16.mxu0 0
      %6030 = vmatmul.mubr.bf16.gmra.mrb[0].mxu0 %v5885
      %v6031 = vpop.f32.mrb[0].mxu0
      %v6032 = vadd.f32 0.0, %v6031
      %v6033 = vpop.f32.mrb[0].mxu0
      %v6034 = vpop.f32.mrb[0].mxu0
      %v6035 = vadd.f32 0.0, %v6034
      %v6036 = vpop.f32.mrb[0].mxu0
      %6037 = vmatprep.mubr.bf16.mxu0 0
      %6038 = vmatmul.mubr.bf16.gmra.mrb[0].mxu0 %v5887
      %v6039 = vpop.f32.mrb[0].mxu0
      %v6040 = vadd.f32 0.0, %v6039
      %v6041 = vpop.f32.mrb[0].mxu0
      %v6042 = vpop.f32.mrb[0].mxu0
      %v6043 = vadd.f32 0.0, %v6042
      %v6044 = vpop.f32.mrb[0].mxu0
      %6045 = vmatprep.mubr.bf16.mxu0 0
      %6046 = vmatmul.mubr.bf16.gmra.mrb[0].mxu0 %v5889
      %v6047 = vpop.f32.mrb[0].mxu0
      %v6048 = vadd.f32 0.0, %v6047
      %v6049 = vpop.f32.mrb[0].mxu0
      %v6050 = vpop.f32.mrb[0].mxu0
      %v6051 = vadd.f32 0.0, %v6050
      %v6052 = vpop.f32.mrb[0].mxu0
      %6053 = vmatprep.mubr.bf16.mxu0 0
      %6054 = vmatmul.mubr.bf16.gmra.mrb[0].mxu0 %v5891
      %v6055 = vpop.f32.mrb[0].mxu0
      %v6056 = vadd.f32 0.0, %v6055
      %v6057 = vpop.f32.mrb[0].mxu0
      %v6058 = vpop.f32.mrb[0].mxu0
      %v6059 = vadd.f32 0.0, %v6058
      %v6060 = vpop.f32.mrb[0].mxu0
      %6061 = vmatprep.mubr.bf16.mxu0 0
      %6062 = vmatmul.mubr.bf16.gmra.mrb[0].mxu0 %v5893
      %v6063 = vpop.f32.mrb[0].mxu0
      %v6064 = vadd.f32 0.0, %v6063
      %v6065 = vpop.f32.mrb[0].mxu0
      %v6066 = vpop.f32.mrb[0].mxu0
      %v6067 = vadd.f32 0.0, %v6066
      %v6068 = vpop.f32.mrb[0].mxu0
      %6069 = vmatprep.mubr.bf16.mxu0 0
      %6070 = vmatmul.mubr.bf16.gmra.mrb[0].mxu0 %v5895
      %v6071 = vpop.f32.mrb[0].mxu0
      %v6072 = vadd.f32 0.0, %v6071
      %v6073 = vpop.f32.mrb[0].mxu0
      %v6074 = vpop.f32.mrb[0].mxu0
      %v6075 = vadd.f32 0.0, %v6074
      %v6076 = vpop.f32.mrb[0].mxu0
      %6077 = vmatprep.mubr.bf16.mxu0 0
      %6078 = vmatmul.mubr.bf16.gmra.mrb[0].mxu0 %v5897
      %v6079 = vpop.f32.mrb[0].mxu0
      %v6080 = vadd.f32 0.0, %v6079
      %v6081 = vpop.f32.mrb[0].mxu0
      %v6082 = vpop.f32.mrb[0].mxu0
      %v6083 = vadd.f32 0.0, %v6082
      %v6084 = vpop.f32.mrb[0].mxu0
      %6085 = vmatprep.mubr.bf16.mxu0 0
      %6086 = vmatmul.mubr.bf16.gmra.mrb[0].mxu0 %v5899
      %v6087 = vpop.f32.mrb[0].mxu0
      %v6088 = vadd.f32 0.0, %v6087
      %v6089 = vpop.f32.mrb[0].mxu0
      %v6090 = vpop.f32.mrb[0].mxu0
      %v6091 = vadd.f32 0.0, %v6090
      %v6092 = vpop.f32.mrb[0].mxu0
      %6093 = vmatprep.mubr.bf16.mxu0 0
      %6094 = vmatmul.mubr.bf16.gmra.mrb[0].mxu0 %v5901
      %v6095 = vpop.f32.mrb[0].mxu0
      %v6096 = vadd.f32 0.0, %v6095
      %v6097 = vpop.f32.mrb[0].mxu0
      %v6098 = vpop.f32.mrb[0].mxu0
      %v6099 = vadd.f32 0.0, %v6098
      %v6100 = vpop.f32.mrb[0].mxu0
      %6101 = vmatprep.mubr.bf16.mxu0 0
      %6102 = vmatmul.mubr.bf16.gmra.mrb[0].mxu0 %v5903
      %v6103 = vpop.f32.mrb[0].mxu0
      %v6104 = vadd.f32 0.0, %v6103
      %v6105 = vpop.f32.mrb[0].mxu0
      %v6106 = vpop.f32.mrb[0].mxu0
      %v6107 = vadd.f32 0.0, %v6106
      %v6108 = vpop.f32.mrb[0].mxu0
      %6109 = vmatprep.mubr.bf16.mxu0 0
      %6110 = vmatmul.mubr.bf16.gmra.mrb[0].mxu0 %v5905
      %v6111 = vpop.f32.mrb[0].mxu0
      %v6112 = vadd.f32 0.0, %v6111
      %v6113 = vpop.f32.mrb[0].mxu0
      %v6114 = vpop.f32.mrb[0].mxu0
      %v6115 = vadd.f32 0.0, %v6114
      %v6116 = vpop.f32.mrb[0].mxu0
      %6117 = vmatprep.mubr.bf16.mxu0 0
      %6118 = vmatmul.mubr.bf16.gmra.mrb[0].mxu0 %v5907
      %v6119 = vpop.f32.mrb[0].mxu0
      %v6120 = vadd.f32 0.0, %v6119
      %v6121 = vpop.f32.mrb[0].mxu0
      %v6122 = vpop.f32.mrb[0].mxu0
      %v6123 = vadd.f32 0.0, %v6122
      %v6124 = vpop.f32.mrb[0].mxu0
      %6125 = vmatprep.mubr.bf16.mxu0 0
      %6126 = vmatmul.mubr.bf16.gmra.mrb[0].mxu0 %v5909
      %v6127 = vpop.f32.mrb[0].mxu0
      %v6128 = vadd.f32 0.0, %v6127
      %v6129 = vpop.f32.mrb[0].mxu0
      %v6130 = vpop.f32.mrb[0].mxu0
      %v6131 = vadd.f32 0.0, %v6130
      %v6132 = vpop.f32.mrb[0].mxu0
      %6133 = vmatprep.mubr.bf16.mxu0 0
      %6134 = vmatmul.mubr.bf16.gmra.mrb[0].mxu0 %v5911
      %v6135 = vpop.f32.mrb[0].mxu0
      %v6136 = vadd.f32 0.0, %v6135
      %v6137 = vpop.f32.mrb[0].mxu0
      %v6138 = vpop.f32.mrb[0].mxu0
      %v6139 = vadd.f32 0.0, %v6138
      %v6140 = vpop.f32.mrb[0].mxu0
      %6141 = vdwg.mxu0
      %v6145 = vunpack.c.l.b16 %v5786
      %v6146 = vunpack.c.l.b16 %v5787
      %v6147 = vunpack.c.l.b16 %v5788
      %v6148 = vpack.c.b16 %v6146, %v6145
      %v6149 = vpack.c.b16 %v6147, %v6147
      %v6151 = vsel %vm5864, %v5739, 0
      %v6153 = vsel %vm5864, %v5763, 0
      %v6156 = vsel %vm5913, %v6149, 0
      %6158 = vmatprep.subr.bf16.mxu0 0
      %6159 = vmatpush1.bf16.msra.mxu0 %v6148
      %6160 = vmatprep.subr.bf16.mxu0 0
      %6161 = vmatpush1.bf16.msra.mxu0 %v6156
      %6162 = vmatprep.subr.bf16.mxu0 0
      %6163 = vmatpush1.bf16.msra.mxu0 0
      %6164 = vmatprep.subr.bf16.mxu0 0
      %6165 = vmatpush1.bf16.msra.mxu0 0
      %6166 = vmatprep.subr.bf16.mxu0 0
      %6167 = vmatpush1.bf16.msra.mxu0 0
      %6168 = vmatprep.subr.bf16.mxu0 0
      %6169 = vmatpush1.bf16.msra.mxu0 0
      %6170 = vmatprep.subr.bf16.mxu0 0
      %6171 = vmatpush1.bf16.msra.mxu0 0
      %6172 = vmatprep.subr.bf16.mxu0 0
      %6173 = vmatpush1.bf16.msra.mxu0 0
      %6174 = vmatprep.subr.bf16.mxu0 0
      %6175 = vmatpush1.bf16.msra.mxu0 0
      %6176 = vmatprep.subr.bf16.mxu0 0
      %6177 = vmatpush1.bf16.msra.mxu0 0
      %6178 = vmatprep.subr.bf16.mxu0 0
      %6179 = vmatpush1.bf16.msra.mxu0 0
      %6180 = vmatprep.subr.bf16.mxu0 0
      %6181 = vmatpush1.bf16.msra.mxu0 0
      %6182 = vmatprep.subr.bf16.mxu0 0
      %6183 = vmatpush1.bf16.msra.mxu0 0
      %6184 = vmatprep.subr.bf16.mxu0 0
      %6185 = vmatpush1.bf16.msra.mxu0 0
      %6186 = vmatprep.subr.bf16.mxu0 0
      %6187 = vmatpush1.bf16.msra.mxu0 0
      %6188 = vmatprep.subr.bf16.mxu0 0
      %6189 = vmatpush1.bf16.msra.mxu0 0
      %6190 = vmatprep.mubr.bf16.mxu0 0
      %6191 = vmatmul.mubr.bf16.gmra.mrb[0].mxu0 %v6151
      %v6192 = vpop.f32.mrb[0].mxu0
      %v6193 = vadd.f32 %v5952, %v6192
      %v6194 = vpop.f32.mrb[0].mxu0
      %v6195 = vpop.f32.mrb[0].mxu0
      %v6196 = vadd.f32 %v5955, %v6195
      %v6197 = vpop.f32.mrb[0].mxu0
      %6198 = vmatprep.mubr.bf16.mxu0 0
      %6199 = vmatmul.mubr.bf16.gmra.mrb[0].mxu0 %v5865
      %v6200 = vpop.f32.mrb[0].mxu0
      %v6201 = vadd.f32 %v5960, %v6200
      %v6202 = vpop.f32.mrb[0].mxu0
      %v6203 = vpop.f32.mrb[0].mxu0
      %v6204 = vadd.f32 %v5963, %v6203
      %v6205 = vpop.f32.mrb[0].mxu0
      %6206 = vmatprep.mubr.bf16.mxu0 0
      %6207 = vmatmul.mubr.bf16.gmra.mrb[0].mxu0 %v5867
      %v6208 = vpop.f32.mrb[0].mxu0
      %v6209 = vadd.f32 %v5968, %v6208
      %v6210 = vpop.f32.mrb[0].mxu0
      %v6211 = vpop.f32.mrb[0].mxu0
      %v6212 = vadd.f32 %v5971, %v6211
      %v6213 = vpop.f32.mrb[0].mxu0
      %6214 = vmatprep.mubr.bf16.mxu0 0
      %6215 = vmatmul.mubr.bf16.gmra.mrb[0].mxu0 %v5869
      %v6216 = vpop.f32.mrb[0].mxu0
      %v6217 = vadd.f32 %v5976, %v6216
      %v6218 = vpop.f32.mrb[0].mxu0
      %v6219 = vpop.f32.mrb[0].mxu0
      %v6220 = vadd.f32 %v5979, %v6219
      %v6221 = vpop.f32.mrb[0].mxu0
      %6222 = vmatprep.mubr.bf16.mxu0 0
      %6223 = vmatmul.mubr.bf16.gmra.mrb[0].mxu0 %v5871
      %v6224 = vpop.f32.mrb[0].mxu0
      %v6225 = vadd.f32 %v5984, %v6224
      %v6226 = vpop.f32.mrb[0].mxu0
      %v6227 = vpop.f32.mrb[0].mxu0
      %v6228 = vadd.f32 %v5987, %v6227
      %v6229 = vpop.f32.mrb[0].mxu0
      %6230 = vmatprep.mubr.bf16.mxu0 0
      %6231 = vmatmul.mubr.bf16.gmra.mrb[0].mxu0 %v5873
      %v6232 = vpop.f32.mrb[0].mxu0
      %v6233 = vadd.f32 %v5992, %v6232
      %v6234 = vpop.f32.mrb[0].mxu0
      %v6235 = vpop.f32.mrb[0].mxu0
      %v6236 = vadd.f32 %v5995, %v6235
      %v6237 = vpop.f32.mrb[0].mxu0
      %6238 = vmatprep.mubr.bf16.mxu0 0
      %6239 = vmatmul.mubr.bf16.gmra.mrb[0].mxu0 %v5875
      %v6240 = vpop.f32.mrb[0].mxu0
      %v6241 = vadd.f32 %v6000, %v6240
      %v6242 = vpop.f32.mrb[0].mxu0
      %v6243 = vpop.f32.mrb[0].mxu0
      %v6244 = vadd.f32 %v6003, %v6243
      %v6245 = vpop.f32.mrb[0].mxu0
      %6246 = vmatprep.mubr.bf16.mxu0 0
      %6247 = vmatmul.mubr.bf16.gmra.mrb[0].mxu0 %v5877
      %v6248 = vpop.f32.mrb[0].mxu0
      %v6249 = vadd.f32 %v6008, %v6248
      %v6250 = vpop.f32.mrb[0].mxu0
      %v6251 = vpop.f32.mrb[0].mxu0
      %v6252 = vadd.f32 %v6011, %v6251
      %v6253 = vpop.f32.mrb[0].mxu0
      %6254 = vmatprep.mubr.bf16.mxu0 0
      %6255 = vmatmul.mubr.bf16.gmra.mrb[0].mxu0 %v5879
      %v6256 = vpop.f32.mrb[0].mxu0
      %v6257 = vadd.f32 %v6016, %v6256
      %v6258 = vpop.f32.mrb[0].mxu0
      %v6259 = vpop.f32.mrb[0].mxu0
      %v6260 = vadd.f32 %v6019, %v6259
      %v6261 = vpop.f32.mrb[0].mxu0
      %6262 = vmatprep.mubr.bf16.mxu0 0
      %6263 = vmatmul.mubr.bf16.gmra.mrb[0].mxu0 %v5881
      %v6264 = vpop.f32.mrb[0].mxu0
      %v6265 = vadd.f32 %v6024, %v6264
      %v6266 = vpop.f32.mrb[0].mxu0
      %v6267 = vpop.f32.mrb[0].mxu0
      %v6268 = vadd.f32 %v6027, %v6267
      %v6269 = vpop.f32.mrb[0].mxu0
      %6270 = vmatprep.mubr.bf16.mxu0 0
      %6271 = vmatmul.mubr.bf16.gmra.mrb[0].mxu0 %v5883
      %v6272 = vpop.f32.mrb[0].mxu0
      %v6273 = vadd.f32 %v6032, %v6272
      %v6274 = vpop.f32.mrb[0].mxu0
      %v6275 = vpop.f32.mrb[0].mxu0
      %v6276 = vadd.f32 %v6035, %v6275
      %v6277 = vpop.f32.mrb[0].mxu0
      %6278 = vmatprep.mubr.bf16.mxu0 0
      %6279 = vmatmul.mubr.bf16.gmra.mrb[0].mxu0 %v5885
      %v6280 = vpop.f32.mrb[0].mxu0
      %v6281 = vadd.f32 %v6040, %v6280
      %v6282 = vpop.f32.mrb[0].mxu0
      %v6283 = vpop.f32.mrb[0].mxu0
      %v6284 = vadd.f32 %v6043, %v6283
      %v6285 = vpop.f32.mrb[0].mxu0
      %6286 = vmatprep.mubr.bf16.mxu0 0
      %6287 = vmatmul.mubr.bf16.gmra.mrb[0].mxu0 %v6153
      %v6288 = vpop.f32.mrb[0].mxu0
      %v6289 = vadd.f32 %v6048, %v6288
      %v6290 = vpop.f32.mrb[0].mxu0
      %v6291 = vpop.f32.mrb[0].mxu0
      %v6292 = vadd.f32 %v6051, %v6291
      %v6293 = vpop.f32.mrb[0].mxu0
      %6294 = vmatprep.mubr.bf16.mxu0 0
      %6295 = vmatmul.mubr.bf16.gmra.mrb[0].mxu0 %v5889
      %v6296 = vpop.f32.mrb[0].mxu0
      %v6297 = vadd.f32 %v6056, %v6296
      %v6298 = vpop.f32.mrb[0].mxu0
      %v6299 = vpop.f32.mrb[0].mxu0
      %v6300 = vadd.f32 %v6059, %v6299
      %v6301 = vpop.f32.mrb[0].mxu0
      %6302 = vmatprep.mubr.bf16.mxu0 0
      %6303 = vmatmul.mubr.bf16.gmra.mrb[0].mxu0 %v5891
      %v6304 = vpop.f32.mrb[0].mxu0
      %v6305 = vadd.f32 %v6064, %v6304
      %v6306 = vpop.f32.mrb[0].mxu0
      %v6307 = vpop.f32.mrb[0].mxu0
      %v6308 = vadd.f32 %v6067, %v6307
      %v6309 = vpop.f32.mrb[0].mxu0
      %6310 = vmatprep.mubr.bf16.mxu0 0
      %6311 = vmatmul.mubr.bf16.gmra.mrb[0].mxu0 %v5893
      %v6312 = vpop.f32.mrb[0].mxu0
      %v6313 = vadd.f32 %v6072, %v6312
      %v6314 = vpop.f32.mrb[0].mxu0
      %v6315 = vpop.f32.mrb[0].mxu0
      %v6316 = vadd.f32 %v6075, %v6315
      %v6317 = vpop.f32.mrb[0].mxu0
      %6318 = vmatprep.mubr.bf16.mxu0 0
      %6319 = vmatmul.mubr.bf16.gmra.mrb[0].mxu0 %v5895
      %v6320 = vpop.f32.mrb[0].mxu0
      %v6321 = vadd.f32 %v6080, %v6320
      %v6322 = vpop.f32.mrb[0].mxu0
      %v6323 = vpop.f32.mrb[0].mxu0
      %v6324 = vadd.f32 %v6083, %v6323
      %v6325 = vpop.f32.mrb[0].mxu0
      %6326 = vmatprep.mubr.bf16.mxu0 0
      %6327 = vmatmul.mubr.bf16.gmra.mrb[0].mxu0 %v5897
      %v6328 = vpop.f32.mrb[0].mxu0
      %v6329 = vadd.f32 %v6088, %v6328
      %v6330 = vpop.f32.mrb[0].mxu0
      %v6331 = vpop.f32.mrb[0].mxu0
      %v6332 = vadd.f32 %v6091, %v6331
      %v6333 = vpop.f32.mrb[0].mxu0
      %6334 = vmatprep.mubr.bf16.mxu0 0
      %6335 = vmatmul.mubr.bf16.gmra.mrb[0].mxu0 %v5899
      %v6336 = vpop.f32.mrb[0].mxu0
      %v6337 = vadd.f32 %v6096, %v6336
      %v6338 = vpop.f32.mrb[0].mxu0
      %v6339 = vpop.f32.mrb[0].mxu0
      %v6340 = vadd.f32 %v6099, %v6339
      %v6341 = vpop.f32.mrb[0].mxu0
      %6342 = vmatprep.mubr.bf16.mxu0 0
      %6343 = vmatmul.mubr.bf16.gmra.mrb[0].mxu0 %v5901
      %v6344 = vpop.f32.mrb[0].mxu0
      %v6345 = vadd.f32 %v6104, %v6344
      %v6346 = vpop.f32.mrb[0].mxu0
      %v6347 = vpop.f32.mrb[0].mxu0
      %v6348 = vadd.f32 %v6107, %v6347
      %v6349 = vpop.f32.mrb[0].mxu0
      %6350 = vmatprep.mubr.bf16.mxu0 0
      %6351 = vmatmul.mubr.bf16.gmra.mrb[0].mxu0 %v5903
      %v6352 = vpop.f32.mrb[0].mxu0
      %v6353 = vadd.f32 %v6112, %v6352
      %v6354 = vpop.f32.mrb[0].mxu0
      %v6355 = vpop.f32.mrb[0].mxu0
      %v6356 = vadd.f32 %v6115, %v6355
      %v6357 = vpop.f32.mrb[0].mxu0
      %6358 = vmatprep.mubr.bf16.mxu0 0
      %6359 = vmatmul.mubr.bf16.gmra.mrb[0].mxu0 %v5905
      %v6360 = vpop.f32.mrb[0].mxu0
      %v6361 = vadd.f32 %v6120, %v6360
      %v6362 = vpop.f32.mrb[0].mxu0
      %v6363 = vpop.f32.mrb[0].mxu0
      %v6364 = vadd.f32 %v6123, %v6363
      %v6365 = vpop.f32.mrb[0].mxu0
      %6366 = vmatprep.mubr.bf16.mxu0 0
      %6367 = vmatmul.mubr.bf16.gmra.mrb[0].mxu0 %v5907
      %v6368 = vpop.f32.mrb[0].mxu0
      %v6369 = vadd.f32 %v6128, %v6368
      %v6370 = vpop.f32.mrb[0].mxu0
      %v6371 = vpop.f32.mrb[0].mxu0
      %v6372 = vadd.f32 %v6131, %v6371
      %v6373 = vpop.f32.mrb[0].mxu0
      %6374 = vmatprep.mubr.bf16.mxu0 0
      %6375 = vmatmul.mubr.bf16.gmra.mrb[0].mxu0 %v5909
      %v6376 = vpop.f32.mrb[0].mxu0
      %v6377 = vadd.f32 %v6136, %v6376
      %v6378 = vpop.f32.mrb[0].mxu0
      %v6379 = vpop.f32.mrb[0].mxu0
      %v6380 = vadd.f32 %v6139, %v6379
      %v6381 = vpop.f32.mrb[0].mxu0
      %6382 = vdwg.mxu0
      %v6387 = vunpack.c.l.b16 %v4996
      %v6388 = vunpack.c.l.b16 %v4997
      %v6389 = vunpack.c.l.b16 %v5038
      %v6390 = vunpack.c.l.b16 %v5039
      %v6391 = vpack.c.b16 %v6388, %v6387
      %v6392 = vpack.c.b16 %v6390, %v6389
      %v6395 = vunpack.c.l.b16 %v4998
      %v6396 = vunpack.c.l.b16 %v5040
      %v6397 = vpack.c.b16 %v6395, %v6395
      %v6398 = vpack.c.b16 %v6396, %v6396
      %v6400 = vshrl.u32 %v6391, 16
      %v6402 = vshll.u32 %v6391, 16
      %v6404 = vrot.slane %v6402, 1
      %v6405 = vor.u32 %v6400, %v6404
      %v6407 = vshll.u32 %v6397, 16
      %v6409 = vrot.slane %v6407, 1
      %v6410 = vsel %vm1931, %v6405, %v6409
      %v6412 = vshrl.u32 %v6392, 16
      %v6414 = vshll.u32 %v6392, 16
      %v6416 = vrot.slane %v6414, 1
      %v6417 = vor.u32 %v6412, %v6416
      %v6419 = vshll.u32 %v6398, 16
      %v6421 = vrot.slane %v6419, 1
      %v6422 = vsel %vm1931, %v6417, %v6421
      %6423 = vrot.lane.b32.xlu0 %v6410, 8
      %v6424 = vpop.permute.xlu0 %6423
      %6425 = vrot.lane.b32.xlu0 %v6422, 8
      %v6426 = vpop.permute.xlu0 %6425
      %v6427 = vrot.slane %v6391, 1
      %v6428 = vrot.slane %v6397, 1
      %v6429 = vsel %vm2324, %v6427, %v6428
      %v6430 = vrot.slane %v6392, 1
      %v6431 = vrot.slane %v6398, 1
      %v6432 = vsel %vm2324, %v6430, %v6431
      %6433 = vrot.lane.b32.xlu0 %v6429, 16
      %v6434 = vpop.permute.xlu0 %6433
      %6435 = vrot.lane.b32.xlu0 %v6432, 16
      %v6436 = vpop.permute.xlu0 %6435
      %v6438 = vsel %vm2522, %v6391, %v6424
      %v6440 = vsel %vm2522, %v6392, %v6426
      %v6442 = vsel %vm5737, %v6438, %v6434
      %v6444 = vsel %vm5737, %v6440, %v6436
      %s6445 = scalar_lea.vmem %s3, 24
      %v6446 = vld [vmem:[%s6445] sm:$0xf]
      %v6447 = vld [vmem:[%s6445 + $0x4] sm:$0xf]
      %v6448 = vld [vmem:[%s6445 + $0x8] sm:$0xf]
      %v6452 = vunpack.c.l.b16 %v6446
      %v6453 = vunpack.c.l.b16 %v6447
      %v6454 = vunpack.c.l.b16 %v6448
      %v6455 = vpack.c.b16 %v6453, %v6452
      %v6456 = vpack.c.b16 %v6454, %v6454
      %v6458 = vsel %vm5864, %v6442, 0
      %v6460 = vsel %vm5864, %v6444, 0
      %v6463 = vsel %vm5913, %v6456, 0
      %6465 = vmatprep.subr.bf16.mxu0 0
      %6466 = vmatpush1.bf16.msra.mxu0 %v6455
      %6467 = vmatprep.subr.bf16.mxu0 0
      %6468 = vmatpush1.bf16.msra.mxu0 %v6463
      %6469 = vmatprep.subr.bf16.mxu0 0
      %6470 = vmatpush1.bf16.msra.mxu0 0
      %6471 = vmatprep.subr.bf16.mxu0 0
      %6472 = vmatpush1.bf16.msra.mxu0 0
      %6473 = vmatprep.subr.bf16.mxu0 0
      %6474 = vmatpush1.bf16.msra.mxu0 0
      %6475 = vmatprep.subr.bf16.mxu0 0
      %6476 = vmatpush1.bf16.msra.mxu0 0
      %6477 = vmatprep.subr.bf16.mxu0 0
      %6478 = vmatpush1.bf16.msra.mxu0 0
      %6479 = vmatprep.subr.bf16.mxu0 0
      %6480 = vmatpush1.bf16.msra.mxu0 0
      %6481 = vmatprep.subr.bf16.mxu0 0
      %6482 = vmatpush1.bf16.msra.mxu0 0
      %6483 = vmatprep.subr.bf16.mxu0 0
      %6484 = vmatpush1.bf16.msra.mxu0 0
      %6485 = vmatprep.subr.bf16.mxu0 0
      %6486 = vmatpush1.bf16.msra.mxu0 0
      %6487 = vmatprep.subr.bf16.mxu0 0
      %6488 = vmatpush1.bf16.msra.mxu0 0
      %6489 = vmatprep.subr.bf16.mxu0 0
      %6490 = vmatpush1.bf16.msra.mxu0 0
      %6491 = vmatprep.subr.bf16.mxu0 0
      %6492 = vmatpush1.bf16.msra.mxu0 0
      %6493 = vmatprep.subr.bf16.mxu0 0
      %6494 = vmatpush1.bf16.msra.mxu0 0
      %6495 = vmatprep.subr.bf16.mxu0 0
      %6496 = vmatpush1.bf16.msra.mxu0 0
      %6497 = vmatprep.mubr.bf16.mxu0 0
      %6498 = vmatmul.mubr.bf16.gmra.mrb[0].mxu0 %v5867
      %v6499 = vpop.f32.mrb[0].mxu0
      %v6500 = vadd.f32 0.0, %v6499
      %v6501 = vpop.f32.mrb[0].mxu0
      %v6502 = vpop.f32.mrb[0].mxu0
      %v6503 = vadd.f32 0.0, %v6502
      %v6504 = vpop.f32.mrb[0].mxu0
      %6505 = vmatprep.mubr.bf16.mxu0 0
      %6506 = vmatmul.mubr.bf16.gmra.mrb[0].mxu0 %v5869
      %v6507 = vpop.f32.mrb[0].mxu0
      %v6508 = vadd.f32 0.0, %v6507
      %v6509 = vpop.f32.mrb[0].mxu0
      %v6510 = vpop.f32.mrb[0].mxu0
      %v6511 = vadd.f32 0.0, %v6510
      %v6512 = vpop.f32.mrb[0].mxu0
      %6513 = vmatprep.mubr.bf16.mxu0 0
      %6514 = vmatmul.mubr.bf16.gmra.mrb[0].mxu0 %v5871
      %v6515 = vpop.f32.mrb[0].mxu0
      %v6516 = vadd.f32 0.0, %v6515
      %v6517 = vpop.f32.mrb[0].mxu0
      %v6518 = vpop.f32.mrb[0].mxu0
      %v6519 = vadd.f32 0.0, %v6518
      %v6520 = vpop.f32.mrb[0].mxu0
      %6521 = vmatprep.mubr.bf16.mxu0 0
      %6522 = vmatmul.mubr.bf16.gmra.mrb[0].mxu0 %v5873
      %v6523 = vpop.f32.mrb[0].mxu0
      %v6524 = vadd.f32 0.0, %v6523
      %v6525 = vpop.f32.mrb[0].mxu0
      %v6526 = vpop.f32.mrb[0].mxu0
      %v6527 = vadd.f32 0.0, %v6526
      %v6528 = vpop.f32.mrb[0].mxu0
      %6529 = vmatprep.mubr.bf16.mxu0 0
      %6530 = vmatmul.mubr.bf16.gmra.mrb[0].mxu0 %v5875
      %v6531 = vpop.f32.mrb[0].mxu0
      %v6532 = vadd.f32 0.0, %v6531
      %v6533 = vpop.f32.mrb[0].mxu0
      %v6534 = vpop.f32.mrb[0].mxu0
      %v6535 = vadd.f32 0.0, %v6534
      %v6536 = vpop.f32.mrb[0].mxu0
      %6537 = vmatprep.mubr.bf16.mxu0 0
      %6538 = vmatmul.mubr.bf16.gmra.mrb[0].mxu0 %v5877
      %v6539 = vpop.f32.mrb[0].mxu0
      %v6540 = vadd.f32 0.0, %v6539
      %v6541 = vpop.f32.mrb[0].mxu0
      %v6542 = vpop.f32.mrb[0].mxu0
      %v6543 = vadd.f32 0.0, %v6542
      %v6544 = vpop.f32.mrb[0].mxu0
      %6545 = vmatprep.mubr.bf16.mxu0 0
      %6546 = vmatmul.mubr.bf16.gmra.mrb[0].mxu0 %v5879
      %v6547 = vpop.f32.mrb[0].mxu0
      %v6548 = vadd.f32 0.0, %v6547
      %v6549 = vpop.f32.mrb[0].mxu0
      %v6550 = vpop.f32.mrb[0].mxu0
      %v6551 = vadd.f32 0.0, %v6550
      %v6552 = vpop.f32.mrb[0].mxu0
      %6553 = vmatprep.mubr.bf16.mxu0 0
      %6554 = vmatmul.mubr.bf16.gmra.mrb[0].mxu0 %v5881
      %v6555 = vpop.f32.mrb[0].mxu0
      %v6556 = vadd.f32 0.0, %v6555
      %v6557 = vpop.f32.mrb[0].mxu0
      %v6558 = vpop.f32.mrb[0].mxu0
      %v6559 = vadd.f32 0.0, %v6558
      %v6560 = vpop.f32.mrb[0].mxu0
      %6561 = vmatprep.mubr.bf16.mxu0 0
      %6562 = vmatmul.mubr.bf16.gmra.mrb[0].mxu0 %v5883
      %v6563 = vpop.f32.mrb[0].mxu0
      %v6564 = vadd.f32 0.0, %v6563
      %v6565 = vpop.f32.mrb[0].mxu0
      %v6566 = vpop.f32.mrb[0].mxu0
      %v6567 = vadd.f32 0.0, %v6566
      %v6568 = vpop.f32.mrb[0].mxu0
      %6569 = vmatprep.mubr.bf16.mxu0 0
      %6570 = vmatmul.mubr.bf16.gmra.mrb[0].mxu0 %v5885
      %v6571 = vpop.f32.mrb[0].mxu0
      %v6572 = vadd.f32 0.0, %v6571
      %v6573 = vpop.f32.mrb[0].mxu0
      %v6574 = vpop.f32.mrb[0].mxu0
      %v6575 = vadd.f32 0.0, %v6574
      %v6576 = vpop.f32.mrb[0].mxu0
      %6577 = vmatprep.mubr.bf16.mxu0 0
      %6578 = vmatmul.mubr.bf16.gmra.mrb[0].mxu0 %v5887
      %v6579 = vpop.f32.mrb[0].mxu0
      %v6580 = vadd.f32 0.0, %v6579
      %v6581 = vpop.f32.mrb[0].mxu0
      %v6582 = vpop.f32.mrb[0].mxu0
      %v6583 = vadd.f32 0.0, %v6582
      %v6584 = vpop.f32.mrb[0].mxu0
      %6585 = vmatprep.mubr.bf16.mxu0 0
      %6586 = vmatmul.mubr.bf16.gmra.mrb[0].mxu0 %v6458
      %v6587 = vpop.f32.mrb[0].mxu0
      %v6588 = vadd.f32 0.0, %v6587
      %v6589 = vpop.f32.mrb[0].mxu0
      %v6590 = vpop.f32.mrb[0].mxu0
      %v6591 = vadd.f32 0.0, %v6590
      %v6592 = vpop.f32.mrb[0].mxu0
      %6593 = vmatprep.mubr.bf16.mxu0 0
      %6594 = vmatmul.mubr.bf16.gmra.mrb[0].mxu0 %v5891
      %v6595 = vpop.f32.mrb[0].mxu0
      %v6596 = vadd.f32 0.0, %v6595
      %v6597 = vpop.f32.mrb[0].mxu0
      %v6598 = vpop.f32.mrb[0].mxu0
      %v6599 = vadd.f32 0.0, %v6598
      %v6600 = vpop.f32.mrb[0].mxu0
      %6601 = vmatprep.mubr.bf16.mxu0 0
      %6602 = vmatmul.mubr.bf16.gmra.mrb[0].mxu0 %v5893
      %v6603 = vpop.f32.mrb[0].mxu0
      %v6604 = vadd.f32 0.0, %v6603
      %v6605 = vpop.f32.mrb[0].mxu0
      %v6606 = vpop.f32.mrb[0].mxu0
      %v6607 = vadd.f32 0.0, %v6606
      %v6608 = vpop.f32.mrb[0].mxu0
      %6609 = vmatprep.mubr.bf16.mxu0 0
      %6610 = vmatmul.mubr.bf16.gmra.mrb[0].mxu0 %v5895
      %v6611 = vpop.f32.mrb[0].mxu0
      %v6612 = vadd.f32 0.0, %v6611
      %v6613 = vpop.f32.mrb[0].mxu0
      %v6614 = vpop.f32.mrb[0].mxu0
      %v6615 = vadd.f32 0.0, %v6614
      %v6616 = vpop.f32.mrb[0].mxu0
      %6617 = vmatprep.mubr.bf16.mxu0 0
      %6618 = vmatmul.mubr.bf16.gmra.mrb[0].mxu0 %v5897
      %v6619 = vpop.f32.mrb[0].mxu0
      %v6620 = vadd.f32 0.0, %v6619
      %v6621 = vpop.f32.mrb[0].mxu0
      %v6622 = vpop.f32.mrb[0].mxu0
      %v6623 = vadd.f32 0.0, %v6622
      %v6624 = vpop.f32.mrb[0].mxu0
      %6625 = vmatprep.mubr.bf16.mxu0 0
      %6626 = vmatmul.mubr.bf16.gmra.mrb[0].mxu0 %v5899
      %v6627 = vpop.f32.mrb[0].mxu0
      %v6628 = vadd.f32 0.0, %v6627
      %v6629 = vpop.f32.mrb[0].mxu0
      %v6630 = vpop.f32.mrb[0].mxu0
      %v6631 = vadd.f32 0.0, %v6630
      %v6632 = vpop.f32.mrb[0].mxu0
      %6633 = vmatprep.mubr.bf16.mxu0 0
      %6634 = vmatmul.mubr.bf16.gmra.mrb[0].mxu0 %v5901
      %v6635 = vpop.f32.mrb[0].mxu0
      %v6636 = vadd.f32 0.0, %v6635
      %v6637 = vpop.f32.mrb[0].mxu0
      %v6638 = vpop.f32.mrb[0].mxu0
      %v6639 = vadd.f32 0.0, %v6638
      %v6640 = vpop.f32.mrb[0].mxu0
      %6641 = vmatprep.mubr.bf16.mxu0 0
      %6642 = vmatmul.mubr.bf16.gmra.mrb[0].mxu0 %v5903
      %v6643 = vpop.f32.mrb[0].mxu0
      %v6644 = vadd.f32 0.0, %v6643
      %v6645 = vpop.f32.mrb[0].mxu0
      %v6646 = vpop.f32.mrb[0].mxu0
      %v6647 = vadd.f32 0.0, %v6646
      %v6648 = vpop.f32.mrb[0].mxu0
      %6649 = vmatprep.mubr.bf16.mxu0 0
      %6650 = vmatmul.mubr.bf16.gmra.mrb[0].mxu0 %v5905
      %v6651 = vpop.f32.mrb[0].mxu0
      %v6652 = vadd.f32 0.0, %v6651
      %v6653 = vpop.f32.mrb[0].mxu0
      %v6654 = vpop.f32.mrb[0].mxu0
      %v6655 = vadd.f32 0.0, %v6654
      %v6656 = vpop.f32.mrb[0].mxu0
      %6657 = vmatprep.mubr.bf16.mxu0 0
      %6658 = vmatmul.mubr.bf16.gmra.mrb[0].mxu0 %v5907
      %v6659 = vpop.f32.mrb[0].mxu0
      %v6660 = vadd.f32 0.0, %v6659
      %v6661 = vpop.f32.mrb[0].mxu0
      %v6662 = vpop.f32.mrb[0].mxu0
      %v6663 = vadd.f32 0.0, %v6662
      %v6664 = vpop.f32.mrb[0].mxu0
      %6665 = vmatprep.mubr.bf16.mxu0 0
      %6666 = vmatmul.mubr.bf16.gmra.mrb[0].mxu0 %v5909
      %v6667 = vpop.f32.mrb[0].mxu0
      %v6668 = vadd.f32 0.0, %v6667
      %v6669 = vpop.f32.mrb[0].mxu0
      %v6670 = vpop.f32.mrb[0].mxu0
      %v6671 = vadd.f32 0.0, %v6670
      %v6672 = vpop.f32.mrb[0].mxu0
      %6673 = vmatprep.mubr.bf16.mxu0 0
      %6674 = vmatmul.mubr.bf16.gmra.mrb[0].mxu0 %v5911
      %v6675 = vpop.f32.mrb[0].mxu0
      %v6676 = vadd.f32 0.0, %v6675
      %v6677 = vpop.f32.mrb[0].mxu0
      %v6678 = vpop.f32.mrb[0].mxu0
      %v6679 = vadd.f32 0.0, %v6678
      %v6680 = vpop.f32.mrb[0].mxu0
      %6681 = vmatprep.mubr.bf16.mxu0 0
      %6682 = vmatmul.mubr.bf16.gmra.mrb[0].mxu0 %v6460
      %v6683 = vpop.f32.mrb[0].mxu0
      %v6684 = vadd.f32 0.0, %v6683
      %v6685 = vpop.f32.mrb[0].mxu0
      %v6686 = vpop.f32.mrb[0].mxu0
      %v6687 = vadd.f32 0.0, %v6686
      %v6688 = vpop.f32.mrb[0].mxu0
      %6689 = vdwg.mxu0
      %v6690 = vadd.f32 %v6193, %v6500
      %v6691 = vadd.f32 %v6196, %v6503
      %v6692 = vadd.f32 %v6201, %v6508
      %v6693 = vadd.f32 %v6204, %v6511
      %v6694 = vadd.f32 %v6209, %v6516
      %v6695 = vadd.f32 %v6212, %v6519
      %v6696 = vadd.f32 %v6217, %v6524
      %v6697 = vadd.f32 %v6220, %v6527
      %v6698 = vadd.f32 %v6225, %v6532
      %v6699 = vadd.f32 %v6228, %v6535
      %v6700 = vadd.f32 %v6233, %v6540
      %v6701 = vadd.f32 %v6236, %v6543
      %v6702 = vadd.f32 %v6241, %v6548
      %v6703 = vadd.f32 %v6244, %v6551
      %v6704 = vadd.f32 %v6249, %v6556
      %v6705 = vadd.f32 %v6252, %v6559
      %v6706 = vadd.f32 %v6257, %v6564
      %v6707 = vadd.f32 %v6260, %v6567
      %v6708 = vadd.f32 %v6265, %v6572
      %v6709 = vadd.f32 %v6268, %v6575
      %v6710 = vadd.f32 %v6273, %v6580
      %v6711 = vadd.f32 %v6276, %v6583
      %v6712 = vadd.f32 %v6281, %v6588
      %v6713 = vadd.f32 %v6284, %v6591
      %v6714 = vadd.f32 %v6289, %v6596
      %v6715 = vadd.f32 %v6292, %v6599
      %v6716 = vadd.f32 %v6297, %v6604
      %v6717 = vadd.f32 %v6300, %v6607
      %v6718 = vadd.f32 %v6305, %v6612
      %v6719 = vadd.f32 %v6308, %v6615
      %v6720 = vadd.f32 %v6313, %v6620
      %v6721 = vadd.f32 %v6316, %v6623
      %v6722 = vadd.f32 %v6321, %v6628
      %v6723 = vadd.f32 %v6324, %v6631
      %v6724 = vadd.f32 %v6329, %v6636
      %v6725 = vadd.f32 %v6332, %v6639
      %v6726 = vadd.f32 %v6337, %v6644
      %v6727 = vadd.f32 %v6340, %v6647
      %v6728 = vadd.f32 %v6345, %v6652
      %v6729 = vadd.f32 %v6348, %v6655
      %v6730 = vadd.f32 %v6353, %v6660
      %v6731 = vadd.f32 %v6356, %v6663
      %v6732 = vadd.f32 %v6361, %v6668
      %v6733 = vadd.f32 %v6364, %v6671
      %v6734 = vadd.f32 %v6369, %v6676
      %v6735 = vadd.f32 %v6372, %v6679
      %v6736 = vadd.f32 %v6377, %v6684
      %v6737 = vadd.f32 %v6380, %v6687
      %v6738 = vld [vmem:[%s4] sm:$0x1]
      %v6740 = vlaneseq
      %v6741 = vshrl.u32 %v6740, 7
      %v6742 = vsub.s32 0, %v6741
      %v6743 = vrot.slane %v6738, %v6742
      %v6745 = vadd.f32 %v6690, %v6743
      %v6746 = vadd.f32 %v6691, %v6743
      %v6747 = vadd.f32 %v6692, %v6743
      %v6748 = vadd.f32 %v6693, %v6743
      %v6749 = vadd.f32 %v6694, %v6743
      %v6750 = vadd.f32 %v6695, %v6743
      %v6751 = vadd.f32 %v6696, %v6743
      %v6752 = vadd.f32 %v6697, %v6743
      %v6753 = vadd.f32 %v6698, %v6743
      %v6754 = vadd.f32 %v6699, %v6743
      %v6755 = vadd.f32 %v6700, %v6743
      %v6756 = vadd.f32 %v6701, %v6743
      %v6757 = vadd.f32 %v6702, %v6743
      %v6758 = vadd.f32 %v6703, %v6743
      %v6759 = vadd.f32 %v6704, %v6743
      %v6760 = vadd.f32 %v6705, %v6743
      %v6761 = vadd.f32 %v6706, %v6743
      %v6762 = vadd.f32 %v6707, %v6743
      %v6763 = vadd.f32 %v6708, %v6743
      %v6764 = vadd.f32 %v6709, %v6743
      %v6765 = vadd.f32 %v6710, %v6743
      %v6766 = vadd.f32 %v6711, %v6743
      %v6767 = vadd.f32 %v6712, %v6743
      %v6768 = vadd.f32 %v6713, %v6743
      %v6769 = vadd.f32 %v6714, %v6743
      %v6770 = vadd.f32 %v6715, %v6743
      %v6771 = vadd.f32 %v6716, %v6743
      %v6772 = vadd.f32 %v6717, %v6743
      %v6773 = vadd.f32 %v6718, %v6743
      %v6774 = vadd.f32 %v6719, %v6743
      %v6775 = vadd.f32 %v6720, %v6743
      %v6776 = vadd.f32 %v6721, %v6743
      %v6777 = vadd.f32 %v6722, %v6743
      %v6778 = vadd.f32 %v6723, %v6743
      %v6779 = vadd.f32 %v6724, %v6743
      %v6780 = vadd.f32 %v6725, %v6743
      %v6781 = vadd.f32 %v6726, %v6743
      %v6782 = vadd.f32 %v6727, %v6743
      %v6783 = vadd.f32 %v6728, %v6743
      %v6784 = vadd.f32 %v6729, %v6743
      %v6785 = vadd.f32 %v6730, %v6743
      %v6786 = vadd.f32 %v6731, %v6743
      %v6787 = vadd.f32 %v6732, %v6743
      %v6788 = vadd.f32 %v6733, %v6743
      %v6789 = vadd.f32 %v6734, %v6743
      %v6790 = vadd.f32 %v6735, %v6743
      %v6791 = vadd.f32 %v6736, %v6743
      %v6792 = vadd.f32 %v6737, %v6743
      %v6793 = vld [vmem:[%s5] sm:$0x3]
      %v6794 = vld [vmem:[%s6] sm:$0x1]
      %v6796 = vlaneseq
      %v6797 = vshrl.u32 %v6796, 7
      %v6798 = vsub.s32 0, %v6797
      %v6799 = vrot.slane %v6794, %v6798
      %v6849 = vunpack.c.l.b16 %v293
      %v6850 = vunpack.c.l.b16 %v294
      %v6851 = vunpack.c.l.b16 %v295
      %v6852 = vunpack.c.l.b16 %v296
      %v6853 = vunpack.c.l.b16 %v297
      %v6854 = vunpack.c.l.b16 %v298
      %v6855 = vunpack.c.l.b16 %v299
      %v6856 = vunpack.c.l.b16 %v300
      %v6857 = vunpack.c.l.b16 %v301
      %v6858 = vunpack.c.l.b16 %v302
      %v6859 = vunpack.c.l.b16 %v303
      %v6860 = vunpack.c.l.b16 %v304
      %v6861 = vunpack.c.l.b16 %v305
      %v6862 = vunpack.c.l.b16 %v306
      %v6863 = vunpack.c.l.b16 %v307
      %v6864 = vunpack.c.l.b16 %v308
      %v6865 = vunpack.c.l.b16 %v309
      %v6866 = vunpack.c.l.b16 %v310
      %v6867 = vunpack.c.l.b16 %v311
      %v6868 = vunpack.c.l.b16 %v312
      %v6869 = vunpack.c.l.b16 %v313
      %v6870 = vunpack.c.l.b16 %v314
      %v6871 = vunpack.c.l.b16 %v315
      %v6872 = vunpack.c.l.b16 %v316
      %v6873 = vunpack.c.l.b16 %v325
      %v6874 = vunpack.c.l.b16 %v326
      %v6875 = vunpack.c.l.b16 %v327
      %v6876 = vunpack.c.l.b16 %v328
      %v6877 = vunpack.c.l.b16 %v329
      %v6878 = vunpack.c.l.b16 %v330
      %v6879 = vunpack.c.l.b16 %v331
      %v6880 = vunpack.c.l.b16 %v332
      %v6881 = vunpack.c.l.b16 %v333
      %v6882 = vunpack.c.l.b16 %v334
      %v6883 = vunpack.c.l.b16 %v335
      %v6884 = vunpack.c.l.b16 %v336
      %v6885 = vunpack.c.l.b16 %v337
      %v6886 = vunpack.c.l.b16 %v338
      %v6887 = vunpack.c.l.b16 %v339
      %v6888 = vunpack.c.l.b16 %v340
      %v6889 = vunpack.c.l.b16 %v341
      %v6890 = vunpack.c.l.b16 %v342
      %v6891 = vunpack.c.l.b16 %v343
      %v6892 = vunpack.c.l.b16 %v344
      %v6893 = vunpack.c.l.b16 %v345
      %v6894 = vunpack.c.l.b16 %v346
      %v6895 = vunpack.c.l.b16 %v347
      %v6896 = vunpack.c.l.b16 %v348
      %v6897 = vpack.c.b16 %v6850, %v6849
      %v6898 = vpack.c.b16 %v6852, %v6851
      %v6899 = vpack.c.b16 %v6854, %v6853
      %v6900 = vpack.c.b16 %v6856, %v6855
      %v6901 = vpack.c.b16 %v6858, %v6857
      %v6902 = vpack.c.b16 %v6860, %v6859
      %v6903 = vpack.c.b16 %v6862, %v6861
      %v6904 = vpack.c.b16 %v6864, %v6863
      %v6905 = vpack.c.b16 %v6866, %v6865
      %v6906 = vpack.c.b16 %v6868, %v6867
      %v6907 = vpack.c.b16 %v6870, %v6869
      %v6908 = vpack.c.b16 %v6872, %v6871
      %v6909 = vpack.c.b16 %v6874, %v6873
      %v6910 = vpack.c.b16 %v6876, %v6875
      %v6911 = vpack.c.b16 %v6878, %v6877
      %v6912 = vpack.c.b16 %v6880, %v6879
      %v6913 = vpack.c.b16 %v6882, %v6881
      %v6914 = vpack.c.b16 %v6884, %v6883
      %v6915 = vpack.c.b16 %v6886, %v6885
      %v6916 = vpack.c.b16 %v6888, %v6887
      %v6917 = vpack.c.b16 %v6890, %v6889
      %v6918 = vpack.c.b16 %v6892, %v6891
      %v6919 = vpack.c.b16 %v6894, %v6893
      %v6920 = vpack.c.b16 %v6896, %v6895
      %v6922 = vsel %vm2465, %v6897, 0
      %v6925 = vsel %vm2465, %v6898, 0
      %v6928 = vsel %vm2465, %v6899, 0
      %v6931 = vsel %vm2465, %v6900, 0
      %v6934 = vsel %vm2465, %v6901, 0
      %v6937 = vsel %vm2465, %v6902, 0
      %v6940 = vsel %vm2465, %v6903, 0
      %v6943 = vsel %vm2465, %v6904, 0
      %v6946 = vsel %vm2465, %v6905, 0
      %v6949 = vsel %vm2465, %v6906, 0
      %v6952 = vsel %vm2465, %v6907, 0
      %v6955 = vsel %vm2465, %v6908, 0
      %v6958 = vsel %vm2465, %v6909, 0
      %v6961 = vsel %vm2465, %v6910, 0
      %v6964 = vsel %vm2465, %v6911, 0
      %v6967 = vsel %vm2465, %v6912, 0
      %v6970 = vsel %vm2465, %v6913, 0
      %v6973 = vsel %vm2465, %v6914, 0
      %v6976 = vsel %vm2465, %v6915, 0
      %v6979 = vsel %vm2465, %v6916, 0
      %v6982 = vsel %vm2465, %v6917, 0
      %v6985 = vsel %vm2465, %v6918, 0
      %v6988 = vsel %vm2465, %v6919, 0
      %v6991 = vsel %vm2465, %v6920, 0
      %vm6993 = vcmask 1041408
      %v6995 = vsel %vm6993, %v6793, 0
      %6997 = vmatprep.subr.bf16.mxu0 0
      %6998 = vmatpush1.bf16.msra.mxu0 %v6995
      %6999 = vmatprep.subr.bf16.mxu0 0
      %7000 = vmatpush1.bf16.msra.mxu0 0
      %7001 = vmatprep.subr.bf16.mxu0 0
      %7002 = vmatpush1.bf16.msra.mxu0 0
      %7003 = vmatprep.subr.bf16.mxu0 0
      %7004 = vmatpush1.bf16.msra.mxu0 0
      %7005 = vmatprep.subr.bf16.mxu0 0
      %7006 = vmatpush1.bf16.msra.mxu0 0
      %7007 = vmatprep.subr.bf16.mxu0 0
      %7008 = vmatpush1.bf16.msra.mxu0 0
      %7009 = vmatprep.subr.bf16.mxu0 0
      %7010 = vmatpush1.bf16.msra.mxu0 0
      %7011 = vmatprep.subr.bf16.mxu0 0
      %7012 = vmatpush1.bf16.msra.mxu0 0
      %7013 = vmatprep.subr.bf16.mxu0 0
      %7014 = vmatpush1.bf16.msra.mxu0 0
      %7015 = vmatprep.subr.bf16.mxu0 0
      %7016 = vmatpush1.bf16.msra.mxu0 0
      %7017 = vmatprep.subr.bf16.mxu0 0
      %7018 = vmatpush1.bf16.msra.mxu0 0
      %7019 = vmatprep.subr.bf16.mxu0 0
      %7020 = vmatpush1.bf16.msra.mxu0 0
      %7021 = vmatprep.subr.bf16.mxu0 0
      %7022 = vmatpush1.bf16.msra.mxu0 0
      %7023 = vmatprep.subr.bf16.mxu0 0
      %7024 = vmatpush1.bf16.msra.mxu0 0
      %7025 = vmatprep.subr.bf16.mxu0 0
      %7026 = vmatpush1.bf16.msra.mxu0 0
      %7027 = vmatprep.subr.bf16.mxu0 0
      %7028 = vmatpush1.bf16.msra.mxu0 0
      %7029 = vmatprep.mubr.bf16.mxu0 0
      %7030 = vmatmul.mubr.bf16.gmra.mrb[0].mxu0 %v6922
      %v7031 = vpop.f32.mrb[0].mxu0
      %v7032 = vadd.f32 %v6799, %v7031
      %v7033 = vpop.f32.mrb[0].mxu0
      %v7034 = vpop.f32.mrb[0].mxu0
      %v7035 = vadd.f32 %v6799, %v7034
      %v7036 = vpop.f32.mrb[0].mxu0
      %7037 = vmatprep.mubr.bf16.mxu0 0
      %7038 = vmatmul.mubr.bf16.gmra.mrb[0].mxu0 %v6925
      %v7039 = vpop.f32.mrb[0].mxu0
      %v7040 = vadd.f32 %v6799, %v7039
      %v7041 = vpop.f32.mrb[0].mxu0
      %v7042 = vpop.f32.mrb[0].mxu0
      %v7043 = vadd.f32 %v6799, %v7042
      %v7044 = vpop.f32.mrb[0].mxu0
      %7045 = vmatprep.mubr.bf16.mxu0 0
      %7046 = vmatmul.mubr.bf16.gmra.mrb[0].mxu0 %v6928
      %v7047 = vpop.f32.mrb[0].mxu0
      %v7048 = vadd.f32 %v6799, %v7047
      %v7049 = vpop.f32.mrb[0].mxu0
      %v7050 = vpop.f32.mrb[0].mxu0
      %v7051 = vadd.f32 %v6799, %v7050
      %v7052 = vpop.f32.mrb[0].mxu0
      %7053 = vmatprep.mubr.bf16.mxu0 0
      %7054 = vmatmul.mubr.bf16.gmra.mrb[0].mxu0 %v6931
      %v7055 = vpop.f32.mrb[0].mxu0
      %v7056 = vadd.f32 %v6799, %v7055
      %v7057 = vpop.f32.mrb[0].mxu0
      %v7058 = vpop.f32.mrb[0].mxu0
      %v7059 = vadd.f32 %v6799, %v7058
      %v7060 = vpop.f32.mrb[0].mxu0
      %7061 = vmatprep.mubr.bf16.mxu0 0
      %7062 = vmatmul.mubr.bf16.gmra.mrb[0].mxu0 %v6934
      %v7063 = vpop.f32.mrb[0].mxu0
      %v7064 = vadd.f32 %v6799, %v7063
      %v7065 = vpop.f32.mrb[0].mxu0
      %v7066 = vpop.f32.mrb[0].mxu0
      %v7067 = vadd.f32 %v6799, %v7066
      %v7068 = vpop.f32.mrb[0].mxu0
      %7069 = vmatprep.mubr.bf16.mxu0 0
      %7070 = vmatmul.mubr.bf16.gmra.mrb[0].mxu0 %v6937
      %v7071 = vpop.f32.mrb[0].mxu0
      %v7072 = vadd.f32 %v6799, %v7071
      %v7073 = vpop.f32.mrb[0].mxu0
      %v7074 = vpop.f32.mrb[0].mxu0
      %v7075 = vadd.f32 %v6799, %v7074
      %v7076 = vpop.f32.mrb[0].mxu0
      %7077 = vmatprep.mubr.bf16.mxu0 0
      %7078 = vmatmul.mubr.bf16.gmra.mrb[0].mxu0 %v6940
      %v7079 = vpop.f32.mrb[0].mxu0
      %v7080 = vadd.f32 %v6799, %v7079
      %v7081 = vpop.f32.mrb[0].mxu0
      %v7082 = vpop.f32.mrb[0].mxu0
      %v7083 = vadd.f32 %v6799, %v7082
      %v7084 = vpop.f32.mrb[0].mxu0
      %7085 = vmatprep.mubr.bf16.mxu0 0
      %7086 = vmatmul.mubr.bf16.gmra.mrb[0].mxu0 %v6943
      %v7087 = vpop.f32.mrb[0].mxu0
      %v7088 = vadd.f32 %v6799, %v7087
      %v7089 = vpop.f32.mrb[0].mxu0
      %v7090 = vpop.f32.mrb[0].mxu0
      %v7091 = vadd.f32 %v6799, %v7090
      %v7092 = vpop.f32.mrb[0].mxu0
      %7093 = vmatprep.mubr.bf16.mxu0 0
      %7094 = vmatmul.mubr.bf16.gmra.mrb[0].mxu0 %v6946
      %v7095 = vpop.f32.mrb[0].mxu0
      %v7096 = vadd.f32 %v6799, %v7095
      %v7097 = vpop.f32.mrb[0].mxu0
      %v7098 = vpop.f32.mrb[0].mxu0
      %v7099 = vadd.f32 %v6799, %v7098
      %v7100 = vpop.f32.mrb[0].mxu0
      %7101 = vmatprep.mubr.bf16.mxu0 0
      %7102 = vmatmul.mubr.bf16.gmra.mrb[0].mxu0 %v6949
      %v7103 = vpop.f32.mrb[0].mxu0
      %v7104 = vadd.f32 %v6799, %v7103
      %v7105 = vpop.f32.mrb[0].mxu0
      %v7106 = vpop.f32.mrb[0].mxu0
      %v7107 = vadd.f32 %v6799, %v7106
      %v7108 = vpop.f32.mrb[0].mxu0
      %7109 = vmatprep.mubr.bf16.mxu0 0
      %7110 = vmatmul.mubr.bf16.gmra.mrb[0].mxu0 %v6952
      %v7111 = vpop.f32.mrb[0].mxu0
      %v7112 = vadd.f32 %v6799, %v7111
      %v7113 = vpop.f32.mrb[0].mxu0
      %v7114 = vpop.f32.mrb[0].mxu0
      %v7115 = vadd.f32 %v6799, %v7114
      %v7116 = vpop.f32.mrb[0].mxu0
      %7117 = vmatprep.mubr.bf16.mxu0 0
      %7118 = vmatmul.mubr.bf16.gmra.mrb[0].mxu0 %v6955
      %v7119 = vpop.f32.mrb[0].mxu0
      %v7120 = vadd.f32 %v6799, %v7119
      %v7121 = vpop.f32.mrb[0].mxu0
      %v7122 = vpop.f32.mrb[0].mxu0
      %v7123 = vadd.f32 %v6799, %v7122
      %v7124 = vpop.f32.mrb[0].mxu0
      %7125 = vmatprep.mubr.bf16.mxu0 0
      %7126 = vmatmul.mubr.bf16.gmra.mrb[0].mxu0 %v6958
      %v7127 = vpop.f32.mrb[0].mxu0
      %v7128 = vadd.f32 %v6799, %v7127
      %v7129 = vpop.f32.mrb[0].mxu0
      %v7130 = vpop.f32.mrb[0].mxu0
      %v7131 = vadd.f32 %v6799, %v7130
      %v7132 = vpop.f32.mrb[0].mxu0
      %7133 = vmatprep.mubr.bf16.mxu0 0
      %7134 = vmatmul.mubr.bf16.gmra.mrb[0].mxu0 %v6961
      %v7135 = vpop.f32.mrb[0].mxu0
      %v7136 = vadd.f32 %v6799, %v7135
      %v7137 = vpop.f32.mrb[0].mxu0
      %v7138 = vpop.f32.mrb[0].mxu0
      %v7139 = vadd.f32 %v6799, %v7138
      %v7140 = vpop.f32.mrb[0].mxu0
      %7141 = vmatprep.mubr.bf16.mxu0 0
      %7142 = vmatmul.mubr.bf16.gmra.mrb[0].mxu0 %v6964
      %v7143 = vpop.f32.mrb[0].mxu0
      %v7144 = vadd.f32 %v6799, %v7143
      %v7145 = vpop.f32.mrb[0].mxu0
      %v7146 = vpop.f32.mrb[0].mxu0
      %v7147 = vadd.f32 %v6799, %v7146
      %v7148 = vpop.f32.mrb[0].mxu0
      %7149 = vmatprep.mubr.bf16.mxu0 0
      %7150 = vmatmul.mubr.bf16.gmra.mrb[0].mxu0 %v6967
      %v7151 = vpop.f32.mrb[0].mxu0
      %v7152 = vadd.f32 %v6799, %v7151
      %v7153 = vpop.f32.mrb[0].mxu0
      %v7154 = vpop.f32.mrb[0].mxu0
      %v7155 = vadd.f32 %v6799, %v7154
      %v7156 = vpop.f32.mrb[0].mxu0
      %7157 = vmatprep.mubr.bf16.mxu0 0
      %7158 = vmatmul.mubr.bf16.gmra.mrb[0].mxu0 %v6970
      %v7159 = vpop.f32.mrb[0].mxu0
      %v7160 = vadd.f32 %v6799, %v7159
      %v7161 = vpop.f32.mrb[0].mxu0
      %v7162 = vpop.f32.mrb[0].mxu0
      %v7163 = vadd.f32 %v6799, %v7162
      %v7164 = vpop.f32.mrb[0].mxu0
      %7165 = vmatprep.mubr.bf16.mxu0 0
      %7166 = vmatmul.mubr.bf16.gmra.mrb[0].mxu0 %v6973
      %v7167 = vpop.f32.mrb[0].mxu0
      %v7168 = vadd.f32 %v6799, %v7167
      %v7169 = vpop.f32.mrb[0].mxu0
      %v7170 = vpop.f32.mrb[0].mxu0
      %v7171 = vadd.f32 %v6799, %v7170
      %v7172 = vpop.f32.mrb[0].mxu0
      %7173 = vmatprep.mubr.bf16.mxu0 0
      %7174 = vmatmul.mubr.bf16.gmra.mrb[0].mxu0 %v6976
      %v7175 = vpop.f32.mrb[0].mxu0
      %v7176 = vadd.f32 %v6799, %v7175
      %v7177 = vpop.f32.mrb[0].mxu0
      %v7178 = vpop.f32.mrb[0].mxu0
      %v7179 = vadd.f32 %v6799, %v7178
      %v7180 = vpop.f32.mrb[0].mxu0
      %7181 = vmatprep.mubr.bf16.mxu0 0
      %7182 = vmatmul.mubr.bf16.gmra.mrb[0].mxu0 %v6979
      %v7183 = vpop.f32.mrb[0].mxu0
      %v7184 = vadd.f32 %v6799, %v7183
      %v7185 = vpop.f32.mrb[0].mxu0
      %v7186 = vpop.f32.mrb[0].mxu0
      %v7187 = vadd.f32 %v6799, %v7186
      %v7188 = vpop.f32.mrb[0].mxu0
      %7189 = vmatprep.mubr.bf16.mxu0 0
      %7190 = vmatmul.mubr.bf16.gmra.mrb[0].mxu0 %v6982
      %v7191 = vpop.f32.mrb[0].mxu0
      %v7192 = vadd.f32 %v6799, %v7191
      %v7193 = vpop.f32.mrb[0].mxu0
      %v7194 = vpop.f32.mrb[0].mxu0
      %v7195 = vadd.f32 %v6799, %v7194
      %v7196 = vpop.f32.mrb[0].mxu0
      %7197 = vmatprep.mubr.bf16.mxu0 0
      %7198 = vmatmul.mubr.bf16.gmra.mrb[0].mxu0 %v6985
      %v7199 = vpop.f32.mrb[0].mxu0
      %v7200 = vadd.f32 %v6799, %v7199
      %v7201 = vpop.f32.mrb[0].mxu0
      %v7202 = vpop.f32.mrb[0].mxu0
      %v7203 = vadd.f32 %v6799, %v7202
      %v7204 = vpop.f32.mrb[0].mxu0
      %7205 = vmatprep.mubr.bf16.mxu0 0
      %7206 = vmatmul.mubr.bf16.gmra.mrb[0].mxu0 %v6988
      %v7207 = vpop.f32.mrb[0].mxu0
      %v7208 = vadd.f32 %v6799, %v7207
      %v7209 = vpop.f32.mrb[0].mxu0
      %v7210 = vpop.f32.mrb[0].mxu0
      %v7211 = vadd.f32 %v6799, %v7210
      %v7212 = vpop.f32.mrb[0].mxu0
      %7213 = vmatprep.mubr.bf16.mxu0 0
      %7214 = vmatmul.mubr.bf16.gmra.mrb[0].mxu0 %v6991
      %v7215 = vpop.f32.mrb[0].mxu0
      %v7216 = vadd.f32 %v6799, %v7215
      %v7217 = vpop.f32.mrb[0].mxu0
      %v7218 = vpop.f32.mrb[0].mxu0
      %v7219 = vadd.f32 %v6799, %v7218
      %v7220 = vpop.f32.mrb[0].mxu0
      %7221 = vdwg.mxu0
      %v7222 = vadd.f32 %v6745, %v7032
      %v7223 = vadd.f32 %v6746, %v7035
      %v7224 = vadd.f32 %v6747, %v7040
      %v7225 = vadd.f32 %v6748, %v7043
      %v7226 = vadd.f32 %v6749, %v7048
      %v7227 = vadd.f32 %v6750, %v7051
      %v7228 = vadd.f32 %v6751, %v7056
      %v7229 = vadd.f32 %v6752, %v7059
      %v7230 = vadd.f32 %v6753, %v7064
      %v7231 = vadd.f32 %v6754, %v7067
      %v7232 = vadd.f32 %v6755, %v7072
      %v7233 = vadd.f32 %v6756, %v7075
      %v7234 = vadd.f32 %v6757, %v7080
      %v7235 = vadd.f32 %v6758, %v7083
      %v7236 = vadd.f32 %v6759, %v7088
      %v7237 = vadd.f32 %v6760, %v7091
      %v7238 = vadd.f32 %v6761, %v7096
      %v7239 = vadd.f32 %v6762, %v7099
      %v7240 = vadd.f32 %v6763, %v7104
      %v7241 = vadd.f32 %v6764, %v7107
      %v7242 = vadd.f32 %v6765, %v7112
      %v7243 = vadd.f32 %v6766, %v7115
      %v7244 = vadd.f32 %v6767, %v7120
      %v7245 = vadd.f32 %v6768, %v7123
      %v7246 = vadd.f32 %v6769, %v7128
      %v7247 = vadd.f32 %v6770, %v7131
      %v7248 = vadd.f32 %v6771, %v7136
      %v7249 = vadd.f32 %v6772, %v7139
      %v7250 = vadd.f32 %v6773, %v7144
      %v7251 = vadd.f32 %v6774, %v7147
      %v7252 = vadd.f32 %v6775, %v7152
      %v7253 = vadd.f32 %v6776, %v7155
      %v7254 = vadd.f32 %v6777, %v7160
      %v7255 = vadd.f32 %v6778, %v7163
      %v7256 = vadd.f32 %v6779, %v7168
      %v7257 = vadd.f32 %v6780, %v7171
      %v7258 = vadd.f32 %v6781, %v7176
      %v7259 = vadd.f32 %v6782, %v7179
      %v7260 = vadd.f32 %v6783, %v7184
      %v7261 = vadd.f32 %v6784, %v7187
      %v7262 = vadd.f32 %v6785, %v7192
      %v7263 = vadd.f32 %v6786, %v7195
      %v7264 = vadd.f32 %v6787, %v7200
      %v7265 = vadd.f32 %v6788, %v7203
      %v7266 = vadd.f32 %v6789, %v7208
      %v7267 = vadd.f32 %v6790, %v7211
      %v7268 = vadd.f32 %v6791, %v7216
      %v7269 = vadd.f32 %v6792, %v7219
      %7270 = vxpose.xlu0.b32.start [1/16] %v7222, 128
      %7271 = vxpose.xlu0.b32.cont [2/16] %v7223, 128
      %7272 = vxpose.xlu0.b32.cont [3/16] %v7224, 128
      %7273 = vxpose.xlu0.b32.cont [4/16] %v7225, 128
      %7274 = vxpose.xlu0.b32.cont [5/16] %v7226, 128
      %7275 = vxpose.xlu0.b32.cont [6/16] %v7227, 128
      %7276 = vxpose.xlu0.b32.cont [7/16] %v7228, 128
      %7277 = vxpose.xlu0.b32.cont [8/16] %v7229, 128
      %7278 = vxpose.xlu0.b32.cont [9/16] %v7230, 128
      %7279 = vxpose.xlu0.b32.cont [10/16] %v7231, 128
      %7280 = vxpose.xlu0.b32.cont [11/16] %v7232, 128
      %7281 = vxpose.xlu0.b32.cont [12/16] %v7233, 128
      %7282 = vxpose.xlu0.b32.cont [13/16] %v7234, 128
      %7283 = vxpose.xlu0.b32.cont [14/16] %v7235, 128
      %7284 = vxpose.xlu0.b32.cont [15/16] %v7236, 128
      %7285 = vxpose.xlu0.b32.end [16/16] %v7237, 128
      %v7286 = vpop.trf.xlu0
      %v7287 = vpop.trf.xlu0
      %v7288 = vpop.trf.xlu0
      %v7289 = vpop.trf.xlu0
      %v7290 = vpop.trf.xlu0
      %v7291 = vpop.trf.xlu0
      %v7292 = vpop.trf.xlu0
      %v7293 = vpop.trf.xlu0
      %v7294 = vpop.trf.xlu0
      %v7295 = vpop.trf.xlu0
      %v7296 = vpop.trf.xlu0
      %v7297 = vpop.trf.xlu0
      %v7298 = vpop.trf.xlu0
      %v7299 = vpop.trf.xlu0
      %v7300 = vpop.trf.xlu0
      %v7301 = vpop.trf.xlu0
      %7302 = vxpose.xlu0.b32.start [1/16] %v7238, 128
      %7303 = vxpose.xlu0.b32.cont [2/16] %v7239, 128
      %7304 = vxpose.xlu0.b32.cont [3/16] %v7240, 128
      %7305 = vxpose.xlu0.b32.cont [4/16] %v7241, 128
      %7306 = vxpose.xlu0.b32.cont [5/16] %v7242, 128
      %7307 = vxpose.xlu0.b32.cont [6/16] %v7243, 128
      %7308 = vxpose.xlu0.b32.cont [7/16] %v7244, 128
      %7309 = vxpose.xlu0.b32.cont [8/16] %v7245, 128
      %7310 = vxpose.xlu0.b32.cont [9/16] 0.0, 128
      %7311 = vxpose.xlu0.b32.cont [10/16] 0.0, 128
      %7312 = vxpose.xlu0.b32.cont [11/16] 0.0, 128
      %7313 = vxpose.xlu0.b32.cont [12/16] 0.0, 128
      %7314 = vxpose.xlu0.b32.cont [13/16] 0.0, 128
      %7315 = vxpose.xlu0.b32.cont [14/16] 0.0, 128
      %7316 = vxpose.xlu0.b32.cont [15/16] 0.0, 128
      %7317 = vxpose.xlu0.b32.end [16/16] 0.0, 128
      %v7318 = vpop.trf.xlu0
      %v7319 = vpop.trf.xlu0
      %v7320 = vpop.trf.xlu0
      %v7321 = vpop.trf.xlu0
      %v7322 = vpop.trf.xlu0
      %v7323 = vpop.trf.xlu0
      %v7324 = vpop.trf.xlu0
      %v7325 = vpop.trf.xlu0
      %v7326 = vpop.trf.xlu0
      %v7327 = vpop.trf.xlu0
      %v7328 = vpop.trf.xlu0
      %v7329 = vpop.trf.xlu0
      %v7330 = vpop.trf.xlu0
      %v7331 = vpop.trf.xlu0
      %v7332 = vpop.trf.xlu0
      %v7333 = vpop.trf.xlu0
      %7334 = vxpose.xlu0.b32.start [1/16] %v7246, 128
      %7335 = vxpose.xlu0.b32.cont [2/16] %v7247, 128
      %7336 = vxpose.xlu0.b32.cont [3/16] %v7248, 128
      %7337 = vxpose.xlu0.b32.cont [4/16] %v7249, 128
      %7338 = vxpose.xlu0.b32.cont [5/16] %v7250, 128
      %7339 = vxpose.xlu0.b32.cont [6/16] %v7251, 128
      %7340 = vxpose.xlu0.b32.cont [7/16] %v7252, 128
      %7341 = vxpose.xlu0.b32.cont [8/16] %v7253, 128
      %7342 = vxpose.xlu0.b32.cont [9/16] %v7254, 128
      %7343 = vxpose.xlu0.b32.cont [10/16] %v7255, 128
      %7344 = vxpose.xlu0.b32.cont [11/16] %v7256, 128
      %7345 = vxpose.xlu0.b32.cont [12/16] %v7257, 128
      %7346 = vxpose.xlu0.b32.cont [13/16] %v7258, 128
      %7347 = vxpose.xlu0.b32.cont [14/16] %v7259, 128
      %7348 = vxpose.xlu0.b32.cont [15/16] %v7260, 128
      %7349 = vxpose.xlu0.b32.end [16/16] %v7261, 128
      %v7350 = vpop.trf.xlu0
      %v7351 = vpop.trf.xlu0
      %v7352 = vpop.trf.xlu0
      %v7353 = vpop.trf.xlu0
      %v7354 = vpop.trf.xlu0
      %v7355 = vpop.trf.xlu0
      %v7356 = vpop.trf.xlu0
      %v7357 = vpop.trf.xlu0
      %v7358 = vpop.trf.xlu0
      %v7359 = vpop.trf.xlu0
      %v7360 = vpop.trf.xlu0
      %v7361 = vpop.trf.xlu0
      %v7362 = vpop.trf.xlu0
      %v7363 = vpop.trf.xlu0
      %v7364 = vpop.trf.xlu0
      %v7365 = vpop.trf.xlu0
      %7366 = vxpose.xlu0.b32.start [1/16] %v7262, 128
      %7367 = vxpose.xlu0.b32.cont [2/16] %v7263, 128
      %7368 = vxpose.xlu0.b32.cont [3/16] %v7264, 128
      %7369 = vxpose.xlu0.b32.cont [4/16] %v7265, 128
      %7370 = vxpose.xlu0.b32.cont [5/16] %v7266, 128
      %7371 = vxpose.xlu0.b32.cont [6/16] %v7267, 128
      %7372 = vxpose.xlu0.b32.cont [7/16] %v7268, 128
      %7373 = vxpose.xlu0.b32.cont [8/16] %v7269, 128
      %7374 = vxpose.xlu0.b32.cont [9/16] 0.0, 128
      %7375 = vxpose.xlu0.b32.cont [10/16] 0.0, 128
      %7376 = vxpose.xlu0.b32.cont [11/16] 0.0, 128
      %7377 = vxpose.xlu0.b32.cont [12/16] 0.0, 128
      %7378 = vxpose.xlu0.b32.cont [13/16] 0.0, 128
      %7379 = vxpose.xlu0.b32.cont [14/16] 0.0, 128
      %7380 = vxpose.xlu0.b32.cont [15/16] 0.0, 128
      %7381 = vxpose.xlu0.b32.end [16/16] 0.0, 128
      %v7382 = vpop.trf.xlu0
      %v7383 = vpop.trf.xlu0
      %v7384 = vpop.trf.xlu0
      %v7385 = vpop.trf.xlu0
      %v7386 = vpop.trf.xlu0
      %v7387 = vpop.trf.xlu0
      %v7388 = vpop.trf.xlu0
      %v7389 = vpop.trf.xlu0
      %v7390 = vpop.trf.xlu0
      %v7391 = vpop.trf.xlu0
      %v7392 = vpop.trf.xlu0
      %v7393 = vpop.trf.xlu0
      %v7394 = vpop.trf.xlu0
      %v7395 = vpop.trf.xlu0
      %v7396 = vpop.trf.xlu0
      %v7397 = vpop.trf.xlu0
      %7398 = vst [vmem:[%s285] sm:$0xff] %v7286
      %vm7399 = vcmask 523264
      %7400 = vst.msk [vmem:[%s285 + $0x8] sm:$0xff] %vm7399, %v7318
      %7401 = vst [vmem:[%s285 + $0x10] sm:$0xff] %v7350
      %7402 = vst.msk [vmem:[%s285 + $0x18] sm:$0xff] %vm7399, %v7382
      %s7403 = smul.u32 2, %s18
      %p7404 = scmp.lt.s32.totalorder %s7403, 3
      %s7405 = scalar_select %p7404, %s7403, 3
      %s7406 = smul.addr %s7405, 2
      %s7407 = smul.addr %s7406, 8
      %s7408 = scalar_lea.vmem %s7, %s7407
      // Predicated region
      $region49: #{wide_basic_forward.1} parent=47 // pred_check
        %p7409 = pneg %p188
      $region50: #{wide_basic_forward.1} parent=47 // pred_check_branch
        %7411 = sbr.rel (%p7409) target = $region52
      $region51: #{wide_basic_forward.1} parent=47 // pred_region
        %s7412 = smul.u32 2, %s18
      $region52: #{wide_basic_forward.1} parent=47 // pred_fallthru
        _
    $region48: #{wide_basic_forward.1} parent=5 // pred_fallthru
      _
    %p7413 = scmp.le.s32.totalorder 2, %s13
    // Predicated region
    $region53: #{wide_basic_forward.1} parent=5 // pred_check
      %p7414 = pneg %p7413
    $region54: #{wide_basic_forward.1} parent=5 // pred_check_branch
      %7416 = sbr.rel (%p7414) target = $region56
    $region55: #{wide_basic_forward.1} parent=5 // pred_region
      %s7417 = ssub.s32 %s13, 2
      // Predicated region
      $region57: #{wide_basic_forward.1} parent=55 // pred_check
        %p7418 = pneg %p194
      $region58: #{wide_basic_forward.1} parent=55 // pred_check_branch
        %7420 = sbr.rel (%p7418) target = $region60
      $region59: #{wide_basic_forward.1} parent=55 // pred_region
        %s7421 = smul.u32 2, %s19
        %p7422 = scmp.lt.s32.totalorder %s7421, 3
        %s7423 = scalar_select %p7422, %s7421, 3
        %s7424 = smul.addr %s7423, 2
        %s7425 = smul.addr %s7424, 8
        %s7426 = scalar_lea.vmem %s7, %s7425
      $region60: #{wide_basic_forward.1} parent=55 // pred_fallthru
        _
    $region56: #{wide_basic_forward.1} parent=5 // pred_fallthru
      _
  $region6: #{wide_basic_forward.1} parent=0 // loop_footer
    %s17 = sadd.s32 1, %s13
  $region7: #{wide_basic_forward.1} parent=0 // loop_footer_branch
    %12 = sbr.rel target = $region3
  $region8: #{wide_basic_forward.1} parent=0 // loop_exit
    _

</llo_original>
